<compile_context>
chip_gen: v6e
topology: v6e:2x2x1
jax: 0.10.0
libtpu: 0.0.40
codegen_flags: <defaults>
</compile_context>

<pallas_src>
import functools

import jax
import jax.numpy as jnp
from jax.experimental import pallas as pl
from jax.experimental.pallas import tpu as pltpu


_PADL = 8  # left zero-margin: image sits at a sublane-aligned column offset


# ------------------------------ fused kernel --------------------------------
def _vgg16_head_kernel(cols_ref, w1_ref, b1_ref, w2_ref, b2_ref, w3_ref, b3_ref,
                       w4_ref, b4_ref, w5_ref, b5_ref, o_ref,
                       pad1, t2, pad2, pad3, t4, pad4, *, H, W):
    """One image per grid step; all intermediates stay in VMEM scratch."""
    H2, W2 = H // 2, W // 2
    H4, W4 = H // 4, W // 4
    f32, bf16 = jnp.float32, jnp.bfloat16

    def conv3x3(pad_ref, w_ref, b_ref, h, w, cin, cout, relu):
        """3x3 SAME conv read from a zero-padded VMEM scratch.

        pad_ref: (h+2, _PADL+w+_PADL, cin) f32, image at [1:h+1, _PADL:_PADL+w).
        Returns (h*w, cout) f32.
        """
        acc = jnp.broadcast_to(b_ref[...], (h * w, cout))          # bias-init acc
        for dy in range(3):
            for dx in range(3):
                c0 = _PADL - 1 + dx
                slab = pad_ref[dy:dy + h, c0:c0 + w, :]            # (h, w, cin) f32
                slab = slab.reshape(h * w, cin).astype(bf16)       # bf16 MXU operand
                acc = acc + jnp.dot(slab, w_ref[dy, dx],
                                    preferred_element_type=f32)
        return jnp.maximum(acc, 0.0) if relu else acc

    def store_padded(dst_ref, val, h, w):
        dst_ref[...] = jnp.zeros_like(dst_ref)                     # zero halo strip
        dst_ref[1:h + 1, _PADL:_PADL + w, :] = val                 # aligned interior

    def maxpool2x2(src_ref, ho, wo):
        a = src_ref[pl.ds(0, ho, 2), pl.ds(0, wo, 2), :]
        b = src_ref[pl.ds(0, ho, 2), pl.ds(1, wo, 2), :]
        c = src_ref[pl.ds(1, ho, 2), pl.ds(0, wo, 2), :]
        d = src_ref[pl.ds(1, ho, 2), pl.ds(1, wo, 2), :]
        return jnp.maximum(jnp.maximum(a, b), jnp.maximum(c, d))

    # conv1_1 (+ReLU): im2col'd stem, single (H*W, 27) x (27, 64) matmul.
    a1 = jnp.dot(cols_ref[0], w1_ref[...], preferred_element_type=f32)
    a1 = jnp.maximum(a1 + b1_ref[...], 0.0)
    store_padded(pad1, a1.reshape(H, W, 64), H, W)

    # conv1_2 (+ReLU) -> fused 2x2 maxpool.
    a2 = conv3x3(pad1, w2_ref, b2_ref, H, W, 64, 64, relu=True)
    t2[...] = a2.reshape(H, W, 64)
    store_padded(pad2, maxpool2x2(t2, H2, W2), H2, W2)

    # conv2_1 (+ReLU).
    a3 = conv3x3(pad2, w3_ref, b3_ref, H2, W2, 64, 128, relu=True)
    store_padded(pad3, a3.reshape(H2, W2, 128), H2, W2)

    # conv2_2 (+ReLU) -> fused 2x2 maxpool.
    a4 = conv3x3(pad3, w4_ref, b4_ref, H2, W2, 128, 128, relu=True)
    t4[...] = a4.reshape(H2, W2, 128)
    store_padded(pad4, maxpool2x2(t4, H4, W4), H4, W4)

    # conv3_1 (hooked layer-11 output, pre-ReLU) -> lane-dense (H4*W4, 256) store.
    a5 = conv3x3(pad4, w5_ref, b5_ref, H4, W4, 128, 256, relu=False)
    o_ref[0] = a5.astype(o_ref.dtype)


# ------------------------------- wrapper -------------------------------------
def dnn_activations_vgg16_layer11(x_nchw, params):
    """DNNActivations(vgg16, layer=11).forward.

    x_nchw: (N, 3, H, W) -> (N, 256, H//4, W//4), NCHW like the PyTorch module.
    """
    N, cin, H, W = x_nchw.shape
    assert cin == 3 and H % 4 == 0 and W % 4 == 0
    H2, W2, H4, W4 = H // 2, W // 2, H // 4, W // 4

    x = jnp.transpose(x_nchw, (0, 2, 3, 1)).astype(jnp.float32)      # NCHW -> NHWC
    # im2col of the 3-channel stem: (N, H*W, 27) in (dy, dx, cin) tap order.
    xp = jnp.pad(x, ((0, 0), (1, 1), (1, 1), (0, 0)))
    cols = jnp.concatenate(
        [xp[:, dy:dy + H, dx:dx + W, :] for dy in range(3) for dx in range(3)],
        axis=-1).reshape(N, H * W, 27).astype(jnp.bfloat16)

    (w1, b1), (w2, b2), (w3, b3), (w4, b4), (w5, b5) = params
    w1p = w1.reshape(27, 64).astype(jnp.bfloat16)                    # matches tap order
    w2b, w3b, w4b, w5b = (w.astype(jnp.bfloat16) for w in (w2, w3, w4, w5))
    b1r, b2r, b3r, b4r, b5r = (b.reshape(1, -1).astype(jnp.float32)
                               for b in (b1, b2, b3, b4, b5))

    def wspec(*shape):
        return pl.BlockSpec(shape, lambda n: (0,) * len(shape))

    Wx = 2 * _PADL                                                   # scratch W margin

    out = pl.pallas_call(
        functools.partial(_vgg16_head_kernel, H=H, W=W),
        out_shape=jax.ShapeDtypeStruct((N, H4 * W4, 256), jnp.float32),
        grid=(N,),
        in_specs=[
            pl.BlockSpec((1, H * W, 27), lambda n: (n, 0, 0)),
            wspec(27, 64), wspec(1, 64),
            wspec(3, 3, 64, 64), wspec(1, 64),
            wspec(3, 3, 64, 128), wspec(1, 128),
            wspec(3, 3, 128, 128), wspec(1, 128),
            wspec(3, 3, 128, 256), wspec(1, 256),
        ],
        out_specs=pl.BlockSpec((1, H4 * W4, 256), lambda n: (n, 0, 0)),
        scratch_shapes=[
            pltpu.VMEM((H + 2, W + Wx, 64), jnp.float32),     # pad1 (conv1_1 out)
            pltpu.VMEM((H, W, 64), jnp.float32),              # t2   (conv1_2 out)
            pltpu.VMEM((H2 + 2, W2 + Wx, 64), jnp.float32),   # pad2 (pool1 out)
            pltpu.VMEM((H2 + 2, W2 + Wx, 128), jnp.float32),  # pad3 (conv2_1 out)
            pltpu.VMEM((H2, W2, 128), jnp.float32),           # t4   (conv2_2 out)
            pltpu.VMEM((H4 + 2, W4 + Wx, 128), jnp.float32),  # pad4 (pool2 out)
        ],
        compiler_params=pltpu.CompilerParams(
            dimension_semantics=("parallel",),
            vmem_limit_bytes=32 * 1024 * 1024),
    )(cols, w1p, b1r, w2b, b2r, w3b, b3r, w4b, b4r, w5b, b5r)

    out = out.reshape(N, H4, W4, 256)
    return jnp.transpose(out, (0, 3, 1, 2))                          # NHWC -> NCHW


# --------------------------- params (deterministic) --------------------------
def init_params(key):
    """VGG16 conv1_1..conv3_1 weights (HWIO), deterministic He-style init."""
    dims = [(3, 64), (64, 64), (64, 128), (128, 128), (128, 256)]
    params = []
    for cin, cout in dims:
        kw, kb, key = jax.random.split(key, 3)
        scale = (2.0 / (9.0 * cin)) ** 0.5
        w = scale * jax.random.normal(kw, (3, 3, cin, cout), jnp.float32)
        b = 0.01 * jax.random.normal(kb, (cout,), jnp.float32)
        params.append((w, b))
    return params


# ------------------------------ pure-JAX reference ---------------------------
def _ref_forward(x_nchw, params):
    def conv(x, w, b, relu):
        y = jax.lax.conv_general_dilated(
            x, w, window_strides=(1, 1), padding="SAME",
            dimension_numbers=("NCHW", "HWIO", "NCHW"),
            precision=jax.lax.Precision.HIGHEST)
        y = y + b[None, :, None, None]
        return jnp.maximum(y, 0.0) if relu else y

    def pool(x):
        return jax.lax.reduce_window(x, -jnp.inf, jax.lax.max,
                                     (1, 1, 2, 2), (1, 1, 2, 2), "VALID")

    (w1, b1), (w2, b2), (w3, b3), (w4, b4), (w5, b5) = params
    x = conv(x_nchw, w1, b1, True)
    x = conv(x, w2, b2, True)
    x = pool(x)
    x = conv(x, w3, b3, True)
    x = conv(x, w4, b4, True)
    x = pool(x)
    return conv(x, w5, b5, False)


if __name__ == "__main__":
    key = jax.random.PRNGKey(0)
    kx, kp = jax.random.split(key)
    x = jax.random.normal(kx, (2, 3, 16, 16), jnp.float32)   # NCHW, like PyTorch
    params = init_params(kp)

    fwd = jax.jit(dnn_activations_vgg16_layer11)
    out = jax.block_until_ready(fwd(x, params))
    assert out.shape == (2, 256, 4, 4), out.shape

    ref = _ref_forward(x, params)
    max_err = float(jnp.max(jnp.abs(out - ref)))
    # bf16 MXU operands (f32 accumulation) vs. the all-f32 XLA reference.
    assert jnp.allclose(out, ref, atol=5e-2, rtol=5e-2), max_err

    print("KERNEL_OK")
</pallas_src>

<mosaic_0001>
module attributes {stable_mosaic.version = 11 : i64} {
  func.func @_vgg16_head_kernel(%arg0: i32, %arg1: memref<1x256x27xbf16, #tpu.memory_space<vmem>>, %arg2: memref<27x64xbf16, #tpu.memory_space<vmem>>, %arg3: memref<1x64xf32, #tpu.memory_space<vmem>>, %arg4: memref<3x3x64x64xbf16, #tpu.memory_space<vmem>>, %arg5: memref<1x64xf32, #tpu.memory_space<vmem>>, %arg6: memref<3x3x64x128xbf16, #tpu.memory_space<vmem>>, %arg7: memref<1x128xf32, #tpu.memory_space<vmem>>, %arg8: memref<3x3x128x128xbf16, #tpu.memory_space<vmem>>, %arg9: memref<1x128xf32, #tpu.memory_space<vmem>>, %arg10: memref<3x3x128x256xbf16, #tpu.memory_space<vmem>>, %arg11: memref<1x256xf32, #tpu.memory_space<vmem>>, %arg12: memref<1x16x256xf32, #tpu.memory_space<vmem>>, %arg13: memref<18x32x64xf32, #tpu.memory_space<vmem>>, %arg14: memref<16x16x64xf32, #tpu.memory_space<vmem>>, %arg15: memref<10x24x64xf32, #tpu.memory_space<vmem>>, %arg16: memref<10x24x128xf32, #tpu.memory_space<vmem>>, %arg17: memref<8x8x128xf32, #tpu.memory_space<vmem>>, %arg18: memref<6x20x128xf32, #tpu.memory_space<vmem>>) attributes {dimension_semantics = [#tpu.dimension_semantics<parallel>], iteration_bounds = array<i64: 2>, scalar_prefetch = 0 : i64, scratch_operands = 6 : i64, tpu.core_type = #tpu.core_type<tc>, window_params = [{transform_indices = @transform_0, window_bounds = array<i64: 1, 256, 27>}, {pipeline_mode = #tpu.pipeline_mode<synchronous>, transform_indices = @transform_1, window_bounds = array<i64: 27, 64>}, {pipeline_mode = #tpu.pipeline_mode<synchronous>, transform_indices = @transform_2, window_bounds = array<i64: 1, 64>}, {pipeline_mode = #tpu.pipeline_mode<synchronous>, transform_indices = @transform_3, window_bounds = array<i64: 3, 3, 64, 64>}, {pipeline_mode = #tpu.pipeline_mode<synchronous>, transform_indices = @transform_4, window_bounds = array<i64: 1, 64>}, {pipeline_mode = #tpu.pipeline_mode<synchronous>, transform_indices = @transform_5, window_bounds = array<i64: 3, 3, 64, 128>}, {pipeline_mode = #tpu.pipeline_mode<synchronous>, transform_indices = @transform_6, window_bounds = array<i64: 1, 128>}, {pipeline_mode = #tpu.pipeline_mode<synchronous>, transform_indices = @transform_7, window_bounds = array<i64: 3, 3, 128, 128>}, {pipeline_mode = #tpu.pipeline_mode<synchronous>, transform_indices = @transform_8, window_bounds = array<i64: 1, 128>}, {pipeline_mode = #tpu.pipeline_mode<synchronous>, transform_indices = @transform_9, window_bounds = array<i64: 3, 3, 128, 256>}, {pipeline_mode = #tpu.pipeline_mode<synchronous>, transform_indices = @transform_10, window_bounds = array<i64: 1, 256>}, {transform_indices = @transform_11, window_bounds = array<i64: 1, 16, 256>}]} {
    %c0 = arith.constant 0 : index
    %c0_0 = arith.constant 0 : index
    %c0_1 = arith.constant 0 : index
    %0 = vector.load %arg1[%c0, %c0_0, %c0_1] : memref<1x256x27xbf16, #tpu.memory_space<vmem>>, vector<1x256x27xbf16>
    %1 = vector.shape_cast %0 : vector<1x256x27xbf16> to vector<256x27xbf16>
    %c0_2 = arith.constant 0 : index
    %c0_3 = arith.constant 0 : index
    %2 = vector.load %arg2[%c0_2, %c0_3] : memref<27x64xbf16, #tpu.memory_space<vmem>>, vector<27x64xbf16>
    %cst = arith.constant dense<0.000000e+00> : vector<256x64xf32>
    %3 = tpu.matmul %1, %2, %cst {dimension_numbers = #tpu.dot_dimension_numbers<[1], [0], [0], [1], [0, 0, 1, 1], [], []>} : vector<256x27xbf16>, vector<27x64xbf16>, vector<256x64xf32> -> vector<256x64xf32>
    %c0_4 = arith.constant 0 : index
    %c0_5 = arith.constant 0 : index
    %4 = vector.load %arg3[%c0_4, %c0_5] : memref<1x64xf32, #tpu.memory_space<vmem>>, vector<1x64xf32>
    %5 = vector.broadcast %4 : vector<1x64xf32> to vector<256x64xf32>
    %6 = arith.addf %3, %5 : vector<256x64xf32>
    %cst_6 = arith.constant 0.000000e+00 : f32
    %7 = vector.broadcast %cst_6 : f32 to vector<256x64xf32>
    %8 = arith.maximumf %6, %7 : vector<256x64xf32>
    %9 = vector.shape_cast %8 : vector<256x64xf32> to vector<16x16x64xf32>
    %cst_7 = arith.constant 0.000000e+00 : f32
    %10 = vector.broadcast %cst_7 : f32 to vector<18x32x64xf32>
    %c0_8 = arith.constant 0 : index
    %c0_9 = arith.constant 0 : index
    %c0_10 = arith.constant 0 : index
    %11 = vector.load %arg13[%c0_8, %c0_9, %c0_10] : memref<18x32x64xf32, #tpu.memory_space<vmem>>, vector<18x32x64xf32>
    tpu.vector_store %arg13[%c0_8, %c0_9, %c0_10], %10 {strides = array<i32>} : memref<18x32x64xf32, #tpu.memory_space<vmem>>, vector<18x32x64xf32>,
    %c1 = arith.constant 1 : index
    %c8 = arith.constant 8 : index
    %c0_11 = arith.constant 0 : index
    %12 = vector.load %arg13[%c1, %c8, %c0_11] : memref<18x32x64xf32, #tpu.memory_space<vmem>>, vector<16x16x64xf32>
    tpu.vector_store %arg13[%c1, %c8, %c0_11], %9 {strides = array<i32>} : memref<18x32x64xf32, #tpu.memory_space<vmem>>, vector<16x16x64xf32>,
    %c0_12 = arith.constant 0 : index
    %c0_13 = arith.constant 0 : index
    %13 = vector.load %arg5[%c0_12, %c0_13] : memref<1x64xf32, #tpu.memory_space<vmem>>, vector<1x64xf32>
    %14 = vector.shape_cast %13 : vector<1x64xf32> to vector<1x64xf32>
    %15 = vector.broadcast %14 : vector<1x64xf32> to vector<256x64xf32>
    %c0_14 = arith.constant 0 : index
    %c7 = arith.constant 7 : index
    %c0_15 = arith.constant 0 : index
    %16 = vector.load %arg13[%c0_14, %c7, %c0_15] : memref<18x32x64xf32, #tpu.memory_space<vmem>>, vector<16x16x64xf32>
    %17 = vector.shape_cast %16 : vector<16x16x64xf32> to vector<256x64xf32>
    %18 = arith.truncf %17 : vector<256x64xf32> to vector<256x64xbf16>
    %c0_16 = arith.constant 0 : index
    %c0_17 = arith.constant 0 : index
    %c0_18 = arith.constant 0 : index
    %c0_19 = arith.constant 0 : index
    %19 = vector.load %arg4[%c0_16, %c0_17, %c0_18, %c0_19] : memref<3x3x64x64xbf16, #tpu.memory_space<vmem>>, vector<1x1x64x64xbf16>
    %20 = vector.shape_cast %19 : vector<1x1x64x64xbf16> to vector<64x64xbf16>
    %cst_20 = arith.constant dense<0.000000e+00> : vector<256x64xf32>
    %21 = tpu.matmul %18, %20, %cst_20 {dimension_numbers = #tpu.dot_dimension_numbers<[1], [0], [0], [1], [0, 0, 1, 1], [], []>} : vector<256x64xbf16>, vector<64x64xbf16>, vector<256x64xf32> -> vector<256x64xf32>
    %22 = arith.addf %15, %21 : vector<256x64xf32>
    %c0_21 = arith.constant 0 : index
    %c8_22 = arith.constant 8 : index
    %c0_23 = arith.constant 0 : index
    %23 = vector.load %arg13[%c0_21, %c8_22, %c0_23] : memref<18x32x64xf32, #tpu.memory_space<vmem>>, vector<16x16x64xf32>
    %24 = vector.shape_cast %23 : vector<16x16x64xf32> to vector<256x64xf32>
    %25 = arith.truncf %24 : vector<256x64xf32> to vector<256x64xbf16>
    %c0_24 = arith.constant 0 : index
    %c1_25 = arith.constant 1 : index
    %c0_26 = arith.constant 0 : index
    %c0_27 = arith.constant 0 : index
    %26 = vector.load %arg4[%c0_24, %c1_25, %c0_26, %c0_27] : memref<3x3x64x64xbf16, #tpu.memory_space<vmem>>, vector<1x1x64x64xbf16>
    %27 = vector.shape_cast %26 : vector<1x1x64x64xbf16> to vector<64x64xbf16>
    %cst_28 = arith.constant dense<0.000000e+00> : vector<256x64xf32>
    %28 = tpu.matmul %25, %27, %cst_28 {dimension_numbers = #tpu.dot_dimension_numbers<[1], [0], [0], [1], [0, 0, 1, 1], [], []>} : vector<256x64xbf16>, vector<64x64xbf16>, vector<256x64xf32> -> vector<256x64xf32>
    %29 = arith.addf %22, %28 : vector<256x64xf32>
    %c0_29 = arith.constant 0 : index
    %c9 = arith.constant 9 : index
    %c0_30 = arith.constant 0 : index
    %30 = vector.load %arg13[%c0_29, %c9, %c0_30] : memref<18x32x64xf32, #tpu.memory_space<vmem>>, vector<16x16x64xf32>
    %31 = vector.shape_cast %30 : vector<16x16x64xf32> to vector<256x64xf32>
    %32 = arith.truncf %31 : vector<256x64xf32> to vector<256x64xbf16>
    %c0_31 = arith.constant 0 : index
    %c2 = arith.constant 2 : index
    %c0_32 = arith.constant 0 : index
    %c0_33 = arith.constant 0 : index
    %33 = vector.load %arg4[%c0_31, %c2, %c0_32, %c0_33] : memref<3x3x64x64xbf16, #tpu.memory_space<vmem>>, vector<1x1x64x64xbf16>
    %34 = vector.shape_cast %33 : vector<1x1x64x64xbf16> to vector<64x64xbf16>
    %cst_34 = arith.constant dense<0.000000e+00> : vector<256x64xf32>
    %35 = tpu.matmul %32, %34, %cst_34 {dimension_numbers = #tpu.dot_dimension_numbers<[1], [0], [0], [1], [0, 0, 1, 1], [], []>} : vector<256x64xbf16>, vector<64x64xbf16>, vector<256x64xf32> -> vector<256x64xf32>
    %36 = arith.addf %29, %35 : vector<256x64xf32>
    %c1_35 = arith.constant 1 : index
    %c7_36 = arith.constant 7 : index
    %c0_37 = arith.constant 0 : index
    %37 = vector.load %arg13[%c1_35, %c7_36, %c0_37] : memref<18x32x64xf32, #tpu.memory_space<vmem>>, vector<16x16x64xf32>
    %38 = vector.shape_cast %37 : vector<16x16x64xf32> to vector<256x64xf32>
    %39 = arith.truncf %38 : vector<256x64xf32> to vector<256x64xbf16>
    %c1_38 = arith.constant 1 : index
    %c0_39 = arith.constant 0 : index
    %c0_40 = arith.constant 0 : index
    %c0_41 = arith.constant 0 : index
    %40 = vector.load %arg4[%c1_38, %c0_39, %c0_40, %c0_41] : memref<3x3x64x64xbf16, #tpu.memory_space<vmem>>, vector<1x1x64x64xbf16>
    %41 = vector.shape_cast %40 : vector<1x1x64x64xbf16> to vector<64x64xbf16>
    %cst_42 = arith.constant dense<0.000000e+00> : vector<256x64xf32>
    %42 = tpu.matmul %39, %41, %cst_42 {dimension_numbers = #tpu.dot_dimension_numbers<[1], [0], [0], [1], [0, 0, 1, 1], [], []>} : vector<256x64xbf16>, vector<64x64xbf16>, vector<256x64xf32> -> vector<256x64xf32>
    %43 = arith.addf %36, %42 : vector<256x64xf32>
    %c1_43 = arith.constant 1 : index
    %c8_44 = arith.constant 8 : index
    %c0_45 = arith.constant 0 : index
    %44 = vector.load %arg13[%c1_43, %c8_44, %c0_45] : memref<18x32x64xf32, #tpu.memory_space<vmem>>, vector<16x16x64xf32>
    %45 = vector.shape_cast %44 : vector<16x16x64xf32> to vector<256x64xf32>
    %46 = arith.truncf %45 : vector<256x64xf32> to vector<256x64xbf16>
    %c1_46 = arith.constant 1 : index
    %c1_47 = arith.constant 1 : index
    %c0_48 = arith.constant 0 : index
    %c0_49 = arith.constant 0 : index
    %47 = vector.load %arg4[%c1_46, %c1_47, %c0_48, %c0_49] : memref<3x3x64x64xbf16, #tpu.memory_space<vmem>>, vector<1x1x64x64xbf16>
    %48 = vector.shape_cast %47 : vector<1x1x64x64xbf16> to vector<64x64xbf16>
    %cst_50 = arith.constant dense<0.000000e+00> : vector<256x64xf32>
    %49 = tpu.matmul %46, %48, %cst_50 {dimension_numbers = #tpu.dot_dimension_numbers<[1], [0], [0], [1], [0, 0, 1, 1], [], []>} : vector<256x64xbf16>, vector<64x64xbf16>, vector<256x64xf32> -> vector<256x64xf32>
    %50 = arith.addf %43, %49 : vector<256x64xf32>
    %c1_51 = arith.constant 1 : index
    %c9_52 = arith.constant 9 : index
    %c0_53 = arith.constant 0 : index
    %51 = vector.load %arg13[%c1_51, %c9_52, %c0_53] : memref<18x32x64xf32, #tpu.memory_space<vmem>>, vector<16x16x64xf32>
    %52 = vector.shape_cast %51 : vector<16x16x64xf32> to vector<256x64xf32>
    %53 = arith.truncf %52 : vector<256x64xf32> to vector<256x64xbf16>
    %c1_54 = arith.constant 1 : index
    %c2_55 = arith.constant 2 : index
    %c0_56 = arith.constant 0 : index
    %c0_57 = arith.constant 0 : index
    %54 = vector.load %arg4[%c1_54, %c2_55, %c0_56, %c0_57] : memref<3x3x64x64xbf16, #tpu.memory_space<vmem>>, vector<1x1x64x64xbf16>
    %55 = vector.shape_cast %54 : vector<1x1x64x64xbf16> to vector<64x64xbf16>
    %cst_58 = arith.constant dense<0.000000e+00> : vector<256x64xf32>
    %56 = tpu.matmul %53, %55, %cst_58 {dimension_numbers = #tpu.dot_dimension_numbers<[1], [0], [0], [1], [0, 0, 1, 1], [], []>} : vector<256x64xbf16>, vector<64x64xbf16>, vector<256x64xf32> -> vector<256x64xf32>
    %57 = arith.addf %50, %56 : vector<256x64xf32>
    %c2_59 = arith.constant 2 : index
    %c7_60 = arith.constant 7 : index
    %c0_61 = arith.constant 0 : index
    %58 = vector.load %arg13[%c2_59, %c7_60, %c0_61] : memref<18x32x64xf32, #tpu.memory_space<vmem>>, vector<16x16x64xf32>
    %59 = vector.shape_cast %58 : vector<16x16x64xf32> to vector<256x64xf32>
    %60 = arith.truncf %59 : vector<256x64xf32> to vector<256x64xbf16>
    %c2_62 = arith.constant 2 : index
    %c0_63 = arith.constant 0 : index
    %c0_64 = arith.constant 0 : index
    %c0_65 = arith.constant 0 : index
    %61 = vector.load %arg4[%c2_62, %c0_63, %c0_64, %c0_65] : memref<3x3x64x64xbf16, #tpu.memory_space<vmem>>, vector<1x1x64x64xbf16>
    %62 = vector.shape_cast %61 : vector<1x1x64x64xbf16> to vector<64x64xbf16>
    %cst_66 = arith.constant dense<0.000000e+00> : vector<256x64xf32>
    %63 = tpu.matmul %60, %62, %cst_66 {dimension_numbers = #tpu.dot_dimension_numbers<[1], [0], [0], [1], [0, 0, 1, 1], [], []>} : vector<256x64xbf16>, vector<64x64xbf16>, vector<256x64xf32> -> vector<256x64xf32>
    %64 = arith.addf %57, %63 : vector<256x64xf32>
    %c2_67 = arith.constant 2 : index
    %c8_68 = arith.constant 8 : index
    %c0_69 = arith.constant 0 : index
    %65 = vector.load %arg13[%c2_67, %c8_68, %c0_69] : memref<18x32x64xf32, #tpu.memory_space<vmem>>, vector<16x16x64xf32>
    %66 = vector.shape_cast %65 : vector<16x16x64xf32> to vector<256x64xf32>
    %67 = arith.truncf %66 : vector<256x64xf32> to vector<256x64xbf16>
    %c2_70 = arith.constant 2 : index
    %c1_71 = arith.constant 1 : index
    %c0_72 = arith.constant 0 : index
    %c0_73 = arith.constant 0 : index
    %68 = vector.load %arg4[%c2_70, %c1_71, %c0_72, %c0_73] : memref<3x3x64x64xbf16, #tpu.memory_space<vmem>>, vector<1x1x64x64xbf16>
    %69 = vector.shape_cast %68 : vector<1x1x64x64xbf16> to vector<64x64xbf16>
    %cst_74 = arith.constant dense<0.000000e+00> : vector<256x64xf32>
    %70 = tpu.matmul %67, %69, %cst_74 {dimension_numbers = #tpu.dot_dimension_numbers<[1], [0], [0], [1], [0, 0, 1, 1], [], []>} : vector<256x64xbf16>, vector<64x64xbf16>, vector<256x64xf32> -> vector<256x64xf32>
    %71 = arith.addf %64, %70 : vector<256x64xf32>
    %c2_75 = arith.constant 2 : index
    %c9_76 = arith.constant 9 : index
    %c0_77 = arith.constant 0 : index
    %72 = vector.load %arg13[%c2_75, %c9_76, %c0_77] : memref<18x32x64xf32, #tpu.memory_space<vmem>>, vector<16x16x64xf32>
    %73 = vector.shape_cast %72 : vector<16x16x64xf32> to vector<256x64xf32>
    %74 = arith.truncf %73 : vector<256x64xf32> to vector<256x64xbf16>
    %c2_78 = arith.constant 2 : index
    %c2_79 = arith.constant 2 : index
    %c0_80 = arith.constant 0 : index
    %c0_81 = arith.constant 0 : index
    %75 = vector.load %arg4[%c2_78, %c2_79, %c0_80, %c0_81] : memref<3x3x64x64xbf16, #tpu.memory_space<vmem>>, vector<1x1x64x64xbf16>
    %76 = vector.shape_cast %75 : vector<1x1x64x64xbf16> to vector<64x64xbf16>
    %cst_82 = arith.constant dense<0.000000e+00> : vector<256x64xf32>
    %77 = tpu.matmul %74, %76, %cst_82 {dimension_numbers = #tpu.dot_dimension_numbers<[1], [0], [0], [1], [0, 0, 1, 1], [], []>} : vector<256x64xbf16>, vector<64x64xbf16>, vector<256x64xf32> -> vector<256x64xf32>
    %78 = arith.addf %71, %77 : vector<256x64xf32>
    %cst_83 = arith.constant 0.000000e+00 : f32
    %79 = vector.broadcast %cst_83 : f32 to vector<256x64xf32>
    %80 = arith.maximumf %78, %79 : vector<256x64xf32>
    %81 = vector.shape_cast %80 : vector<256x64xf32> to vector<16x16x64xf32>
    %c0_84 = arith.constant 0 : index
    %c0_85 = arith.constant 0 : index
    %c0_86 = arith.constant 0 : index
    %82 = vector.load %arg14[%c0_84, %c0_85, %c0_86] : memref<16x16x64xf32, #tpu.memory_space<vmem>>, vector<16x16x64xf32>
    tpu.vector_store %arg14[%c0_84, %c0_85, %c0_86], %81 {strides = array<i32>} : memref<16x16x64xf32, #tpu.memory_space<vmem>>, vector<16x16x64xf32>,
    %c0_87 = arith.constant 0 : index
    %c0_88 = arith.constant 0 : index
    %c0_89 = arith.constant 0 : index
    %83 = tpu.strided_load %arg14[%c0_87, %c0_88, %c0_89] {strides = array<i32: 2, 2, 1>} : memref<16x16x64xf32, #tpu.memory_space<vmem>>, vector<8x8x64xf32>
    %c0_90 = arith.constant 0 : index
    %c1_91 = arith.constant 1 : index
    %c0_92 = arith.constant 0 : index
    %84 = tpu.strided_load %arg14[%c0_90, %c1_91, %c0_92] {strides = array<i32: 2, 2, 1>} : memref<16x16x64xf32, #tpu.memory_space<vmem>>, vector<8x8x64xf32>
    %c1_93 = arith.constant 1 : index
    %c0_94 = arith.constant 0 : index
    %c0_95 = arith.constant 0 : index
    %85 = tpu.strided_load %arg14[%c1_93, %c0_94, %c0_95] {strides = array<i32: 2, 2, 1>} : memref<16x16x64xf32, #tpu.memory_space<vmem>>, vector<8x8x64xf32>
    %c1_96 = arith.constant 1 : index
    %c1_97 = arith.constant 1 : index
    %c0_98 = arith.constant 0 : index
    %86 = tpu.strided_load %arg14[%c1_96, %c1_97, %c0_98] {strides = array<i32: 2, 2, 1>} : memref<16x16x64xf32, #tpu.memory_space<vmem>>, vector<8x8x64xf32>
    %87 = arith.maximumf %83, %84 : vector<8x8x64xf32>
    %88 = arith.maximumf %85, %86 : vector<8x8x64xf32>
    %89 = arith.maximumf %87, %88 : vector<8x8x64xf32>
    %cst_99 = arith.constant 0.000000e+00 : f32
    %90 = vector.broadcast %cst_99 : f32 to vector<10x24x64xf32>
    %c0_100 = arith.constant 0 : index
    %c0_101 = arith.constant 0 : index
    %c0_102 = arith.constant 0 : index
    %91 = vector.load %arg15[%c0_100, %c0_101, %c0_102] : memref<10x24x64xf32, #tpu.memory_space<vmem>>, vector<10x24x64xf32>
    tpu.vector_store %arg15[%c0_100, %c0_101, %c0_102], %90 {strides = array<i32>} : memref<10x24x64xf32, #tpu.memory_space<vmem>>, vector<10x24x64xf32>,
    %c1_103 = arith.constant 1 : index
    %c8_104 = arith.constant 8 : index
    %c0_105 = arith.constant 0 : index
    %92 = vector.load %arg15[%c1_103, %c8_104, %c0_105] : memref<10x24x64xf32, #tpu.memory_space<vmem>>, vector<8x8x64xf32>
    tpu.vector_store %arg15[%c1_103, %c8_104, %c0_105], %89 {strides = array<i32>} : memref<10x24x64xf32, #tpu.memory_space<vmem>>, vector<8x8x64xf32>,
    %c0_106 = arith.constant 0 : index
    %c0_107 = arith.constant 0 : index
    %93 = vector.load %arg7[%c0_106, %c0_107] : memref<1x128xf32, #tpu.memory_space<vmem>>, vector<1x128xf32>
    %94 = vector.shape_cast %93 : vector<1x128xf32> to vector<1x128xf32>
    %95 = vector.broadcast %94 : vector<1x128xf32> to vector<64x128xf32>
    %c0_108 = arith.constant 0 : index
    %c7_109 = arith.constant 7 : index
    %c0_110 = arith.constant 0 : index
    %96 = vector.load %arg15[%c0_108, %c7_109, %c0_110] : memref<10x24x64xf32, #tpu.memory_space<vmem>>, vector<8x8x64xf32>
    %97 = vector.shape_cast %96 : vector<8x8x64xf32> to vector<64x64xf32>
    %98 = arith.truncf %97 : vector<64x64xf32> to vector<64x64xbf16>
    %c0_111 = arith.constant 0 : index
    %c0_112 = arith.constant 0 : index
    %c0_113 = arith.constant 0 : index
    %c0_114 = arith.constant 0 : index
    %99 = vector.load %arg6[%c0_111, %c0_112, %c0_113, %c0_114] : memref<3x3x64x128xbf16, #tpu.memory_space<vmem>>, vector<1x1x64x128xbf16>
    %100 = vector.shape_cast %99 : vector<1x1x64x128xbf16> to vector<64x128xbf16>
    %cst_115 = arith.constant dense<0.000000e+00> : vector<64x128xf32>
    %101 = tpu.matmul %98, %100, %cst_115 {dimension_numbers = #tpu.dot_dimension_numbers<[1], [0], [0], [1], [0, 0, 1, 1], [], []>} : vector<64x64xbf16>, vector<64x128xbf16>, vector<64x128xf32> -> vector<64x128xf32>
    %102 = arith.addf %95, %101 : vector<64x128xf32>
    %c0_116 = arith.constant 0 : index
    %c8_117 = arith.constant 8 : index
    %c0_118 = arith.constant 0 : index
    %103 = vector.load %arg15[%c0_116, %c8_117, %c0_118] : memref<10x24x64xf32, #tpu.memory_space<vmem>>, vector<8x8x64xf32>
    %104 = vector.shape_cast %103 : vector<8x8x64xf32> to vector<64x64xf32>
    %105 = arith.truncf %104 : vector<64x64xf32> to vector<64x64xbf16>
    %c0_119 = arith.constant 0 : index
    %c1_120 = arith.constant 1 : index
    %c0_121 = arith.constant 0 : index
    %c0_122 = arith.constant 0 : index
    %106 = vector.load %arg6[%c0_119, %c1_120, %c0_121, %c0_122] : memref<3x3x64x128xbf16, #tpu.memory_space<vmem>>, vector<1x1x64x128xbf16>
    %107 = vector.shape_cast %106 : vector<1x1x64x128xbf16> to vector<64x128xbf16>
    %cst_123 = arith.constant dense<0.000000e+00> : vector<64x128xf32>
    %108 = tpu.matmul %105, %107, %cst_123 {dimension_numbers = #tpu.dot_dimension_numbers<[1], [0], [0], [1], [0, 0, 1, 1], [], []>} : vector<64x64xbf16>, vector<64x128xbf16>, vector<64x128xf32> -> vector<64x128xf32>
    %109 = arith.addf %102, %108 : vector<64x128xf32>
    %c0_124 = arith.constant 0 : index
    %c9_125 = arith.constant 9 : index
    %c0_126 = arith.constant 0 : index
    %110 = vector.load %arg15[%c0_124, %c9_125, %c0_126] : memref<10x24x64xf32, #tpu.memory_space<vmem>>, vector<8x8x64xf32>
    %111 = vector.shape_cast %110 : vector<8x8x64xf32> to vector<64x64xf32>
    %112 = arith.truncf %111 : vector<64x64xf32> to vector<64x64xbf16>
    %c0_127 = arith.constant 0 : index
    %c2_128 = arith.constant 2 : index
    %c0_129 = arith.constant 0 : index
    %c0_130 = arith.constant 0 : index
    %113 = vector.load %arg6[%c0_127, %c2_128, %c0_129, %c0_130] : memref<3x3x64x128xbf16, #tpu.memory_space<vmem>>, vector<1x1x64x128xbf16>
    %114 = vector.shape_cast %113 : vector<1x1x64x128xbf16> to vector<64x128xbf16>
    %cst_131 = arith.constant dense<0.000000e+00> : vector<64x128xf32>
    %115 = tpu.matmul %112, %114, %cst_131 {dimension_numbers = #tpu.dot_dimension_numbers<[1], [0], [0], [1], [0, 0, 1, 1], [], []>} : vector<64x64xbf16>, vector<64x128xbf16>, vector<64x128xf32> -> vector<64x128xf32>
    %116 = arith.addf %109, %115 : vector<64x128xf32>
    %c1_132 = arith.constant 1 : index
    %c7_133 = arith.constant 7 : index
    %c0_134 = arith.constant 0 : index
    %117 = vector.load %arg15[%c1_132, %c7_133, %c0_134] : memref<10x24x64xf32, #tpu.memory_space<vmem>>, vector<8x8x64xf32>
    %118 = vector.shape_cast %117 : vector<8x8x64xf32> to vector<64x64xf32>
    %119 = arith.truncf %118 : vector<64x64xf32> to vector<64x64xbf16>
    %c1_135 = arith.constant 1 : index
    %c0_136 = arith.constant 0 : index
    %c0_137 = arith.constant 0 : index
    %c0_138 = arith.constant 0 : index
    %120 = vector.load %arg6[%c1_135, %c0_136, %c0_137, %c0_138] : memref<3x3x64x128xbf16, #tpu.memory_space<vmem>>, vector<1x1x64x128xbf16>
    %121 = vector.shape_cast %120 : vector<1x1x64x128xbf16> to vector<64x128xbf16>
    %cst_139 = arith.constant dense<0.000000e+00> : vector<64x128xf32>
    %122 = tpu.matmul %119, %121, %cst_139 {dimension_numbers = #tpu.dot_dimension_numbers<[1], [0], [0], [1], [0, 0, 1, 1], [], []>} : vector<64x64xbf16>, vector<64x128xbf16>, vector<64x128xf32> -> vector<64x128xf32>
    %123 = arith.addf %116, %122 : vector<64x128xf32>
    %c1_140 = arith.constant 1 : index
    %c8_141 = arith.constant 8 : index
    %c0_142 = arith.constant 0 : index
    %124 = vector.load %arg15[%c1_140, %c8_141, %c0_142] : memref<10x24x64xf32, #tpu.memory_space<vmem>>, vector<8x8x64xf32>
    %125 = vector.shape_cast %124 : vector<8x8x64xf32> to vector<64x64xf32>
    %126 = arith.truncf %125 : vector<64x64xf32> to vector<64x64xbf16>
    %c1_143 = arith.constant 1 : index
    %c1_144 = arith.constant 1 : index
    %c0_145 = arith.constant 0 : index
    %c0_146 = arith.constant 0 : index
    %127 = vector.load %arg6[%c1_143, %c1_144, %c0_145, %c0_146] : memref<3x3x64x128xbf16, #tpu.memory_space<vmem>>, vector<1x1x64x128xbf16>
    %128 = vector.shape_cast %127 : vector<1x1x64x128xbf16> to vector<64x128xbf16>
    %cst_147 = arith.constant dense<0.000000e+00> : vector<64x128xf32>
    %129 = tpu.matmul %126, %128, %cst_147 {dimension_numbers = #tpu.dot_dimension_numbers<[1], [0], [0], [1], [0, 0, 1, 1], [], []>} : vector<64x64xbf16>, vector<64x128xbf16>, vector<64x128xf32> -> vector<64x128xf32>
    %130 = arith.addf %123, %129 : vector<64x128xf32>
    %c1_148 = arith.constant 1 : index
    %c9_149 = arith.constant 9 : index
    %c0_150 = arith.constant 0 : index
    %131 = vector.load %arg15[%c1_148, %c9_149, %c0_150] : memref<10x24x64xf32, #tpu.memory_space<vmem>>, vector<8x8x64xf32>
    %132 = vector.shape_cast %131 : vector<8x8x64xf32> to vector<64x64xf32>
    %133 = arith.truncf %132 : vector<64x64xf32> to vector<64x64xbf16>
    %c1_151 = arith.constant 1 : index
    %c2_152 = arith.constant 2 : index
    %c0_153 = arith.constant 0 : index
    %c0_154 = arith.constant 0 : index
    %134 = vector.load %arg6[%c1_151, %c2_152, %c0_153, %c0_154] : memref<3x3x64x128xbf16, #tpu.memory_space<vmem>>, vector<1x1x64x128xbf16>
    %135 = vector.shape_cast %134 : vector<1x1x64x128xbf16> to vector<64x128xbf16>
    %cst_155 = arith.constant dense<0.000000e+00> : vector<64x128xf32>
    %136 = tpu.matmul %133, %135, %cst_155 {dimension_numbers = #tpu.dot_dimension_numbers<[1], [0], [0], [1], [0, 0, 1, 1], [], []>} : vector<64x64xbf16>, vector<64x128xbf16>, vector<64x128xf32> -> vector<64x128xf32>
    %137 = arith.addf %130, %136 : vector<64x128xf32>
    %c2_156 = arith.constant 2 : index
    %c7_157 = arith.constant 7 : index
    %c0_158 = arith.constant 0 : index
    %138 = vector.load %arg15[%c2_156, %c7_157, %c0_158] : memref<10x24x64xf32, #tpu.memory_space<vmem>>, vector<8x8x64xf32>
    %139 = vector.shape_cast %138 : vector<8x8x64xf32> to vector<64x64xf32>
    %140 = arith.truncf %139 : vector<64x64xf32> to vector<64x64xbf16>
    %c2_159 = arith.constant 2 : index
    %c0_160 = arith.constant 0 : index
    %c0_161 = arith.constant 0 : index
    %c0_162 = arith.constant 0 : index
    %141 = vector.load %arg6[%c2_159, %c0_160, %c0_161, %c0_162] : memref<3x3x64x128xbf16, #tpu.memory_space<vmem>>, vector<1x1x64x128xbf16>
    %142 = vector.shape_cast %141 : vector<1x1x64x128xbf16> to vector<64x128xbf16>
    %cst_163 = arith.constant dense<0.000000e+00> : vector<64x128xf32>
    %143 = tpu.matmul %140, %142, %cst_163 {dimension_numbers = #tpu.dot_dimension_numbers<[1], [0], [0], [1], [0, 0, 1, 1], [], []>} : vector<64x64xbf16>, vector<64x128xbf16>, vector<64x128xf32> -> vector<64x128xf32>
    %144 = arith.addf %137, %143 : vector<64x128xf32>
    %c2_164 = arith.constant 2 : index
    %c8_165 = arith.constant 8 : index
    %c0_166 = arith.constant 0 : index
    %145 = vector.load %arg15[%c2_164, %c8_165, %c0_166] : memref<10x24x64xf32, #tpu.memory_space<vmem>>, vector<8x8x64xf32>
    %146 = vector.shape_cast %145 : vector<8x8x64xf32> to vector<64x64xf32>
    %147 = arith.truncf %146 : vector<64x64xf32> to vector<64x64xbf16>
    %c2_167 = arith.constant 2 : index
    %c1_168 = arith.constant 1 : index
    %c0_169 = arith.constant 0 : index
    %c0_170 = arith.constant 0 : index
    %148 = vector.load %arg6[%c2_167, %c1_168, %c0_169, %c0_170] : memref<3x3x64x128xbf16, #tpu.memory_space<vmem>>, vector<1x1x64x128xbf16>
    %149 = vector.shape_cast %148 : vector<1x1x64x128xbf16> to vector<64x128xbf16>
    %cst_171 = arith.constant dense<0.000000e+00> : vector<64x128xf32>
    %150 = tpu.matmul %147, %149, %cst_171 {dimension_numbers = #tpu.dot_dimension_numbers<[1], [0], [0], [1], [0, 0, 1, 1], [], []>} : vector<64x64xbf16>, vector<64x128xbf16>, vector<64x128xf32> -> vector<64x128xf32>
    %151 = arith.addf %144, %150 : vector<64x128xf32>
    %c2_172 = arith.constant 2 : index
    %c9_173 = arith.constant 9 : index
    %c0_174 = arith.constant 0 : index
    %152 = vector.load %arg15[%c2_172, %c9_173, %c0_174] : memref<10x24x64xf32, #tpu.memory_space<vmem>>, vector<8x8x64xf32>
    %153 = vector.shape_cast %152 : vector<8x8x64xf32> to vector<64x64xf32>
    %154 = arith.truncf %153 : vector<64x64xf32> to vector<64x64xbf16>
    %c2_175 = arith.constant 2 : index
    %c2_176 = arith.constant 2 : index
    %c0_177 = arith.constant 0 : index
    %c0_178 = arith.constant 0 : index
    %155 = vector.load %arg6[%c2_175, %c2_176, %c0_177, %c0_178] : memref<3x3x64x128xbf16, #tpu.memory_space<vmem>>, vector<1x1x64x128xbf16>
    %156 = vector.shape_cast %155 : vector<1x1x64x128xbf16> to vector<64x128xbf16>
    %cst_179 = arith.constant dense<0.000000e+00> : vector<64x128xf32>
    %157 = tpu.matmul %154, %156, %cst_179 {dimension_numbers = #tpu.dot_dimension_numbers<[1], [0], [0], [1], [0, 0, 1, 1], [], []>} : vector<64x64xbf16>, vector<64x128xbf16>, vector<64x128xf32> -> vector<64x128xf32>
    %158 = arith.addf %151, %157 : vector<64x128xf32>
    %cst_180 = arith.constant 0.000000e+00 : f32
    %159 = vector.broadcast %cst_180 : f32 to vector<64x128xf32>
    %160 = arith.maximumf %158, %159 : vector<64x128xf32>
    %161 = vector.shape_cast %160 : vector<64x128xf32> to vector<8x8x128xf32>
    %cst_181 = arith.constant 0.000000e+00 : f32
    %162 = vector.broadcast %cst_181 : f32 to vector<10x24x128xf32>
    %c0_182 = arith.constant 0 : index
    %c0_183 = arith.constant 0 : index
    %c0_184 = arith.constant 0 : index
    %163 = vector.load %arg16[%c0_182, %c0_183, %c0_184] : memref<10x24x128xf32, #tpu.memory_space<vmem>>, vector<10x24x128xf32>
    tpu.vector_store %arg16[%c0_182, %c0_183, %c0_184], %162 {strides = array<i32>} : memref<10x24x128xf32, #tpu.memory_space<vmem>>, vector<10x24x128xf32>,
    %c1_185 = arith.constant 1 : index
    %c8_186 = arith.constant 8 : index
    %c0_187 = arith.constant 0 : index
    %164 = vector.load %arg16[%c1_185, %c8_186, %c0_187] : memref<10x24x128xf32, #tpu.memory_space<vmem>>, vector<8x8x128xf32>
    tpu.vector_store %arg16[%c1_185, %c8_186, %c0_187], %161 {strides = array<i32>} : memref<10x24x128xf32, #tpu.memory_space<vmem>>, vector<8x8x128xf32>,
    %c0_188 = arith.constant 0 : index
    %c0_189 = arith.constant 0 : index
    %165 = vector.load %arg9[%c0_188, %c0_189] : memref<1x128xf32, #tpu.memory_space<vmem>>, vector<1x128xf32>
    %166 = vector.shape_cast %165 : vector<1x128xf32> to vector<1x128xf32>
    %167 = vector.broadcast %166 : vector<1x128xf32> to vector<64x128xf32>
    %c0_190 = arith.constant 0 : index
    %c7_191 = arith.constant 7 : index
    %c0_192 = arith.constant 0 : index
    %168 = vector.load %arg16[%c0_190, %c7_191, %c0_192] : memref<10x24x128xf32, #tpu.memory_space<vmem>>, vector<8x8x128xf32>
    %169 = vector.shape_cast %168 : vector<8x8x128xf32> to vector<64x128xf32>
    %170 = arith.truncf %169 : vector<64x128xf32> to vector<64x128xbf16>
    %c0_193 = arith.constant 0 : index
    %c0_194 = arith.constant 0 : index
    %c0_195 = arith.constant 0 : index
    %c0_196 = arith.constant 0 : index
    %171 = vector.load %arg8[%c0_193, %c0_194, %c0_195, %c0_196] : memref<3x3x128x128xbf16, #tpu.memory_space<vmem>>, vector<1x1x128x128xbf16>
    %172 = vector.shape_cast %171 : vector<1x1x128x128xbf16> to vector<128x128xbf16>
    %cst_197 = arith.constant dense<0.000000e+00> : vector<64x128xf32>
    %173 = tpu.matmul %170, %172, %cst_197 {dimension_numbers = #tpu.dot_dimension_numbers<[1], [0], [0], [1], [0, 0, 1, 1], [], []>} : vector<64x128xbf16>, vector<128x128xbf16>, vector<64x128xf32> -> vector<64x128xf32>
    %174 = arith.addf %167, %173 : vector<64x128xf32>
    %c0_198 = arith.constant 0 : index
    %c8_199 = arith.constant 8 : index
    %c0_200 = arith.constant 0 : index
    %175 = vector.load %arg16[%c0_198, %c8_199, %c0_200] : memref<10x24x128xf32, #tpu.memory_space<vmem>>, vector<8x8x128xf32>
    %176 = vector.shape_cast %175 : vector<8x8x128xf32> to vector<64x128xf32>
    %177 = arith.truncf %176 : vector<64x128xf32> to vector<64x128xbf16>
    %c0_201 = arith.constant 0 : index
    %c1_202 = arith.constant 1 : index
    %c0_203 = arith.constant 0 : index
    %c0_204 = arith.constant 0 : index
    %178 = vector.load %arg8[%c0_201, %c1_202, %c0_203, %c0_204] : memref<3x3x128x128xbf16, #tpu.memory_space<vmem>>, vector<1x1x128x128xbf16>
    %179 = vector.shape_cast %178 : vector<1x1x128x128xbf16> to vector<128x128xbf16>
    %cst_205 = arith.constant dense<0.000000e+00> : vector<64x128xf32>
    %180 = tpu.matmul %177, %179, %cst_205 {dimension_numbers = #tpu.dot_dimension_numbers<[1], [0], [0], [1], [0, 0, 1, 1], [], []>} : vector<64x128xbf16>, vector<128x128xbf16>, vector<64x128xf32> -> vector<64x128xf32>
    %181 = arith.addf %174, %180 : vector<64x128xf32>
    %c0_206 = arith.constant 0 : index
    %c9_207 = arith.constant 9 : index
    %c0_208 = arith.constant 0 : index
    %182 = vector.load %arg16[%c0_206, %c9_207, %c0_208] : memref<10x24x128xf32, #tpu.memory_space<vmem>>, vector<8x8x128xf32>
    %183 = vector.shape_cast %182 : vector<8x8x128xf32> to vector<64x128xf32>
    %184 = arith.truncf %183 : vector<64x128xf32> to vector<64x128xbf16>
    %c0_209 = arith.constant 0 : index
    %c2_210 = arith.constant 2 : index
    %c0_211 = arith.constant 0 : index
    %c0_212 = arith.constant 0 : index
    %185 = vector.load %arg8[%c0_209, %c2_210, %c0_211, %c0_212] : memref<3x3x128x128xbf16, #tpu.memory_space<vmem>>, vector<1x1x128x128xbf16>
    %186 = vector.shape_cast %185 : vector<1x1x128x128xbf16> to vector<128x128xbf16>
    %cst_213 = arith.constant dense<0.000000e+00> : vector<64x128xf32>
    %187 = tpu.matmul %184, %186, %cst_213 {dimension_numbers = #tpu.dot_dimension_numbers<[1], [0], [0], [1], [0, 0, 1, 1], [], []>} : vector<64x128xbf16>, vector<128x128xbf16>, vector<64x128xf32> -> vector<64x128xf32>
    %188 = arith.addf %181, %187 : vector<64x128xf32>
    %c1_214 = arith.constant 1 : index
    %c7_215 = arith.constant 7 : index
    %c0_216 = arith.constant 0 : index
    %189 = vector.load %arg16[%c1_214, %c7_215, %c0_216] : memref<10x24x128xf32, #tpu.memory_space<vmem>>, vector<8x8x128xf32>
    %190 = vector.shape_cast %189 : vector<8x8x128xf32> to vector<64x128xf32>
    %191 = arith.truncf %190 : vector<64x128xf32> to vector<64x128xbf16>
    %c1_217 = arith.constant 1 : index
    %c0_218 = arith.constant 0 : index
    %c0_219 = arith.constant 0 : index
    %c0_220 = arith.constant 0 : index
    %192 = vector.load %arg8[%c1_217, %c0_218, %c0_219, %c0_220] : memref<3x3x128x128xbf16, #tpu.memory_space<vmem>>, vector<1x1x128x128xbf16>
    %193 = vector.shape_cast %192 : vector<1x1x128x128xbf16> to vector<128x128xbf16>
    %cst_221 = arith.constant dense<0.000000e+00> : vector<64x128xf32>
    %194 = tpu.matmul %191, %193, %cst_221 {dimension_numbers = #tpu.dot_dimension_numbers<[1], [0], [0], [1], [0, 0, 1, 1], [], []>} : vector<64x128xbf16>, vector<128x128xbf16>, vector<64x128xf32> -> vector<64x128xf32>
    %195 = arith.addf %188, %194 : vector<64x128xf32>
    %c1_222 = arith.constant 1 : index
    %c8_223 = arith.constant 8 : index
    %c0_224 = arith.constant 0 : index
    %196 = vector.load %arg16[%c1_222, %c8_223, %c0_224] : memref<10x24x128xf32, #tpu.memory_space<vmem>>, vector<8x8x128xf32>
    %197 = vector.shape_cast %196 : vector<8x8x128xf32> to vector<64x128xf32>
    %198 = arith.truncf %197 : vector<64x128xf32> to vector<64x128xbf16>
    %c1_225 = arith.constant 1 : index
    %c1_226 = arith.constant 1 : index
    %c0_227 = arith.constant 0 : index
    %c0_228 = arith.constant 0 : index
    %199 = vector.load %arg8[%c1_225, %c1_226, %c0_227, %c0_228] : memref<3x3x128x128xbf16, #tpu.memory_space<vmem>>, vector<1x1x128x128xbf16>
    %200 = vector.shape_cast %199 : vector<1x1x128x128xbf16> to vector<128x128xbf16>
    %cst_229 = arith.constant dense<0.000000e+00> : vector<64x128xf32>
    %201 = tpu.matmul %198, %200, %cst_229 {dimension_numbers = #tpu.dot_dimension_numbers<[1], [0], [0], [1], [0, 0, 1, 1], [], []>} : vector<64x128xbf16>, vector<128x128xbf16>, vector<64x128xf32> -> vector<64x128xf32>
    %202 = arith.addf %195, %201 : vector<64x128xf32>
    %c1_230 = arith.constant 1 : index
    %c9_231 = arith.constant 9 : index
    %c0_232 = arith.constant 0 : index
    %203 = vector.load %arg16[%c1_230, %c9_231, %c0_232] : memref<10x24x128xf32, #tpu.memory_space<vmem>>, vector<8x8x128xf32>
    %204 = vector.shape_cast %203 : vector<8x8x128xf32> to vector<64x128xf32>
    %205 = arith.truncf %204 : vector<64x128xf32> to vector<64x128xbf16>
    %c1_233 = arith.constant 1 : index
    %c2_234 = arith.constant 2 : index
    %c0_235 = arith.constant 0 : index
    %c0_236 = arith.constant 0 : index
    %206 = vector.load %arg8[%c1_233, %c2_234, %c0_235, %c0_236] : memref<3x3x128x128xbf16, #tpu.memory_space<vmem>>, vector<1x1x128x128xbf16>
    %207 = vector.shape_cast %206 : vector<1x1x128x128xbf16> to vector<128x128xbf16>
    %cst_237 = arith.constant dense<0.000000e+00> : vector<64x128xf32>
    %208 = tpu.matmul %205, %207, %cst_237 {dimension_numbers = #tpu.dot_dimension_numbers<[1], [0], [0], [1], [0, 0, 1, 1], [], []>} : vector<64x128xbf16>, vector<128x128xbf16>, vector<64x128xf32> -> vector<64x128xf32>
    %209 = arith.addf %202, %208 : vector<64x128xf32>
    %c2_238 = arith.constant 2 : index
    %c7_239 = arith.constant 7 : index
    %c0_240 = arith.constant 0 : index
    %210 = vector.load %arg16[%c2_238, %c7_239, %c0_240] : memref<10x24x128xf32, #tpu.memory_space<vmem>>, vector<8x8x128xf32>
    %211 = vector.shape_cast %210 : vector<8x8x128xf32> to vector<64x128xf32>
    %212 = arith.truncf %211 : vector<64x128xf32> to vector<64x128xbf16>
    %c2_241 = arith.constant 2 : index
    %c0_242 = arith.constant 0 : index
    %c0_243 = arith.constant 0 : index
    %c0_244 = arith.constant 0 : index
    %213 = vector.load %arg8[%c2_241, %c0_242, %c0_243, %c0_244] : memref<3x3x128x128xbf16, #tpu.memory_space<vmem>>, vector<1x1x128x128xbf16>
    %214 = vector.shape_cast %213 : vector<1x1x128x128xbf16> to vector<128x128xbf16>
    %cst_245 = arith.constant dense<0.000000e+00> : vector<64x128xf32>
    %215 = tpu.matmul %212, %214, %cst_245 {dimension_numbers = #tpu.dot_dimension_numbers<[1], [0], [0], [1], [0, 0, 1, 1], [], []>} : vector<64x128xbf16>, vector<128x128xbf16>, vector<64x128xf32> -> vector<64x128xf32>
    %216 = arith.addf %209, %215 : vector<64x128xf32>
    %c2_246 = arith.constant 2 : index
    %c8_247 = arith.constant 8 : index
    %c0_248 = arith.constant 0 : index
    %217 = vector.load %arg16[%c2_246, %c8_247, %c0_248] : memref<10x24x128xf32, #tpu.memory_space<vmem>>, vector<8x8x128xf32>
    %218 = vector.shape_cast %217 : vector<8x8x128xf32> to vector<64x128xf32>
    %219 = arith.truncf %218 : vector<64x128xf32> to vector<64x128xbf16>
    %c2_249 = arith.constant 2 : index
    %c1_250 = arith.constant 1 : index
    %c0_251 = arith.constant 0 : index
    %c0_252 = arith.constant 0 : index
    %220 = vector.load %arg8[%c2_249, %c1_250, %c0_251, %c0_252] : memref<3x3x128x128xbf16, #tpu.memory_space<vmem>>, vector<1x1x128x128xbf16>
    %221 = vector.shape_cast %220 : vector<1x1x128x128xbf16> to vector<128x128xbf16>
    %cst_253 = arith.constant dense<0.000000e+00> : vector<64x128xf32>
    %222 = tpu.matmul %219, %221, %cst_253 {dimension_numbers = #tpu.dot_dimension_numbers<[1], [0], [0], [1], [0, 0, 1, 1], [], []>} : vector<64x128xbf16>, vector<128x128xbf16>, vector<64x128xf32> -> vector<64x128xf32>
    %223 = arith.addf %216, %222 : vector<64x128xf32>
    %c2_254 = arith.constant 2 : index
    %c9_255 = arith.constant 9 : index
    %c0_256 = arith.constant 0 : index
    %224 = vector.load %arg16[%c2_254, %c9_255, %c0_256] : memref<10x24x128xf32, #tpu.memory_space<vmem>>, vector<8x8x128xf32>
    %225 = vector.shape_cast %224 : vector<8x8x128xf32> to vector<64x128xf32>
    %226 = arith.truncf %225 : vector<64x128xf32> to vector<64x128xbf16>
    %c2_257 = arith.constant 2 : index
    %c2_258 = arith.constant 2 : index
    %c0_259 = arith.constant 0 : index
    %c0_260 = arith.constant 0 : index
    %227 = vector.load %arg8[%c2_257, %c2_258, %c0_259, %c0_260] : memref<3x3x128x128xbf16, #tpu.memory_space<vmem>>, vector<1x1x128x128xbf16>
    %228 = vector.shape_cast %227 : vector<1x1x128x128xbf16> to vector<128x128xbf16>
    %cst_261 = arith.constant dense<0.000000e+00> : vector<64x128xf32>
    %229 = tpu.matmul %226, %228, %cst_261 {dimension_numbers = #tpu.dot_dimension_numbers<[1], [0], [0], [1], [0, 0, 1, 1], [], []>} : vector<64x128xbf16>, vector<128x128xbf16>, vector<64x128xf32> -> vector<64x128xf32>
    %230 = arith.addf %223, %229 : vector<64x128xf32>
    %cst_262 = arith.constant 0.000000e+00 : f32
    %231 = vector.broadcast %cst_262 : f32 to vector<64x128xf32>
    %232 = arith.maximumf %230, %231 : vector<64x128xf32>
    %233 = vector.shape_cast %232 : vector<64x128xf32> to vector<8x8x128xf32>
    %c0_263 = arith.constant 0 : index
    %c0_264 = arith.constant 0 : index
    %c0_265 = arith.constant 0 : index
    %234 = vector.load %arg17[%c0_263, %c0_264, %c0_265] : memref<8x8x128xf32, #tpu.memory_space<vmem>>, vector<8x8x128xf32>
    tpu.vector_store %arg17[%c0_263, %c0_264, %c0_265], %233 {strides = array<i32>} : memref<8x8x128xf32, #tpu.memory_space<vmem>>, vector<8x8x128xf32>,
    %c0_266 = arith.constant 0 : index
    %c0_267 = arith.constant 0 : index
    %c0_268 = arith.constant 0 : index
    %235 = tpu.strided_load %arg17[%c0_266, %c0_267, %c0_268] {strides = array<i32: 2, 2, 1>} : memref<8x8x128xf32, #tpu.memory_space<vmem>>, vector<4x4x128xf32>
    %c0_269 = arith.constant 0 : index
    %c1_270 = arith.constant 1 : index
    %c0_271 = arith.constant 0 : index
    %236 = tpu.strided_load %arg17[%c0_269, %c1_270, %c0_271] {strides = array<i32: 2, 2, 1>} : memref<8x8x128xf32, #tpu.memory_space<vmem>>, vector<4x4x128xf32>
    %c1_272 = arith.constant 1 : index
    %c0_273 = arith.constant 0 : index
    %c0_274 = arith.constant 0 : index
    %237 = tpu.strided_load %arg17[%c1_272, %c0_273, %c0_274] {strides = array<i32: 2, 2, 1>} : memref<8x8x128xf32, #tpu.memory_space<vmem>>, vector<4x4x128xf32>
    %c1_275 = arith.constant 1 : index
    %c1_276 = arith.constant 1 : index
    %c0_277 = arith.constant 0 : index
    %238 = tpu.strided_load %arg17[%c1_275, %c1_276, %c0_277] {strides = array<i32: 2, 2, 1>} : memref<8x8x128xf32, #tpu.memory_space<vmem>>, vector<4x4x128xf32>
    %239 = arith.maximumf %235, %236 : vector<4x4x128xf32>
    %240 = arith.maximumf %237, %238 : vector<4x4x128xf32>
    %241 = arith.maximumf %239, %240 : vector<4x4x128xf32>
    %cst_278 = arith.constant 0.000000e+00 : f32
    %242 = vector.broadcast %cst_278 : f32 to vector<6x20x128xf32>
    %c0_279 = arith.constant 0 : index
    %c0_280 = arith.constant 0 : index
    %c0_281 = arith.constant 0 : index
    %243 = vector.load %arg18[%c0_279, %c0_280, %c0_281] : memref<6x20x128xf32, #tpu.memory_space<vmem>>, vector<6x20x128xf32>
    tpu.vector_store %arg18[%c0_279, %c0_280, %c0_281], %242 {strides = array<i32>} : memref<6x20x128xf32, #tpu.memory_space<vmem>>, vector<6x20x128xf32>,
    %c1_282 = arith.constant 1 : index
    %c8_283 = arith.constant 8 : index
    %c0_284 = arith.constant 0 : index
    %244 = vector.load %arg18[%c1_282, %c8_283, %c0_284] : memref<6x20x128xf32, #tpu.memory_space<vmem>>, vector<4x4x128xf32>
    tpu.vector_store %arg18[%c1_282, %c8_283, %c0_284], %241 {strides = array<i32>} : memref<6x20x128xf32, #tpu.memory_space<vmem>>, vector<4x4x128xf32>,
    %c0_285 = arith.constant 0 : index
    %c0_286 = arith.constant 0 : index
    %245 = vector.load %arg11[%c0_285, %c0_286] : memref<1x256xf32, #tpu.memory_space<vmem>>, vector<1x256xf32>
    %246 = vector.shape_cast %245 : vector<1x256xf32> to vector<1x256xf32>
    %247 = vector.broadcast %246 : vector<1x256xf32> to vector<16x256xf32>
    %c0_287 = arith.constant 0 : index
    %c7_288 = arith.constant 7 : index
    %c0_289 = arith.constant 0 : index
    %248 = vector.load %arg18[%c0_287, %c7_288, %c0_289] : memref<6x20x128xf32, #tpu.memory_space<vmem>>, vector<4x4x128xf32>
    %249 = vector.shape_cast %248 : vector<4x4x128xf32> to vector<16x128xf32>
    %250 = arith.truncf %249 : vector<16x128xf32> to vector<16x128xbf16>
    %c0_290 = arith.constant 0 : index
    %c0_291 = arith.constant 0 : index
    %c0_292 = arith.constant 0 : index
    %c0_293 = arith.constant 0 : index
    %251 = vector.load %arg10[%c0_290, %c0_291, %c0_292, %c0_293] : memref<3x3x128x256xbf16, #tpu.memory_space<vmem>>, vector<1x1x128x256xbf16>
    %252 = vector.shape_cast %251 : vector<1x1x128x256xbf16> to vector<128x256xbf16>
    %cst_294 = arith.constant dense<0.000000e+00> : vector<16x256xf32>
    %253 = tpu.matmul %250, %252, %cst_294 {dimension_numbers = #tpu.dot_dimension_numbers<[1], [0], [0], [1], [0, 0, 1, 1], [], []>} : vector<16x128xbf16>, vector<128x256xbf16>, vector<16x256xf32> -> vector<16x256xf32>
    %254 = arith.addf %247, %253 : vector<16x256xf32>
    %c0_295 = arith.constant 0 : index
    %c8_296 = arith.constant 8 : index
    %c0_297 = arith.constant 0 : index
    %255 = vector.load %arg18[%c0_295, %c8_296, %c0_297] : memref<6x20x128xf32, #tpu.memory_space<vmem>>, vector<4x4x128xf32>
    %256 = vector.shape_cast %255 : vector<4x4x128xf32> to vector<16x128xf32>
    %257 = arith.truncf %256 : vector<16x128xf32> to vector<16x128xbf16>
    %c0_298 = arith.constant 0 : index
    %c1_299 = arith.constant 1 : index
    %c0_300 = arith.constant 0 : index
    %c0_301 = arith.constant 0 : index
    %258 = vector.load %arg10[%c0_298, %c1_299, %c0_300, %c0_301] : memref<3x3x128x256xbf16, #tpu.memory_space<vmem>>, vector<1x1x128x256xbf16>
    %259 = vector.shape_cast %258 : vector<1x1x128x256xbf16> to vector<128x256xbf16>
    %cst_302 = arith.constant dense<0.000000e+00> : vector<16x256xf32>
    %260 = tpu.matmul %257, %259, %cst_302 {dimension_numbers = #tpu.dot_dimension_numbers<[1], [0], [0], [1], [0, 0, 1, 1], [], []>} : vector<16x128xbf16>, vector<128x256xbf16>, vector<16x256xf32> -> vector<16x256xf32>
    %261 = arith.addf %254, %260 : vector<16x256xf32>
    %c0_303 = arith.constant 0 : index
    %c9_304 = arith.constant 9 : index
    %c0_305 = arith.constant 0 : index
    %262 = vector.load %arg18[%c0_303, %c9_304, %c0_305] : memref<6x20x128xf32, #tpu.memory_space<vmem>>, vector<4x4x128xf32>
    %263 = vector.shape_cast %262 : vector<4x4x128xf32> to vector<16x128xf32>
    %264 = arith.truncf %263 : vector<16x128xf32> to vector<16x128xbf16>
    %c0_306 = arith.constant 0 : index
    %c2_307 = arith.constant 2 : index
    %c0_308 = arith.constant 0 : index
    %c0_309 = arith.constant 0 : index
    %265 = vector.load %arg10[%c0_306, %c2_307, %c0_308, %c0_309] : memref<3x3x128x256xbf16, #tpu.memory_space<vmem>>, vector<1x1x128x256xbf16>
    %266 = vector.shape_cast %265 : vector<1x1x128x256xbf16> to vector<128x256xbf16>
    %cst_310 = arith.constant dense<0.000000e+00> : vector<16x256xf32>
    %267 = tpu.matmul %264, %266, %cst_310 {dimension_numbers = #tpu.dot_dimension_numbers<[1], [0], [0], [1], [0, 0, 1, 1], [], []>} : vector<16x128xbf16>, vector<128x256xbf16>, vector<16x256xf32> -> vector<16x256xf32>
    %268 = arith.addf %261, %267 : vector<16x256xf32>
    %c1_311 = arith.constant 1 : index
    %c7_312 = arith.constant 7 : index
    %c0_313 = arith.constant 0 : index
    %269 = vector.load %arg18[%c1_311, %c7_312, %c0_313] : memref<6x20x128xf32, #tpu.memory_space<vmem>>, vector<4x4x128xf32>
    %270 = vector.shape_cast %269 : vector<4x4x128xf32> to vector<16x128xf32>
    %271 = arith.truncf %270 : vector<16x128xf32> to vector<16x128xbf16>
    %c1_314 = arith.constant 1 : index
    %c0_315 = arith.constant 0 : index
    %c0_316 = arith.constant 0 : index
    %c0_317 = arith.constant 0 : index
    %272 = vector.load %arg10[%c1_314, %c0_315, %c0_316, %c0_317] : memref<3x3x128x256xbf16, #tpu.memory_space<vmem>>, vector<1x1x128x256xbf16>
    %273 = vector.shape_cast %272 : vector<1x1x128x256xbf16> to vector<128x256xbf16>
    %cst_318 = arith.constant dense<0.000000e+00> : vector<16x256xf32>
    %274 = tpu.matmul %271, %273, %cst_318 {dimension_numbers = #tpu.dot_dimension_numbers<[1], [0], [0], [1], [0, 0, 1, 1], [], []>} : vector<16x128xbf16>, vector<128x256xbf16>, vector<16x256xf32> -> vector<16x256xf32>
    %275 = arith.addf %268, %274 : vector<16x256xf32>
    %c1_319 = arith.constant 1 : index
    %c8_320 = arith.constant 8 : index
    %c0_321 = arith.constant 0 : index
    %276 = vector.load %arg18[%c1_319, %c8_320, %c0_321] : memref<6x20x128xf32, #tpu.memory_space<vmem>>, vector<4x4x128xf32>
    %277 = vector.shape_cast %276 : vector<4x4x128xf32> to vector<16x128xf32>
    %278 = arith.truncf %277 : vector<16x128xf32> to vector<16x128xbf16>
    %c1_322 = arith.constant 1 : index
    %c1_323 = arith.constant 1 : index
    %c0_324 = arith.constant 0 : index
    %c0_325 = arith.constant 0 : index
    %279 = vector.load %arg10[%c1_322, %c1_323, %c0_324, %c0_325] : memref<3x3x128x256xbf16, #tpu.memory_space<vmem>>, vector<1x1x128x256xbf16>
    %280 = vector.shape_cast %279 : vector<1x1x128x256xbf16> to vector<128x256xbf16>
    %cst_326 = arith.constant dense<0.000000e+00> : vector<16x256xf32>
    %281 = tpu.matmul %278, %280, %cst_326 {dimension_numbers = #tpu.dot_dimension_numbers<[1], [0], [0], [1], [0, 0, 1, 1], [], []>} : vector<16x128xbf16>, vector<128x256xbf16>, vector<16x256xf32> -> vector<16x256xf32>
    %282 = arith.addf %275, %281 : vector<16x256xf32>
    %c1_327 = arith.constant 1 : index
    %c9_328 = arith.constant 9 : index
    %c0_329 = arith.constant 0 : index
    %283 = vector.load %arg18[%c1_327, %c9_328, %c0_329] : memref<6x20x128xf32, #tpu.memory_space<vmem>>, vector<4x4x128xf32>
    %284 = vector.shape_cast %283 : vector<4x4x128xf32> to vector<16x128xf32>
    %285 = arith.truncf %284 : vector<16x128xf32> to vector<16x128xbf16>
    %c1_330 = arith.constant 1 : index
    %c2_331 = arith.constant 2 : index
    %c0_332 = arith.constant 0 : index
    %c0_333 = arith.constant 0 : index
    %286 = vector.load %arg10[%c1_330, %c2_331, %c0_332, %c0_333] : memref<3x3x128x256xbf16, #tpu.memory_space<vmem>>, vector<1x1x128x256xbf16>
    %287 = vector.shape_cast %286 : vector<1x1x128x256xbf16> to vector<128x256xbf16>
    %cst_334 = arith.constant dense<0.000000e+00> : vector<16x256xf32>
    %288 = tpu.matmul %285, %287, %cst_334 {dimension_numbers = #tpu.dot_dimension_numbers<[1], [0], [0], [1], [0, 0, 1, 1], [], []>} : vector<16x128xbf16>, vector<128x256xbf16>, vector<16x256xf32> -> vector<16x256xf32>
    %289 = arith.addf %282, %288 : vector<16x256xf32>
    %c2_335 = arith.constant 2 : index
    %c7_336 = arith.constant 7 : index
    %c0_337 = arith.constant 0 : index
    %290 = vector.load %arg18[%c2_335, %c7_336, %c0_337] : memref<6x20x128xf32, #tpu.memory_space<vmem>>, vector<4x4x128xf32>
    %291 = vector.shape_cast %290 : vector<4x4x128xf32> to vector<16x128xf32>
    %292 = arith.truncf %291 : vector<16x128xf32> to vector<16x128xbf16>
    %c2_338 = arith.constant 2 : index
    %c0_339 = arith.constant 0 : index
    %c0_340 = arith.constant 0 : index
    %c0_341 = arith.constant 0 : index
    %293 = vector.load %arg10[%c2_338, %c0_339, %c0_340, %c0_341] : memref<3x3x128x256xbf16, #tpu.memory_space<vmem>>, vector<1x1x128x256xbf16>
    %294 = vector.shape_cast %293 : vector<1x1x128x256xbf16> to vector<128x256xbf16>
    %cst_342 = arith.constant dense<0.000000e+00> : vector<16x256xf32>
    %295 = tpu.matmul %292, %294, %cst_342 {dimension_numbers = #tpu.dot_dimension_numbers<[1], [0], [0], [1], [0, 0, 1, 1], [], []>} : vector<16x128xbf16>, vector<128x256xbf16>, vector<16x256xf32> -> vector<16x256xf32>
    %296 = arith.addf %289, %295 : vector<16x256xf32>
    %c2_343 = arith.constant 2 : index
    %c8_344 = arith.constant 8 : index
    %c0_345 = arith.constant 0 : index
    %297 = vector.load %arg18[%c2_343, %c8_344, %c0_345] : memref<6x20x128xf32, #tpu.memory_space<vmem>>, vector<4x4x128xf32>
    %298 = vector.shape_cast %297 : vector<4x4x128xf32> to vector<16x128xf32>
    %299 = arith.truncf %298 : vector<16x128xf32> to vector<16x128xbf16>
    %c2_346 = arith.constant 2 : index
    %c1_347 = arith.constant 1 : index
    %c0_348 = arith.constant 0 : index
    %c0_349 = arith.constant 0 : index
    %300 = vector.load %arg10[%c2_346, %c1_347, %c0_348, %c0_349] : memref<3x3x128x256xbf16, #tpu.memory_space<vmem>>, vector<1x1x128x256xbf16>
    %301 = vector.shape_cast %300 : vector<1x1x128x256xbf16> to vector<128x256xbf16>
    %cst_350 = arith.constant dense<0.000000e+00> : vector<16x256xf32>
    %302 = tpu.matmul %299, %301, %cst_350 {dimension_numbers = #tpu.dot_dimension_numbers<[1], [0], [0], [1], [0, 0, 1, 1], [], []>} : vector<16x128xbf16>, vector<128x256xbf16>, vector<16x256xf32> -> vector<16x256xf32>
    %303 = arith.addf %296, %302 : vector<16x256xf32>
    %c2_351 = arith.constant 2 : index
    %c9_352 = arith.constant 9 : index
    %c0_353 = arith.constant 0 : index
    %304 = vector.load %arg18[%c2_351, %c9_352, %c0_353] : memref<6x20x128xf32, #tpu.memory_space<vmem>>, vector<4x4x128xf32>
    %305 = vector.shape_cast %304 : vector<4x4x128xf32> to vector<16x128xf32>
    %306 = arith.truncf %305 : vector<16x128xf32> to vector<16x128xbf16>
    %c2_354 = arith.constant 2 : index
    %c2_355 = arith.constant 2 : index
    %c0_356 = arith.constant 0 : index
    %c0_357 = arith.constant 0 : index
    %307 = vector.load %arg10[%c2_354, %c2_355, %c0_356, %c0_357] : memref<3x3x128x256xbf16, #tpu.memory_space<vmem>>, vector<1x1x128x256xbf16>
    %308 = vector.shape_cast %307 : vector<1x1x128x256xbf16> to vector<128x256xbf16>
    %cst_358 = arith.constant dense<0.000000e+00> : vector<16x256xf32>
    %309 = tpu.matmul %306, %308, %cst_358 {dimension_numbers = #tpu.dot_dimension_numbers<[1], [0], [0], [1], [0, 0, 1, 1], [], []>} : vector<16x128xbf16>, vector<128x256xbf16>, vector<16x256xf32> -> vector<16x256xf32>
    %310 = arith.addf %303, %309 : vector<16x256xf32>
    %c0_359 = arith.constant 0 : index
    %c0_360 = arith.constant 0 : index
    %c0_361 = arith.constant 0 : index
    %311 = vector.load %arg12[%c0_359, %c0_360, %c0_361] : memref<1x16x256xf32, #tpu.memory_space<vmem>>, vector<1x16x256xf32>
    %312 = vector.shape_cast %311 : vector<1x16x256xf32> to vector<16x256xf32>
    %313 = vector.shape_cast %310 : vector<16x256xf32> to vector<1x16x256xf32>
    tpu.vector_store %arg12[%c0_359, %c0_360, %c0_361], %313 {strides = array<i32>} : memref<1x16x256xf32, #tpu.memory_space<vmem>>, vector<1x16x256xf32>,
    return
  }
  func.func @transform_0(%arg0: i32) -> (i32, i32, i32) {
    %c0_i32 = arith.constant 0 : i32
    %c0_i32_0 = arith.constant 0 : i32
    %c0_i32_1 = arith.constant 0 : i32
    return %arg0, %c0_i32, %c0_i32_0 : i32, i32, i32
  }
  func.func @transform_1(%arg0: i32) -> (i32, i32) {
    %c0_i32 = arith.constant 0 : i32
    %c0_i32_0 = arith.constant 0 : i32
    %c0_i32_1 = arith.constant 0 : i32
    return %c0_i32, %c0_i32_0 : i32, i32
  }
  func.func @transform_2(%arg0: i32) -> (i32, i32) {
    %c0_i32 = arith.constant 0 : i32
    %c0_i32_0 = arith.constant 0 : i32
    %c0_i32_1 = arith.constant 0 : i32
    return %c0_i32, %c0_i32_0 : i32, i32
  }
  func.func @transform_3(%arg0: i32) -> (i32, i32, i32, i32) {
    %c0_i32 = arith.constant 0 : i32
    %c0_i32_0 = arith.constant 0 : i32
    %c0_i32_1 = arith.constant 0 : i32
    %c0_i32_2 = arith.constant 0 : i32
    %c0_i32_3 = arith.constant 0 : i32
    return %c0_i32, %c0_i32_0, %c0_i32_1, %c0_i32_2 : i32, i32, i32, i32
  }
  func.func @transform_4(%arg0: i32) -> (i32, i32) {
    %c0_i32 = arith.constant 0 : i32
    %c0_i32_0 = arith.constant 0 : i32
    %c0_i32_1 = arith.constant 0 : i32
    return %c0_i32, %c0_i32_0 : i32, i32
  }
  func.func @transform_5(%arg0: i32) -> (i32, i32, i32, i32) {
    %c0_i32 = arith.constant 0 : i32
    %c0_i32_0 = arith.constant 0 : i32
    %c0_i32_1 = arith.constant 0 : i32
    %c0_i32_2 = arith.constant 0 : i32
    %c0_i32_3 = arith.constant 0 : i32
    return %c0_i32, %c0_i32_0, %c0_i32_1, %c0_i32_2 : i32, i32, i32, i32
  }
  func.func @transform_6(%arg0: i32) -> (i32, i32) {
    %c0_i32 = arith.constant 0 : i32
    %c0_i32_0 = arith.constant 0 : i32
    %c0_i32_1 = arith.constant 0 : i32
    return %c0_i32, %c0_i32_0 : i32, i32
  }
  func.func @transform_7(%arg0: i32) -> (i32, i32, i32, i32) {
    %c0_i32 = arith.constant 0 : i32
    %c0_i32_0 = arith.constant 0 : i32
    %c0_i32_1 = arith.constant 0 : i32
    %c0_i32_2 = arith.constant 0 : i32
    %c0_i32_3 = arith.constant 0 : i32
    return %c0_i32, %c0_i32_0, %c0_i32_1, %c0_i32_2 : i32, i32, i32, i32
  }
  func.func @transform_8(%arg0: i32) -> (i32, i32) {
    %c0_i32 = arith.constant 0 : i32
    %c0_i32_0 = arith.constant 0 : i32
    %c0_i32_1 = arith.constant 0 : i32
    return %c0_i32, %c0_i32_0 : i32, i32
  }
  func.func @transform_9(%arg0: i32) -> (i32, i32, i32, i32) {
    %c0_i32 = arith.constant 0 : i32
    %c0_i32_0 = arith.constant 0 : i32
    %c0_i32_1 = arith.constant 0 : i32
    %c0_i32_2 = arith.constant 0 : i32
    %c0_i32_3 = arith.constant 0 : i32
    return %c0_i32, %c0_i32_0, %c0_i32_1, %c0_i32_2 : i32, i32, i32, i32
  }
  func.func @transform_10(%arg0: i32) -> (i32, i32) {
    %c0_i32 = arith.constant 0 : i32
    %c0_i32_0 = arith.constant 0 : i32
    %c0_i32_1 = arith.constant 0 : i32
    return %c0_i32, %c0_i32_0 : i32, i32
  }
  func.func @transform_11(%arg0: i32) -> (i32, i32, i32) {
    %c0_i32 = arith.constant 0 : i32
    %c0_i32_0 = arith.constant 0 : i32
    %c0_i32_1 = arith.constant 0 : i32
    return %arg0, %c0_i32, %c0_i32_0 : i32, i32, i32
  }
}

</mosaic_0001>

<llo_original>
// kernel: dnn_activations_vgg16_layer11.1
$region0: #{dnn_activations_vgg16_layer11.1}
  #allocation0 [shape = 'u32[]', space=smem, size = 0x4, offset = 0x4, fixed_abs, tag = 'smem constant byte address 0x4 - core index']
  #allocation1 [shape = 'u32[144,128]{1,0:T(1,128)}', space=vmem, size = 0x12000, scoped, tag = 'internal scratch']
  #allocation2 [shape = 'f32[18,32,64]{2,1,0:T(8,128)}', space=vmem, size = 0x48000, scoped, tag = 'scratch operand']
  #allocation3 [shape = 'f32[16,16,64]{2,1,0:T(8,128)}', space=vmem, size = 0x20000, scoped, tag = 'scratch operand']
  #allocation4 [shape = 'f32[10,24,64]{2,1,0:T(8,128)}', space=vmem, size = 0x1e000, scoped, tag = 'scratch operand']
  #allocation5 [shape = 'f32[10,24,128]{2,1,0:T(8,128)}', space=vmem, size = 0x1e000, scoped, tag = 'scratch operand']
  #allocation6 [shape = 'f32[8,8,128]{2,1,0:T(8,128)}', space=vmem, size = 0x8000, scoped, tag = 'scratch operand']
  #allocation7 [shape = 'f32[6,20,128]{2,1,0:T(8,128)}', space=vmem, size = 0x12000, scoped, tag = 'scratch operand']
  %s0 = inlined_call_operand.vmem [shape: bf16[2,256,27], index: 0, kind: input, shape index: {}]
  %s1 = inlined_call_operand.vmem [shape: bf16[27,64], index: 1, kind: input, shape index: {}]
  %s2 = inlined_call_operand.vmem [shape: f32[1,64], index: 2, kind: input, shape index: {}]
  %s3 = inlined_call_operand.vmem [shape: bf16[3,3,64,64], index: 3, kind: input, shape index: {}]
  %s4 = inlined_call_operand.vmem [shape: f32[1,64], index: 4, kind: input, shape index: {}]
  %s5 = inlined_call_operand.vmem [shape: bf16[3,3,64,128], index: 5, kind: input, shape index: {}]
  %s6 = inlined_call_operand.vmem [shape: f32[1,128], index: 6, kind: input, shape index: {}]
  %s7 = inlined_call_operand.vmem [shape: bf16[3,3,128,128], index: 7, kind: input, shape index: {}]
  %s8 = inlined_call_operand.vmem [shape: f32[1,128], index: 8, kind: input, shape index: {}]
  %s9 = inlined_call_operand.vmem [shape: bf16[3,3,128,256], index: 9, kind: input, shape index: {}]
  %s10 = inlined_call_operand.vmem [shape: f32[1,256], index: 10, kind: input, shape index: {}]
  %s11 = inlined_call_operand.vmem [shape: f32[2,16,256], index: 11, kind: output, shape index: {}]
  %s12 = sld [smem:[#allocation0]]
  $region77: #{dnn_activations_vgg16_layer11.1} parent=0
    _
  %s14 = ssub.s32 1, %s12
  %s15 = scalar_select 0, %s14, %s12
  loop: start=0, step=1, limit=4
  $region2: #{dnn_activations_vgg16_layer11.1} parent=0 // loop_pre_header
    _
  $region3: #{dnn_activations_vgg16_layer11.1} parent=0 // loop_header
    %s17 = sphi 0, %s21
    %p18 = scmp.ge.s32.totalorder %s17, 4
    %s27 = sphi 0, %s29
    %s30 = sphi 0, %s27
    %s31 = sphi 0, %s30
    %s47 = sphi 0, %s31
    %s51 = sphi 0, %s51
    %s53 = sphi 0, %s51
    %s54 = sphi 0, %s53
    %s68 = sphi 0, %s54
    %s72 = sphi 0, %s72
    %s74 = sphi 0, %s72
    %s75 = sphi 0, %s74
    %s89 = sphi 0, %s75
    %s93 = sphi 0, %s93
    %s95 = sphi 0, %s93
    %s96 = sphi 0, %s95
    %s110 = sphi 0, %s96
    %s114 = sphi 0, %s114
    %s116 = sphi 0, %s114
    %s117 = sphi 0, %s116
    %s131 = sphi 0, %s117
    %s135 = sphi 0, %s135
    %s137 = sphi 0, %s135
    %s138 = sphi 0, %s137
    %s152 = sphi 0, %s138
    %s156 = sphi 0, %s156
    %s158 = sphi 0, %s156
    %s159 = sphi 0, %s158
    %s173 = sphi 0, %s159
    %s177 = sphi 0, %s177
    %s179 = sphi 0, %s177
    %s180 = sphi 0, %s179
    %s194 = sphi 0, %s180
    %s198 = sphi 0, %s198
    %s200 = sphi 0, %s198
    %s201 = sphi 0, %s200
    %s215 = sphi 0, %s201
    %s219 = sphi 0, %s219
    %s221 = sphi 0, %s219
    %s222 = sphi 0, %s221
    %s236 = sphi 0, %s222
    %s240 = sphi 0, %s240
    %s242 = sphi 0, %s240
    %s243 = sphi 0, %s242
    %s257 = sphi 0, %s243
    %s263 = sphi 0, %s265
    %s266 = sphi 0, %s263
    %s267 = sphi 0, %s266
    %s283 = sphi 0, %s267
  $region4: #{dnn_activations_vgg16_layer11.1} parent=0 // loop_header_branch
    %20 = sbr.rel (%p18) target = $region8
  $region5: #{dnn_activations_vgg16_layer11.1} parent=0 // loop_body
    %s22 = ssub.s32 %s17, 1
    %s23 = ssub.s32 %s17, 2
    %s24 = sadd.s32 %s17, 1
    %s25 = ssub.s32 %s17, %s24
    %p26 = scmp.eq.s32.totalorder %s25, 0
    %s28 = sadd.s32 %s27, 1
    %s29 = scalar_select %p26, %s27, %s28
    %p32 = pneg %p26
    %p33 = scmp.eq.s32.totalorder %s17, 1
    %p34 = por %p32, %p33
    %p35 = scmp.ne.s32.totalorder %s27, %s30
    %p36 = scmp.eq.s32.totalorder %s17, 0
    %p37 = por %p35, %p36
    %p38 = scmp.ne.s32.totalorder %s27, %s30
    %p39 = scmp.eq.s32.totalorder %s22, 1
    %p40 = por %p38, %p39
    %p41 = scmp.ne.s32.totalorder %s30, %s31
    %p42 = scmp.eq.s32.totalorder %s22, 0
    %p43 = por %p41, %p42
    %p44 = scmp.ne.s32.totalorder %s30, %s31
    %p45 = scmp.eq.s32.totalorder %s23, 1
    %p46 = por %p44, %p45
    %p48 = scmp.ne.s32.totalorder %s31, %s47
    %p49 = scmp.eq.s32.totalorder %s23, 0
    %p50 = por %p48, %p49
    %s52 = sadd.s32 %s51, 1
    %p55 = scmp.eq.s32.totalorder %s17, 1
    %p56 = scmp.ne.s32.totalorder %s51, %s53
    %p57 = scmp.eq.s32.totalorder %s17, 0
    %p58 = por %p56, %p57
    %p59 = scmp.ne.s32.totalorder %s51, %s53
    %p60 = scmp.eq.s32.totalorder %s22, 1
    %p61 = por %p59, %p60
    %p62 = scmp.ne.s32.totalorder %s53, %s54
    %p63 = scmp.eq.s32.totalorder %s22, 0
    %p64 = por %p62, %p63
    %p65 = scmp.ne.s32.totalorder %s53, %s54
    %p66 = scmp.eq.s32.totalorder %s23, 1
    %p67 = por %p65, %p66
    %p69 = scmp.ne.s32.totalorder %s54, %s68
    %p70 = scmp.eq.s32.totalorder %s23, 0
    %p71 = por %p69, %p70
    %s73 = sadd.s32 %s72, 1
    %p76 = scmp.eq.s32.totalorder %s17, 1
    %p77 = scmp.ne.s32.totalorder %s72, %s74
    %p78 = scmp.eq.s32.totalorder %s17, 0
    %p79 = por %p77, %p78
    %p80 = scmp.ne.s32.totalorder %s72, %s74
    %p81 = scmp.eq.s32.totalorder %s22, 1
    %p82 = por %p80, %p81
    %p83 = scmp.ne.s32.totalorder %s74, %s75
    %p84 = scmp.eq.s32.totalorder %s22, 0
    %p85 = por %p83, %p84
    %p86 = scmp.ne.s32.totalorder %s74, %s75
    %p87 = scmp.eq.s32.totalorder %s23, 1
    %p88 = por %p86, %p87
    %p90 = scmp.ne.s32.totalorder %s75, %s89
    %p91 = scmp.eq.s32.totalorder %s23, 0
    %p92 = por %p90, %p91
    %s94 = sadd.s32 %s93, 1
    %p97 = scmp.eq.s32.totalorder %s17, 1
    %p98 = scmp.ne.s32.totalorder %s93, %s95
    %p99 = scmp.eq.s32.totalorder %s17, 0
    %p100 = por %p98, %p99
    %p101 = scmp.ne.s32.totalorder %s93, %s95
    %p102 = scmp.eq.s32.totalorder %s22, 1
    %p103 = por %p101, %p102
    %p104 = scmp.ne.s32.totalorder %s95, %s96
    %p105 = scmp.eq.s32.totalorder %s22, 0
    %p106 = por %p104, %p105
    %p107 = scmp.ne.s32.totalorder %s95, %s96
    %p108 = scmp.eq.s32.totalorder %s23, 1
    %p109 = por %p107, %p108
    %p111 = scmp.ne.s32.totalorder %s96, %s110
    %p112 = scmp.eq.s32.totalorder %s23, 0
    %p113 = por %p111, %p112
    %s115 = sadd.s32 %s114, 1
    %p118 = scmp.eq.s32.totalorder %s17, 1
    %p119 = scmp.ne.s32.totalorder %s114, %s116
    %p120 = scmp.eq.s32.totalorder %s17, 0
    %p121 = por %p119, %p120
    %p122 = scmp.ne.s32.totalorder %s114, %s116
    %p123 = scmp.eq.s32.totalorder %s22, 1
    %p124 = por %p122, %p123
    %p125 = scmp.ne.s32.totalorder %s116, %s117
    %p126 = scmp.eq.s32.totalorder %s22, 0
    %p127 = por %p125, %p126
    %p128 = scmp.ne.s32.totalorder %s116, %s117
    %p129 = scmp.eq.s32.totalorder %s23, 1
    %p130 = por %p128, %p129
    %p132 = scmp.ne.s32.totalorder %s117, %s131
    %p133 = scmp.eq.s32.totalorder %s23, 0
    %p134 = por %p132, %p133
    %s136 = sadd.s32 %s135, 1
    %p139 = scmp.eq.s32.totalorder %s17, 1
    %p140 = scmp.ne.s32.totalorder %s135, %s137
    %p141 = scmp.eq.s32.totalorder %s17, 0
    %p142 = por %p140, %p141
    %p143 = scmp.ne.s32.totalorder %s135, %s137
    %p144 = scmp.eq.s32.totalorder %s22, 1
    %p145 = por %p143, %p144
    %p146 = scmp.ne.s32.totalorder %s137, %s138
    %p147 = scmp.eq.s32.totalorder %s22, 0
    %p148 = por %p146, %p147
    %p149 = scmp.ne.s32.totalorder %s137, %s138
    %p150 = scmp.eq.s32.totalorder %s23, 1
    %p151 = por %p149, %p150
    %p153 = scmp.ne.s32.totalorder %s138, %s152
    %p154 = scmp.eq.s32.totalorder %s23, 0
    %p155 = por %p153, %p154
    %s157 = sadd.s32 %s156, 1
    %p160 = scmp.eq.s32.totalorder %s17, 1
    %p161 = scmp.ne.s32.totalorder %s156, %s158
    %p162 = scmp.eq.s32.totalorder %s17, 0
    %p163 = por %p161, %p162
    %p164 = scmp.ne.s32.totalorder %s156, %s158
    %p165 = scmp.eq.s32.totalorder %s22, 1
    %p166 = por %p164, %p165
    %p167 = scmp.ne.s32.totalorder %s158, %s159
    %p168 = scmp.eq.s32.totalorder %s22, 0
    %p169 = por %p167, %p168
    %p170 = scmp.ne.s32.totalorder %s158, %s159
    %p171 = scmp.eq.s32.totalorder %s23, 1
    %p172 = por %p170, %p171
    %p174 = scmp.ne.s32.totalorder %s159, %s173
    %p175 = scmp.eq.s32.totalorder %s23, 0
    %p176 = por %p174, %p175
    %s178 = sadd.s32 %s177, 1
    %p181 = scmp.eq.s32.totalorder %s17, 1
    %p182 = scmp.ne.s32.totalorder %s177, %s179
    %p183 = scmp.eq.s32.totalorder %s17, 0
    %p184 = por %p182, %p183
    %p185 = scmp.ne.s32.totalorder %s177, %s179
    %p186 = scmp.eq.s32.totalorder %s22, 1
    %p187 = por %p185, %p186
    %p188 = scmp.ne.s32.totalorder %s179, %s180
    %p189 = scmp.eq.s32.totalorder %s22, 0
    %p190 = por %p188, %p189
    %p191 = scmp.ne.s32.totalorder %s179, %s180
    %p192 = scmp.eq.s32.totalorder %s23, 1
    %p193 = por %p191, %p192
    %p195 = scmp.ne.s32.totalorder %s180, %s194
    %p196 = scmp.eq.s32.totalorder %s23, 0
    %p197 = por %p195, %p196
    %s199 = sadd.s32 %s198, 1
    %p202 = scmp.eq.s32.totalorder %s17, 1
    %p203 = scmp.ne.s32.totalorder %s198, %s200
    %p204 = scmp.eq.s32.totalorder %s17, 0
    %p205 = por %p203, %p204
    %p206 = scmp.ne.s32.totalorder %s198, %s200
    %p207 = scmp.eq.s32.totalorder %s22, 1
    %p208 = por %p206, %p207
    %p209 = scmp.ne.s32.totalorder %s200, %s201
    %p210 = scmp.eq.s32.totalorder %s22, 0
    %p211 = por %p209, %p210
    %p212 = scmp.ne.s32.totalorder %s200, %s201
    %p213 = scmp.eq.s32.totalorder %s23, 1
    %p214 = por %p212, %p213
    %p216 = scmp.ne.s32.totalorder %s201, %s215
    %p217 = scmp.eq.s32.totalorder %s23, 0
    %p218 = por %p216, %p217
    %s220 = sadd.s32 %s219, 1
    %p223 = scmp.eq.s32.totalorder %s17, 1
    %p224 = scmp.ne.s32.totalorder %s219, %s221
    %p225 = scmp.eq.s32.totalorder %s17, 0
    %p226 = por %p224, %p225
    %p227 = scmp.ne.s32.totalorder %s219, %s221
    %p228 = scmp.eq.s32.totalorder %s22, 1
    %p229 = por %p227, %p228
    %p230 = scmp.ne.s32.totalorder %s221, %s222
    %p231 = scmp.eq.s32.totalorder %s22, 0
    %p232 = por %p230, %p231
    %p233 = scmp.ne.s32.totalorder %s221, %s222
    %p234 = scmp.eq.s32.totalorder %s23, 1
    %p235 = por %p233, %p234
    %p237 = scmp.ne.s32.totalorder %s222, %s236
    %p238 = scmp.eq.s32.totalorder %s23, 0
    %p239 = por %p237, %p238
    %s241 = sadd.s32 %s240, 1
    %p244 = scmp.eq.s32.totalorder %s17, 1
    %p245 = scmp.ne.s32.totalorder %s240, %s242
    %p246 = scmp.eq.s32.totalorder %s17, 0
    %p247 = por %p245, %p246
    %p248 = scmp.ne.s32.totalorder %s240, %s242
    %p249 = scmp.eq.s32.totalorder %s22, 1
    %p250 = por %p248, %p249
    %p251 = scmp.ne.s32.totalorder %s242, %s243
    %p252 = scmp.eq.s32.totalorder %s22, 0
    %p253 = por %p251, %p252
    %p254 = scmp.ne.s32.totalorder %s242, %s243
    %p255 = scmp.eq.s32.totalorder %s23, 1
    %p256 = por %p254, %p255
    %p258 = scmp.ne.s32.totalorder %s243, %s257
    %p259 = scmp.eq.s32.totalorder %s23, 0
    %p260 = por %p258, %p259
    %s261 = ssub.s32 %s17, %s24
    %p262 = scmp.eq.s32.totalorder %s261, 0
    %s264 = sadd.s32 %s263, 1
    %s265 = scalar_select %p262, %s263, %s264
    %p268 = pneg %p262
    %p269 = scmp.eq.s32.totalorder %s17, 1
    %p270 = por %p268, %p269
    %p271 = scmp.ne.s32.totalorder %s263, %s266
    %p272 = scmp.eq.s32.totalorder %s17, 0
    %p273 = por %p271, %p272
    %p274 = scmp.ne.s32.totalorder %s263, %s266
    %p275 = scmp.eq.s32.totalorder %s22, 1
    %p276 = por %p274, %p275
    %p277 = scmp.ne.s32.totalorder %s266, %s267
    %p278 = scmp.eq.s32.totalorder %s22, 0
    %p279 = por %p277, %p278
    %p280 = scmp.ne.s32.totalorder %s266, %s267
    %p281 = scmp.eq.s32.totalorder %s23, 1
    %p282 = por %p280, %p281
    %p284 = scmp.ne.s32.totalorder %s267, %s283
    %p285 = scmp.eq.s32.totalorder %s23, 0
    %p286 = por %p284, %p285
    %p287 = scmp.le.s32.totalorder 1, %s17
    %p288 = scmp.lt.s32.totalorder %s17, 3
    %p289 = pnand %p287, %p288
    %p290 = pneg %p289
    // Predicated region
    $region9: #{dnn_activations_vgg16_layer11.1} parent=5 // pred_check
      _
    $region10: #{dnn_activations_vgg16_layer11.1} parent=5 // pred_check_branch
      %292 = sbr.rel (%p289) target = $region12
    $region11: #{dnn_activations_vgg16_layer11.1} parent=5 // pred_region
      %s293 = ssub.s32 %s17, 1
      // Predicated region
      $region13: #{dnn_activations_vgg16_layer11.1} parent=11 // pred_check
        %p294 = pneg %p64
      $region14: #{dnn_activations_vgg16_layer11.1} parent=11 // pred_check_branch
        %296 = sbr.rel (%p294) target = $region16
      $region15: #{dnn_activations_vgg16_layer11.1} parent=11 // pred_region
        _
      $region16: #{dnn_activations_vgg16_layer11.1} parent=11 // pred_fallthru
        _
      // Predicated region
      $region17: #{dnn_activations_vgg16_layer11.1} parent=11 // pred_check
        %p297 = pneg %p85
      $region18: #{dnn_activations_vgg16_layer11.1} parent=11 // pred_check_branch
        %299 = sbr.rel (%p297) target = $region20
      $region19: #{dnn_activations_vgg16_layer11.1} parent=11 // pred_region
        _
      $region20: #{dnn_activations_vgg16_layer11.1} parent=11 // pred_fallthru
        _
      // Predicated region
      $region21: #{dnn_activations_vgg16_layer11.1} parent=11 // pred_check
        %p300 = pneg %p106
      $region22: #{dnn_activations_vgg16_layer11.1} parent=11 // pred_check_branch
        %302 = sbr.rel (%p300) target = $region24
      $region23: #{dnn_activations_vgg16_layer11.1} parent=11 // pred_region
        _
      $region24: #{dnn_activations_vgg16_layer11.1} parent=11 // pred_fallthru
        _
      // Predicated region
      $region25: #{dnn_activations_vgg16_layer11.1} parent=11 // pred_check
        %p303 = pneg %p127
      $region26: #{dnn_activations_vgg16_layer11.1} parent=11 // pred_check_branch
        %305 = sbr.rel (%p303) target = $region28
      $region27: #{dnn_activations_vgg16_layer11.1} parent=11 // pred_region
        _
      $region28: #{dnn_activations_vgg16_layer11.1} parent=11 // pred_fallthru
        _
      // Predicated region
      $region29: #{dnn_activations_vgg16_layer11.1} parent=11 // pred_check
        %p306 = pneg %p148
      $region30: #{dnn_activations_vgg16_layer11.1} parent=11 // pred_check_branch
        %308 = sbr.rel (%p306) target = $region32
      $region31: #{dnn_activations_vgg16_layer11.1} parent=11 // pred_region
        _
      $region32: #{dnn_activations_vgg16_layer11.1} parent=11 // pred_fallthru
        _
      // Predicated region
      $region33: #{dnn_activations_vgg16_layer11.1} parent=11 // pred_check
        %p309 = pneg %p169
      $region34: #{dnn_activations_vgg16_layer11.1} parent=11 // pred_check_branch
        %311 = sbr.rel (%p309) target = $region36
      $region35: #{dnn_activations_vgg16_layer11.1} parent=11 // pred_region
        _
      $region36: #{dnn_activations_vgg16_layer11.1} parent=11 // pred_fallthru
        _
      // Predicated region
      $region37: #{dnn_activations_vgg16_layer11.1} parent=11 // pred_check
        %p312 = pneg %p190
      $region38: #{dnn_activations_vgg16_layer11.1} parent=11 // pred_check_branch
        %314 = sbr.rel (%p312) target = $region40
      $region39: #{dnn_activations_vgg16_layer11.1} parent=11 // pred_region
        _
      $region40: #{dnn_activations_vgg16_layer11.1} parent=11 // pred_fallthru
        _
      // Predicated region
      $region41: #{dnn_activations_vgg16_layer11.1} parent=11 // pred_check
        %p315 = pneg %p211
      $region42: #{dnn_activations_vgg16_layer11.1} parent=11 // pred_check_branch
        %317 = sbr.rel (%p315) target = $region44
      $region43: #{dnn_activations_vgg16_layer11.1} parent=11 // pred_region
        _
      $region44: #{dnn_activations_vgg16_layer11.1} parent=11 // pred_fallthru
        _
      // Predicated region
      $region45: #{dnn_activations_vgg16_layer11.1} parent=11 // pred_check
        %p318 = pneg %p232
      $region46: #{dnn_activations_vgg16_layer11.1} parent=11 // pred_check_branch
        %320 = sbr.rel (%p318) target = $region48
      $region47: #{dnn_activations_vgg16_layer11.1} parent=11 // pred_region
        _
      $region48: #{dnn_activations_vgg16_layer11.1} parent=11 // pred_fallthru
        _
      // Predicated region
      $region49: #{dnn_activations_vgg16_layer11.1} parent=11 // pred_check
        %p321 = pneg %p253
      $region50: #{dnn_activations_vgg16_layer11.1} parent=11 // pred_check_branch
        %323 = sbr.rel (%p321) target = $region52
      $region51: #{dnn_activations_vgg16_layer11.1} parent=11 // pred_region
        _
      $region52: #{dnn_activations_vgg16_layer11.1} parent=11 // pred_fallthru
        _
    $region12: #{dnn_activations_vgg16_layer11.1} parent=5 // pred_fallthru
      _
    %p324 = scmp.lt.s32.totalorder %s17, 2
    // Predicated region
    $region53: #{dnn_activations_vgg16_layer11.1} parent=5 // pred_check
      %p325 = pneg %p324
    $region54: #{dnn_activations_vgg16_layer11.1} parent=5 // pred_check_branch
      %327 = sbr.rel (%p325) target = $region56
    $region55: #{dnn_activations_vgg16_layer11.1} parent=5 // pred_region
      // Predicated region
      $region57: #{dnn_activations_vgg16_layer11.1} parent=55 // pred_check
        %p328 = pneg %p37
      $region58: #{dnn_activations_vgg16_layer11.1} parent=55 // pred_check_branch
        %330 = sbr.rel (%p328) target = $region60
      $region59: #{dnn_activations_vgg16_layer11.1} parent=55 // pred_region
        %p331 = scmp.lt.s32.totalorder %s17, 1
        %s332 = scalar_select %p331, %s17, 1
        %s333 = smul.addr %s332, 32
        %s334 = smul.addr %s333, 4
        %s335 = scalar_lea.vmem %s0, %s334
      $region60: #{dnn_activations_vgg16_layer11.1} parent=55 // pred_fallthru
        _
    $region56: #{dnn_activations_vgg16_layer11.1} parent=5 // pred_fallthru
      _
    %p336 = scmp.le.s32.totalorder 1, %s17
    %p337 = scmp.lt.s32.totalorder %s17, 3
    %p338 = pnand %p336, %p337
    %p339 = pneg %p338
    // Predicated region
    $region61: #{dnn_activations_vgg16_layer11.1} parent=5 // pred_check
      _
    $region62: #{dnn_activations_vgg16_layer11.1} parent=5 // pred_check_branch
      %341 = sbr.rel (%p338) target = $region64
    $region63: #{dnn_activations_vgg16_layer11.1} parent=5 // pred_region
      %s342 = ssub.s32 %s17, 1
      %p343 = scmp.lt.s32.totalorder %s22, 1
      %s344 = scalar_select %p343, %s22, 1
      %s345 = smul.addr %s344, 32
      %s346 = smul.addr %s345, 4
      %s347 = scalar_lea.vmem %s0, %s346
      %p348 = pneg %p43
      %p349 = pneg %p40
      %p350 = pneg %p64
      %p351 = pneg %p61
      %p352 = pneg %p85
      %p353 = pneg %p82
      %p354 = pneg %p106
      %p355 = pneg %p103
      %p356 = pneg %p127
      %p357 = pneg %p124
      %p358 = pneg %p148
      %p359 = pneg %p145
      %p360 = pneg %p169
      %p361 = pneg %p166
      %p362 = pneg %p190
      %p363 = pneg %p187
      %p364 = pneg %p211
      %p365 = pneg %p208
      %p366 = pneg %p232
      %p367 = pneg %p229
      %p368 = pneg %p253
      %p369 = pneg %p250
      %p370 = pneg %p279
      %p371 = pneg %p276
      %p372 = scmp.lt.s32.totalorder %s22, 1
      %s373 = scalar_select %p372, %s22, 1
      %s374 = smul.addr %s373, 4
      %s375 = smul.addr %s374, 8
      %s376 = scalar_lea.vmem %s11, %s375
      %p377 = scmp.lt.s32.totalorder %s22, 1
      %s378 = scalar_select %p377, %s22, 1
      %s379 = smul.addr %s378, 32
      %s380 = smul.addr %s379, 4
      %s381 = scalar_lea.vmem %s0, %s380
      %p382 = scmp.lt.s32.totalorder %s22, 1
      %s383 = scalar_select %p382, %s22, 1
      %s384 = smul.addr %s383, 4
      %s385 = smul.addr %s384, 8
      %s386 = scalar_lea.vmem %s11, %s385
      %v388 = vld [vmem:[%s381] sm:$0xf]
      %v389 = vld [vmem:[%s381 + $0x4] sm:$0xf]
      %v390 = vld [vmem:[%s381 + $0x8] sm:$0xf]
      %v391 = vld [vmem:[%s381 + $0xc] sm:$0xf]
      %v392 = vld [vmem:[%s381 + $0x10] sm:$0xf]
      %v393 = vld [vmem:[%s381 + $0x14] sm:$0xf]
      %v394 = vld [vmem:[%s381 + $0x18] sm:$0xf]
      %v395 = vld [vmem:[%s381 + $0x1c] sm:$0xf]
      %v396 = vld [vmem:[%s381 + $0x20] sm:$0xf]
      %v397 = vld [vmem:[%s381 + $0x24] sm:$0xf]
      %v398 = vld [vmem:[%s381 + $0x28] sm:$0xf]
      %v399 = vld [vmem:[%s381 + $0x2c] sm:$0xf]
      %v400 = vld [vmem:[%s381 + $0x30] sm:$0xf]
      %v401 = vld [vmem:[%s381 + $0x34] sm:$0xf]
      %v402 = vld [vmem:[%s381 + $0x38] sm:$0xf]
      %v403 = vld [vmem:[%s381 + $0x3c] sm:$0xf]
      %v404 = vld [vmem:[%s381 + $0x40] sm:$0xf]
      %v405 = vld [vmem:[%s381 + $0x44] sm:$0xf]
      %v406 = vld [vmem:[%s381 + $0x48] sm:$0xf]
      %v407 = vld [vmem:[%s381 + $0x4c] sm:$0xf]
      %v408 = vld [vmem:[%s381 + $0x50] sm:$0xf]
      %v409 = vld [vmem:[%s381 + $0x54] sm:$0xf]
      %v410 = vld [vmem:[%s381 + $0x58] sm:$0xf]
      %v411 = vld [vmem:[%s381 + $0x5c] sm:$0xf]
      %v412 = vld [vmem:[%s381 + $0x60] sm:$0xf]
      %v413 = vld [vmem:[%s381 + $0x64] sm:$0xf]
      %v414 = vld [vmem:[%s381 + $0x68] sm:$0xf]
      %v415 = vld [vmem:[%s381 + $0x6c] sm:$0xf]
      %v416 = vld [vmem:[%s381 + $0x70] sm:$0xf]
      %v417 = vld [vmem:[%s381 + $0x74] sm:$0xf]
      %v418 = vld [vmem:[%s381 + $0x78] sm:$0xf]
      %v419 = vld [vmem:[%s381 + $0x7c] sm:$0xf]
      %v420 = vld [vmem:[%s1] sm:$0xf]
      %v421 = vld [vmem:[%s1 + $0x4] sm:$0xf]
      %v422 = vld [vmem:[%s1 + $0x8] sm:$0xf]
      %v423 = vld [vmem:[%s1 + $0xc] sm:$0x3]
      %v424 = vld [vmem:[%s2] sm:$0x1]
      %v426 = vlaneseq
      %v427 = vshrl.u32 %v426, 7
      %v428 = vsub.s32 0, %v427
      %v429 = vrot.slane %v424, %v428
      %v463 = vunpack.c.l.b16 %v388
      %v464 = vunpack.c.l.b16 %v389
      %v465 = vunpack.c.l.b16 %v390
      %v466 = vunpack.c.l.b16 %v391
      %v467 = vunpack.c.l.b16 %v392
      %v468 = vunpack.c.l.b16 %v393
      %v469 = vunpack.c.l.b16 %v394
      %v470 = vunpack.c.l.b16 %v395
      %v471 = vunpack.c.l.b16 %v396
      %v472 = vunpack.c.l.b16 %v397
      %v473 = vunpack.c.l.b16 %v398
      %v474 = vunpack.c.l.b16 %v399
      %v475 = vunpack.c.l.b16 %v400
      %v476 = vunpack.c.l.b16 %v401
      %v477 = vunpack.c.l.b16 %v402
      %v478 = vunpack.c.l.b16 %v403
      %v479 = vunpack.c.l.b16 %v404
      %v480 = vunpack.c.l.b16 %v405
      %v481 = vunpack.c.l.b16 %v406
      %v482 = vunpack.c.l.b16 %v407
      %v483 = vunpack.c.l.b16 %v408
      %v484 = vunpack.c.l.b16 %v409
      %v485 = vunpack.c.l.b16 %v410
      %v486 = vunpack.c.l.b16 %v411
      %v487 = vunpack.c.l.b16 %v412
      %v488 = vunpack.c.l.b16 %v413
      %v489 = vunpack.c.l.b16 %v414
      %v490 = vunpack.c.l.b16 %v415
      %v491 = vunpack.c.l.b16 %v416
      %v492 = vunpack.c.l.b16 %v417
      %v493 = vunpack.c.l.b16 %v418
      %v494 = vunpack.c.l.b16 %v419
      %v495 = vpack.c.b16 %v464, %v463
      %v496 = vpack.c.b16 %v466, %v465
      %v497 = vpack.c.b16 %v468, %v467
      %v498 = vpack.c.b16 %v470, %v469
      %v499 = vpack.c.b16 %v472, %v471
      %v500 = vpack.c.b16 %v474, %v473
      %v501 = vpack.c.b16 %v476, %v475
      %v502 = vpack.c.b16 %v478, %v477
      %v503 = vpack.c.b16 %v480, %v479
      %v504 = vpack.c.b16 %v482, %v481
      %v505 = vpack.c.b16 %v484, %v483
      %v506 = vpack.c.b16 %v486, %v485
      %v507 = vpack.c.b16 %v488, %v487
      %v508 = vpack.c.b16 %v490, %v489
      %v509 = vpack.c.b16 %v492, %v491
      %v510 = vpack.c.b16 %v494, %v493
      %v515 = vunpack.c.l.b16 %v420
      %v516 = vunpack.c.l.b16 %v421
      %v517 = vunpack.c.l.b16 %v422
      %v518 = vunpack.c.l.b16 %v423
      %v519 = vpack.c.b16 %v516, %v515
      %v520 = vpack.c.b16 %v518, %v517
      %vm522 = vcmask 220160
      %v524 = vsel %vm522, %v495, 0
      %v527 = vsel %vm522, %v496, 0
      %v530 = vsel %vm522, %v497, 0
      %v533 = vsel %vm522, %v498, 0
      %v536 = vsel %vm522, %v499, 0
      %v539 = vsel %vm522, %v500, 0
      %v542 = vsel %vm522, %v501, 0
      %v545 = vsel %vm522, %v502, 0
      %v548 = vsel %vm522, %v503, 0
      %v551 = vsel %vm522, %v504, 0
      %v554 = vsel %vm522, %v505, 0
      %v557 = vsel %vm522, %v506, 0
      %v560 = vsel %vm522, %v507, 0
      %v563 = vsel %vm522, %v508, 0
      %v566 = vsel %vm522, %v509, 0
      %v569 = vsel %vm522, %v510, 0
      %vm571 = vcmask 1044480
      %vm572 = vcmask 1045504
      %v573 = vsel %vm571, 4294967295, 65535
      %v574 = vsel %vm572, %v573, 0
      %v576 = vand.u32 %v520, %v574
      %578 = vmatprep.subr.bf16.mxu0 0
      %579 = vmatpush1.bf16.msra.mxu0 0
      %580 = vmatprep.subr.bf16.mxu0 0
      %581 = vmatpush1.bf16.msra.mxu0 0
      %582 = vmatprep.subr.bf16.mxu0 0
      %583 = vmatpush1.bf16.msra.mxu0 0
      %584 = vmatprep.subr.bf16.mxu0 0
      %585 = vmatpush1.bf16.msra.mxu0 0
      %586 = vmatprep.subr.bf16.mxu0 0
      %587 = vmatpush1.bf16.msra.mxu0 0
      %588 = vmatprep.subr.bf16.mxu0 0
      %589 = vmatpush1.bf16.msra.mxu0 0
      %590 = vmatprep.subr.bf16.mxu0 0
      %591 = vmatpush1.bf16.msra.mxu0 %v576
      %592 = vmatprep.subr.bf16.mxu0 0
      %593 = vmatpush1.bf16.msra.mxu0 %v519
      %594 = vmatprep.subr.bf16.mxu0 0
      %595 = vmatpush2.bf16.msra.mxu0 0
      %596 = vmatprep.subr.bf16.mxu0 0
      %597 = vmatpush2.bf16.msra.mxu0 0
      %598 = vmatprep.subr.bf16.mxu0 0
      %599 = vmatpush2.bf16.msra.mxu0 0
      %600 = vmatprep.subr.bf16.mxu0 0
      %601 = vmatpush2.bf16.msra.mxu0 0
      %602 = vmatprep.subr.bf16.mxu0 0
      %603 = vmatpush2.bf16.msra.mxu0 0
      %604 = vmatprep.subr.bf16.mxu0 0
      %605 = vmatpush2.bf16.msra.mxu0 0
      %606 = vmatprep.subr.bf16.mxu0 0
      %607 = vmatpush2.bf16.msra.mxu0 0
      %608 = vmatprep.subr.bf16.mxu0 0
      %609 = vmatpush2.bf16.msra.mxu0 0
      %610 = vmatprep.mubr.bf16.mxu0 0
      %611 = vmatmul.mubr.bf16.gmra.mxu0 %v524
      %v612 = vpop.f32.mrf.mxu0
      %v613 = vadd.f32 %v429, %v612
      %v614 = vpop.f32.mrf.mxu0
      %v615 = vpop.f32.mrf.mxu0
      %v616 = vadd.f32 %v429, %v615
      %v617 = vpop.f32.mrf.mxu0
      %618 = vmatprep.mubr.bf16.mxu0 0
      %619 = vmatmul.mubr.bf16.gmra.mxu0 %v527
      %v620 = vpop.f32.mrf.mxu0
      %v621 = vadd.f32 %v429, %v620
      %v622 = vpop.f32.mrf.mxu0
      %v623 = vpop.f32.mrf.mxu0
      %v624 = vadd.f32 %v429, %v623
      %v625 = vpop.f32.mrf.mxu0
      %626 = vmatprep.mubr.bf16.mxu0 0
      %627 = vmatmul.mubr.bf16.gmra.mxu0 %v530
      %v628 = vpop.f32.mrf.mxu0
      %v629 = vadd.f32 %v429, %v628
      %v630 = vpop.f32.mrf.mxu0
      %v631 = vpop.f32.mrf.mxu0
      %v632 = vadd.f32 %v429, %v631
      %v633 = vpop.f32.mrf.mxu0
      %634 = vmatprep.mubr.bf16.mxu0 0
      %635 = vmatmul.mubr.bf16.gmra.mxu0 %v533
      %v636 = vpop.f32.mrf.mxu0
      %v637 = vadd.f32 %v429, %v636
      %v638 = vpop.f32.mrf.mxu0
      %v639 = vpop.f32.mrf.mxu0
      %v640 = vadd.f32 %v429, %v639
      %v641 = vpop.f32.mrf.mxu0
      %642 = vmatprep.mubr.bf16.mxu0 0
      %643 = vmatmul.mubr.bf16.gmra.mxu0 %v536
      %v644 = vpop.f32.mrf.mxu0
      %v645 = vadd.f32 %v429, %v644
      %v646 = vpop.f32.mrf.mxu0
      %v647 = vpop.f32.mrf.mxu0
      %v648 = vadd.f32 %v429, %v647
      %v649 = vpop.f32.mrf.mxu0
      %650 = vmatprep.mubr.bf16.mxu0 0
      %651 = vmatmul.mubr.bf16.gmra.mxu0 %v539
      %v652 = vpop.f32.mrf.mxu0
      %v653 = vadd.f32 %v429, %v652
      %v654 = vpop.f32.mrf.mxu0
      %v655 = vpop.f32.mrf.mxu0
      %v656 = vadd.f32 %v429, %v655
      %v657 = vpop.f32.mrf.mxu0
      %658 = vmatprep.mubr.bf16.mxu0 0
      %659 = vmatmul.mubr.bf16.gmra.mxu0 %v542
      %v660 = vpop.f32.mrf.mxu0
      %v661 = vadd.f32 %v429, %v660
      %v662 = vpop.f32.mrf.mxu0
      %v663 = vpop.f32.mrf.mxu0
      %v664 = vadd.f32 %v429, %v663
      %v665 = vpop.f32.mrf.mxu0
      %666 = vmatprep.mubr.bf16.mxu0 0
      %667 = vmatmul.mubr.bf16.gmra.mxu0 %v545
      %v668 = vpop.f32.mrf.mxu0
      %v669 = vadd.f32 %v429, %v668
      %v670 = vpop.f32.mrf.mxu0
      %v671 = vpop.f32.mrf.mxu0
      %v672 = vadd.f32 %v429, %v671
      %v673 = vpop.f32.mrf.mxu0
      %674 = vmatprep.mubr.bf16.mxu0 0
      %675 = vmatmul.mubr.bf16.gmra.mxu0 %v548
      %v676 = vpop.f32.mrf.mxu0
      %v677 = vadd.f32 %v429, %v676
      %v678 = vpop.f32.mrf.mxu0
      %v679 = vpop.f32.mrf.mxu0
      %v680 = vadd.f32 %v429, %v679
      %v681 = vpop.f32.mrf.mxu0
      %682 = vmatprep.mubr.bf16.mxu0 0
      %683 = vmatmul.mubr.bf16.gmra.mxu0 %v551
      %v684 = vpop.f32.mrf.mxu0
      %v685 = vadd.f32 %v429, %v684
      %v686 = vpop.f32.mrf.mxu0
      %v687 = vpop.f32.mrf.mxu0
      %v688 = vadd.f32 %v429, %v687
      %v689 = vpop.f32.mrf.mxu0
      %690 = vmatprep.mubr.bf16.mxu0 0
      %691 = vmatmul.mubr.bf16.gmra.mxu0 %v554
      %v692 = vpop.f32.mrf.mxu0
      %v693 = vadd.f32 %v429, %v692
      %v694 = vpop.f32.mrf.mxu0
      %v695 = vpop.f32.mrf.mxu0
      %v696 = vadd.f32 %v429, %v695
      %v697 = vpop.f32.mrf.mxu0
      %698 = vmatprep.mubr.bf16.mxu0 0
      %699 = vmatmul.mubr.bf16.gmra.mxu0 %v557
      %v700 = vpop.f32.mrf.mxu0
      %v701 = vadd.f32 %v429, %v700
      %v702 = vpop.f32.mrf.mxu0
      %v703 = vpop.f32.mrf.mxu0
      %v704 = vadd.f32 %v429, %v703
      %v705 = vpop.f32.mrf.mxu0
      %706 = vmatprep.mubr.bf16.mxu0 0
      %707 = vmatmul.mubr.bf16.gmra.mxu0 %v560
      %v708 = vpop.f32.mrf.mxu0
      %v709 = vadd.f32 %v429, %v708
      %v710 = vpop.f32.mrf.mxu0
      %v711 = vpop.f32.mrf.mxu0
      %v712 = vadd.f32 %v429, %v711
      %v713 = vpop.f32.mrf.mxu0
      %714 = vmatprep.mubr.bf16.mxu0 0
      %715 = vmatmul.mubr.bf16.gmra.mxu0 %v563
      %v716 = vpop.f32.mrf.mxu0
      %v717 = vadd.f32 %v429, %v716
      %v718 = vpop.f32.mrf.mxu0
      %v719 = vpop.f32.mrf.mxu0
      %v720 = vadd.f32 %v429, %v719
      %v721 = vpop.f32.mrf.mxu0
      %722 = vmatprep.mubr.bf16.mxu0 0
      %723 = vmatmul.mubr.bf16.gmra.mxu0 %v566
      %v724 = vpop.f32.mrf.mxu0
      %v725 = vadd.f32 %v429, %v724
      %v726 = vpop.f32.mrf.mxu0
      %v727 = vpop.f32.mrf.mxu0
      %v728 = vadd.f32 %v429, %v727
      %v729 = vpop.f32.mrf.mxu0
      %730 = vmatprep.mubr.bf16.mxu0 0
      %731 = vmatmul.mubr.bf16.gmra.mxu0 %v569
      %v732 = vpop.f32.mrf.mxu0
      %v733 = vadd.f32 %v429, %v732
      %v734 = vpop.f32.mrf.mxu0
      %v735 = vpop.f32.mrf.mxu0
      %v736 = vadd.f32 %v429, %v735
      %v737 = vpop.f32.mrf.mxu0
      %738 = vdwg.mxu0
      %v739 = vmax.f32 %v613, 0.0
      %v740 = vmax.f32 %v616, 0.0
      %v741 = vmax.f32 %v621, 0.0
      %v742 = vmax.f32 %v624, 0.0
      %v743 = vmax.f32 %v629, 0.0
      %v744 = vmax.f32 %v632, 0.0
      %v745 = vmax.f32 %v637, 0.0
      %v746 = vmax.f32 %v640, 0.0
      %v747 = vmax.f32 %v645, 0.0
      %v748 = vmax.f32 %v648, 0.0
      %v749 = vmax.f32 %v653, 0.0
      %v750 = vmax.f32 %v656, 0.0
      %v751 = vmax.f32 %v661, 0.0
      %v752 = vmax.f32 %v664, 0.0
      %v753 = vmax.f32 %v669, 0.0
      %v754 = vmax.f32 %v672, 0.0
      %v755 = vmax.f32 %v677, 0.0
      %v756 = vmax.f32 %v680, 0.0
      %v757 = vmax.f32 %v685, 0.0
      %v758 = vmax.f32 %v688, 0.0
      %v759 = vmax.f32 %v693, 0.0
      %v760 = vmax.f32 %v696, 0.0
      %v761 = vmax.f32 %v701, 0.0
      %v762 = vmax.f32 %v704, 0.0
      %v763 = vmax.f32 %v709, 0.0
      %v764 = vmax.f32 %v712, 0.0
      %v765 = vmax.f32 %v717, 0.0
      %v766 = vmax.f32 %v720, 0.0
      %v767 = vmax.f32 %v725, 0.0
      %v768 = vmax.f32 %v728, 0.0
      %v769 = vmax.f32 %v733, 0.0
      %v770 = vmax.f32 %v736, 0.0
      %vm771 = vcmask 523264
      %772 = vst.msk [vmem:[#allocation2] sm:$0xff] %vm771, 0.0
      %773 = vst.msk [vmem:[#allocation2 + $0x8] sm:$0xff] %vm771, 0.0
      %774 = vst.msk [vmem:[#allocation2 + $0x10] sm:$0xff] %vm771, 0.0
      %775 = vst.msk [vmem:[#allocation2 + $0x18] sm:$0xff] %vm771, 0.0
      %776 = vst.msk [vmem:[#allocation2 + $0x20] sm:$0xff] %vm771, 0.0
      %777 = vst.msk [vmem:[#allocation2 + $0x28] sm:$0xff] %vm771, 0.0
      %778 = vst.msk [vmem:[#allocation2 + $0x30] sm:$0xff] %vm771, 0.0
      %779 = vst.msk [vmem:[#allocation2 + $0x38] sm:$0xff] %vm771, 0.0
      %780 = vst.msk [vmem:[#allocation2 + $0x40] sm:$0xff] %vm771, 0.0
      %781 = vst.msk [vmem:[#allocation2 + $0x48] sm:$0xff] %vm771, 0.0
      %782 = vst.msk [vmem:[#allocation2 + $0x50] sm:$0xff] %vm771, 0.0
      %783 = vst.msk [vmem:[#allocation2 + $0x58] sm:$0xff] %vm771, 0.0
      %784 = vst.msk [vmem:[#allocation2 + $0x60] sm:$0xff] %vm771, 0.0
      %785 = vst.msk [vmem:[#allocation2 + $0x68] sm:$0xff] %vm771, 0.0
      %786 = vst.msk [vmem:[#allocation2 + $0x70] sm:$0xff] %vm771, 0.0
      %787 = vst.msk [vmem:[#allocation2 + $0x78] sm:$0xff] %vm771, 0.0
      %788 = vst.msk [vmem:[#allocation2 + $0x80] sm:$0xff] %vm771, 0.0
      %789 = vst.msk [vmem:[#allocation2 + $0x88] sm:$0xff] %vm771, 0.0
      %790 = vst.msk [vmem:[#allocation2 + $0x90] sm:$0xff] %vm771, 0.0
      %791 = vst.msk [vmem:[#allocation2 + $0x98] sm:$0xff] %vm771, 0.0
      %792 = vst.msk [vmem:[#allocation2 + $0xa0] sm:$0xff] %vm771, 0.0
      %793 = vst.msk [vmem:[#allocation2 + $0xa8] sm:$0xff] %vm771, 0.0
      %794 = vst.msk [vmem:[#allocation2 + $0xb0] sm:$0xff] %vm771, 0.0
      %795 = vst.msk [vmem:[#allocation2 + $0xb8] sm:$0xff] %vm771, 0.0
      %796 = vst.msk [vmem:[#allocation2 + $0xc0] sm:$0xff] %vm771, 0.0
      %797 = vst.msk [vmem:[#allocation2 + $0xc8] sm:$0xff] %vm771, 0.0
      %798 = vst.msk [vmem:[#allocation2 + $0xd0] sm:$0xff] %vm771, 0.0
      %799 = vst.msk [vmem:[#allocation2 + $0xd8] sm:$0xff] %vm771, 0.0
      %800 = vst.msk [vmem:[#allocation2 + $0xe0] sm:$0xff] %vm771, 0.0
      %801 = vst.msk [vmem:[#allocation2 + $0xe8] sm:$0xff] %vm771, 0.0
      %802 = vst.msk [vmem:[#allocation2 + $0xf0] sm:$0xff] %vm771, 0.0
      %803 = vst.msk [vmem:[#allocation2 + $0xf8] sm:$0xff] %vm771, 0.0
      %804 = vst.msk [vmem:[#allocation2 + $0x100] sm:$0xff] %vm771, 0.0
      %805 = vst.msk [vmem:[#allocation2 + $0x108] sm:$0xff] %vm771, 0.0
      %806 = vst.msk [vmem:[#allocation2 + $0x110] sm:$0xff] %vm771, 0.0
      %807 = vst.msk [vmem:[#allocation2 + $0x118] sm:$0xff] %vm771, 0.0
      %808 = vst.msk [vmem:[#allocation2 + $0x120] sm:$0xff] %vm771, 0.0
      %809 = vst.msk [vmem:[#allocation2 + $0x128] sm:$0xff] %vm771, 0.0
      %810 = vst.msk [vmem:[#allocation2 + $0x130] sm:$0xff] %vm771, 0.0
      %811 = vst.msk [vmem:[#allocation2 + $0x138] sm:$0xff] %vm771, 0.0
      %812 = vst.msk [vmem:[#allocation2 + $0x140] sm:$0xff] %vm771, 0.0
      %813 = vst.msk [vmem:[#allocation2 + $0x148] sm:$0xff] %vm771, 0.0
      %814 = vst.msk [vmem:[#allocation2 + $0x150] sm:$0xff] %vm771, 0.0
      %815 = vst.msk [vmem:[#allocation2 + $0x158] sm:$0xff] %vm771, 0.0
      %816 = vst.msk [vmem:[#allocation2 + $0x160] sm:$0xff] %vm771, 0.0
      %817 = vst.msk [vmem:[#allocation2 + $0x168] sm:$0xff] %vm771, 0.0
      %818 = vst.msk [vmem:[#allocation2 + $0x170] sm:$0xff] %vm771, 0.0
      %819 = vst.msk [vmem:[#allocation2 + $0x178] sm:$0xff] %vm771, 0.0
      %820 = vst.msk [vmem:[#allocation2 + $0x180] sm:$0xff] %vm771, 0.0
      %821 = vst.msk [vmem:[#allocation2 + $0x188] sm:$0xff] %vm771, 0.0
      %822 = vst.msk [vmem:[#allocation2 + $0x190] sm:$0xff] %vm771, 0.0
      %823 = vst.msk [vmem:[#allocation2 + $0x198] sm:$0xff] %vm771, 0.0
      %824 = vst.msk [vmem:[#allocation2 + $0x1a0] sm:$0xff] %vm771, 0.0
      %825 = vst.msk [vmem:[#allocation2 + $0x1a8] sm:$0xff] %vm771, 0.0
      %826 = vst.msk [vmem:[#allocation2 + $0x1b0] sm:$0xff] %vm771, 0.0
      %827 = vst.msk [vmem:[#allocation2 + $0x1b8] sm:$0xff] %vm771, 0.0
      %828 = vst.msk [vmem:[#allocation2 + $0x1c0] sm:$0xff] %vm771, 0.0
      %829 = vst.msk [vmem:[#allocation2 + $0x1c8] sm:$0xff] %vm771, 0.0
      %830 = vst.msk [vmem:[#allocation2 + $0x1d0] sm:$0xff] %vm771, 0.0
      %831 = vst.msk [vmem:[#allocation2 + $0x1d8] sm:$0xff] %vm771, 0.0
      %832 = vst.msk [vmem:[#allocation2 + $0x1e0] sm:$0xff] %vm771, 0.0
      %833 = vst.msk [vmem:[#allocation2 + $0x1e8] sm:$0xff] %vm771, 0.0
      %834 = vst.msk [vmem:[#allocation2 + $0x1f0] sm:$0xff] %vm771, 0.0
      %835 = vst.msk [vmem:[#allocation2 + $0x1f8] sm:$0xff] %vm771, 0.0
      %836 = vst.msk [vmem:[#allocation2 + $0x200] sm:$0xff] %vm771, 0.0
      %837 = vst.msk [vmem:[#allocation2 + $0x208] sm:$0xff] %vm771, 0.0
      %838 = vst.msk [vmem:[#allocation2 + $0x210] sm:$0xff] %vm771, 0.0
      %839 = vst.msk [vmem:[#allocation2 + $0x218] sm:$0xff] %vm771, 0.0
      %840 = vst.msk [vmem:[#allocation2 + $0x220] sm:$0xff] %vm771, 0.0
      %841 = vst.msk [vmem:[#allocation2 + $0x228] sm:$0xff] %vm771, 0.0
      %842 = vst.msk [vmem:[#allocation2 + $0x230] sm:$0xff] %vm771, 0.0
      %843 = vst.msk [vmem:[#allocation2 + $0x238] sm:$0xff] %vm771, 0.0
      %s844 = scalar_lea.vmem [#allocation2], 32
      %845 = vst.msk [vmem:[%s844 + $0x8] sm:$0xff] %vm771, %v739
      %846 = vst.msk [vmem:[%s844 + $0x10] sm:$0xff] %vm771, %v740
      %847 = vst.msk [vmem:[%s844 + $0x28] sm:$0xff] %vm771, %v741
      %848 = vst.msk [vmem:[%s844 + $0x30] sm:$0xff] %vm771, %v742
      %849 = vst.msk [vmem:[%s844 + $0x48] sm:$0xff] %vm771, %v743
      %850 = vst.msk [vmem:[%s844 + $0x50] sm:$0xff] %vm771, %v744
      %851 = vst.msk [vmem:[%s844 + $0x68] sm:$0xff] %vm771, %v745
      %852 = vst.msk [vmem:[%s844 + $0x70] sm:$0xff] %vm771, %v746
      %853 = vst.msk [vmem:[%s844 + $0x88] sm:$0xff] %vm771, %v747
      %854 = vst.msk [vmem:[%s844 + $0x90] sm:$0xff] %vm771, %v748
      %855 = vst.msk [vmem:[%s844 + $0xa8] sm:$0xff] %vm771, %v749
      %856 = vst.msk [vmem:[%s844 + $0xb0] sm:$0xff] %vm771, %v750
      %857 = vst.msk [vmem:[%s844 + $0xc8] sm:$0xff] %vm771, %v751
      %858 = vst.msk [vmem:[%s844 + $0xd0] sm:$0xff] %vm771, %v752
      %859 = vst.msk [vmem:[%s844 + $0xe8] sm:$0xff] %vm771, %v753
      %860 = vst.msk [vmem:[%s844 + $0xf0] sm:$0xff] %vm771, %v754
      %861 = vst.msk [vmem:[%s844 + $0x108] sm:$0xff] %vm771, %v755
      %862 = vst.msk [vmem:[%s844 + $0x110] sm:$0xff] %vm771, %v756
      %863 = vst.msk [vmem:[%s844 + $0x128] sm:$0xff] %vm771, %v757
      %864 = vst.msk [vmem:[%s844 + $0x130] sm:$0xff] %vm771, %v758
      %865 = vst.msk [vmem:[%s844 + $0x148] sm:$0xff] %vm771, %v759
      %866 = vst.msk [vmem:[%s844 + $0x150] sm:$0xff] %vm771, %v760
      %867 = vst.msk [vmem:[%s844 + $0x168] sm:$0xff] %vm771, %v761
      %868 = vst.msk [vmem:[%s844 + $0x170] sm:$0xff] %vm771, %v762
      %869 = vst.msk [vmem:[%s844 + $0x188] sm:$0xff] %vm771, %v763
      %870 = vst.msk [vmem:[%s844 + $0x190] sm:$0xff] %vm771, %v764
      %871 = vst.msk [vmem:[%s844 + $0x1a8] sm:$0xff] %vm771, %v765
      %872 = vst.msk [vmem:[%s844 + $0x1b0] sm:$0xff] %vm771, %v766
      %873 = vst.msk [vmem:[%s844 + $0x1c8] sm:$0xff] %vm771, %v767
      %874 = vst.msk [vmem:[%s844 + $0x1d0] sm:$0xff] %vm771, %v768
      %875 = vst.msk [vmem:[%s844 + $0x1e8] sm:$0xff] %vm771, %v769
      %876 = vst.msk [vmem:[%s844 + $0x1f0] sm:$0xff] %vm771, %v770
      %v877 = vld [vmem:[%s4] sm:$0x1]
      %v879 = vlaneseq
      %v880 = vshrl.u32 %v879, 7
      %v881 = vsub.s32 0, %v880
      %v882 = vrot.slane %v877, %v881
      %v884 = vld [vmem:[#allocation2 + $0x7] sm:$0xff]
      %v885 = vld [vmem:[#allocation2 + $0xf] sm:$0xff]
      %v886 = vld [vmem:[#allocation2 + $0x27] sm:$0xff]
      %v887 = vld [vmem:[#allocation2 + $0x2f] sm:$0xff]
      %v888 = vld [vmem:[#allocation2 + $0x47] sm:$0xff]
      %v889 = vld [vmem:[#allocation2 + $0x4f] sm:$0xff]
      %v890 = vld [vmem:[#allocation2 + $0x67] sm:$0xff]
      %v891 = vld [vmem:[#allocation2 + $0x6f] sm:$0xff]
      %v892 = vld [vmem:[#allocation2 + $0x87] sm:$0xff]
      %v893 = vld [vmem:[#allocation2 + $0x8f] sm:$0xff]
      %v894 = vld [vmem:[#allocation2 + $0xa7] sm:$0xff]
      %v895 = vld [vmem:[#allocation2 + $0xaf] sm:$0xff]
      %v896 = vld [vmem:[#allocation2 + $0xc7] sm:$0xff]
      %v897 = vld [vmem:[#allocation2 + $0xcf] sm:$0xff]
      %v898 = vld [vmem:[#allocation2 + $0xe7] sm:$0xff]
      %v899 = vld [vmem:[#allocation2 + $0xef] sm:$0xff]
      %v900 = vld [vmem:[#allocation2 + $0x107] sm:$0xff]
      %v901 = vld [vmem:[#allocation2 + $0x10f] sm:$0xff]
      %v902 = vld [vmem:[#allocation2 + $0x127] sm:$0xff]
      %v903 = vld [vmem:[#allocation2 + $0x12f] sm:$0xff]
      %v904 = vld [vmem:[#allocation2 + $0x147] sm:$0xff]
      %v905 = vld [vmem:[#allocation2 + $0x14f] sm:$0xff]
      %v906 = vld [vmem:[#allocation2 + $0x167] sm:$0xff]
      %v907 = vld [vmem:[#allocation2 + $0x16f] sm:$0xff]
      %v908 = vld [vmem:[#allocation2 + $0x187] sm:$0xff]
      %v909 = vld [vmem:[#allocation2 + $0x18f] sm:$0xff]
      %v910 = vld [vmem:[#allocation2 + $0x1a7] sm:$0xff]
      %v911 = vld [vmem:[#allocation2 + $0x1af] sm:$0xff]
      %v912 = vld [vmem:[#allocation2 + $0x1c7] sm:$0xff]
      %v913 = vld [vmem:[#allocation2 + $0x1cf] sm:$0xff]
      %v914 = vld [vmem:[#allocation2 + $0x1e7] sm:$0xff]
      %v915 = vld [vmem:[#allocation2 + $0x1ef] sm:$0xff]
      %v916 = vpack.c.bf16 %v885, %v884
      %v917 = vpack.c.bf16 %v887, %v886
      %v918 = vpack.c.bf16 %v889, %v888
      %v919 = vpack.c.bf16 %v891, %v890
      %v920 = vpack.c.bf16 %v893, %v892
      %v921 = vpack.c.bf16 %v895, %v894
      %v922 = vpack.c.bf16 %v897, %v896
      %v923 = vpack.c.bf16 %v899, %v898
      %v924 = vpack.c.bf16 %v901, %v900
      %v925 = vpack.c.bf16 %v903, %v902
      %v926 = vpack.c.bf16 %v905, %v904
      %v927 = vpack.c.bf16 %v907, %v906
      %v928 = vpack.c.bf16 %v909, %v908
      %v929 = vpack.c.bf16 %v911, %v910
      %v930 = vpack.c.bf16 %v913, %v912
      %v931 = vpack.c.bf16 %v915, %v914
      %v932 = vld [vmem:[%s3] sm:$0xf]
      %v933 = vld [vmem:[%s3 + $0x4] sm:$0xf]
      %v934 = vld [vmem:[%s3 + $0x8] sm:$0xf]
      %v935 = vld [vmem:[%s3 + $0xc] sm:$0xf]
      %v936 = vld [vmem:[%s3 + $0x10] sm:$0xf]
      %v937 = vld [vmem:[%s3 + $0x14] sm:$0xf]
      %v938 = vld [vmem:[%s3 + $0x18] sm:$0xf]
      %v939 = vld [vmem:[%s3 + $0x1c] sm:$0xf]
      %v948 = vunpack.c.l.b16 %v932
      %v949 = vunpack.c.l.b16 %v933
      %v950 = vunpack.c.l.b16 %v934
      %v951 = vunpack.c.l.b16 %v935
      %v952 = vunpack.c.l.b16 %v936
      %v953 = vunpack.c.l.b16 %v937
      %v954 = vunpack.c.l.b16 %v938
      %v955 = vunpack.c.l.b16 %v939
      %v956 = vpack.c.b16 %v949, %v948
      %v957 = vpack.c.b16 %v951, %v950
      %v958 = vpack.c.b16 %v953, %v952
      %v959 = vpack.c.b16 %v955, %v954
      %v965 = vsel %vm771, %v916, 0
      %v968 = vsel %vm771, %v917, 0
      %v971 = vsel %vm771, %v918, 0
      %v974 = vsel %vm771, %v919, 0
      %v977 = vsel %vm771, %v920, 0
      %v980 = vsel %vm771, %v921, 0
      %v983 = vsel %vm771, %v922, 0
      %v986 = vsel %vm771, %v923, 0
      %v989 = vsel %vm771, %v924, 0
      %v992 = vsel %vm771, %v925, 0
      %v995 = vsel %vm771, %v926, 0
      %v998 = vsel %vm771, %v927, 0
      %v1001 = vsel %vm771, %v928, 0
      %v1004 = vsel %vm771, %v929, 0
      %v1007 = vsel %vm771, %v930, 0
      %v1010 = vsel %vm771, %v931, 0
      %1012 = vmatprep.subr.bf16.mxu0 0
      %1013 = vmatpush1.bf16.msra.mxu0 0
      %1014 = vmatprep.subr.bf16.mxu0 0
      %1015 = vmatpush1.bf16.msra.mxu0 0
      %1016 = vmatprep.subr.bf16.mxu0 0
      %1017 = vmatpush1.bf16.msra.mxu0 0
      %1018 = vmatprep.subr.bf16.mxu0 0
      %1019 = vmatpush1.bf16.msra.mxu0 0
      %1020 = vmatprep.subr.bf16.mxu0 0
      %1021 = vmatpush1.bf16.msra.mxu0 %v959
      %1022 = vmatprep.subr.bf16.mxu0 0
      %1023 = vmatpush1.bf16.msra.mxu0 %v958
      %1024 = vmatprep.subr.bf16.mxu0 0
      %1025 = vmatpush1.bf16.msra.mxu0 %v957
      %1026 = vmatprep.subr.bf16.mxu0 0
      %1027 = vmatpush1.bf16.msra.mxu0 %v956
      %1028 = vmatprep.subr.bf16.mxu0 0
      %1029 = vmatpush2.bf16.msra.mxu0 0
      %1030 = vmatprep.subr.bf16.mxu0 0
      %1031 = vmatpush2.bf16.msra.mxu0 0
      %1032 = vmatprep.subr.bf16.mxu0 0
      %1033 = vmatpush2.bf16.msra.mxu0 0
      %1034 = vmatprep.subr.bf16.mxu0 0
      %1035 = vmatpush2.bf16.msra.mxu0 0
      %1036 = vmatprep.subr.bf16.mxu0 0
      %1037 = vmatpush2.bf16.msra.mxu0 0
      %1038 = vmatprep.subr.bf16.mxu0 0
      %1039 = vmatpush2.bf16.msra.mxu0 0
      %1040 = vmatprep.subr.bf16.mxu0 0
      %1041 = vmatpush2.bf16.msra.mxu0 0
      %1042 = vmatprep.subr.bf16.mxu0 0
      %1043 = vmatpush2.bf16.msra.mxu0 0
      %1044 = vmatprep.mubr.bf16.mxu0 0
      %1045 = vmatmul.mubr.bf16.gmra.mxu0 %v965
      %v1046 = vpop.f32.mrf.mxu0
      %v1047 = vadd.f32 0.0, %v1046
      %v1048 = vpop.f32.mrf.mxu0
      %v1049 = vpop.f32.mrf.mxu0
      %v1050 = vadd.f32 0.0, %v1049
      %v1051 = vpop.f32.mrf.mxu0
      %1052 = vmatprep.mubr.bf16.mxu0 0
      %1053 = vmatmul.mubr.bf16.gmra.mxu0 %v968
      %v1054 = vpop.f32.mrf.mxu0
      %v1055 = vadd.f32 0.0, %v1054
      %v1056 = vpop.f32.mrf.mxu0
      %v1057 = vpop.f32.mrf.mxu0
      %v1058 = vadd.f32 0.0, %v1057
      %v1059 = vpop.f32.mrf.mxu0
      %1060 = vmatprep.mubr.bf16.mxu0 0
      %1061 = vmatmul.mubr.bf16.gmra.mxu0 %v971
      %v1062 = vpop.f32.mrf.mxu0
      %v1063 = vadd.f32 0.0, %v1062
      %v1064 = vpop.f32.mrf.mxu0
      %v1065 = vpop.f32.mrf.mxu0
      %v1066 = vadd.f32 0.0, %v1065
      %v1067 = vpop.f32.mrf.mxu0
      %1068 = vmatprep.mubr.bf16.mxu0 0
      %1069 = vmatmul.mubr.bf16.gmra.mxu0 %v974
      %v1070 = vpop.f32.mrf.mxu0
      %v1071 = vadd.f32 0.0, %v1070
      %v1072 = vpop.f32.mrf.mxu0
      %v1073 = vpop.f32.mrf.mxu0
      %v1074 = vadd.f32 0.0, %v1073
      %v1075 = vpop.f32.mrf.mxu0
      %1076 = vmatprep.mubr.bf16.mxu0 0
      %1077 = vmatmul.mubr.bf16.gmra.mxu0 %v977
      %v1078 = vpop.f32.mrf.mxu0
      %v1079 = vadd.f32 0.0, %v1078
      %v1080 = vpop.f32.mrf.mxu0
      %v1081 = vpop.f32.mrf.mxu0
      %v1082 = vadd.f32 0.0, %v1081
      %v1083 = vpop.f32.mrf.mxu0
      %1084 = vmatprep.mubr.bf16.mxu0 0
      %1085 = vmatmul.mubr.bf16.gmra.mxu0 %v980
      %v1086 = vpop.f32.mrf.mxu0
      %v1087 = vadd.f32 0.0, %v1086
      %v1088 = vpop.f32.mrf.mxu0
      %v1089 = vpop.f32.mrf.mxu0
      %v1090 = vadd.f32 0.0, %v1089
      %v1091 = vpop.f32.mrf.mxu0
      %1092 = vmatprep.mubr.bf16.mxu0 0
      %1093 = vmatmul.mubr.bf16.gmra.mxu0 %v983
      %v1094 = vpop.f32.mrf.mxu0
      %v1095 = vadd.f32 0.0, %v1094
      %v1096 = vpop.f32.mrf.mxu0
      %v1097 = vpop.f32.mrf.mxu0
      %v1098 = vadd.f32 0.0, %v1097
      %v1099 = vpop.f32.mrf.mxu0
      %1100 = vmatprep.mubr.bf16.mxu0 0
      %1101 = vmatmul.mubr.bf16.gmra.mxu0 %v986
      %v1102 = vpop.f32.mrf.mxu0
      %v1103 = vadd.f32 0.0, %v1102
      %v1104 = vpop.f32.mrf.mxu0
      %v1105 = vpop.f32.mrf.mxu0
      %v1106 = vadd.f32 0.0, %v1105
      %v1107 = vpop.f32.mrf.mxu0
      %1108 = vmatprep.mubr.bf16.mxu0 0
      %1109 = vmatmul.mubr.bf16.gmra.mxu0 %v989
      %v1110 = vpop.f32.mrf.mxu0
      %v1111 = vadd.f32 0.0, %v1110
      %v1112 = vpop.f32.mrf.mxu0
      %v1113 = vpop.f32.mrf.mxu0
      %v1114 = vadd.f32 0.0, %v1113
      %v1115 = vpop.f32.mrf.mxu0
      %1116 = vmatprep.mubr.bf16.mxu0 0
      %1117 = vmatmul.mubr.bf16.gmra.mxu0 %v992
      %v1118 = vpop.f32.mrf.mxu0
      %v1119 = vadd.f32 0.0, %v1118
      %v1120 = vpop.f32.mrf.mxu0
      %v1121 = vpop.f32.mrf.mxu0
      %v1122 = vadd.f32 0.0, %v1121
      %v1123 = vpop.f32.mrf.mxu0
      %1124 = vmatprep.mubr.bf16.mxu0 0
      %1125 = vmatmul.mubr.bf16.gmra.mxu0 %v995
      %v1126 = vpop.f32.mrf.mxu0
      %v1127 = vadd.f32 0.0, %v1126
      %v1128 = vpop.f32.mrf.mxu0
      %v1129 = vpop.f32.mrf.mxu0
      %v1130 = vadd.f32 0.0, %v1129
      %v1131 = vpop.f32.mrf.mxu0
      %1132 = vmatprep.mubr.bf16.mxu0 0
      %1133 = vmatmul.mubr.bf16.gmra.mxu0 %v998
      %v1134 = vpop.f32.mrf.mxu0
      %v1135 = vadd.f32 0.0, %v1134
      %v1136 = vpop.f32.mrf.mxu0
      %v1137 = vpop.f32.mrf.mxu0
      %v1138 = vadd.f32 0.0, %v1137
      %v1139 = vpop.f32.mrf.mxu0
      %1140 = vmatprep.mubr.bf16.mxu0 0
      %1141 = vmatmul.mubr.bf16.gmra.mxu0 %v1001
      %v1142 = vpop.f32.mrf.mxu0
      %v1143 = vadd.f32 0.0, %v1142
      %v1144 = vpop.f32.mrf.mxu0
      %v1145 = vpop.f32.mrf.mxu0
      %v1146 = vadd.f32 0.0, %v1145
      %v1147 = vpop.f32.mrf.mxu0
      %1148 = vmatprep.mubr.bf16.mxu0 0
      %1149 = vmatmul.mubr.bf16.gmra.mxu0 %v1004
      %v1150 = vpop.f32.mrf.mxu0
      %v1151 = vadd.f32 0.0, %v1150
      %v1152 = vpop.f32.mrf.mxu0
      %v1153 = vpop.f32.mrf.mxu0
      %v1154 = vadd.f32 0.0, %v1153
      %v1155 = vpop.f32.mrf.mxu0
      %1156 = vmatprep.mubr.bf16.mxu0 0
      %1157 = vmatmul.mubr.bf16.gmra.mxu0 %v1007
      %v1158 = vpop.f32.mrf.mxu0
      %v1159 = vadd.f32 0.0, %v1158
      %v1160 = vpop.f32.mrf.mxu0
      %v1161 = vpop.f32.mrf.mxu0
      %v1162 = vadd.f32 0.0, %v1161
      %v1163 = vpop.f32.mrf.mxu0
      %1164 = vmatprep.mubr.bf16.mxu0 0
      %1165 = vmatmul.mubr.bf16.gmra.mxu0 %v1010
      %v1166 = vpop.f32.mrf.mxu0
      %v1167 = vadd.f32 0.0, %v1166
      %v1168 = vpop.f32.mrf.mxu0
      %v1169 = vpop.f32.mrf.mxu0
      %v1170 = vadd.f32 0.0, %v1169
      %v1171 = vpop.f32.mrf.mxu0
      %1172 = vdwg.mxu0
      %v1173 = vadd.f32 %v882, %v1047
      %v1174 = vadd.f32 %v882, %v1050
      %v1175 = vadd.f32 %v882, %v1055
      %v1176 = vadd.f32 %v882, %v1058
      %v1177 = vadd.f32 %v882, %v1063
      %v1178 = vadd.f32 %v882, %v1066
      %v1179 = vadd.f32 %v882, %v1071
      %v1180 = vadd.f32 %v882, %v1074
      %v1181 = vadd.f32 %v882, %v1079
      %v1182 = vadd.f32 %v882, %v1082
      %v1183 = vadd.f32 %v882, %v1087
      %v1184 = vadd.f32 %v882, %v1090
      %v1185 = vadd.f32 %v882, %v1095
      %v1186 = vadd.f32 %v882, %v1098
      %v1187 = vadd.f32 %v882, %v1103
      %v1188 = vadd.f32 %v882, %v1106
      %v1189 = vadd.f32 %v882, %v1111
      %v1190 = vadd.f32 %v882, %v1114
      %v1191 = vadd.f32 %v882, %v1119
      %v1192 = vadd.f32 %v882, %v1122
      %v1193 = vadd.f32 %v882, %v1127
      %v1194 = vadd.f32 %v882, %v1130
      %v1195 = vadd.f32 %v882, %v1135
      %v1196 = vadd.f32 %v882, %v1138
      %v1197 = vadd.f32 %v882, %v1143
      %v1198 = vadd.f32 %v882, %v1146
      %v1199 = vadd.f32 %v882, %v1151
      %v1200 = vadd.f32 %v882, %v1154
      %v1201 = vadd.f32 %v882, %v1159
      %v1202 = vadd.f32 %v882, %v1162
      %v1203 = vadd.f32 %v882, %v1167
      %v1204 = vadd.f32 %v882, %v1170
      %v1205 = vld [vmem:[#allocation2 + $0x8] sm:$0xff]
      %v1206 = vld [vmem:[#allocation2 + $0x10] sm:$0xff]
      %v1207 = vld [vmem:[#allocation2 + $0x28] sm:$0xff]
      %v1208 = vld [vmem:[#allocation2 + $0x30] sm:$0xff]
      %v1209 = vld [vmem:[#allocation2 + $0x48] sm:$0xff]
      %v1210 = vld [vmem:[#allocation2 + $0x50] sm:$0xff]
      %v1211 = vld [vmem:[#allocation2 + $0x68] sm:$0xff]
      %v1212 = vld [vmem:[#allocation2 + $0x70] sm:$0xff]
      %v1213 = vld [vmem:[#allocation2 + $0x88] sm:$0xff]
      %v1214 = vld [vmem:[#allocation2 + $0x90] sm:$0xff]
      %v1215 = vld [vmem:[#allocation2 + $0xa8] sm:$0xff]
      %v1216 = vld [vmem:[#allocation2 + $0xb0] sm:$0xff]
      %v1217 = vld [vmem:[#allocation2 + $0xc8] sm:$0xff]
      %v1218 = vld [vmem:[#allocation2 + $0xd0] sm:$0xff]
      %v1219 = vld [vmem:[#allocation2 + $0xe8] sm:$0xff]
      %v1220 = vld [vmem:[#allocation2 + $0xf0] sm:$0xff]
      %v1221 = vld [vmem:[#allocation2 + $0x108] sm:$0xff]
      %v1222 = vld [vmem:[#allocation2 + $0x110] sm:$0xff]
      %v1223 = vld [vmem:[#allocation2 + $0x128] sm:$0xff]
      %v1224 = vld [vmem:[#allocation2 + $0x130] sm:$0xff]
      %v1225 = vld [vmem:[#allocation2 + $0x148] sm:$0xff]
      %v1226 = vld [vmem:[#allocation2 + $0x150] sm:$0xff]
      %v1227 = vld [vmem:[#allocation2 + $0x168] sm:$0xff]
      %v1228 = vld [vmem:[#allocation2 + $0x170] sm:$0xff]
      %v1229 = vld [vmem:[#allocation2 + $0x188] sm:$0xff]
      %v1230 = vld [vmem:[#allocation2 + $0x190] sm:$0xff]
      %v1231 = vld [vmem:[#allocation2 + $0x1a8] sm:$0xff]
      %v1232 = vld [vmem:[#allocation2 + $0x1b0] sm:$0xff]
      %v1233 = vld [vmem:[#allocation2 + $0x1c8] sm:$0xff]
      %v1234 = vld [vmem:[#allocation2 + $0x1d0] sm:$0xff]
      %v1235 = vld [vmem:[#allocation2 + $0x1e8] sm:$0xff]
      %v1236 = vld [vmem:[#allocation2 + $0x1f0] sm:$0xff]
      %v1237 = vpack.c.bf16 %v1206, %v1205
      %v1238 = vpack.c.bf16 %v1208, %v1207
      %v1239 = vpack.c.bf16 %v1210, %v1209
      %v1240 = vpack.c.bf16 %v1212, %v1211
      %v1241 = vpack.c.bf16 %v1214, %v1213
      %v1242 = vpack.c.bf16 %v1216, %v1215
      %v1243 = vpack.c.bf16 %v1218, %v1217
      %v1244 = vpack.c.bf16 %v1220, %v1219
      %v1245 = vpack.c.bf16 %v1222, %v1221
      %v1246 = vpack.c.bf16 %v1224, %v1223
      %v1247 = vpack.c.bf16 %v1226, %v1225
      %v1248 = vpack.c.bf16 %v1228, %v1227
      %v1249 = vpack.c.bf16 %v1230, %v1229
      %v1250 = vpack.c.bf16 %v1232, %v1231
      %v1251 = vpack.c.bf16 %v1234, %v1233
      %v1252 = vpack.c.bf16 %v1236, %v1235
      %s1253 = scalar_lea.vmem %s3, 32
      %v1254 = vld [vmem:[%s1253] sm:$0xf]
      %v1255 = vld [vmem:[%s1253 + $0x4] sm:$0xf]
      %v1256 = vld [vmem:[%s1253 + $0x8] sm:$0xf]
      %v1257 = vld [vmem:[%s1253 + $0xc] sm:$0xf]
      %v1258 = vld [vmem:[%s1253 + $0x10] sm:$0xf]
      %v1259 = vld [vmem:[%s1253 + $0x14] sm:$0xf]
      %v1260 = vld [vmem:[%s1253 + $0x18] sm:$0xf]
      %v1261 = vld [vmem:[%s1253 + $0x1c] sm:$0xf]
      %v1270 = vunpack.c.l.b16 %v1254
      %v1271 = vunpack.c.l.b16 %v1255
      %v1272 = vunpack.c.l.b16 %v1256
      %v1273 = vunpack.c.l.b16 %v1257
      %v1274 = vunpack.c.l.b16 %v1258
      %v1275 = vunpack.c.l.b16 %v1259
      %v1276 = vunpack.c.l.b16 %v1260
      %v1277 = vunpack.c.l.b16 %v1261
      %v1278 = vpack.c.b16 %v1271, %v1270
      %v1279 = vpack.c.b16 %v1273, %v1272
      %v1280 = vpack.c.b16 %v1275, %v1274
      %v1281 = vpack.c.b16 %v1277, %v1276
      %v1287 = vsel %vm771, %v1237, 0
      %v1290 = vsel %vm771, %v1238, 0
      %v1293 = vsel %vm771, %v1239, 0
      %v1296 = vsel %vm771, %v1240, 0
      %v1299 = vsel %vm771, %v1241, 0
      %v1302 = vsel %vm771, %v1242, 0
      %v1305 = vsel %vm771, %v1243, 0
      %v1308 = vsel %vm771, %v1244, 0
      %v1311 = vsel %vm771, %v1245, 0
      %v1314 = vsel %vm771, %v1246, 0
      %v1317 = vsel %vm771, %v1247, 0
      %v1320 = vsel %vm771, %v1248, 0
      %v1323 = vsel %vm771, %v1249, 0
      %v1326 = vsel %vm771, %v1250, 0
      %v1329 = vsel %vm771, %v1251, 0
      %v1332 = vsel %vm771, %v1252, 0
      %1334 = vmatprep.subr.bf16.mxu0 0
      %1335 = vmatpush1.bf16.msra.mxu0 0
      %1336 = vmatprep.subr.bf16.mxu0 0
      %1337 = vmatpush1.bf16.msra.mxu0 0
      %1338 = vmatprep.subr.bf16.mxu0 0
      %1339 = vmatpush1.bf16.msra.mxu0 0
      %1340 = vmatprep.subr.bf16.mxu0 0
      %1341 = vmatpush1.bf16.msra.mxu0 0
      %1342 = vmatprep.subr.bf16.mxu0 0
      %1343 = vmatpush1.bf16.msra.mxu0 %v1281
      %1344 = vmatprep.subr.bf16.mxu0 0
      %1345 = vmatpush1.bf16.msra.mxu0 %v1280
      %1346 = vmatprep.subr.bf16.mxu0 0
      %1347 = vmatpush1.bf16.msra.mxu0 %v1279
      %1348 = vmatprep.subr.bf16.mxu0 0
      %1349 = vmatpush1.bf16.msra.mxu0 %v1278
      %1350 = vmatprep.subr.bf16.mxu0 0
      %1351 = vmatpush2.bf16.msra.mxu0 0
      %1352 = vmatprep.subr.bf16.mxu0 0
      %1353 = vmatpush2.bf16.msra.mxu0 0
      %1354 = vmatprep.subr.bf16.mxu0 0
      %1355 = vmatpush2.bf16.msra.mxu0 0
      %1356 = vmatprep.subr.bf16.mxu0 0
      %1357 = vmatpush2.bf16.msra.mxu0 0
      %1358 = vmatprep.subr.bf16.mxu0 0
      %1359 = vmatpush2.bf16.msra.mxu0 0
      %1360 = vmatprep.subr.bf16.mxu0 0
      %1361 = vmatpush2.bf16.msra.mxu0 0
      %1362 = vmatprep.subr.bf16.mxu0 0
      %1363 = vmatpush2.bf16.msra.mxu0 0
      %1364 = vmatprep.subr.bf16.mxu0 0
      %1365 = vmatpush2.bf16.msra.mxu0 0
      %1366 = vmatprep.mubr.bf16.mxu0 0
      %1367 = vmatmul.mubr.bf16.gmra.mxu0 %v1287
      %v1368 = vpop.f32.mrf.mxu0
      %v1369 = vadd.f32 0.0, %v1368
      %v1370 = vpop.f32.mrf.mxu0
      %v1371 = vpop.f32.mrf.mxu0
      %v1372 = vadd.f32 0.0, %v1371
      %v1373 = vpop.f32.mrf.mxu0
      %1374 = vmatprep.mubr.bf16.mxu0 0
      %1375 = vmatmul.mubr.bf16.gmra.mxu0 %v1290
      %v1376 = vpop.f32.mrf.mxu0
      %v1377 = vadd.f32 0.0, %v1376
      %v1378 = vpop.f32.mrf.mxu0
      %v1379 = vpop.f32.mrf.mxu0
      %v1380 = vadd.f32 0.0, %v1379
      %v1381 = vpop.f32.mrf.mxu0
      %1382 = vmatprep.mubr.bf16.mxu0 0
      %1383 = vmatmul.mubr.bf16.gmra.mxu0 %v1293
      %v1384 = vpop.f32.mrf.mxu0
      %v1385 = vadd.f32 0.0, %v1384
      %v1386 = vpop.f32.mrf.mxu0
      %v1387 = vpop.f32.mrf.mxu0
      %v1388 = vadd.f32 0.0, %v1387
      %v1389 = vpop.f32.mrf.mxu0
      %1390 = vmatprep.mubr.bf16.mxu0 0
      %1391 = vmatmul.mubr.bf16.gmra.mxu0 %v1296
      %v1392 = vpop.f32.mrf.mxu0
      %v1393 = vadd.f32 0.0, %v1392
      %v1394 = vpop.f32.mrf.mxu0
      %v1395 = vpop.f32.mrf.mxu0
      %v1396 = vadd.f32 0.0, %v1395
      %v1397 = vpop.f32.mrf.mxu0
      %1398 = vmatprep.mubr.bf16.mxu0 0
      %1399 = vmatmul.mubr.bf16.gmra.mxu0 %v1299
      %v1400 = vpop.f32.mrf.mxu0
      %v1401 = vadd.f32 0.0, %v1400
      %v1402 = vpop.f32.mrf.mxu0
      %v1403 = vpop.f32.mrf.mxu0
      %v1404 = vadd.f32 0.0, %v1403
      %v1405 = vpop.f32.mrf.mxu0
      %1406 = vmatprep.mubr.bf16.mxu0 0
      %1407 = vmatmul.mubr.bf16.gmra.mxu0 %v1302
      %v1408 = vpop.f32.mrf.mxu0
      %v1409 = vadd.f32 0.0, %v1408
      %v1410 = vpop.f32.mrf.mxu0
      %v1411 = vpop.f32.mrf.mxu0
      %v1412 = vadd.f32 0.0, %v1411
      %v1413 = vpop.f32.mrf.mxu0
      %1414 = vmatprep.mubr.bf16.mxu0 0
      %1415 = vmatmul.mubr.bf16.gmra.mxu0 %v1305
      %v1416 = vpop.f32.mrf.mxu0
      %v1417 = vadd.f32 0.0, %v1416
      %v1418 = vpop.f32.mrf.mxu0
      %v1419 = vpop.f32.mrf.mxu0
      %v1420 = vadd.f32 0.0, %v1419
      %v1421 = vpop.f32.mrf.mxu0
      %1422 = vmatprep.mubr.bf16.mxu0 0
      %1423 = vmatmul.mubr.bf16.gmra.mxu0 %v1308
      %v1424 = vpop.f32.mrf.mxu0
      %v1425 = vadd.f32 0.0, %v1424
      %v1426 = vpop.f32.mrf.mxu0
      %v1427 = vpop.f32.mrf.mxu0
      %v1428 = vadd.f32 0.0, %v1427
      %v1429 = vpop.f32.mrf.mxu0
      %1430 = vmatprep.mubr.bf16.mxu0 0
      %1431 = vmatmul.mubr.bf16.gmra.mxu0 %v1311
      %v1432 = vpop.f32.mrf.mxu0
      %v1433 = vadd.f32 0.0, %v1432
      %v1434 = vpop.f32.mrf.mxu0
      %v1435 = vpop.f32.mrf.mxu0
      %v1436 = vadd.f32 0.0, %v1435
      %v1437 = vpop.f32.mrf.mxu0
      %1438 = vmatprep.mubr.bf16.mxu0 0
      %1439 = vmatmul.mubr.bf16.gmra.mxu0 %v1314
      %v1440 = vpop.f32.mrf.mxu0
      %v1441 = vadd.f32 0.0, %v1440
      %v1442 = vpop.f32.mrf.mxu0
      %v1443 = vpop.f32.mrf.mxu0
      %v1444 = vadd.f32 0.0, %v1443
      %v1445 = vpop.f32.mrf.mxu0
      %1446 = vmatprep.mubr.bf16.mxu0 0
      %1447 = vmatmul.mubr.bf16.gmra.mxu0 %v1317
      %v1448 = vpop.f32.mrf.mxu0
      %v1449 = vadd.f32 0.0, %v1448
      %v1450 = vpop.f32.mrf.mxu0
      %v1451 = vpop.f32.mrf.mxu0
      %v1452 = vadd.f32 0.0, %v1451
      %v1453 = vpop.f32.mrf.mxu0
      %1454 = vmatprep.mubr.bf16.mxu0 0
      %1455 = vmatmul.mubr.bf16.gmra.mxu0 %v1320
      %v1456 = vpop.f32.mrf.mxu0
      %v1457 = vadd.f32 0.0, %v1456
      %v1458 = vpop.f32.mrf.mxu0
      %v1459 = vpop.f32.mrf.mxu0
      %v1460 = vadd.f32 0.0, %v1459
      %v1461 = vpop.f32.mrf.mxu0
      %1462 = vmatprep.mubr.bf16.mxu0 0
      %1463 = vmatmul.mubr.bf16.gmra.mxu0 %v1323
      %v1464 = vpop.f32.mrf.mxu0
      %v1465 = vadd.f32 0.0, %v1464
      %v1466 = vpop.f32.mrf.mxu0
      %v1467 = vpop.f32.mrf.mxu0
      %v1468 = vadd.f32 0.0, %v1467
      %v1469 = vpop.f32.mrf.mxu0
      %1470 = vmatprep.mubr.bf16.mxu0 0
      %1471 = vmatmul.mubr.bf16.gmra.mxu0 %v1326
      %v1472 = vpop.f32.mrf.mxu0
      %v1473 = vadd.f32 0.0, %v1472
      %v1474 = vpop.f32.mrf.mxu0
      %v1475 = vpop.f32.mrf.mxu0
      %v1476 = vadd.f32 0.0, %v1475
      %v1477 = vpop.f32.mrf.mxu0
      %1478 = vmatprep.mubr.bf16.mxu0 0
      %1479 = vmatmul.mubr.bf16.gmra.mxu0 %v1329
      %v1480 = vpop.f32.mrf.mxu0
      %v1481 = vadd.f32 0.0, %v1480
      %v1482 = vpop.f32.mrf.mxu0
      %v1483 = vpop.f32.mrf.mxu0
      %v1484 = vadd.f32 0.0, %v1483
      %v1485 = vpop.f32.mrf.mxu0
      %1486 = vmatprep.mubr.bf16.mxu0 0
      %1487 = vmatmul.mubr.bf16.gmra.mxu0 %v1332
      %v1488 = vpop.f32.mrf.mxu0
      %v1489 = vadd.f32 0.0, %v1488
      %v1490 = vpop.f32.mrf.mxu0
      %v1491 = vpop.f32.mrf.mxu0
      %v1492 = vadd.f32 0.0, %v1491
      %v1493 = vpop.f32.mrf.mxu0
      %1494 = vdwg.mxu0
      %v1495 = vadd.f32 %v1173, %v1369
      %v1496 = vadd.f32 %v1174, %v1372
      %v1497 = vadd.f32 %v1175, %v1377
      %v1498 = vadd.f32 %v1176, %v1380
      %v1499 = vadd.f32 %v1177, %v1385
      %v1500 = vadd.f32 %v1178, %v1388
      %v1501 = vadd.f32 %v1179, %v1393
      %v1502 = vadd.f32 %v1180, %v1396
      %v1503 = vadd.f32 %v1181, %v1401
      %v1504 = vadd.f32 %v1182, %v1404
      %v1505 = vadd.f32 %v1183, %v1409
      %v1506 = vadd.f32 %v1184, %v1412
      %v1507 = vadd.f32 %v1185, %v1417
      %v1508 = vadd.f32 %v1186, %v1420
      %v1509 = vadd.f32 %v1187, %v1425
      %v1510 = vadd.f32 %v1188, %v1428
      %v1511 = vadd.f32 %v1189, %v1433
      %v1512 = vadd.f32 %v1190, %v1436
      %v1513 = vadd.f32 %v1191, %v1441
      %v1514 = vadd.f32 %v1192, %v1444
      %v1515 = vadd.f32 %v1193, %v1449
      %v1516 = vadd.f32 %v1194, %v1452
      %v1517 = vadd.f32 %v1195, %v1457
      %v1518 = vadd.f32 %v1196, %v1460
      %v1519 = vadd.f32 %v1197, %v1465
      %v1520 = vadd.f32 %v1198, %v1468
      %v1521 = vadd.f32 %v1199, %v1473
      %v1522 = vadd.f32 %v1200, %v1476
      %v1523 = vadd.f32 %v1201, %v1481
      %v1524 = vadd.f32 %v1202, %v1484
      %v1525 = vadd.f32 %v1203, %v1489
      %v1526 = vadd.f32 %v1204, %v1492
      %v1527 = vld [vmem:[#allocation2 + $0x9] sm:$0xff]
      %v1528 = vld [vmem:[#allocation2 + $0x11] sm:$0xff]
      %v1529 = vld [vmem:[#allocation2 + $0x29] sm:$0xff]
      %v1530 = vld [vmem:[#allocation2 + $0x31] sm:$0xff]
      %v1531 = vld [vmem:[#allocation2 + $0x49] sm:$0xff]
      %v1532 = vld [vmem:[#allocation2 + $0x51] sm:$0xff]
      %v1533 = vld [vmem:[#allocation2 + $0x69] sm:$0xff]
      %v1534 = vld [vmem:[#allocation2 + $0x71] sm:$0xff]
      %v1535 = vld [vmem:[#allocation2 + $0x89] sm:$0xff]
      %v1536 = vld [vmem:[#allocation2 + $0x91] sm:$0xff]
      %v1537 = vld [vmem:[#allocation2 + $0xa9] sm:$0xff]
      %v1538 = vld [vmem:[#allocation2 + $0xb1] sm:$0xff]
      %v1539 = vld [vmem:[#allocation2 + $0xc9] sm:$0xff]
      %v1540 = vld [vmem:[#allocation2 + $0xd1] sm:$0xff]
      %v1541 = vld [vmem:[#allocation2 + $0xe9] sm:$0xff]
      %v1542 = vld [vmem:[#allocation2 + $0xf1] sm:$0xff]
      %v1543 = vld [vmem:[#allocation2 + $0x109] sm:$0xff]
      %v1544 = vld [vmem:[#allocation2 + $0x111] sm:$0xff]
      %v1545 = vld [vmem:[#allocation2 + $0x129] sm:$0xff]
      %v1546 = vld [vmem:[#allocation2 + $0x131] sm:$0xff]
      %v1547 = vld [vmem:[#allocation2 + $0x149] sm:$0xff]
      %v1548 = vld [vmem:[#allocation2 + $0x151] sm:$0xff]
      %v1549 = vld [vmem:[#allocation2 + $0x169] sm:$0xff]
      %v1550 = vld [vmem:[#allocation2 + $0x171] sm:$0xff]
      %v1551 = vld [vmem:[#allocation2 + $0x189] sm:$0xff]
      %v1552 = vld [vmem:[#allocation2 + $0x191] sm:$0xff]
      %v1553 = vld [vmem:[#allocation2 + $0x1a9] sm:$0xff]
      %v1554 = vld [vmem:[#allocation2 + $0x1b1] sm:$0xff]
      %v1555 = vld [vmem:[#allocation2 + $0x1c9] sm:$0xff]
      %v1556 = vld [vmem:[#allocation2 + $0x1d1] sm:$0xff]
      %v1557 = vld [vmem:[#allocation2 + $0x1e9] sm:$0xff]
      %v1558 = vld [vmem:[#allocation2 + $0x1f1] sm:$0xff]
      %v1559 = vpack.c.bf16 %v1528, %v1527
      %v1560 = vpack.c.bf16 %v1530, %v1529
      %v1561 = vpack.c.bf16 %v1532, %v1531
      %v1562 = vpack.c.bf16 %v1534, %v1533
      %v1563 = vpack.c.bf16 %v1536, %v1535
      %v1564 = vpack.c.bf16 %v1538, %v1537
      %v1565 = vpack.c.bf16 %v1540, %v1539
      %v1566 = vpack.c.bf16 %v1542, %v1541
      %v1567 = vpack.c.bf16 %v1544, %v1543
      %v1568 = vpack.c.bf16 %v1546, %v1545
      %v1569 = vpack.c.bf16 %v1548, %v1547
      %v1570 = vpack.c.bf16 %v1550, %v1549
      %v1571 = vpack.c.bf16 %v1552, %v1551
      %v1572 = vpack.c.bf16 %v1554, %v1553
      %v1573 = vpack.c.bf16 %v1556, %v1555
      %v1574 = vpack.c.bf16 %v1558, %v1557
      %s1575 = scalar_lea.vmem %s3, 64
      %v1576 = vld [vmem:[%s1575] sm:$0xf]
      %v1577 = vld [vmem:[%s1575 + $0x4] sm:$0xf]
      %v1578 = vld [vmem:[%s1575 + $0x8] sm:$0xf]
      %v1579 = vld [vmem:[%s1575 + $0xc] sm:$0xf]
      %v1580 = vld [vmem:[%s1575 + $0x10] sm:$0xf]
      %v1581 = vld [vmem:[%s1575 + $0x14] sm:$0xf]
      %v1582 = vld [vmem:[%s1575 + $0x18] sm:$0xf]
      %v1583 = vld [vmem:[%s1575 + $0x1c] sm:$0xf]
      %v1592 = vunpack.c.l.b16 %v1576
      %v1593 = vunpack.c.l.b16 %v1577
      %v1594 = vunpack.c.l.b16 %v1578
      %v1595 = vunpack.c.l.b16 %v1579
      %v1596 = vunpack.c.l.b16 %v1580
      %v1597 = vunpack.c.l.b16 %v1581
      %v1598 = vunpack.c.l.b16 %v1582
      %v1599 = vunpack.c.l.b16 %v1583
      %v1600 = vpack.c.b16 %v1593, %v1592
      %v1601 = vpack.c.b16 %v1595, %v1594
      %v1602 = vpack.c.b16 %v1597, %v1596
      %v1603 = vpack.c.b16 %v1599, %v1598
      %v1609 = vsel %vm771, %v1559, 0
      %v1612 = vsel %vm771, %v1560, 0
      %v1615 = vsel %vm771, %v1561, 0
      %v1618 = vsel %vm771, %v1562, 0
      %v1621 = vsel %vm771, %v1563, 0
      %v1624 = vsel %vm771, %v1564, 0
      %v1627 = vsel %vm771, %v1565, 0
      %v1630 = vsel %vm771, %v1566, 0
      %v1633 = vsel %vm771, %v1567, 0
      %v1636 = vsel %vm771, %v1568, 0
      %v1639 = vsel %vm771, %v1569, 0
      %v1642 = vsel %vm771, %v1570, 0
      %v1645 = vsel %vm771, %v1571, 0
      %v1648 = vsel %vm771, %v1572, 0
      %v1651 = vsel %vm771, %v1573, 0
      %v1654 = vsel %vm771, %v1574, 0
      %1656 = vmatprep.subr.bf16.mxu0 0
      %1657 = vmatpush1.bf16.msra.mxu0 0
      %1658 = vmatprep.subr.bf16.mxu0 0
      %1659 = vmatpush1.bf16.msra.mxu0 0
      %1660 = vmatprep.subr.bf16.mxu0 0
      %1661 = vmatpush1.bf16.msra.mxu0 0
      %1662 = vmatprep.subr.bf16.mxu0 0
      %1663 = vmatpush1.bf16.msra.mxu0 0
      %1664 = vmatprep.subr.bf16.mxu0 0
      %1665 = vmatpush1.bf16.msra.mxu0 %v1603
      %1666 = vmatprep.subr.bf16.mxu0 0
      %1667 = vmatpush1.bf16.msra.mxu0 %v1602
      %1668 = vmatprep.subr.bf16.mxu0 0
      %1669 = vmatpush1.bf16.msra.mxu0 %v1601
      %1670 = vmatprep.subr.bf16.mxu0 0
      %1671 = vmatpush1.bf16.msra.mxu0 %v1600
      %1672 = vmatprep.subr.bf16.mxu0 0
      %1673 = vmatpush2.bf16.msra.mxu0 0
      %1674 = vmatprep.subr.bf16.mxu0 0
      %1675 = vmatpush2.bf16.msra.mxu0 0
      %1676 = vmatprep.subr.bf16.mxu0 0
      %1677 = vmatpush2.bf16.msra.mxu0 0
      %1678 = vmatprep.subr.bf16.mxu0 0
      %1679 = vmatpush2.bf16.msra.mxu0 0
      %1680 = vmatprep.subr.bf16.mxu0 0
      %1681 = vmatpush2.bf16.msra.mxu0 0
      %1682 = vmatprep.subr.bf16.mxu0 0
      %1683 = vmatpush2.bf16.msra.mxu0 0
      %1684 = vmatprep.subr.bf16.mxu0 0
      %1685 = vmatpush2.bf16.msra.mxu0 0
      %1686 = vmatprep.subr.bf16.mxu0 0
      %1687 = vmatpush2.bf16.msra.mxu0 0
      %1688 = vmatprep.mubr.bf16.mxu0 0
      %1689 = vmatmul.mubr.bf16.gmra.mxu0 %v1609
      %v1690 = vpop.f32.mrf.mxu0
      %v1691 = vadd.f32 0.0, %v1690
      %v1692 = vpop.f32.mrf.mxu0
      %v1693 = vpop.f32.mrf.mxu0
      %v1694 = vadd.f32 0.0, %v1693
      %v1695 = vpop.f32.mrf.mxu0
      %1696 = vmatprep.mubr.bf16.mxu0 0
      %1697 = vmatmul.mubr.bf16.gmra.mxu0 %v1612
      %v1698 = vpop.f32.mrf.mxu0
      %v1699 = vadd.f32 0.0, %v1698
      %v1700 = vpop.f32.mrf.mxu0
      %v1701 = vpop.f32.mrf.mxu0
      %v1702 = vadd.f32 0.0, %v1701
      %v1703 = vpop.f32.mrf.mxu0
      %1704 = vmatprep.mubr.bf16.mxu0 0
      %1705 = vmatmul.mubr.bf16.gmra.mxu0 %v1615
      %v1706 = vpop.f32.mrf.mxu0
      %v1707 = vadd.f32 0.0, %v1706
      %v1708 = vpop.f32.mrf.mxu0
      %v1709 = vpop.f32.mrf.mxu0
      %v1710 = vadd.f32 0.0, %v1709
      %v1711 = vpop.f32.mrf.mxu0
      %1712 = vmatprep.mubr.bf16.mxu0 0
      %1713 = vmatmul.mubr.bf16.gmra.mxu0 %v1618
      %v1714 = vpop.f32.mrf.mxu0
      %v1715 = vadd.f32 0.0, %v1714
      %v1716 = vpop.f32.mrf.mxu0
      %v1717 = vpop.f32.mrf.mxu0
      %v1718 = vadd.f32 0.0, %v1717
      %v1719 = vpop.f32.mrf.mxu0
      %1720 = vmatprep.mubr.bf16.mxu0 0
      %1721 = vmatmul.mubr.bf16.gmra.mxu0 %v1621
      %v1722 = vpop.f32.mrf.mxu0
      %v1723 = vadd.f32 0.0, %v1722
      %v1724 = vpop.f32.mrf.mxu0
      %v1725 = vpop.f32.mrf.mxu0
      %v1726 = vadd.f32 0.0, %v1725
      %v1727 = vpop.f32.mrf.mxu0
      %1728 = vmatprep.mubr.bf16.mxu0 0
      %1729 = vmatmul.mubr.bf16.gmra.mxu0 %v1624
      %v1730 = vpop.f32.mrf.mxu0
      %v1731 = vadd.f32 0.0, %v1730
      %v1732 = vpop.f32.mrf.mxu0
      %v1733 = vpop.f32.mrf.mxu0
      %v1734 = vadd.f32 0.0, %v1733
      %v1735 = vpop.f32.mrf.mxu0
      %1736 = vmatprep.mubr.bf16.mxu0 0
      %1737 = vmatmul.mubr.bf16.gmra.mxu0 %v1627
      %v1738 = vpop.f32.mrf.mxu0
      %v1739 = vadd.f32 0.0, %v1738
      %v1740 = vpop.f32.mrf.mxu0
      %v1741 = vpop.f32.mrf.mxu0
      %v1742 = vadd.f32 0.0, %v1741
      %v1743 = vpop.f32.mrf.mxu0
      %1744 = vmatprep.mubr.bf16.mxu0 0
      %1745 = vmatmul.mubr.bf16.gmra.mxu0 %v1630
      %v1746 = vpop.f32.mrf.mxu0
      %v1747 = vadd.f32 0.0, %v1746
      %v1748 = vpop.f32.mrf.mxu0
      %v1749 = vpop.f32.mrf.mxu0
      %v1750 = vadd.f32 0.0, %v1749
      %v1751 = vpop.f32.mrf.mxu0
      %1752 = vmatprep.mubr.bf16.mxu0 0
      %1753 = vmatmul.mubr.bf16.gmra.mxu0 %v1633
      %v1754 = vpop.f32.mrf.mxu0
      %v1755 = vadd.f32 0.0, %v1754
      %v1756 = vpop.f32.mrf.mxu0
      %v1757 = vpop.f32.mrf.mxu0
      %v1758 = vadd.f32 0.0, %v1757
      %v1759 = vpop.f32.mrf.mxu0
      %1760 = vmatprep.mubr.bf16.mxu0 0
      %1761 = vmatmul.mubr.bf16.gmra.mxu0 %v1636
      %v1762 = vpop.f32.mrf.mxu0
      %v1763 = vadd.f32 0.0, %v1762
      %v1764 = vpop.f32.mrf.mxu0
      %v1765 = vpop.f32.mrf.mxu0
      %v1766 = vadd.f32 0.0, %v1765
      %v1767 = vpop.f32.mrf.mxu0
      %1768 = vmatprep.mubr.bf16.mxu0 0
      %1769 = vmatmul.mubr.bf16.gmra.mxu0 %v1639
      %v1770 = vpop.f32.mrf.mxu0
      %v1771 = vadd.f32 0.0, %v1770
      %v1772 = vpop.f32.mrf.mxu0
      %v1773 = vpop.f32.mrf.mxu0
      %v1774 = vadd.f32 0.0, %v1773
      %v1775 = vpop.f32.mrf.mxu0
      %1776 = vmatprep.mubr.bf16.mxu0 0
      %1777 = vmatmul.mubr.bf16.gmra.mxu0 %v1642
      %v1778 = vpop.f32.mrf.mxu0
      %v1779 = vadd.f32 0.0, %v1778
      %v1780 = vpop.f32.mrf.mxu0
      %v1781 = vpop.f32.mrf.mxu0
      %v1782 = vadd.f32 0.0, %v1781
      %v1783 = vpop.f32.mrf.mxu0
      %1784 = vmatprep.mubr.bf16.mxu0 0
      %1785 = vmatmul.mubr.bf16.gmra.mxu0 %v1645
      %v1786 = vpop.f32.mrf.mxu0
      %v1787 = vadd.f32 0.0, %v1786
      %v1788 = vpop.f32.mrf.mxu0
      %v1789 = vpop.f32.mrf.mxu0
      %v1790 = vadd.f32 0.0, %v1789
      %v1791 = vpop.f32.mrf.mxu0
      %1792 = vmatprep.mubr.bf16.mxu0 0
      %1793 = vmatmul.mubr.bf16.gmra.mxu0 %v1648
      %v1794 = vpop.f32.mrf.mxu0
      %v1795 = vadd.f32 0.0, %v1794
      %v1796 = vpop.f32.mrf.mxu0
      %v1797 = vpop.f32.mrf.mxu0
      %v1798 = vadd.f32 0.0, %v1797
      %v1799 = vpop.f32.mrf.mxu0
      %1800 = vmatprep.mubr.bf16.mxu0 0
      %1801 = vmatmul.mubr.bf16.gmra.mxu0 %v1651
      %v1802 = vpop.f32.mrf.mxu0
      %v1803 = vadd.f32 0.0, %v1802
      %v1804 = vpop.f32.mrf.mxu0
      %v1805 = vpop.f32.mrf.mxu0
      %v1806 = vadd.f32 0.0, %v1805
      %v1807 = vpop.f32.mrf.mxu0
      %1808 = vmatprep.mubr.bf16.mxu0 0
      %1809 = vmatmul.mubr.bf16.gmra.mxu0 %v1654
      %v1810 = vpop.f32.mrf.mxu0
      %v1811 = vadd.f32 0.0, %v1810
      %v1812 = vpop.f32.mrf.mxu0
      %v1813 = vpop.f32.mrf.mxu0
      %v1814 = vadd.f32 0.0, %v1813
      %v1815 = vpop.f32.mrf.mxu0
      %1816 = vdwg.mxu0
      %v1817 = vadd.f32 %v1495, %v1691
      %v1818 = vadd.f32 %v1496, %v1694
      %v1819 = vadd.f32 %v1497, %v1699
      %v1820 = vadd.f32 %v1498, %v1702
      %v1821 = vadd.f32 %v1499, %v1707
      %v1822 = vadd.f32 %v1500, %v1710
      %v1823 = vadd.f32 %v1501, %v1715
      %v1824 = vadd.f32 %v1502, %v1718
      %v1825 = vadd.f32 %v1503, %v1723
      %v1826 = vadd.f32 %v1504, %v1726
      %v1827 = vadd.f32 %v1505, %v1731
      %v1828 = vadd.f32 %v1506, %v1734
      %v1829 = vadd.f32 %v1507, %v1739
      %v1830 = vadd.f32 %v1508, %v1742
      %v1831 = vadd.f32 %v1509, %v1747
      %v1832 = vadd.f32 %v1510, %v1750
      %v1833 = vadd.f32 %v1511, %v1755
      %v1834 = vadd.f32 %v1512, %v1758
      %v1835 = vadd.f32 %v1513, %v1763
      %v1836 = vadd.f32 %v1514, %v1766
      %v1837 = vadd.f32 %v1515, %v1771
      %v1838 = vadd.f32 %v1516, %v1774
      %v1839 = vadd.f32 %v1517, %v1779
      %v1840 = vadd.f32 %v1518, %v1782
      %v1841 = vadd.f32 %v1519, %v1787
      %v1842 = vadd.f32 %v1520, %v1790
      %v1843 = vadd.f32 %v1521, %v1795
      %v1844 = vadd.f32 %v1522, %v1798
      %v1845 = vadd.f32 %v1523, %v1803
      %v1846 = vadd.f32 %v1524, %v1806
      %v1847 = vadd.f32 %v1525, %v1811
      %v1848 = vadd.f32 %v1526, %v1814
      %v1849 = vld [vmem:[%s844 + $0x7] sm:$0xff]
      %v1850 = vld [vmem:[%s844 + $0xf] sm:$0xff]
      %v1851 = vld [vmem:[%s844 + $0x27] sm:$0xff]
      %v1852 = vld [vmem:[%s844 + $0x2f] sm:$0xff]
      %v1853 = vld [vmem:[%s844 + $0x47] sm:$0xff]
      %v1854 = vld [vmem:[%s844 + $0x4f] sm:$0xff]
      %v1855 = vld [vmem:[%s844 + $0x67] sm:$0xff]
      %v1856 = vld [vmem:[%s844 + $0x6f] sm:$0xff]
      %v1857 = vld [vmem:[%s844 + $0x87] sm:$0xff]
      %v1858 = vld [vmem:[%s844 + $0x8f] sm:$0xff]
      %v1859 = vld [vmem:[%s844 + $0xa7] sm:$0xff]
      %v1860 = vld [vmem:[%s844 + $0xaf] sm:$0xff]
      %v1861 = vld [vmem:[%s844 + $0xc7] sm:$0xff]
      %v1862 = vld [vmem:[%s844 + $0xcf] sm:$0xff]
      %v1863 = vld [vmem:[%s844 + $0xe7] sm:$0xff]
      %v1864 = vld [vmem:[%s844 + $0xef] sm:$0xff]
      %v1865 = vld [vmem:[%s844 + $0x107] sm:$0xff]
      %v1866 = vld [vmem:[%s844 + $0x10f] sm:$0xff]
      %v1867 = vld [vmem:[%s844 + $0x127] sm:$0xff]
      %v1868 = vld [vmem:[%s844 + $0x12f] sm:$0xff]
      %v1869 = vld [vmem:[%s844 + $0x147] sm:$0xff]
      %v1870 = vld [vmem:[%s844 + $0x14f] sm:$0xff]
      %v1871 = vld [vmem:[%s844 + $0x167] sm:$0xff]
      %v1872 = vld [vmem:[%s844 + $0x16f] sm:$0xff]
      %v1873 = vld [vmem:[%s844 + $0x187] sm:$0xff]
      %v1874 = vld [vmem:[%s844 + $0x18f] sm:$0xff]
      %v1875 = vld [vmem:[%s844 + $0x1a7] sm:$0xff]
      %v1876 = vld [vmem:[%s844 + $0x1af] sm:$0xff]
      %v1877 = vld [vmem:[%s844 + $0x1c7] sm:$0xff]
      %v1878 = vld [vmem:[%s844 + $0x1cf] sm:$0xff]
      %v1879 = vld [vmem:[%s844 + $0x1e7] sm:$0xff]
      %v1880 = vld [vmem:[%s844 + $0x1ef] sm:$0xff]
      %v1881 = vpack.c.bf16 %v1850, %v1849
      %v1882 = vpack.c.bf16 %v1852, %v1851
      %v1883 = vpack.c.bf16 %v1854, %v1853
      %v1884 = vpack.c.bf16 %v1856, %v1855
      %v1885 = vpack.c.bf16 %v1858, %v1857
      %v1886 = vpack.c.bf16 %v1860, %v1859
      %v1887 = vpack.c.bf16 %v1862, %v1861
      %v1888 = vpack.c.bf16 %v1864, %v1863
      %v1889 = vpack.c.bf16 %v1866, %v1865
      %v1890 = vpack.c.bf16 %v1868, %v1867
      %v1891 = vpack.c.bf16 %v1870, %v1869
      %v1892 = vpack.c.bf16 %v1872, %v1871
      %v1893 = vpack.c.bf16 %v1874, %v1873
      %v1894 = vpack.c.bf16 %v1876, %v1875
      %v1895 = vpack.c.bf16 %v1878, %v1877
      %v1896 = vpack.c.bf16 %v1880, %v1879
      %s1897 = scalar_lea.vmem %s3, 96
      %v1898 = vld [vmem:[%s1897] sm:$0xf]
      %v1899 = vld [vmem:[%s1897 + $0x4] sm:$0xf]
      %v1900 = vld [vmem:[%s1897 + $0x8] sm:$0xf]
      %v1901 = vld [vmem:[%s1897 + $0xc] sm:$0xf]
      %v1902 = vld [vmem:[%s1897 + $0x10] sm:$0xf]
      %v1903 = vld [vmem:[%s1897 + $0x14] sm:$0xf]
      %v1904 = vld [vmem:[%s1897 + $0x18] sm:$0xf]
      %v1905 = vld [vmem:[%s1897 + $0x1c] sm:$0xf]
      %v1914 = vunpack.c.l.b16 %v1898
      %v1915 = vunpack.c.l.b16 %v1899
      %v1916 = vunpack.c.l.b16 %v1900
      %v1917 = vunpack.c.l.b16 %v1901
      %v1918 = vunpack.c.l.b16 %v1902
      %v1919 = vunpack.c.l.b16 %v1903
      %v1920 = vunpack.c.l.b16 %v1904
      %v1921 = vunpack.c.l.b16 %v1905
      %v1922 = vpack.c.b16 %v1915, %v1914
      %v1923 = vpack.c.b16 %v1917, %v1916
      %v1924 = vpack.c.b16 %v1919, %v1918
      %v1925 = vpack.c.b16 %v1921, %v1920
      %v1931 = vsel %vm771, %v1881, 0
      %v1934 = vsel %vm771, %v1882, 0
      %v1937 = vsel %vm771, %v1883, 0
      %v1940 = vsel %vm771, %v1884, 0
      %v1943 = vsel %vm771, %v1885, 0
      %v1946 = vsel %vm771, %v1886, 0
      %v1949 = vsel %vm771, %v1887, 0
      %v1952 = vsel %vm771, %v1888, 0
      %v1955 = vsel %vm771, %v1889, 0
      %v1958 = vsel %vm771, %v1890, 0
      %v1961 = vsel %vm771, %v1891, 0
      %v1964 = vsel %vm771, %v1892, 0
      %v1967 = vsel %vm771, %v1893, 0
      %v1970 = vsel %vm771, %v1894, 0
      %v1973 = vsel %vm771, %v1895, 0
      %v1976 = vsel %vm771, %v1896, 0
      %1978 = vmatprep.subr.bf16.mxu0 0
      %1979 = vmatpush1.bf16.msra.mxu0 0
      %1980 = vmatprep.subr.bf16.mxu0 0
      %1981 = vmatpush1.bf16.msra.mxu0 0
      %1982 = vmatprep.subr.bf16.mxu0 0
      %1983 = vmatpush1.bf16.msra.mxu0 0
      %1984 = vmatprep.subr.bf16.mxu0 0
      %1985 = vmatpush1.bf16.msra.mxu0 0
      %1986 = vmatprep.subr.bf16.mxu0 0
      %1987 = vmatpush1.bf16.msra.mxu0 %v1925
      %1988 = vmatprep.subr.bf16.mxu0 0
      %1989 = vmatpush1.bf16.msra.mxu0 %v1924
      %1990 = vmatprep.subr.bf16.mxu0 0
      %1991 = vmatpush1.bf16.msra.mxu0 %v1923
      %1992 = vmatprep.subr.bf16.mxu0 0
      %1993 = vmatpush1.bf16.msra.mxu0 %v1922
      %1994 = vmatprep.subr.bf16.mxu0 0
      %1995 = vmatpush2.bf16.msra.mxu0 0
      %1996 = vmatprep.subr.bf16.mxu0 0
      %1997 = vmatpush2.bf16.msra.mxu0 0
      %1998 = vmatprep.subr.bf16.mxu0 0
      %1999 = vmatpush2.bf16.msra.mxu0 0
      %2000 = vmatprep.subr.bf16.mxu0 0
      %2001 = vmatpush2.bf16.msra.mxu0 0
      %2002 = vmatprep.subr.bf16.mxu0 0
      %2003 = vmatpush2.bf16.msra.mxu0 0
      %2004 = vmatprep.subr.bf16.mxu0 0
      %2005 = vmatpush2.bf16.msra.mxu0 0
      %2006 = vmatprep.subr.bf16.mxu0 0
      %2007 = vmatpush2.bf16.msra.mxu0 0
      %2008 = vmatprep.subr.bf16.mxu0 0
      %2009 = vmatpush2.bf16.msra.mxu0 0
      %2010 = vmatprep.mubr.bf16.mxu0 0
      %2011 = vmatmul.mubr.bf16.gmra.mxu0 %v1931
      %v2012 = vpop.f32.mrf.mxu0
      %v2013 = vadd.f32 0.0, %v2012
      %v2014 = vpop.f32.mrf.mxu0
      %v2015 = vpop.f32.mrf.mxu0
      %v2016 = vadd.f32 0.0, %v2015
      %v2017 = vpop.f32.mrf.mxu0
      %2018 = vmatprep.mubr.bf16.mxu0 0
      %2019 = vmatmul.mubr.bf16.gmra.mxu0 %v1934
      %v2020 = vpop.f32.mrf.mxu0
      %v2021 = vadd.f32 0.0, %v2020
      %v2022 = vpop.f32.mrf.mxu0
      %v2023 = vpop.f32.mrf.mxu0
      %v2024 = vadd.f32 0.0, %v2023
      %v2025 = vpop.f32.mrf.mxu0
      %2026 = vmatprep.mubr.bf16.mxu0 0
      %2027 = vmatmul.mubr.bf16.gmra.mxu0 %v1937
      %v2028 = vpop.f32.mrf.mxu0
      %v2029 = vadd.f32 0.0, %v2028
      %v2030 = vpop.f32.mrf.mxu0
      %v2031 = vpop.f32.mrf.mxu0
      %v2032 = vadd.f32 0.0, %v2031
      %v2033 = vpop.f32.mrf.mxu0
      %2034 = vmatprep.mubr.bf16.mxu0 0
      %2035 = vmatmul.mubr.bf16.gmra.mxu0 %v1940
      %v2036 = vpop.f32.mrf.mxu0
      %v2037 = vadd.f32 0.0, %v2036
      %v2038 = vpop.f32.mrf.mxu0
      %v2039 = vpop.f32.mrf.mxu0
      %v2040 = vadd.f32 0.0, %v2039
      %v2041 = vpop.f32.mrf.mxu0
      %2042 = vmatprep.mubr.bf16.mxu0 0
      %2043 = vmatmul.mubr.bf16.gmra.mxu0 %v1943
      %v2044 = vpop.f32.mrf.mxu0
      %v2045 = vadd.f32 0.0, %v2044
      %v2046 = vpop.f32.mrf.mxu0
      %v2047 = vpop.f32.mrf.mxu0
      %v2048 = vadd.f32 0.0, %v2047
      %v2049 = vpop.f32.mrf.mxu0
      %2050 = vmatprep.mubr.bf16.mxu0 0
      %2051 = vmatmul.mubr.bf16.gmra.mxu0 %v1946
      %v2052 = vpop.f32.mrf.mxu0
      %v2053 = vadd.f32 0.0, %v2052
      %v2054 = vpop.f32.mrf.mxu0
      %v2055 = vpop.f32.mrf.mxu0
      %v2056 = vadd.f32 0.0, %v2055
      %v2057 = vpop.f32.mrf.mxu0
      %2058 = vmatprep.mubr.bf16.mxu0 0
      %2059 = vmatmul.mubr.bf16.gmra.mxu0 %v1949
      %v2060 = vpop.f32.mrf.mxu0
      %v2061 = vadd.f32 0.0, %v2060
      %v2062 = vpop.f32.mrf.mxu0
      %v2063 = vpop.f32.mrf.mxu0
      %v2064 = vadd.f32 0.0, %v2063
      %v2065 = vpop.f32.mrf.mxu0
      %2066 = vmatprep.mubr.bf16.mxu0 0
      %2067 = vmatmul.mubr.bf16.gmra.mxu0 %v1952
      %v2068 = vpop.f32.mrf.mxu0
      %v2069 = vadd.f32 0.0, %v2068
      %v2070 = vpop.f32.mrf.mxu0
      %v2071 = vpop.f32.mrf.mxu0
      %v2072 = vadd.f32 0.0, %v2071
      %v2073 = vpop.f32.mrf.mxu0
      %2074 = vmatprep.mubr.bf16.mxu0 0
      %2075 = vmatmul.mubr.bf16.gmra.mxu0 %v1955
      %v2076 = vpop.f32.mrf.mxu0
      %v2077 = vadd.f32 0.0, %v2076
      %v2078 = vpop.f32.mrf.mxu0
      %v2079 = vpop.f32.mrf.mxu0
      %v2080 = vadd.f32 0.0, %v2079
      %v2081 = vpop.f32.mrf.mxu0
      %2082 = vmatprep.mubr.bf16.mxu0 0
      %2083 = vmatmul.mubr.bf16.gmra.mxu0 %v1958
      %v2084 = vpop.f32.mrf.mxu0
      %v2085 = vadd.f32 0.0, %v2084
      %v2086 = vpop.f32.mrf.mxu0
      %v2087 = vpop.f32.mrf.mxu0
      %v2088 = vadd.f32 0.0, %v2087
      %v2089 = vpop.f32.mrf.mxu0
      %2090 = vmatprep.mubr.bf16.mxu0 0
      %2091 = vmatmul.mubr.bf16.gmra.mxu0 %v1961
      %v2092 = vpop.f32.mrf.mxu0
      %v2093 = vadd.f32 0.0, %v2092
      %v2094 = vpop.f32.mrf.mxu0
      %v2095 = vpop.f32.mrf.mxu0
      %v2096 = vadd.f32 0.0, %v2095
      %v2097 = vpop.f32.mrf.mxu0
      %2098 = vmatprep.mubr.bf16.mxu0 0
      %2099 = vmatmul.mubr.bf16.gmra.mxu0 %v1964
      %v2100 = vpop.f32.mrf.mxu0
      %v2101 = vadd.f32 0.0, %v2100
      %v2102 = vpop.f32.mrf.mxu0
      %v2103 = vpop.f32.mrf.mxu0
      %v2104 = vadd.f32 0.0, %v2103
      %v2105 = vpop.f32.mrf.mxu0
      %2106 = vmatprep.mubr.bf16.mxu0 0
      %2107 = vmatmul.mubr.bf16.gmra.mxu0 %v1967
      %v2108 = vpop.f32.mrf.mxu0
      %v2109 = vadd.f32 0.0, %v2108
      %v2110 = vpop.f32.mrf.mxu0
      %v2111 = vpop.f32.mrf.mxu0
      %v2112 = vadd.f32 0.0, %v2111
      %v2113 = vpop.f32.mrf.mxu0
      %2114 = vmatprep.mubr.bf16.mxu0 0
      %2115 = vmatmul.mubr.bf16.gmra.mxu0 %v1970
      %v2116 = vpop.f32.mrf.mxu0
      %v2117 = vadd.f32 0.0, %v2116
      %v2118 = vpop.f32.mrf.mxu0
      %v2119 = vpop.f32.mrf.mxu0
      %v2120 = vadd.f32 0.0, %v2119
      %v2121 = vpop.f32.mrf.mxu0
      %2122 = vmatprep.mubr.bf16.mxu0 0
      %2123 = vmatmul.mubr.bf16.gmra.mxu0 %v1973
      %v2124 = vpop.f32.mrf.mxu0
      %v2125 = vadd.f32 0.0, %v2124
      %v2126 = vpop.f32.mrf.mxu0
      %v2127 = vpop.f32.mrf.mxu0
      %v2128 = vadd.f32 0.0, %v2127
      %v2129 = vpop.f32.mrf.mxu0
      %2130 = vmatprep.mubr.bf16.mxu0 0
      %2131 = vmatmul.mubr.bf16.gmra.mxu0 %v1976
      %v2132 = vpop.f32.mrf.mxu0
      %v2133 = vadd.f32 0.0, %v2132
      %v2134 = vpop.f32.mrf.mxu0
      %v2135 = vpop.f32.mrf.mxu0
      %v2136 = vadd.f32 0.0, %v2135
      %v2137 = vpop.f32.mrf.mxu0
      %2138 = vdwg.mxu0
      %v2139 = vadd.f32 %v1817, %v2013
      %v2140 = vadd.f32 %v1818, %v2016
      %v2141 = vadd.f32 %v1819, %v2021
      %v2142 = vadd.f32 %v1820, %v2024
      %v2143 = vadd.f32 %v1821, %v2029
      %v2144 = vadd.f32 %v1822, %v2032
      %v2145 = vadd.f32 %v1823, %v2037
      %v2146 = vadd.f32 %v1824, %v2040
      %v2147 = vadd.f32 %v1825, %v2045
      %v2148 = vadd.f32 %v1826, %v2048
      %v2149 = vadd.f32 %v1827, %v2053
      %v2150 = vadd.f32 %v1828, %v2056
      %v2151 = vadd.f32 %v1829, %v2061
      %v2152 = vadd.f32 %v1830, %v2064
      %v2153 = vadd.f32 %v1831, %v2069
      %v2154 = vadd.f32 %v1832, %v2072
      %v2155 = vadd.f32 %v1833, %v2077
      %v2156 = vadd.f32 %v1834, %v2080
      %v2157 = vadd.f32 %v1835, %v2085
      %v2158 = vadd.f32 %v1836, %v2088
      %v2159 = vadd.f32 %v1837, %v2093
      %v2160 = vadd.f32 %v1838, %v2096
      %v2161 = vadd.f32 %v1839, %v2101
      %v2162 = vadd.f32 %v1840, %v2104
      %v2163 = vadd.f32 %v1841, %v2109
      %v2164 = vadd.f32 %v1842, %v2112
      %v2165 = vadd.f32 %v1843, %v2117
      %v2166 = vadd.f32 %v1844, %v2120
      %v2167 = vadd.f32 %v1845, %v2125
      %v2168 = vadd.f32 %v1846, %v2128
      %v2169 = vadd.f32 %v1847, %v2133
      %v2170 = vadd.f32 %v1848, %v2136
      %v2171 = vld [vmem:[%s844 + $0x8] sm:$0xff]
      %v2172 = vld [vmem:[%s844 + $0x10] sm:$0xff]
      %v2173 = vld [vmem:[%s844 + $0x28] sm:$0xff]
      %v2174 = vld [vmem:[%s844 + $0x30] sm:$0xff]
      %v2175 = vld [vmem:[%s844 + $0x48] sm:$0xff]
      %v2176 = vld [vmem:[%s844 + $0x50] sm:$0xff]
      %v2177 = vld [vmem:[%s844 + $0x68] sm:$0xff]
      %v2178 = vld [vmem:[%s844 + $0x70] sm:$0xff]
      %v2179 = vld [vmem:[%s844 + $0x88] sm:$0xff]
      %v2180 = vld [vmem:[%s844 + $0x90] sm:$0xff]
      %v2181 = vld [vmem:[%s844 + $0xa8] sm:$0xff]
      %v2182 = vld [vmem:[%s844 + $0xb0] sm:$0xff]
      %v2183 = vld [vmem:[%s844 + $0xc8] sm:$0xff]
      %v2184 = vld [vmem:[%s844 + $0xd0] sm:$0xff]
      %v2185 = vld [vmem:[%s844 + $0xe8] sm:$0xff]
      %v2186 = vld [vmem:[%s844 + $0xf0] sm:$0xff]
      %v2187 = vld [vmem:[%s844 + $0x108] sm:$0xff]
      %v2188 = vld [vmem:[%s844 + $0x110] sm:$0xff]
      %v2189 = vld [vmem:[%s844 + $0x128] sm:$0xff]
      %v2190 = vld [vmem:[%s844 + $0x130] sm:$0xff]
      %v2191 = vld [vmem:[%s844 + $0x148] sm:$0xff]
      %v2192 = vld [vmem:[%s844 + $0x150] sm:$0xff]
      %v2193 = vld [vmem:[%s844 + $0x168] sm:$0xff]
      %v2194 = vld [vmem:[%s844 + $0x170] sm:$0xff]
      %v2195 = vld [vmem:[%s844 + $0x188] sm:$0xff]
      %v2196 = vld [vmem:[%s844 + $0x190] sm:$0xff]
      %v2197 = vld [vmem:[%s844 + $0x1a8] sm:$0xff]
      %v2198 = vld [vmem:[%s844 + $0x1b0] sm:$0xff]
      %v2199 = vld [vmem:[%s844 + $0x1c8] sm:$0xff]
      %v2200 = vld [vmem:[%s844 + $0x1d0] sm:$0xff]
      %v2201 = vld [vmem:[%s844 + $0x1e8] sm:$0xff]
      %v2202 = vld [vmem:[%s844 + $0x1f0] sm:$0xff]
      %v2203 = vpack.c.bf16 %v2172, %v2171
      %v2204 = vpack.c.bf16 %v2174, %v2173
      %v2205 = vpack.c.bf16 %v2176, %v2175
      %v2206 = vpack.c.bf16 %v2178, %v2177
      %v2207 = vpack.c.bf16 %v2180, %v2179
      %v2208 = vpack.c.bf16 %v2182, %v2181
      %v2209 = vpack.c.bf16 %v2184, %v2183
      %v2210 = vpack.c.bf16 %v2186, %v2185
      %v2211 = vpack.c.bf16 %v2188, %v2187
      %v2212 = vpack.c.bf16 %v2190, %v2189
      %v2213 = vpack.c.bf16 %v2192, %v2191
      %v2214 = vpack.c.bf16 %v2194, %v2193
      %v2215 = vpack.c.bf16 %v2196, %v2195
      %v2216 = vpack.c.bf16 %v2198, %v2197
      %v2217 = vpack.c.bf16 %v2200, %v2199
      %v2218 = vpack.c.bf16 %v2202, %v2201
      %s2219 = scalar_lea.vmem %s3, 128
      %v2220 = vld [vmem:[%s2219] sm:$0xf]
      %v2221 = vld [vmem:[%s2219 + $0x4] sm:$0xf]
      %v2222 = vld [vmem:[%s2219 + $0x8] sm:$0xf]
      %v2223 = vld [vmem:[%s2219 + $0xc] sm:$0xf]
      %v2224 = vld [vmem:[%s2219 + $0x10] sm:$0xf]
      %v2225 = vld [vmem:[%s2219 + $0x14] sm:$0xf]
      %v2226 = vld [vmem:[%s2219 + $0x18] sm:$0xf]
      %v2227 = vld [vmem:[%s2219 + $0x1c] sm:$0xf]
      %v2236 = vunpack.c.l.b16 %v2220
      %v2237 = vunpack.c.l.b16 %v2221
      %v2238 = vunpack.c.l.b16 %v2222
      %v2239 = vunpack.c.l.b16 %v2223
      %v2240 = vunpack.c.l.b16 %v2224
      %v2241 = vunpack.c.l.b16 %v2225
      %v2242 = vunpack.c.l.b16 %v2226
      %v2243 = vunpack.c.l.b16 %v2227
      %v2244 = vpack.c.b16 %v2237, %v2236
      %v2245 = vpack.c.b16 %v2239, %v2238
      %v2246 = vpack.c.b16 %v2241, %v2240
      %v2247 = vpack.c.b16 %v2243, %v2242
      %v2253 = vsel %vm771, %v2203, 0
      %v2256 = vsel %vm771, %v2204, 0
      %v2259 = vsel %vm771, %v2205, 0
      %v2262 = vsel %vm771, %v2206, 0
      %v2265 = vsel %vm771, %v2207, 0
      %v2268 = vsel %vm771, %v2208, 0
      %v2271 = vsel %vm771, %v2209, 0
      %v2274 = vsel %vm771, %v2210, 0
      %v2277 = vsel %vm771, %v2211, 0
      %v2280 = vsel %vm771, %v2212, 0
      %v2283 = vsel %vm771, %v2213, 0
      %v2286 = vsel %vm771, %v2214, 0
      %v2289 = vsel %vm771, %v2215, 0
      %v2292 = vsel %vm771, %v2216, 0
      %v2295 = vsel %vm771, %v2217, 0
      %v2298 = vsel %vm771, %v2218, 0
      %2300 = vmatprep.subr.bf16.mxu0 0
      %2301 = vmatpush1.bf16.msra.mxu0 0
      %2302 = vmatprep.subr.bf16.mxu0 0
      %2303 = vmatpush1.bf16.msra.mxu0 0
      %2304 = vmatprep.subr.bf16.mxu0 0
      %2305 = vmatpush1.bf16.msra.mxu0 0
      %2306 = vmatprep.subr.bf16.mxu0 0
      %2307 = vmatpush1.bf16.msra.mxu0 0
      %2308 = vmatprep.subr.bf16.mxu0 0
      %2309 = vmatpush1.bf16.msra.mxu0 %v2247
      %2310 = vmatprep.subr.bf16.mxu0 0
      %2311 = vmatpush1.bf16.msra.mxu0 %v2246
      %2312 = vmatprep.subr.bf16.mxu0 0
      %2313 = vmatpush1.bf16.msra.mxu0 %v2245
      %2314 = vmatprep.subr.bf16.mxu0 0
      %2315 = vmatpush1.bf16.msra.mxu0 %v2244
      %2316 = vmatprep.subr.bf16.mxu0 0
      %2317 = vmatpush2.bf16.msra.mxu0 0
      %2318 = vmatprep.subr.bf16.mxu0 0
      %2319 = vmatpush2.bf16.msra.mxu0 0
      %2320 = vmatprep.subr.bf16.mxu0 0
      %2321 = vmatpush2.bf16.msra.mxu0 0
      %2322 = vmatprep.subr.bf16.mxu0 0
      %2323 = vmatpush2.bf16.msra.mxu0 0
      %2324 = vmatprep.subr.bf16.mxu0 0
      %2325 = vmatpush2.bf16.msra.mxu0 0
      %2326 = vmatprep.subr.bf16.mxu0 0
      %2327 = vmatpush2.bf16.msra.mxu0 0
      %2328 = vmatprep.subr.bf16.mxu0 0
      %2329 = vmatpush2.bf16.msra.mxu0 0
      %2330 = vmatprep.subr.bf16.mxu0 0
      %2331 = vmatpush2.bf16.msra.mxu0 0
      %2332 = vmatprep.mubr.bf16.mxu0 0
      %2333 = vmatmul.mubr.bf16.gmra.mxu0 %v2253
      %v2334 = vpop.f32.mrf.mxu0
      %v2335 = vadd.f32 0.0, %v2334
      %v2336 = vpop.f32.mrf.mxu0
      %v2337 = vpop.f32.mrf.mxu0
      %v2338 = vadd.f32 0.0, %v2337
      %v2339 = vpop.f32.mrf.mxu0
      %2340 = vmatprep.mubr.bf16.mxu0 0
      %2341 = vmatmul.mubr.bf16.gmra.mxu0 %v2256
      %v2342 = vpop.f32.mrf.mxu0
      %v2343 = vadd.f32 0.0, %v2342
      %v2344 = vpop.f32.mrf.mxu0
      %v2345 = vpop.f32.mrf.mxu0
      %v2346 = vadd.f32 0.0, %v2345
      %v2347 = vpop.f32.mrf.mxu0
      %2348 = vmatprep.mubr.bf16.mxu0 0
      %2349 = vmatmul.mubr.bf16.gmra.mxu0 %v2259
      %v2350 = vpop.f32.mrf.mxu0
      %v2351 = vadd.f32 0.0, %v2350
      %v2352 = vpop.f32.mrf.mxu0
      %v2353 = vpop.f32.mrf.mxu0
      %v2354 = vadd.f32 0.0, %v2353
      %v2355 = vpop.f32.mrf.mxu0
      %2356 = vmatprep.mubr.bf16.mxu0 0
      %2357 = vmatmul.mubr.bf16.gmra.mxu0 %v2262
      %v2358 = vpop.f32.mrf.mxu0
      %v2359 = vadd.f32 0.0, %v2358
      %v2360 = vpop.f32.mrf.mxu0
      %v2361 = vpop.f32.mrf.mxu0
      %v2362 = vadd.f32 0.0, %v2361
      %v2363 = vpop.f32.mrf.mxu0
      %2364 = vmatprep.mubr.bf16.mxu0 0
      %2365 = vmatmul.mubr.bf16.gmra.mxu0 %v2265
      %v2366 = vpop.f32.mrf.mxu0
      %v2367 = vadd.f32 0.0, %v2366
      %v2368 = vpop.f32.mrf.mxu0
      %v2369 = vpop.f32.mrf.mxu0
      %v2370 = vadd.f32 0.0, %v2369
      %v2371 = vpop.f32.mrf.mxu0
      %2372 = vmatprep.mubr.bf16.mxu0 0
      %2373 = vmatmul.mubr.bf16.gmra.mxu0 %v2268
      %v2374 = vpop.f32.mrf.mxu0
      %v2375 = vadd.f32 0.0, %v2374
      %v2376 = vpop.f32.mrf.mxu0
      %v2377 = vpop.f32.mrf.mxu0
      %v2378 = vadd.f32 0.0, %v2377
      %v2379 = vpop.f32.mrf.mxu0
      %2380 = vmatprep.mubr.bf16.mxu0 0
      %2381 = vmatmul.mubr.bf16.gmra.mxu0 %v2271
      %v2382 = vpop.f32.mrf.mxu0
      %v2383 = vadd.f32 0.0, %v2382
      %v2384 = vpop.f32.mrf.mxu0
      %v2385 = vpop.f32.mrf.mxu0
      %v2386 = vadd.f32 0.0, %v2385
      %v2387 = vpop.f32.mrf.mxu0
      %2388 = vmatprep.mubr.bf16.mxu0 0
      %2389 = vmatmul.mubr.bf16.gmra.mxu0 %v2274
      %v2390 = vpop.f32.mrf.mxu0
      %v2391 = vadd.f32 0.0, %v2390
      %v2392 = vpop.f32.mrf.mxu0
      %v2393 = vpop.f32.mrf.mxu0
      %v2394 = vadd.f32 0.0, %v2393
      %v2395 = vpop.f32.mrf.mxu0
      %2396 = vmatprep.mubr.bf16.mxu0 0
      %2397 = vmatmul.mubr.bf16.gmra.mxu0 %v2277
      %v2398 = vpop.f32.mrf.mxu0
      %v2399 = vadd.f32 0.0, %v2398
      %v2400 = vpop.f32.mrf.mxu0
      %v2401 = vpop.f32.mrf.mxu0
      %v2402 = vadd.f32 0.0, %v2401
      %v2403 = vpop.f32.mrf.mxu0
      %2404 = vmatprep.mubr.bf16.mxu0 0
      %2405 = vmatmul.mubr.bf16.gmra.mxu0 %v2280
      %v2406 = vpop.f32.mrf.mxu0
      %v2407 = vadd.f32 0.0, %v2406
      %v2408 = vpop.f32.mrf.mxu0
      %v2409 = vpop.f32.mrf.mxu0
      %v2410 = vadd.f32 0.0, %v2409
      %v2411 = vpop.f32.mrf.mxu0
      %2412 = vmatprep.mubr.bf16.mxu0 0
      %2413 = vmatmul.mubr.bf16.gmra.mxu0 %v2283
      %v2414 = vpop.f32.mrf.mxu0
      %v2415 = vadd.f32 0.0, %v2414
      %v2416 = vpop.f32.mrf.mxu0
      %v2417 = vpop.f32.mrf.mxu0
      %v2418 = vadd.f32 0.0, %v2417
      %v2419 = vpop.f32.mrf.mxu0
      %2420 = vmatprep.mubr.bf16.mxu0 0
      %2421 = vmatmul.mubr.bf16.gmra.mxu0 %v2286
      %v2422 = vpop.f32.mrf.mxu0
      %v2423 = vadd.f32 0.0, %v2422
      %v2424 = vpop.f32.mrf.mxu0
      %v2425 = vpop.f32.mrf.mxu0
      %v2426 = vadd.f32 0.0, %v2425
      %v2427 = vpop.f32.mrf.mxu0
      %2428 = vmatprep.mubr.bf16.mxu0 0
      %2429 = vmatmul.mubr.bf16.gmra.mxu0 %v2289
      %v2430 = vpop.f32.mrf.mxu0
      %v2431 = vadd.f32 0.0, %v2430
      %v2432 = vpop.f32.mrf.mxu0
      %v2433 = vpop.f32.mrf.mxu0
      %v2434 = vadd.f32 0.0, %v2433
      %v2435 = vpop.f32.mrf.mxu0
      %2436 = vmatprep.mubr.bf16.mxu0 0
      %2437 = vmatmul.mubr.bf16.gmra.mxu0 %v2292
      %v2438 = vpop.f32.mrf.mxu0
      %v2439 = vadd.f32 0.0, %v2438
      %v2440 = vpop.f32.mrf.mxu0
      %v2441 = vpop.f32.mrf.mxu0
      %v2442 = vadd.f32 0.0, %v2441
      %v2443 = vpop.f32.mrf.mxu0
      %2444 = vmatprep.mubr.bf16.mxu0 0
      %2445 = vmatmul.mubr.bf16.gmra.mxu0 %v2295
      %v2446 = vpop.f32.mrf.mxu0
      %v2447 = vadd.f32 0.0, %v2446
      %v2448 = vpop.f32.mrf.mxu0
      %v2449 = vpop.f32.mrf.mxu0
      %v2450 = vadd.f32 0.0, %v2449
      %v2451 = vpop.f32.mrf.mxu0
      %2452 = vmatprep.mubr.bf16.mxu0 0
      %2453 = vmatmul.mubr.bf16.gmra.mxu0 %v2298
      %v2454 = vpop.f32.mrf.mxu0
      %v2455 = vadd.f32 0.0, %v2454
      %v2456 = vpop.f32.mrf.mxu0
      %v2457 = vpop.f32.mrf.mxu0
      %v2458 = vadd.f32 0.0, %v2457
      %v2459 = vpop.f32.mrf.mxu0
      %2460 = vdwg.mxu0
      %v2461 = vadd.f32 %v2139, %v2335
      %v2462 = vadd.f32 %v2140, %v2338
      %v2463 = vadd.f32 %v2141, %v2343
      %v2464 = vadd.f32 %v2142, %v2346
      %v2465 = vadd.f32 %v2143, %v2351
      %v2466 = vadd.f32 %v2144, %v2354
      %v2467 = vadd.f32 %v2145, %v2359
      %v2468 = vadd.f32 %v2146, %v2362
      %v2469 = vadd.f32 %v2147, %v2367
      %v2470 = vadd.f32 %v2148, %v2370
      %v2471 = vadd.f32 %v2149, %v2375
      %v2472 = vadd.f32 %v2150, %v2378
      %v2473 = vadd.f32 %v2151, %v2383
      %v2474 = vadd.f32 %v2152, %v2386
      %v2475 = vadd.f32 %v2153, %v2391
      %v2476 = vadd.f32 %v2154, %v2394
      %v2477 = vadd.f32 %v2155, %v2399
      %v2478 = vadd.f32 %v2156, %v2402
      %v2479 = vadd.f32 %v2157, %v2407
      %v2480 = vadd.f32 %v2158, %v2410
      %v2481 = vadd.f32 %v2159, %v2415
      %v2482 = vadd.f32 %v2160, %v2418
      %v2483 = vadd.f32 %v2161, %v2423
      %v2484 = vadd.f32 %v2162, %v2426
      %v2485 = vadd.f32 %v2163, %v2431
      %v2486 = vadd.f32 %v2164, %v2434
      %v2487 = vadd.f32 %v2165, %v2439
      %v2488 = vadd.f32 %v2166, %v2442
      %v2489 = vadd.f32 %v2167, %v2447
      %v2490 = vadd.f32 %v2168, %v2450
      %v2491 = vadd.f32 %v2169, %v2455
      %v2492 = vadd.f32 %v2170, %v2458
      %v2493 = vld [vmem:[%s844 + $0x9] sm:$0xff]
      %v2494 = vld [vmem:[%s844 + $0x11] sm:$0xff]
      %v2495 = vld [vmem:[%s844 + $0x29] sm:$0xff]
      %v2496 = vld [vmem:[%s844 + $0x31] sm:$0xff]
      %v2497 = vld [vmem:[%s844 + $0x49] sm:$0xff]
      %v2498 = vld [vmem:[%s844 + $0x51] sm:$0xff]
      %v2499 = vld [vmem:[%s844 + $0x69] sm:$0xff]
      %v2500 = vld [vmem:[%s844 + $0x71] sm:$0xff]
      %v2501 = vld [vmem:[%s844 + $0x89] sm:$0xff]
      %v2502 = vld [vmem:[%s844 + $0x91] sm:$0xff]
      %v2503 = vld [vmem:[%s844 + $0xa9] sm:$0xff]
      %v2504 = vld [vmem:[%s844 + $0xb1] sm:$0xff]
      %v2505 = vld [vmem:[%s844 + $0xc9] sm:$0xff]
      %v2506 = vld [vmem:[%s844 + $0xd1] sm:$0xff]
      %v2507 = vld [vmem:[%s844 + $0xe9] sm:$0xff]
      %v2508 = vld [vmem:[%s844 + $0xf1] sm:$0xff]
      %v2509 = vld [vmem:[%s844 + $0x109] sm:$0xff]
      %v2510 = vld [vmem:[%s844 + $0x111] sm:$0xff]
      %v2511 = vld [vmem:[%s844 + $0x129] sm:$0xff]
      %v2512 = vld [vmem:[%s844 + $0x131] sm:$0xff]
      %v2513 = vld [vmem:[%s844 + $0x149] sm:$0xff]
      %v2514 = vld [vmem:[%s844 + $0x151] sm:$0xff]
      %v2515 = vld [vmem:[%s844 + $0x169] sm:$0xff]
      %v2516 = vld [vmem:[%s844 + $0x171] sm:$0xff]
      %v2517 = vld [vmem:[%s844 + $0x189] sm:$0xff]
      %v2518 = vld [vmem:[%s844 + $0x191] sm:$0xff]
      %v2519 = vld [vmem:[%s844 + $0x1a9] sm:$0xff]
      %v2520 = vld [vmem:[%s844 + $0x1b1] sm:$0xff]
      %v2521 = vld [vmem:[%s844 + $0x1c9] sm:$0xff]
      %v2522 = vld [vmem:[%s844 + $0x1d1] sm:$0xff]
      %v2523 = vld [vmem:[%s844 + $0x1e9] sm:$0xff]
      %v2524 = vld [vmem:[%s844 + $0x1f1] sm:$0xff]
      %v2525 = vpack.c.bf16 %v2494, %v2493
      %v2526 = vpack.c.bf16 %v2496, %v2495
      %v2527 = vpack.c.bf16 %v2498, %v2497
      %v2528 = vpack.c.bf16 %v2500, %v2499
      %v2529 = vpack.c.bf16 %v2502, %v2501
      %v2530 = vpack.c.bf16 %v2504, %v2503
      %v2531 = vpack.c.bf16 %v2506, %v2505
      %v2532 = vpack.c.bf16 %v2508, %v2507
      %v2533 = vpack.c.bf16 %v2510, %v2509
      %v2534 = vpack.c.bf16 %v2512, %v2511
      %v2535 = vpack.c.bf16 %v2514, %v2513
      %v2536 = vpack.c.bf16 %v2516, %v2515
      %v2537 = vpack.c.bf16 %v2518, %v2517
      %v2538 = vpack.c.bf16 %v2520, %v2519
      %v2539 = vpack.c.bf16 %v2522, %v2521
      %v2540 = vpack.c.bf16 %v2524, %v2523
      %s2541 = scalar_lea.vmem %s3, 160
      %v2542 = vld [vmem:[%s2541] sm:$0xf]
      %v2543 = vld [vmem:[%s2541 + $0x4] sm:$0xf]
      %v2544 = vld [vmem:[%s2541 + $0x8] sm:$0xf]
      %v2545 = vld [vmem:[%s2541 + $0xc] sm:$0xf]
      %v2546 = vld [vmem:[%s2541 + $0x10] sm:$0xf]
      %v2547 = vld [vmem:[%s2541 + $0x14] sm:$0xf]
      %v2548 = vld [vmem:[%s2541 + $0x18] sm:$0xf]
      %v2549 = vld [vmem:[%s2541 + $0x1c] sm:$0xf]
      %v2558 = vunpack.c.l.b16 %v2542
      %v2559 = vunpack.c.l.b16 %v2543
      %v2560 = vunpack.c.l.b16 %v2544
      %v2561 = vunpack.c.l.b16 %v2545
      %v2562 = vunpack.c.l.b16 %v2546
      %v2563 = vunpack.c.l.b16 %v2547
      %v2564 = vunpack.c.l.b16 %v2548
      %v2565 = vunpack.c.l.b16 %v2549
      %v2566 = vpack.c.b16 %v2559, %v2558
      %v2567 = vpack.c.b16 %v2561, %v2560
      %v2568 = vpack.c.b16 %v2563, %v2562
      %v2569 = vpack.c.b16 %v2565, %v2564
      %v2575 = vsel %vm771, %v2525, 0
      %v2578 = vsel %vm771, %v2526, 0
      %v2581 = vsel %vm771, %v2527, 0
      %v2584 = vsel %vm771, %v2528, 0
      %v2587 = vsel %vm771, %v2529, 0
      %v2590 = vsel %vm771, %v2530, 0
      %v2593 = vsel %vm771, %v2531, 0
      %v2596 = vsel %vm771, %v2532, 0
      %v2599 = vsel %vm771, %v2533, 0
      %v2602 = vsel %vm771, %v2534, 0
      %v2605 = vsel %vm771, %v2535, 0
      %v2608 = vsel %vm771, %v2536, 0
      %v2611 = vsel %vm771, %v2537, 0
      %v2614 = vsel %vm771, %v2538, 0
      %v2617 = vsel %vm771, %v2539, 0
      %v2620 = vsel %vm771, %v2540, 0
      %2622 = vmatprep.subr.bf16.mxu0 0
      %2623 = vmatpush1.bf16.msra.mxu0 0
      %2624 = vmatprep.subr.bf16.mxu0 0
      %2625 = vmatpush1.bf16.msra.mxu0 0
      %2626 = vmatprep.subr.bf16.mxu0 0
      %2627 = vmatpush1.bf16.msra.mxu0 0
      %2628 = vmatprep.subr.bf16.mxu0 0
      %2629 = vmatpush1.bf16.msra.mxu0 0
      %2630 = vmatprep.subr.bf16.mxu0 0
      %2631 = vmatpush1.bf16.msra.mxu0 %v2569
      %2632 = vmatprep.subr.bf16.mxu0 0
      %2633 = vmatpush1.bf16.msra.mxu0 %v2568
      %2634 = vmatprep.subr.bf16.mxu0 0
      %2635 = vmatpush1.bf16.msra.mxu0 %v2567
      %2636 = vmatprep.subr.bf16.mxu0 0
      %2637 = vmatpush1.bf16.msra.mxu0 %v2566
      %2638 = vmatprep.subr.bf16.mxu0 0
      %2639 = vmatpush2.bf16.msra.mxu0 0
      %2640 = vmatprep.subr.bf16.mxu0 0
      %2641 = vmatpush2.bf16.msra.mxu0 0
      %2642 = vmatprep.subr.bf16.mxu0 0
      %2643 = vmatpush2.bf16.msra.mxu0 0
      %2644 = vmatprep.subr.bf16.mxu0 0
      %2645 = vmatpush2.bf16.msra.mxu0 0
      %2646 = vmatprep.subr.bf16.mxu0 0
      %2647 = vmatpush2.bf16.msra.mxu0 0
      %2648 = vmatprep.subr.bf16.mxu0 0
      %2649 = vmatpush2.bf16.msra.mxu0 0
      %2650 = vmatprep.subr.bf16.mxu0 0
      %2651 = vmatpush2.bf16.msra.mxu0 0
      %2652 = vmatprep.subr.bf16.mxu0 0
      %2653 = vmatpush2.bf16.msra.mxu0 0
      %2654 = vmatprep.mubr.bf16.mxu0 0
      %2655 = vmatmul.mubr.bf16.gmra.mxu0 %v2575
      %v2656 = vpop.f32.mrf.mxu0
      %v2657 = vadd.f32 0.0, %v2656
      %v2658 = vpop.f32.mrf.mxu0
      %v2659 = vpop.f32.mrf.mxu0
      %v2660 = vadd.f32 0.0, %v2659
      %v2661 = vpop.f32.mrf.mxu0
      %2662 = vmatprep.mubr.bf16.mxu0 0
      %2663 = vmatmul.mubr.bf16.gmra.mxu0 %v2578
      %v2664 = vpop.f32.mrf.mxu0
      %v2665 = vadd.f32 0.0, %v2664
      %v2666 = vpop.f32.mrf.mxu0
      %v2667 = vpop.f32.mrf.mxu0
      %v2668 = vadd.f32 0.0, %v2667
      %v2669 = vpop.f32.mrf.mxu0
      %2670 = vmatprep.mubr.bf16.mxu0 0
      %2671 = vmatmul.mubr.bf16.gmra.mxu0 %v2581
      %v2672 = vpop.f32.mrf.mxu0
      %v2673 = vadd.f32 0.0, %v2672
      %v2674 = vpop.f32.mrf.mxu0
      %v2675 = vpop.f32.mrf.mxu0
      %v2676 = vadd.f32 0.0, %v2675
      %v2677 = vpop.f32.mrf.mxu0
      %2678 = vmatprep.mubr.bf16.mxu0 0
      %2679 = vmatmul.mubr.bf16.gmra.mxu0 %v2584
      %v2680 = vpop.f32.mrf.mxu0
      %v2681 = vadd.f32 0.0, %v2680
      %v2682 = vpop.f32.mrf.mxu0
      %v2683 = vpop.f32.mrf.mxu0
      %v2684 = vadd.f32 0.0, %v2683
      %v2685 = vpop.f32.mrf.mxu0
      %2686 = vmatprep.mubr.bf16.mxu0 0
      %2687 = vmatmul.mubr.bf16.gmra.mxu0 %v2587
      %v2688 = vpop.f32.mrf.mxu0
      %v2689 = vadd.f32 0.0, %v2688
      %v2690 = vpop.f32.mrf.mxu0
      %v2691 = vpop.f32.mrf.mxu0
      %v2692 = vadd.f32 0.0, %v2691
      %v2693 = vpop.f32.mrf.mxu0
      %2694 = vmatprep.mubr.bf16.mxu0 0
      %2695 = vmatmul.mubr.bf16.gmra.mxu0 %v2590
      %v2696 = vpop.f32.mrf.mxu0
      %v2697 = vadd.f32 0.0, %v2696
      %v2698 = vpop.f32.mrf.mxu0
      %v2699 = vpop.f32.mrf.mxu0
      %v2700 = vadd.f32 0.0, %v2699
      %v2701 = vpop.f32.mrf.mxu0
      %2702 = vmatprep.mubr.bf16.mxu0 0
      %2703 = vmatmul.mubr.bf16.gmra.mxu0 %v2593
      %v2704 = vpop.f32.mrf.mxu0
      %v2705 = vadd.f32 0.0, %v2704
      %v2706 = vpop.f32.mrf.mxu0
      %v2707 = vpop.f32.mrf.mxu0
      %v2708 = vadd.f32 0.0, %v2707
      %v2709 = vpop.f32.mrf.mxu0
      %2710 = vmatprep.mubr.bf16.mxu0 0
      %2711 = vmatmul.mubr.bf16.gmra.mxu0 %v2596
      %v2712 = vpop.f32.mrf.mxu0
      %v2713 = vadd.f32 0.0, %v2712
      %v2714 = vpop.f32.mrf.mxu0
      %v2715 = vpop.f32.mrf.mxu0
      %v2716 = vadd.f32 0.0, %v2715
      %v2717 = vpop.f32.mrf.mxu0
      %2718 = vmatprep.mubr.bf16.mxu0 0
      %2719 = vmatmul.mubr.bf16.gmra.mxu0 %v2599
      %v2720 = vpop.f32.mrf.mxu0
      %v2721 = vadd.f32 0.0, %v2720
      %v2722 = vpop.f32.mrf.mxu0
      %v2723 = vpop.f32.mrf.mxu0
      %v2724 = vadd.f32 0.0, %v2723
      %v2725 = vpop.f32.mrf.mxu0
      %2726 = vmatprep.mubr.bf16.mxu0 0
      %2727 = vmatmul.mubr.bf16.gmra.mxu0 %v2602
      %v2728 = vpop.f32.mrf.mxu0
      %v2729 = vadd.f32 0.0, %v2728
      %v2730 = vpop.f32.mrf.mxu0
      %v2731 = vpop.f32.mrf.mxu0
      %v2732 = vadd.f32 0.0, %v2731
      %v2733 = vpop.f32.mrf.mxu0
      %2734 = vmatprep.mubr.bf16.mxu0 0
      %2735 = vmatmul.mubr.bf16.gmra.mxu0 %v2605
      %v2736 = vpop.f32.mrf.mxu0
      %v2737 = vadd.f32 0.0, %v2736
      %v2738 = vpop.f32.mrf.mxu0
      %v2739 = vpop.f32.mrf.mxu0
      %v2740 = vadd.f32 0.0, %v2739
      %v2741 = vpop.f32.mrf.mxu0
      %2742 = vmatprep.mubr.bf16.mxu0 0
      %2743 = vmatmul.mubr.bf16.gmra.mxu0 %v2608
      %v2744 = vpop.f32.mrf.mxu0
      %v2745 = vadd.f32 0.0, %v2744
      %v2746 = vpop.f32.mrf.mxu0
      %v2747 = vpop.f32.mrf.mxu0
      %v2748 = vadd.f32 0.0, %v2747
      %v2749 = vpop.f32.mrf.mxu0
      %2750 = vmatprep.mubr.bf16.mxu0 0
      %2751 = vmatmul.mubr.bf16.gmra.mxu0 %v2611
      %v2752 = vpop.f32.mrf.mxu0
      %v2753 = vadd.f32 0.0, %v2752
      %v2754 = vpop.f32.mrf.mxu0
      %v2755 = vpop.f32.mrf.mxu0
      %v2756 = vadd.f32 0.0, %v2755
      %v2757 = vpop.f32.mrf.mxu0
      %2758 = vmatprep.mubr.bf16.mxu0 0
      %2759 = vmatmul.mubr.bf16.gmra.mxu0 %v2614
      %v2760 = vpop.f32.mrf.mxu0
      %v2761 = vadd.f32 0.0, %v2760
      %v2762 = vpop.f32.mrf.mxu0
      %v2763 = vpop.f32.mrf.mxu0
      %v2764 = vadd.f32 0.0, %v2763
      %v2765 = vpop.f32.mrf.mxu0
      %2766 = vmatprep.mubr.bf16.mxu0 0
      %2767 = vmatmul.mubr.bf16.gmra.mxu0 %v2617
      %v2768 = vpop.f32.mrf.mxu0
      %v2769 = vadd.f32 0.0, %v2768
      %v2770 = vpop.f32.mrf.mxu0
      %v2771 = vpop.f32.mrf.mxu0
      %v2772 = vadd.f32 0.0, %v2771
      %v2773 = vpop.f32.mrf.mxu0
      %2774 = vmatprep.mubr.bf16.mxu0 0
      %2775 = vmatmul.mubr.bf16.gmra.mxu0 %v2620
      %v2776 = vpop.f32.mrf.mxu0
      %v2777 = vadd.f32 0.0, %v2776
      %v2778 = vpop.f32.mrf.mxu0
      %v2779 = vpop.f32.mrf.mxu0
      %v2780 = vadd.f32 0.0, %v2779
      %v2781 = vpop.f32.mrf.mxu0
      %2782 = vdwg.mxu0
      %v2783 = vadd.f32 %v2461, %v2657
      %v2784 = vadd.f32 %v2462, %v2660
      %v2785 = vadd.f32 %v2463, %v2665
      %v2786 = vadd.f32 %v2464, %v2668
      %v2787 = vadd.f32 %v2465, %v2673
      %v2788 = vadd.f32 %v2466, %v2676
      %v2789 = vadd.f32 %v2467, %v2681
      %v2790 = vadd.f32 %v2468, %v2684
      %v2791 = vadd.f32 %v2469, %v2689
      %v2792 = vadd.f32 %v2470, %v2692
      %v2793 = vadd.f32 %v2471, %v2697
      %v2794 = vadd.f32 %v2472, %v2700
      %v2795 = vadd.f32 %v2473, %v2705
      %v2796 = vadd.f32 %v2474, %v2708
      %v2797 = vadd.f32 %v2475, %v2713
      %v2798 = vadd.f32 %v2476, %v2716
      %v2799 = vadd.f32 %v2477, %v2721
      %v2800 = vadd.f32 %v2478, %v2724
      %v2801 = vadd.f32 %v2479, %v2729
      %v2802 = vadd.f32 %v2480, %v2732
      %v2803 = vadd.f32 %v2481, %v2737
      %v2804 = vadd.f32 %v2482, %v2740
      %v2805 = vadd.f32 %v2483, %v2745
      %v2806 = vadd.f32 %v2484, %v2748
      %v2807 = vadd.f32 %v2485, %v2753
      %v2808 = vadd.f32 %v2486, %v2756
      %v2809 = vadd.f32 %v2487, %v2761
      %v2810 = vadd.f32 %v2488, %v2764
      %v2811 = vadd.f32 %v2489, %v2769
      %v2812 = vadd.f32 %v2490, %v2772
      %v2813 = vadd.f32 %v2491, %v2777
      %v2814 = vadd.f32 %v2492, %v2780
      %s2815 = scalar_lea.vmem [#allocation2], 64
      %v2816 = vld [vmem:[%s2815 + $0x7] sm:$0xff]
      %v2817 = vld [vmem:[%s2815 + $0xf] sm:$0xff]
      %v2818 = vld [vmem:[%s2815 + $0x27] sm:$0xff]
      %v2819 = vld [vmem:[%s2815 + $0x2f] sm:$0xff]
      %v2820 = vld [vmem:[%s2815 + $0x47] sm:$0xff]
      %v2821 = vld [vmem:[%s2815 + $0x4f] sm:$0xff]
      %v2822 = vld [vmem:[%s2815 + $0x67] sm:$0xff]
      %v2823 = vld [vmem:[%s2815 + $0x6f] sm:$0xff]
      %v2824 = vld [vmem:[%s2815 + $0x87] sm:$0xff]
      %v2825 = vld [vmem:[%s2815 + $0x8f] sm:$0xff]
      %v2826 = vld [vmem:[%s2815 + $0xa7] sm:$0xff]
      %v2827 = vld [vmem:[%s2815 + $0xaf] sm:$0xff]
      %v2828 = vld [vmem:[%s2815 + $0xc7] sm:$0xff]
      %v2829 = vld [vmem:[%s2815 + $0xcf] sm:$0xff]
      %v2830 = vld [vmem:[%s2815 + $0xe7] sm:$0xff]
      %v2831 = vld [vmem:[%s2815 + $0xef] sm:$0xff]
      %v2832 = vld [vmem:[%s2815 + $0x107] sm:$0xff]
      %v2833 = vld [vmem:[%s2815 + $0x10f] sm:$0xff]
      %v2834 = vld [vmem:[%s2815 + $0x127] sm:$0xff]
      %v2835 = vld [vmem:[%s2815 + $0x12f] sm:$0xff]
      %v2836 = vld [vmem:[%s2815 + $0x147] sm:$0xff]
      %v2837 = vld [vmem:[%s2815 + $0x14f] sm:$0xff]
      %v2838 = vld [vmem:[%s2815 + $0x167] sm:$0xff]
      %v2839 = vld [vmem:[%s2815 + $0x16f] sm:$0xff]
      %v2840 = vld [vmem:[%s2815 + $0x187] sm:$0xff]
      %v2841 = vld [vmem:[%s2815 + $0x18f] sm:$0xff]
      %v2842 = vld [vmem:[%s2815 + $0x1a7] sm:$0xff]
      %v2843 = vld [vmem:[%s2815 + $0x1af] sm:$0xff]
      %v2844 = vld [vmem:[%s2815 + $0x1c7] sm:$0xff]
      %v2845 = vld [vmem:[%s2815 + $0x1cf] sm:$0xff]
      %v2846 = vld [vmem:[%s2815 + $0x1e7] sm:$0xff]
      %v2847 = vld [vmem:[%s2815 + $0x1ef] sm:$0xff]
      %v2848 = vpack.c.bf16 %v2817, %v2816
      %v2849 = vpack.c.bf16 %v2819, %v2818
      %v2850 = vpack.c.bf16 %v2821, %v2820
      %v2851 = vpack.c.bf16 %v2823, %v2822
      %v2852 = vpack.c.bf16 %v2825, %v2824
      %v2853 = vpack.c.bf16 %v2827, %v2826
      %v2854 = vpack.c.bf16 %v2829, %v2828
      %v2855 = vpack.c.bf16 %v2831, %v2830
      %v2856 = vpack.c.bf16 %v2833, %v2832
      %v2857 = vpack.c.bf16 %v2835, %v2834
      %v2858 = vpack.c.bf16 %v2837, %v2836
      %v2859 = vpack.c.bf16 %v2839, %v2838
      %v2860 = vpack.c.bf16 %v2841, %v2840
      %v2861 = vpack.c.bf16 %v2843, %v2842
      %v2862 = vpack.c.bf16 %v2845, %v2844
      %v2863 = vpack.c.bf16 %v2847, %v2846
      %s2864 = scalar_lea.vmem %s3, 192
      %v2865 = vld [vmem:[%s2864] sm:$0xf]
      %v2866 = vld [vmem:[%s2864 + $0x4] sm:$0xf]
      %v2867 = vld [vmem:[%s2864 + $0x8] sm:$0xf]
      %v2868 = vld [vmem:[%s2864 + $0xc] sm:$0xf]
      %v2869 = vld [vmem:[%s2864 + $0x10] sm:$0xf]
      %v2870 = vld [vmem:[%s2864 + $0x14] sm:$0xf]
      %v2871 = vld [vmem:[%s2864 + $0x18] sm:$0xf]
      %v2872 = vld [vmem:[%s2864 + $0x1c] sm:$0xf]
      %v2881 = vunpack.c.l.b16 %v2865
      %v2882 = vunpack.c.l.b16 %v2866
      %v2883 = vunpack.c.l.b16 %v2867
      %v2884 = vunpack.c.l.b16 %v2868
      %v2885 = vunpack.c.l.b16 %v2869
      %v2886 = vunpack.c.l.b16 %v2870
      %v2887 = vunpack.c.l.b16 %v2871
      %v2888 = vunpack.c.l.b16 %v2872
      %v2889 = vpack.c.b16 %v2882, %v2881
      %v2890 = vpack.c.b16 %v2884, %v2883
      %v2891 = vpack.c.b16 %v2886, %v2885
      %v2892 = vpack.c.b16 %v2888, %v2887
      %v2898 = vsel %vm771, %v2848, 0
      %v2901 = vsel %vm771, %v2849, 0
      %v2904 = vsel %vm771, %v2850, 0
      %v2907 = vsel %vm771, %v2851, 0
      %v2910 = vsel %vm771, %v2852, 0
      %v2913 = vsel %vm771, %v2853, 0
      %v2916 = vsel %vm771, %v2854, 0
      %v2919 = vsel %vm771, %v2855, 0
      %v2922 = vsel %vm771, %v2856, 0
      %v2925 = vsel %vm771, %v2857, 0
      %v2928 = vsel %vm771, %v2858, 0
      %v2931 = vsel %vm771, %v2859, 0
      %v2934 = vsel %vm771, %v2860, 0
      %v2937 = vsel %vm771, %v2861, 0
      %v2940 = vsel %vm771, %v2862, 0
      %v2943 = vsel %vm771, %v2863, 0
      %2945 = vmatprep.subr.bf16.mxu0 0
      %2946 = vmatpush1.bf16.msra.mxu0 0
      %2947 = vmatprep.subr.bf16.mxu0 0
      %2948 = vmatpush1.bf16.msra.mxu0 0
      %2949 = vmatprep.subr.bf16.mxu0 0
      %2950 = vmatpush1.bf16.msra.mxu0 0
      %2951 = vmatprep.subr.bf16.mxu0 0
      %2952 = vmatpush1.bf16.msra.mxu0 0
      %2953 = vmatprep.subr.bf16.mxu0 0
      %2954 = vmatpush1.bf16.msra.mxu0 %v2892
      %2955 = vmatprep.subr.bf16.mxu0 0
      %2956 = vmatpush1.bf16.msra.mxu0 %v2891
      %2957 = vmatprep.subr.bf16.mxu0 0
      %2958 = vmatpush1.bf16.msra.mxu0 %v2890
      %2959 = vmatprep.subr.bf16.mxu0 0
      %2960 = vmatpush1.bf16.msra.mxu0 %v2889
      %2961 = vmatprep.subr.bf16.mxu0 0
      %2962 = vmatpush2.bf16.msra.mxu0 0
      %2963 = vmatprep.subr.bf16.mxu0 0
      %2964 = vmatpush2.bf16.msra.mxu0 0
      %2965 = vmatprep.subr.bf16.mxu0 0
      %2966 = vmatpush2.bf16.msra.mxu0 0
      %2967 = vmatprep.subr.bf16.mxu0 0
      %2968 = vmatpush2.bf16.msra.mxu0 0
      %2969 = vmatprep.subr.bf16.mxu0 0
      %2970 = vmatpush2.bf16.msra.mxu0 0
      %2971 = vmatprep.subr.bf16.mxu0 0
      %2972 = vmatpush2.bf16.msra.mxu0 0
      %2973 = vmatprep.subr.bf16.mxu0 0
      %2974 = vmatpush2.bf16.msra.mxu0 0
      %2975 = vmatprep.subr.bf16.mxu0 0
      %2976 = vmatpush2.bf16.msra.mxu0 0
      %2977 = vmatprep.mubr.bf16.mxu0 0
      %2978 = vmatmul.mubr.bf16.gmra.mxu0 %v2898
      %v2979 = vpop.f32.mrf.mxu0
      %v2980 = vadd.f32 0.0, %v2979
      %v2981 = vpop.f32.mrf.mxu0
      %v2982 = vpop.f32.mrf.mxu0
      %v2983 = vadd.f32 0.0, %v2982
      %v2984 = vpop.f32.mrf.mxu0
      %2985 = vmatprep.mubr.bf16.mxu0 0
      %2986 = vmatmul.mubr.bf16.gmra.mxu0 %v2901
      %v2987 = vpop.f32.mrf.mxu0
      %v2988 = vadd.f32 0.0, %v2987
      %v2989 = vpop.f32.mrf.mxu0
      %v2990 = vpop.f32.mrf.mxu0
      %v2991 = vadd.f32 0.0, %v2990
      %v2992 = vpop.f32.mrf.mxu0
      %2993 = vmatprep.mubr.bf16.mxu0 0
      %2994 = vmatmul.mubr.bf16.gmra.mxu0 %v2904
      %v2995 = vpop.f32.mrf.mxu0
      %v2996 = vadd.f32 0.0, %v2995
      %v2997 = vpop.f32.mrf.mxu0
      %v2998 = vpop.f32.mrf.mxu0
      %v2999 = vadd.f32 0.0, %v2998
      %v3000 = vpop.f32.mrf.mxu0
      %3001 = vmatprep.mubr.bf16.mxu0 0
      %3002 = vmatmul.mubr.bf16.gmra.mxu0 %v2907
      %v3003 = vpop.f32.mrf.mxu0
      %v3004 = vadd.f32 0.0, %v3003
      %v3005 = vpop.f32.mrf.mxu0
      %v3006 = vpop.f32.mrf.mxu0
      %v3007 = vadd.f32 0.0, %v3006
      %v3008 = vpop.f32.mrf.mxu0
      %3009 = vmatprep.mubr.bf16.mxu0 0
      %3010 = vmatmul.mubr.bf16.gmra.mxu0 %v2910
      %v3011 = vpop.f32.mrf.mxu0
      %v3012 = vadd.f32 0.0, %v3011
      %v3013 = vpop.f32.mrf.mxu0
      %v3014 = vpop.f32.mrf.mxu0
      %v3015 = vadd.f32 0.0, %v3014
      %v3016 = vpop.f32.mrf.mxu0
      %3017 = vmatprep.mubr.bf16.mxu0 0
      %3018 = vmatmul.mubr.bf16.gmra.mxu0 %v2913
      %v3019 = vpop.f32.mrf.mxu0
      %v3020 = vadd.f32 0.0, %v3019
      %v3021 = vpop.f32.mrf.mxu0
      %v3022 = vpop.f32.mrf.mxu0
      %v3023 = vadd.f32 0.0, %v3022
      %v3024 = vpop.f32.mrf.mxu0
      %3025 = vmatprep.mubr.bf16.mxu0 0
      %3026 = vmatmul.mubr.bf16.gmra.mxu0 %v2916
      %v3027 = vpop.f32.mrf.mxu0
      %v3028 = vadd.f32 0.0, %v3027
      %v3029 = vpop.f32.mrf.mxu0
      %v3030 = vpop.f32.mrf.mxu0
      %v3031 = vadd.f32 0.0, %v3030
      %v3032 = vpop.f32.mrf.mxu0
      %3033 = vmatprep.mubr.bf16.mxu0 0
      %3034 = vmatmul.mubr.bf16.gmra.mxu0 %v2919
      %v3035 = vpop.f32.mrf.mxu0
      %v3036 = vadd.f32 0.0, %v3035
      %v3037 = vpop.f32.mrf.mxu0
      %v3038 = vpop.f32.mrf.mxu0
      %v3039 = vadd.f32 0.0, %v3038
      %v3040 = vpop.f32.mrf.mxu0
      %3041 = vmatprep.mubr.bf16.mxu0 0
      %3042 = vmatmul.mubr.bf16.gmra.mxu0 %v2922
      %v3043 = vpop.f32.mrf.mxu0
      %v3044 = vadd.f32 0.0, %v3043
      %v3045 = vpop.f32.mrf.mxu0
      %v3046 = vpop.f32.mrf.mxu0
      %v3047 = vadd.f32 0.0, %v3046
      %v3048 = vpop.f32.mrf.mxu0
      %3049 = vmatprep.mubr.bf16.mxu0 0
      %3050 = vmatmul.mubr.bf16.gmra.mxu0 %v2925
      %v3051 = vpop.f32.mrf.mxu0
      %v3052 = vadd.f32 0.0, %v3051
      %v3053 = vpop.f32.mrf.mxu0
      %v3054 = vpop.f32.mrf.mxu0
      %v3055 = vadd.f32 0.0, %v3054
      %v3056 = vpop.f32.mrf.mxu0
      %3057 = vmatprep.mubr.bf16.mxu0 0
      %3058 = vmatmul.mubr.bf16.gmra.mxu0 %v2928
      %v3059 = vpop.f32.mrf.mxu0
      %v3060 = vadd.f32 0.0, %v3059
      %v3061 = vpop.f32.mrf.mxu0
      %v3062 = vpop.f32.mrf.mxu0
      %v3063 = vadd.f32 0.0, %v3062
      %v3064 = vpop.f32.mrf.mxu0
      %3065 = vmatprep.mubr.bf16.mxu0 0
      %3066 = vmatmul.mubr.bf16.gmra.mxu0 %v2931
      %v3067 = vpop.f32.mrf.mxu0
      %v3068 = vadd.f32 0.0, %v3067
      %v3069 = vpop.f32.mrf.mxu0
      %v3070 = vpop.f32.mrf.mxu0
      %v3071 = vadd.f32 0.0, %v3070
      %v3072 = vpop.f32.mrf.mxu0
      %3073 = vmatprep.mubr.bf16.mxu0 0
      %3074 = vmatmul.mubr.bf16.gmra.mxu0 %v2934
      %v3075 = vpop.f32.mrf.mxu0
      %v3076 = vadd.f32 0.0, %v3075
      %v3077 = vpop.f32.mrf.mxu0
      %v3078 = vpop.f32.mrf.mxu0
      %v3079 = vadd.f32 0.0, %v3078
      %v3080 = vpop.f32.mrf.mxu0
      %3081 = vmatprep.mubr.bf16.mxu0 0
      %3082 = vmatmul.mubr.bf16.gmra.mxu0 %v2937
      %v3083 = vpop.f32.mrf.mxu0
      %v3084 = vadd.f32 0.0, %v3083
      %v3085 = vpop.f32.mrf.mxu0
      %v3086 = vpop.f32.mrf.mxu0
      %v3087 = vadd.f32 0.0, %v3086
      %v3088 = vpop.f32.mrf.mxu0
      %3089 = vmatprep.mubr.bf16.mxu0 0
      %3090 = vmatmul.mubr.bf16.gmra.mxu0 %v2940
      %v3091 = vpop.f32.mrf.mxu0
      %v3092 = vadd.f32 0.0, %v3091
      %v3093 = vpop.f32.mrf.mxu0
      %v3094 = vpop.f32.mrf.mxu0
      %v3095 = vadd.f32 0.0, %v3094
      %v3096 = vpop.f32.mrf.mxu0
      %3097 = vmatprep.mubr.bf16.mxu0 0
      %3098 = vmatmul.mubr.bf16.gmra.mxu0 %v2943
      %v3099 = vpop.f32.mrf.mxu0
      %v3100 = vadd.f32 0.0, %v3099
      %v3101 = vpop.f32.mrf.mxu0
      %v3102 = vpop.f32.mrf.mxu0
      %v3103 = vadd.f32 0.0, %v3102
      %v3104 = vpop.f32.mrf.mxu0
      %3105 = vdwg.mxu0
      %v3106 = vadd.f32 %v2783, %v2980
      %v3107 = vadd.f32 %v2784, %v2983
      %v3108 = vadd.f32 %v2785, %v2988
      %v3109 = vadd.f32 %v2786, %v2991
      %v3110 = vadd.f32 %v2787, %v2996
      %v3111 = vadd.f32 %v2788, %v2999
      %v3112 = vadd.f32 %v2789, %v3004
      %v3113 = vadd.f32 %v2790, %v3007
      %v3114 = vadd.f32 %v2791, %v3012
      %v3115 = vadd.f32 %v2792, %v3015
      %v3116 = vadd.f32 %v2793, %v3020
      %v3117 = vadd.f32 %v2794, %v3023
      %v3118 = vadd.f32 %v2795, %v3028
      %v3119 = vadd.f32 %v2796, %v3031
      %v3120 = vadd.f32 %v2797, %v3036
      %v3121 = vadd.f32 %v2798, %v3039
      %v3122 = vadd.f32 %v2799, %v3044
      %v3123 = vadd.f32 %v2800, %v3047
      %v3124 = vadd.f32 %v2801, %v3052
      %v3125 = vadd.f32 %v2802, %v3055
      %v3126 = vadd.f32 %v2803, %v3060
      %v3127 = vadd.f32 %v2804, %v3063
      %v3128 = vadd.f32 %v2805, %v3068
      %v3129 = vadd.f32 %v2806, %v3071
      %v3130 = vadd.f32 %v2807, %v3076
      %v3131 = vadd.f32 %v2808, %v3079
      %v3132 = vadd.f32 %v2809, %v3084
      %v3133 = vadd.f32 %v2810, %v3087
      %v3134 = vadd.f32 %v2811, %v3092
      %v3135 = vadd.f32 %v2812, %v3095
      %v3136 = vadd.f32 %v2813, %v3100
      %v3137 = vadd.f32 %v2814, %v3103
      %v3138 = vld [vmem:[%s2815 + $0x8] sm:$0xff]
      %v3139 = vld [vmem:[%s2815 + $0x10] sm:$0xff]
      %v3140 = vld [vmem:[%s2815 + $0x28] sm:$0xff]
      %v3141 = vld [vmem:[%s2815 + $0x30] sm:$0xff]
      %v3142 = vld [vmem:[%s2815 + $0x48] sm:$0xff]
      %v3143 = vld [vmem:[%s2815 + $0x50] sm:$0xff]
      %v3144 = vld [vmem:[%s2815 + $0x68] sm:$0xff]
      %v3145 = vld [vmem:[%s2815 + $0x70] sm:$0xff]
      %v3146 = vld [vmem:[%s2815 + $0x88] sm:$0xff]
      %v3147 = vld [vmem:[%s2815 + $0x90] sm:$0xff]
      %v3148 = vld [vmem:[%s2815 + $0xa8] sm:$0xff]
      %v3149 = vld [vmem:[%s2815 + $0xb0] sm:$0xff]
      %v3150 = vld [vmem:[%s2815 + $0xc8] sm:$0xff]
      %v3151 = vld [vmem:[%s2815 + $0xd0] sm:$0xff]
      %v3152 = vld [vmem:[%s2815 + $0xe8] sm:$0xff]
      %v3153 = vld [vmem:[%s2815 + $0xf0] sm:$0xff]
      %v3154 = vld [vmem:[%s2815 + $0x108] sm:$0xff]
      %v3155 = vld [vmem:[%s2815 + $0x110] sm:$0xff]
      %v3156 = vld [vmem:[%s2815 + $0x128] sm:$0xff]
      %v3157 = vld [vmem:[%s2815 + $0x130] sm:$0xff]
      %v3158 = vld [vmem:[%s2815 + $0x148] sm:$0xff]
      %v3159 = vld [vmem:[%s2815 + $0x150] sm:$0xff]
      %v3160 = vld [vmem:[%s2815 + $0x168] sm:$0xff]
      %v3161 = vld [vmem:[%s2815 + $0x170] sm:$0xff]
      %v3162 = vld [vmem:[%s2815 + $0x188] sm:$0xff]
      %v3163 = vld [vmem:[%s2815 + $0x190] sm:$0xff]
      %v3164 = vld [vmem:[%s2815 + $0x1a8] sm:$0xff]
      %v3165 = vld [vmem:[%s2815 + $0x1b0] sm:$0xff]
      %v3166 = vld [vmem:[%s2815 + $0x1c8] sm:$0xff]
      %v3167 = vld [vmem:[%s2815 + $0x1d0] sm:$0xff]
      %v3168 = vld [vmem:[%s2815 + $0x1e8] sm:$0xff]
      %v3169 = vld [vmem:[%s2815 + $0x1f0] sm:$0xff]
      %v3170 = vpack.c.bf16 %v3139, %v3138
      %v3171 = vpack.c.bf16 %v3141, %v3140
      %v3172 = vpack.c.bf16 %v3143, %v3142
      %v3173 = vpack.c.bf16 %v3145, %v3144
      %v3174 = vpack.c.bf16 %v3147, %v3146
      %v3175 = vpack.c.bf16 %v3149, %v3148
      %v3176 = vpack.c.bf16 %v3151, %v3150
      %v3177 = vpack.c.bf16 %v3153, %v3152
      %v3178 = vpack.c.bf16 %v3155, %v3154
      %v3179 = vpack.c.bf16 %v3157, %v3156
      %v3180 = vpack.c.bf16 %v3159, %v3158
      %v3181 = vpack.c.bf16 %v3161, %v3160
      %v3182 = vpack.c.bf16 %v3163, %v3162
      %v3183 = vpack.c.bf16 %v3165, %v3164
      %v3184 = vpack.c.bf16 %v3167, %v3166
      %v3185 = vpack.c.bf16 %v3169, %v3168
      %s3186 = scalar_lea.vmem %s3, 224
      %v3187 = vld [vmem:[%s3186] sm:$0xf]
      %v3188 = vld [vmem:[%s3186 + $0x4] sm:$0xf]
      %v3189 = vld [vmem:[%s3186 + $0x8] sm:$0xf]
      %v3190 = vld [vmem:[%s3186 + $0xc] sm:$0xf]
      %v3191 = vld [vmem:[%s3186 + $0x10] sm:$0xf]
      %v3192 = vld [vmem:[%s3186 + $0x14] sm:$0xf]
      %v3193 = vld [vmem:[%s3186 + $0x18] sm:$0xf]
      %v3194 = vld [vmem:[%s3186 + $0x1c] sm:$0xf]
      %v3203 = vunpack.c.l.b16 %v3187
      %v3204 = vunpack.c.l.b16 %v3188
      %v3205 = vunpack.c.l.b16 %v3189
      %v3206 = vunpack.c.l.b16 %v3190
      %v3207 = vunpack.c.l.b16 %v3191
      %v3208 = vunpack.c.l.b16 %v3192
      %v3209 = vunpack.c.l.b16 %v3193
      %v3210 = vunpack.c.l.b16 %v3194
      %v3211 = vpack.c.b16 %v3204, %v3203
      %v3212 = vpack.c.b16 %v3206, %v3205
      %v3213 = vpack.c.b16 %v3208, %v3207
      %v3214 = vpack.c.b16 %v3210, %v3209
      %v3220 = vsel %vm771, %v3170, 0
      %v3223 = vsel %vm771, %v3171, 0
      %v3226 = vsel %vm771, %v3172, 0
      %v3229 = vsel %vm771, %v3173, 0
      %v3232 = vsel %vm771, %v3174, 0
      %v3235 = vsel %vm771, %v3175, 0
      %v3238 = vsel %vm771, %v3176, 0
      %v3241 = vsel %vm771, %v3177, 0
      %v3244 = vsel %vm771, %v3178, 0
      %v3247 = vsel %vm771, %v3179, 0
      %v3250 = vsel %vm771, %v3180, 0
      %v3253 = vsel %vm771, %v3181, 0
      %v3256 = vsel %vm771, %v3182, 0
      %v3259 = vsel %vm771, %v3183, 0
      %v3262 = vsel %vm771, %v3184, 0
      %v3265 = vsel %vm771, %v3185, 0
      %3267 = vmatprep.subr.bf16.mxu0 0
      %3268 = vmatpush1.bf16.msra.mxu0 0
      %3269 = vmatprep.subr.bf16.mxu0 0
      %3270 = vmatpush1.bf16.msra.mxu0 0
      %3271 = vmatprep.subr.bf16.mxu0 0
      %3272 = vmatpush1.bf16.msra.mxu0 0
      %3273 = vmatprep.subr.bf16.mxu0 0
      %3274 = vmatpush1.bf16.msra.mxu0 0
      %3275 = vmatprep.subr.bf16.mxu0 0
      %3276 = vmatpush1.bf16.msra.mxu0 %v3214
      %3277 = vmatprep.subr.bf16.mxu0 0
      %3278 = vmatpush1.bf16.msra.mxu0 %v3213
      %3279 = vmatprep.subr.bf16.mxu0 0
      %3280 = vmatpush1.bf16.msra.mxu0 %v3212
      %3281 = vmatprep.subr.bf16.mxu0 0
      %3282 = vmatpush1.bf16.msra.mxu0 %v3211
      %3283 = vmatprep.subr.bf16.mxu0 0
      %3284 = vmatpush2.bf16.msra.mxu0 0
      %3285 = vmatprep.subr.bf16.mxu0 0
      %3286 = vmatpush2.bf16.msra.mxu0 0
      %3287 = vmatprep.subr.bf16.mxu0 0
      %3288 = vmatpush2.bf16.msra.mxu0 0
      %3289 = vmatprep.subr.bf16.mxu0 0
      %3290 = vmatpush2.bf16.msra.mxu0 0
      %3291 = vmatprep.subr.bf16.mxu0 0
      %3292 = vmatpush2.bf16.msra.mxu0 0
      %3293 = vmatprep.subr.bf16.mxu0 0
      %3294 = vmatpush2.bf16.msra.mxu0 0
      %3295 = vmatprep.subr.bf16.mxu0 0
      %3296 = vmatpush2.bf16.msra.mxu0 0
      %3297 = vmatprep.subr.bf16.mxu0 0
      %3298 = vmatpush2.bf16.msra.mxu0 0
      %3299 = vmatprep.mubr.bf16.mxu0 0
      %3300 = vmatmul.mubr.bf16.gmra.mxu0 %v3220
      %v3301 = vpop.f32.mrf.mxu0
      %v3302 = vadd.f32 0.0, %v3301
      %v3303 = vpop.f32.mrf.mxu0
      %v3304 = vpop.f32.mrf.mxu0
      %v3305 = vadd.f32 0.0, %v3304
      %v3306 = vpop.f32.mrf.mxu0
      %3307 = vmatprep.mubr.bf16.mxu0 0
      %3308 = vmatmul.mubr.bf16.gmra.mxu0 %v3223
      %v3309 = vpop.f32.mrf.mxu0
      %v3310 = vadd.f32 0.0, %v3309
      %v3311 = vpop.f32.mrf.mxu0
      %v3312 = vpop.f32.mrf.mxu0
      %v3313 = vadd.f32 0.0, %v3312
      %v3314 = vpop.f32.mrf.mxu0
      %3315 = vmatprep.mubr.bf16.mxu0 0
      %3316 = vmatmul.mubr.bf16.gmra.mxu0 %v3226
      %v3317 = vpop.f32.mrf.mxu0
      %v3318 = vadd.f32 0.0, %v3317
      %v3319 = vpop.f32.mrf.mxu0
      %v3320 = vpop.f32.mrf.mxu0
      %v3321 = vadd.f32 0.0, %v3320
      %v3322 = vpop.f32.mrf.mxu0
      %3323 = vmatprep.mubr.bf16.mxu0 0
      %3324 = vmatmul.mubr.bf16.gmra.mxu0 %v3229
      %v3325 = vpop.f32.mrf.mxu0
      %v3326 = vadd.f32 0.0, %v3325
      %v3327 = vpop.f32.mrf.mxu0
      %v3328 = vpop.f32.mrf.mxu0
      %v3329 = vadd.f32 0.0, %v3328
      %v3330 = vpop.f32.mrf.mxu0
      %3331 = vmatprep.mubr.bf16.mxu0 0
      %3332 = vmatmul.mubr.bf16.gmra.mxu0 %v3232
      %v3333 = vpop.f32.mrf.mxu0
      %v3334 = vadd.f32 0.0, %v3333
      %v3335 = vpop.f32.mrf.mxu0
      %v3336 = vpop.f32.mrf.mxu0
      %v3337 = vadd.f32 0.0, %v3336
      %v3338 = vpop.f32.mrf.mxu0
      %3339 = vmatprep.mubr.bf16.mxu0 0
      %3340 = vmatmul.mubr.bf16.gmra.mxu0 %v3235
      %v3341 = vpop.f32.mrf.mxu0
      %v3342 = vadd.f32 0.0, %v3341
      %v3343 = vpop.f32.mrf.mxu0
      %v3344 = vpop.f32.mrf.mxu0
      %v3345 = vadd.f32 0.0, %v3344
      %v3346 = vpop.f32.mrf.mxu0
      %3347 = vmatprep.mubr.bf16.mxu0 0
      %3348 = vmatmul.mubr.bf16.gmra.mxu0 %v3238
      %v3349 = vpop.f32.mrf.mxu0
      %v3350 = vadd.f32 0.0, %v3349
      %v3351 = vpop.f32.mrf.mxu0
      %v3352 = vpop.f32.mrf.mxu0
      %v3353 = vadd.f32 0.0, %v3352
      %v3354 = vpop.f32.mrf.mxu0
      %3355 = vmatprep.mubr.bf16.mxu0 0
      %3356 = vmatmul.mubr.bf16.gmra.mxu0 %v3241
      %v3357 = vpop.f32.mrf.mxu0
      %v3358 = vadd.f32 0.0, %v3357
      %v3359 = vpop.f32.mrf.mxu0
      %v3360 = vpop.f32.mrf.mxu0
      %v3361 = vadd.f32 0.0, %v3360
      %v3362 = vpop.f32.mrf.mxu0
      %3363 = vmatprep.mubr.bf16.mxu0 0
      %3364 = vmatmul.mubr.bf16.gmra.mxu0 %v3244
      %v3365 = vpop.f32.mrf.mxu0
      %v3366 = vadd.f32 0.0, %v3365
      %v3367 = vpop.f32.mrf.mxu0
      %v3368 = vpop.f32.mrf.mxu0
      %v3369 = vadd.f32 0.0, %v3368
      %v3370 = vpop.f32.mrf.mxu0
      %3371 = vmatprep.mubr.bf16.mxu0 0
      %3372 = vmatmul.mubr.bf16.gmra.mxu0 %v3247
      %v3373 = vpop.f32.mrf.mxu0
      %v3374 = vadd.f32 0.0, %v3373
      %v3375 = vpop.f32.mrf.mxu0
      %v3376 = vpop.f32.mrf.mxu0
      %v3377 = vadd.f32 0.0, %v3376
      %v3378 = vpop.f32.mrf.mxu0
      %3379 = vmatprep.mubr.bf16.mxu0 0
      %3380 = vmatmul.mubr.bf16.gmra.mxu0 %v3250
      %v3381 = vpop.f32.mrf.mxu0
      %v3382 = vadd.f32 0.0, %v3381
      %v3383 = vpop.f32.mrf.mxu0
      %v3384 = vpop.f32.mrf.mxu0
      %v3385 = vadd.f32 0.0, %v3384
      %v3386 = vpop.f32.mrf.mxu0
      %3387 = vmatprep.mubr.bf16.mxu0 0
      %3388 = vmatmul.mubr.bf16.gmra.mxu0 %v3253
      %v3389 = vpop.f32.mrf.mxu0
      %v3390 = vadd.f32 0.0, %v3389
      %v3391 = vpop.f32.mrf.mxu0
      %v3392 = vpop.f32.mrf.mxu0
      %v3393 = vadd.f32 0.0, %v3392
      %v3394 = vpop.f32.mrf.mxu0
      %3395 = vmatprep.mubr.bf16.mxu0 0
      %3396 = vmatmul.mubr.bf16.gmra.mxu0 %v3256
      %v3397 = vpop.f32.mrf.mxu0
      %v3398 = vadd.f32 0.0, %v3397
      %v3399 = vpop.f32.mrf.mxu0
      %v3400 = vpop.f32.mrf.mxu0
      %v3401 = vadd.f32 0.0, %v3400
      %v3402 = vpop.f32.mrf.mxu0
      %3403 = vmatprep.mubr.bf16.mxu0 0
      %3404 = vmatmul.mubr.bf16.gmra.mxu0 %v3259
      %v3405 = vpop.f32.mrf.mxu0
      %v3406 = vadd.f32 0.0, %v3405
      %v3407 = vpop.f32.mrf.mxu0
      %v3408 = vpop.f32.mrf.mxu0
      %v3409 = vadd.f32 0.0, %v3408
      %v3410 = vpop.f32.mrf.mxu0
      %3411 = vmatprep.mubr.bf16.mxu0 0
      %3412 = vmatmul.mubr.bf16.gmra.mxu0 %v3262
      %v3413 = vpop.f32.mrf.mxu0
      %v3414 = vadd.f32 0.0, %v3413
      %v3415 = vpop.f32.mrf.mxu0
      %v3416 = vpop.f32.mrf.mxu0
      %v3417 = vadd.f32 0.0, %v3416
      %v3418 = vpop.f32.mrf.mxu0
      %3419 = vmatprep.mubr.bf16.mxu0 0
      %3420 = vmatmul.mubr.bf16.gmra.mxu0 %v3265
      %v3421 = vpop.f32.mrf.mxu0
      %v3422 = vadd.f32 0.0, %v3421
      %v3423 = vpop.f32.mrf.mxu0
      %v3424 = vpop.f32.mrf.mxu0
      %v3425 = vadd.f32 0.0, %v3424
      %v3426 = vpop.f32.mrf.mxu0
      %3427 = vdwg.mxu0
      %v3428 = vadd.f32 %v3106, %v3302
      %v3429 = vadd.f32 %v3107, %v3305
      %v3430 = vadd.f32 %v3108, %v3310
      %v3431 = vadd.f32 %v3109, %v3313
      %v3432 = vadd.f32 %v3110, %v3318
      %v3433 = vadd.f32 %v3111, %v3321
      %v3434 = vadd.f32 %v3112, %v3326
      %v3435 = vadd.f32 %v3113, %v3329
      %v3436 = vadd.f32 %v3114, %v3334
      %v3437 = vadd.f32 %v3115, %v3337
      %v3438 = vadd.f32 %v3116, %v3342
      %v3439 = vadd.f32 %v3117, %v3345
      %v3440 = vadd.f32 %v3118, %v3350
      %v3441 = vadd.f32 %v3119, %v3353
      %v3442 = vadd.f32 %v3120, %v3358
      %v3443 = vadd.f32 %v3121, %v3361
      %v3444 = vadd.f32 %v3122, %v3366
      %v3445 = vadd.f32 %v3123, %v3369
      %v3446 = vadd.f32 %v3124, %v3374
      %v3447 = vadd.f32 %v3125, %v3377
      %v3448 = vadd.f32 %v3126, %v3382
      %v3449 = vadd.f32 %v3127, %v3385
      %v3450 = vadd.f32 %v3128, %v3390
      %v3451 = vadd.f32 %v3129, %v3393
      %v3452 = vadd.f32 %v3130, %v3398
      %v3453 = vadd.f32 %v3131, %v3401
      %v3454 = vadd.f32 %v3132, %v3406
      %v3455 = vadd.f32 %v3133, %v3409
      %v3456 = vadd.f32 %v3134, %v3414
      %v3457 = vadd.f32 %v3135, %v3417
      %v3458 = vadd.f32 %v3136, %v3422
      %v3459 = vadd.f32 %v3137, %v3425
      %v3460 = vld [vmem:[%s2815 + $0x9] sm:$0xff]
      %v3461 = vld [vmem:[%s2815 + $0x11] sm:$0xff]
      %v3462 = vld [vmem:[%s2815 + $0x29] sm:$0xff]
      %v3463 = vld [vmem:[%s2815 + $0x31] sm:$0xff]
      %v3464 = vld [vmem:[%s2815 + $0x49] sm:$0xff]
      %v3465 = vld [vmem:[%s2815 + $0x51] sm:$0xff]
      %v3466 = vld [vmem:[%s2815 + $0x69] sm:$0xff]
      %v3467 = vld [vmem:[%s2815 + $0x71] sm:$0xff]
      %v3468 = vld [vmem:[%s2815 + $0x89] sm:$0xff]
      %v3469 = vld [vmem:[%s2815 + $0x91] sm:$0xff]
      %v3470 = vld [vmem:[%s2815 + $0xa9] sm:$0xff]
      %v3471 = vld [vmem:[%s2815 + $0xb1] sm:$0xff]
      %v3472 = vld [vmem:[%s2815 + $0xc9] sm:$0xff]
      %v3473 = vld [vmem:[%s2815 + $0xd1] sm:$0xff]
      %v3474 = vld [vmem:[%s2815 + $0xe9] sm:$0xff]
      %v3475 = vld [vmem:[%s2815 + $0xf1] sm:$0xff]
      %v3476 = vld [vmem:[%s2815 + $0x109] sm:$0xff]
      %v3477 = vld [vmem:[%s2815 + $0x111] sm:$0xff]
      %v3478 = vld [vmem:[%s2815 + $0x129] sm:$0xff]
      %v3479 = vld [vmem:[%s2815 + $0x131] sm:$0xff]
      %v3480 = vld [vmem:[%s2815 + $0x149] sm:$0xff]
      %v3481 = vld [vmem:[%s2815 + $0x151] sm:$0xff]
      %v3482 = vld [vmem:[%s2815 + $0x169] sm:$0xff]
      %v3483 = vld [vmem:[%s2815 + $0x171] sm:$0xff]
      %v3484 = vld [vmem:[%s2815 + $0x189] sm:$0xff]
      %v3485 = vld [vmem:[%s2815 + $0x191] sm:$0xff]
      %v3486 = vld [vmem:[%s2815 + $0x1a9] sm:$0xff]
      %v3487 = vld [vmem:[%s2815 + $0x1b1] sm:$0xff]
      %v3488 = vld [vmem:[%s2815 + $0x1c9] sm:$0xff]
      %v3489 = vld [vmem:[%s2815 + $0x1d1] sm:$0xff]
      %v3490 = vld [vmem:[%s2815 + $0x1e9] sm:$0xff]
      %v3491 = vld [vmem:[%s2815 + $0x1f1] sm:$0xff]
      %v3492 = vpack.c.bf16 %v3461, %v3460
      %v3493 = vpack.c.bf16 %v3463, %v3462
      %v3494 = vpack.c.bf16 %v3465, %v3464
      %v3495 = vpack.c.bf16 %v3467, %v3466
      %v3496 = vpack.c.bf16 %v3469, %v3468
      %v3497 = vpack.c.bf16 %v3471, %v3470
      %v3498 = vpack.c.bf16 %v3473, %v3472
      %v3499 = vpack.c.bf16 %v3475, %v3474
      %v3500 = vpack.c.bf16 %v3477, %v3476
      %v3501 = vpack.c.bf16 %v3479, %v3478
      %v3502 = vpack.c.bf16 %v3481, %v3480
      %v3503 = vpack.c.bf16 %v3483, %v3482
      %v3504 = vpack.c.bf16 %v3485, %v3484
      %v3505 = vpack.c.bf16 %v3487, %v3486
      %v3506 = vpack.c.bf16 %v3489, %v3488
      %v3507 = vpack.c.bf16 %v3491, %v3490
      %s3508 = scalar_lea.vmem %s3, 256
      %v3509 = vld [vmem:[%s3508] sm:$0xf]
      %v3510 = vld [vmem:[%s3508 + $0x4] sm:$0xf]
      %v3511 = vld [vmem:[%s3508 + $0x8] sm:$0xf]
      %v3512 = vld [vmem:[%s3508 + $0xc] sm:$0xf]
      %v3513 = vld [vmem:[%s3508 + $0x10] sm:$0xf]
      %v3514 = vld [vmem:[%s3508 + $0x14] sm:$0xf]
      %v3515 = vld [vmem:[%s3508 + $0x18] sm:$0xf]
      %v3516 = vld [vmem:[%s3508 + $0x1c] sm:$0xf]
      %v3525 = vunpack.c.l.b16 %v3509
      %v3526 = vunpack.c.l.b16 %v3510
      %v3527 = vunpack.c.l.b16 %v3511
      %v3528 = vunpack.c.l.b16 %v3512
      %v3529 = vunpack.c.l.b16 %v3513
      %v3530 = vunpack.c.l.b16 %v3514
      %v3531 = vunpack.c.l.b16 %v3515
      %v3532 = vunpack.c.l.b16 %v3516
      %v3533 = vpack.c.b16 %v3526, %v3525
      %v3534 = vpack.c.b16 %v3528, %v3527
      %v3535 = vpack.c.b16 %v3530, %v3529
      %v3536 = vpack.c.b16 %v3532, %v3531
      %v3542 = vsel %vm771, %v3492, 0
      %v3545 = vsel %vm771, %v3493, 0
      %v3548 = vsel %vm771, %v3494, 0
      %v3551 = vsel %vm771, %v3495, 0
      %v3554 = vsel %vm771, %v3496, 0
      %v3557 = vsel %vm771, %v3497, 0
      %v3560 = vsel %vm771, %v3498, 0
      %v3563 = vsel %vm771, %v3499, 0
      %v3566 = vsel %vm771, %v3500, 0
      %v3569 = vsel %vm771, %v3501, 0
      %v3572 = vsel %vm771, %v3502, 0
      %v3575 = vsel %vm771, %v3503, 0
      %v3578 = vsel %vm771, %v3504, 0
      %v3581 = vsel %vm771, %v3505, 0
      %v3584 = vsel %vm771, %v3506, 0
      %v3587 = vsel %vm771, %v3507, 0
      %3589 = vmatprep.subr.bf16.mxu0 0
      %3590 = vmatpush1.bf16.msra.mxu0 0
      %3591 = vmatprep.subr.bf16.mxu0 0
      %3592 = vmatpush1.bf16.msra.mxu0 0
      %3593 = vmatprep.subr.bf16.mxu0 0
      %3594 = vmatpush1.bf16.msra.mxu0 0
      %3595 = vmatprep.subr.bf16.mxu0 0
      %3596 = vmatpush1.bf16.msra.mxu0 0
      %3597 = vmatprep.subr.bf16.mxu0 0
      %3598 = vmatpush1.bf16.msra.mxu0 %v3536
      %3599 = vmatprep.subr.bf16.mxu0 0
      %3600 = vmatpush1.bf16.msra.mxu0 %v3535
      %3601 = vmatprep.subr.bf16.mxu0 0
      %3602 = vmatpush1.bf16.msra.mxu0 %v3534
      %3603 = vmatprep.subr.bf16.mxu0 0
      %3604 = vmatpush1.bf16.msra.mxu0 %v3533
      %3605 = vmatprep.subr.bf16.mxu0 0
      %3606 = vmatpush2.bf16.msra.mxu0 0
      %3607 = vmatprep.subr.bf16.mxu0 0
      %3608 = vmatpush2.bf16.msra.mxu0 0
      %3609 = vmatprep.subr.bf16.mxu0 0
      %3610 = vmatpush2.bf16.msra.mxu0 0
      %3611 = vmatprep.subr.bf16.mxu0 0
      %3612 = vmatpush2.bf16.msra.mxu0 0
      %3613 = vmatprep.subr.bf16.mxu0 0
      %3614 = vmatpush2.bf16.msra.mxu0 0
      %3615 = vmatprep.subr.bf16.mxu0 0
      %3616 = vmatpush2.bf16.msra.mxu0 0
      %3617 = vmatprep.subr.bf16.mxu0 0
      %3618 = vmatpush2.bf16.msra.mxu0 0
      %3619 = vmatprep.subr.bf16.mxu0 0
      %3620 = vmatpush2.bf16.msra.mxu0 0
      %3621 = vmatprep.mubr.bf16.mxu0 0
      %3622 = vmatmul.mubr.bf16.gmra.mxu0 %v3542
      %v3623 = vpop.f32.mrf.mxu0
      %v3624 = vadd.f32 0.0, %v3623
      %v3625 = vpop.f32.mrf.mxu0
      %v3626 = vpop.f32.mrf.mxu0
      %v3627 = vadd.f32 0.0, %v3626
      %v3628 = vpop.f32.mrf.mxu0
      %3629 = vmatprep.mubr.bf16.mxu0 0
      %3630 = vmatmul.mubr.bf16.gmra.mxu0 %v3545
      %v3631 = vpop.f32.mrf.mxu0
      %v3632 = vadd.f32 0.0, %v3631
      %v3633 = vpop.f32.mrf.mxu0
      %v3634 = vpop.f32.mrf.mxu0
      %v3635 = vadd.f32 0.0, %v3634
      %v3636 = vpop.f32.mrf.mxu0
      %3637 = vmatprep.mubr.bf16.mxu0 0
      %3638 = vmatmul.mubr.bf16.gmra.mxu0 %v3548
      %v3639 = vpop.f32.mrf.mxu0
      %v3640 = vadd.f32 0.0, %v3639
      %v3641 = vpop.f32.mrf.mxu0
      %v3642 = vpop.f32.mrf.mxu0
      %v3643 = vadd.f32 0.0, %v3642
      %v3644 = vpop.f32.mrf.mxu0
      %3645 = vmatprep.mubr.bf16.mxu0 0
      %3646 = vmatmul.mubr.bf16.gmra.mxu0 %v3551
      %v3647 = vpop.f32.mrf.mxu0
      %v3648 = vadd.f32 0.0, %v3647
      %v3649 = vpop.f32.mrf.mxu0
      %v3650 = vpop.f32.mrf.mxu0
      %v3651 = vadd.f32 0.0, %v3650
      %v3652 = vpop.f32.mrf.mxu0
      %3653 = vmatprep.mubr.bf16.mxu0 0
      %3654 = vmatmul.mubr.bf16.gmra.mxu0 %v3554
      %v3655 = vpop.f32.mrf.mxu0
      %v3656 = vadd.f32 0.0, %v3655
      %v3657 = vpop.f32.mrf.mxu0
      %v3658 = vpop.f32.mrf.mxu0
      %v3659 = vadd.f32 0.0, %v3658
      %v3660 = vpop.f32.mrf.mxu0
      %3661 = vmatprep.mubr.bf16.mxu0 0
      %3662 = vmatmul.mubr.bf16.gmra.mxu0 %v3557
      %v3663 = vpop.f32.mrf.mxu0
      %v3664 = vadd.f32 0.0, %v3663
      %v3665 = vpop.f32.mrf.mxu0
      %v3666 = vpop.f32.mrf.mxu0
      %v3667 = vadd.f32 0.0, %v3666
      %v3668 = vpop.f32.mrf.mxu0
      %3669 = vmatprep.mubr.bf16.mxu0 0
      %3670 = vmatmul.mubr.bf16.gmra.mxu0 %v3560
      %v3671 = vpop.f32.mrf.mxu0
      %v3672 = vadd.f32 0.0, %v3671
      %v3673 = vpop.f32.mrf.mxu0
      %v3674 = vpop.f32.mrf.mxu0
      %v3675 = vadd.f32 0.0, %v3674
      %v3676 = vpop.f32.mrf.mxu0
      %3677 = vmatprep.mubr.bf16.mxu0 0
      %3678 = vmatmul.mubr.bf16.gmra.mxu0 %v3563
      %v3679 = vpop.f32.mrf.mxu0
      %v3680 = vadd.f32 0.0, %v3679
      %v3681 = vpop.f32.mrf.mxu0
      %v3682 = vpop.f32.mrf.mxu0
      %v3683 = vadd.f32 0.0, %v3682
      %v3684 = vpop.f32.mrf.mxu0
      %3685 = vmatprep.mubr.bf16.mxu0 0
      %3686 = vmatmul.mubr.bf16.gmra.mxu0 %v3566
      %v3687 = vpop.f32.mrf.mxu0
      %v3688 = vadd.f32 0.0, %v3687
      %v3689 = vpop.f32.mrf.mxu0
      %v3690 = vpop.f32.mrf.mxu0
      %v3691 = vadd.f32 0.0, %v3690
      %v3692 = vpop.f32.mrf.mxu0
      %3693 = vmatprep.mubr.bf16.mxu0 0
      %3694 = vmatmul.mubr.bf16.gmra.mxu0 %v3569
      %v3695 = vpop.f32.mrf.mxu0
      %v3696 = vadd.f32 0.0, %v3695
      %v3697 = vpop.f32.mrf.mxu0
      %v3698 = vpop.f32.mrf.mxu0
      %v3699 = vadd.f32 0.0, %v3698
      %v3700 = vpop.f32.mrf.mxu0
      %3701 = vmatprep.mubr.bf16.mxu0 0
      %3702 = vmatmul.mubr.bf16.gmra.mxu0 %v3572
      %v3703 = vpop.f32.mrf.mxu0
      %v3704 = vadd.f32 0.0, %v3703
      %v3705 = vpop.f32.mrf.mxu0
      %v3706 = vpop.f32.mrf.mxu0
      %v3707 = vadd.f32 0.0, %v3706
      %v3708 = vpop.f32.mrf.mxu0
      %3709 = vmatprep.mubr.bf16.mxu0 0
      %3710 = vmatmul.mubr.bf16.gmra.mxu0 %v3575
      %v3711 = vpop.f32.mrf.mxu0
      %v3712 = vadd.f32 0.0, %v3711
      %v3713 = vpop.f32.mrf.mxu0
      %v3714 = vpop.f32.mrf.mxu0
      %v3715 = vadd.f32 0.0, %v3714
      %v3716 = vpop.f32.mrf.mxu0
      %3717 = vmatprep.mubr.bf16.mxu0 0
      %3718 = vmatmul.mubr.bf16.gmra.mxu0 %v3578
      %v3719 = vpop.f32.mrf.mxu0
      %v3720 = vadd.f32 0.0, %v3719
      %v3721 = vpop.f32.mrf.mxu0
      %v3722 = vpop.f32.mrf.mxu0
      %v3723 = vadd.f32 0.0, %v3722
      %v3724 = vpop.f32.mrf.mxu0
      %3725 = vmatprep.mubr.bf16.mxu0 0
      %3726 = vmatmul.mubr.bf16.gmra.mxu0 %v3581
      %v3727 = vpop.f32.mrf.mxu0
      %v3728 = vadd.f32 0.0, %v3727
      %v3729 = vpop.f32.mrf.mxu0
      %v3730 = vpop.f32.mrf.mxu0
      %v3731 = vadd.f32 0.0, %v3730
      %v3732 = vpop.f32.mrf.mxu0
      %3733 = vmatprep.mubr.bf16.mxu0 0
      %3734 = vmatmul.mubr.bf16.gmra.mxu0 %v3584
      %v3735 = vpop.f32.mrf.mxu0
      %v3736 = vadd.f32 0.0, %v3735
      %v3737 = vpop.f32.mrf.mxu0
      %v3738 = vpop.f32.mrf.mxu0
      %v3739 = vadd.f32 0.0, %v3738
      %v3740 = vpop.f32.mrf.mxu0
      %3741 = vmatprep.mubr.bf16.mxu0 0
      %3742 = vmatmul.mubr.bf16.gmra.mxu0 %v3587
      %v3743 = vpop.f32.mrf.mxu0
      %v3744 = vadd.f32 0.0, %v3743
      %v3745 = vpop.f32.mrf.mxu0
      %v3746 = vpop.f32.mrf.mxu0
      %v3747 = vadd.f32 0.0, %v3746
      %v3748 = vpop.f32.mrf.mxu0
      %3749 = vdwg.mxu0
      %v3750 = vadd.f32 %v3428, %v3624
      %v3751 = vadd.f32 %v3429, %v3627
      %v3752 = vadd.f32 %v3430, %v3632
      %v3753 = vadd.f32 %v3431, %v3635
      %v3754 = vadd.f32 %v3432, %v3640
      %v3755 = vadd.f32 %v3433, %v3643
      %v3756 = vadd.f32 %v3434, %v3648
      %v3757 = vadd.f32 %v3435, %v3651
      %v3758 = vadd.f32 %v3436, %v3656
      %v3759 = vadd.f32 %v3437, %v3659
      %v3760 = vadd.f32 %v3438, %v3664
      %v3761 = vadd.f32 %v3439, %v3667
      %v3762 = vadd.f32 %v3440, %v3672
      %v3763 = vadd.f32 %v3441, %v3675
      %v3764 = vadd.f32 %v3442, %v3680
      %v3765 = vadd.f32 %v3443, %v3683
      %v3766 = vadd.f32 %v3444, %v3688
      %v3767 = vadd.f32 %v3445, %v3691
      %v3768 = vadd.f32 %v3446, %v3696
      %v3769 = vadd.f32 %v3447, %v3699
      %v3770 = vadd.f32 %v3448, %v3704
      %v3771 = vadd.f32 %v3449, %v3707
      %v3772 = vadd.f32 %v3450, %v3712
      %v3773 = vadd.f32 %v3451, %v3715
      %v3774 = vadd.f32 %v3452, %v3720
      %v3775 = vadd.f32 %v3453, %v3723
      %v3776 = vadd.f32 %v3454, %v3728
      %v3777 = vadd.f32 %v3455, %v3731
      %v3778 = vadd.f32 %v3456, %v3736
      %v3779 = vadd.f32 %v3457, %v3739
      %v3780 = vadd.f32 %v3458, %v3744
      %v3781 = vadd.f32 %v3459, %v3747
      %v3782 = vmax.f32 %v3750, 0.0
      %v3783 = vmax.f32 %v3751, 0.0
      %v3784 = vmax.f32 %v3752, 0.0
      %v3785 = vmax.f32 %v3753, 0.0
      %v3786 = vmax.f32 %v3754, 0.0
      %v3787 = vmax.f32 %v3755, 0.0
      %v3788 = vmax.f32 %v3756, 0.0
      %v3789 = vmax.f32 %v3757, 0.0
      %v3790 = vmax.f32 %v3758, 0.0
      %v3791 = vmax.f32 %v3759, 0.0
      %v3792 = vmax.f32 %v3760, 0.0
      %v3793 = vmax.f32 %v3761, 0.0
      %v3794 = vmax.f32 %v3762, 0.0
      %v3795 = vmax.f32 %v3763, 0.0
      %v3796 = vmax.f32 %v3764, 0.0
      %v3797 = vmax.f32 %v3765, 0.0
      %v3798 = vmax.f32 %v3766, 0.0
      %v3799 = vmax.f32 %v3767, 0.0
      %v3800 = vmax.f32 %v3768, 0.0
      %v3801 = vmax.f32 %v3769, 0.0
      %v3802 = vmax.f32 %v3770, 0.0
      %v3803 = vmax.f32 %v3771, 0.0
      %v3804 = vmax.f32 %v3772, 0.0
      %v3805 = vmax.f32 %v3773, 0.0
      %v3806 = vmax.f32 %v3774, 0.0
      %v3807 = vmax.f32 %v3775, 0.0
      %v3808 = vmax.f32 %v3776, 0.0
      %v3809 = vmax.f32 %v3777, 0.0
      %v3810 = vmax.f32 %v3778, 0.0
      %v3811 = vmax.f32 %v3779, 0.0
      %v3812 = vmax.f32 %v3780, 0.0
      %v3813 = vmax.f32 %v3781, 0.0
      %3814 = vst.msk [vmem:[#allocation3] sm:$0xff] %vm771, %v3782
      %3815 = vst.msk [vmem:[#allocation3 + $0x8] sm:$0xff] %vm771, %v3783
      %3816 = vst.msk [vmem:[#allocation3 + $0x10] sm:$0xff] %vm771, %v3784
      %3817 = vst.msk [vmem:[#allocation3 + $0x18] sm:$0xff] %vm771, %v3785
      %3818 = vst.msk [vmem:[#allocation3 + $0x20] sm:$0xff] %vm771, %v3786
      %3819 = vst.msk [vmem:[#allocation3 + $0x28] sm:$0xff] %vm771, %v3787
      %3820 = vst.msk [vmem:[#allocation3 + $0x30] sm:$0xff] %vm771, %v3788
      %3821 = vst.msk [vmem:[#allocation3 + $0x38] sm:$0xff] %vm771, %v3789
      %3822 = vst.msk [vmem:[#allocation3 + $0x40] sm:$0xff] %vm771, %v3790
      %3823 = vst.msk [vmem:[#allocation3 + $0x48] sm:$0xff] %vm771, %v3791
      %3824 = vst.msk [vmem:[#allocation3 + $0x50] sm:$0xff] %vm771, %v3792
      %3825 = vst.msk [vmem:[#allocation3 + $0x58] sm:$0xff] %vm771, %v3793
      %3826 = vst.msk [vmem:[#allocation3 + $0x60] sm:$0xff] %vm771, %v3794
      %3827 = vst.msk [vmem:[#allocation3 + $0x68] sm:$0xff] %vm771, %v3795
      %3828 = vst.msk [vmem:[#allocation3 + $0x70] sm:$0xff] %vm771, %v3796
      %3829 = vst.msk [vmem:[#allocation3 + $0x78] sm:$0xff] %vm771, %v3797
      %3830 = vst.msk [vmem:[#allocation3 + $0x80] sm:$0xff] %vm771, %v3798
      %3831 = vst.msk [vmem:[#allocation3 + $0x88] sm:$0xff] %vm771, %v3799
      %3832 = vst.msk [vmem:[#allocation3 + $0x90] sm:$0xff] %vm771, %v3800
      %3833 = vst.msk [vmem:[#allocation3 + $0x98] sm:$0xff] %vm771, %v3801
      %3834 = vst.msk [vmem:[#allocation3 + $0xa0] sm:$0xff] %vm771, %v3802
      %3835 = vst.msk [vmem:[#allocation3 + $0xa8] sm:$0xff] %vm771, %v3803
      %3836 = vst.msk [vmem:[#allocation3 + $0xb0] sm:$0xff] %vm771, %v3804
      %3837 = vst.msk [vmem:[#allocation3 + $0xb8] sm:$0xff] %vm771, %v3805
      %3838 = vst.msk [vmem:[#allocation3 + $0xc0] sm:$0xff] %vm771, %v3806
      %3839 = vst.msk [vmem:[#allocation3 + $0xc8] sm:$0xff] %vm771, %v3807
      %3840 = vst.msk [vmem:[#allocation3 + $0xd0] sm:$0xff] %vm771, %v3808
      %3841 = vst.msk [vmem:[#allocation3 + $0xd8] sm:$0xff] %vm771, %v3809
      %3842 = vst.msk [vmem:[#allocation3 + $0xe0] sm:$0xff] %vm771, %v3810
      %3843 = vst.msk [vmem:[#allocation3 + $0xe8] sm:$0xff] %vm771, %v3811
      %3844 = vst.msk [vmem:[#allocation3 + $0xf0] sm:$0xff] %vm771, %v3812
      %3845 = vst.msk [vmem:[#allocation3 + $0xf8] sm:$0xff] %vm771, %v3813
      %v3846 = vld [vmem:[#allocation3] ss:$2 sm:$0xff]
      %s3847 = scalar_lea.vmem [#allocation3], 32
      %v3848 = vld [vmem:[%s3847] ss:$2 sm:$0xff]
      %s3849 = scalar_lea.vmem [#allocation3], 64
      %v3850 = vld [vmem:[%s3849] ss:$2 sm:$0xff]
      %s3851 = scalar_lea.vmem [#allocation3], 96
      %v3852 = vld [vmem:[%s3851] ss:$2 sm:$0xff]
      %s3853 = scalar_lea.vmem [#allocation3], 128
      %v3854 = vld [vmem:[%s3853] ss:$2 sm:$0xff]
      %s3855 = scalar_lea.vmem [#allocation3], 160
      %v3856 = vld [vmem:[%s3855] ss:$2 sm:$0xff]
      %s3857 = scalar_lea.vmem [#allocation3], 192
      %v3858 = vld [vmem:[%s3857] ss:$2 sm:$0xff]
      %s3859 = scalar_lea.vmem [#allocation3], 224
      %v3860 = vld [vmem:[%s3859] ss:$2 sm:$0xff]
      %s3861 = scalar_lea.vmem [#allocation3], 1
      %v3862 = vld [vmem:[%s3861] ss:$2 sm:$0xff]
      %s3863 = scalar_lea.vmem [#allocation3], 33
      %v3864 = vld [vmem:[%s3863] ss:$2 sm:$0xff]
      %s3865 = scalar_lea.vmem [#allocation3], 65
      %v3866 = vld [vmem:[%s3865] ss:$2 sm:$0xff]
      %s3867 = scalar_lea.vmem [#allocation3], 97
      %v3868 = vld [vmem:[%s3867] ss:$2 sm:$0xff]
      %s3869 = scalar_lea.vmem [#allocation3], 129
      %v3870 = vld [vmem:[%s3869] ss:$2 sm:$0xff]
      %s3871 = scalar_lea.vmem [#allocation3], 161
      %v3872 = vld [vmem:[%s3871] ss:$2 sm:$0xff]
      %s3873 = scalar_lea.vmem [#allocation3], 193
      %v3874 = vld [vmem:[%s3873] ss:$2 sm:$0xff]
      %s3875 = scalar_lea.vmem [#allocation3], 225
      %v3876 = vld [vmem:[%s3875] ss:$2 sm:$0xff]
      %s3877 = scalar_lea.vmem [#allocation3], 16
      %v3878 = vld [vmem:[%s3877] ss:$2 sm:$0xff]
      %s3879 = scalar_lea.vmem %s3877, 32 [#allocation3]
      %v3880 = vld [vmem:[%s3879] ss:$2 sm:$0xff]
      %s3881 = scalar_lea.vmem %s3877, 64 [#allocation3]
      %v3882 = vld [vmem:[%s3881] ss:$2 sm:$0xff]
      %s3883 = scalar_lea.vmem %s3877, 96 [#allocation3]
      %v3884 = vld [vmem:[%s3883] ss:$2 sm:$0xff]
      %s3885 = scalar_lea.vmem %s3877, 128 [#allocation3]
      %v3886 = vld [vmem:[%s3885] ss:$2 sm:$0xff]
      %s3887 = scalar_lea.vmem %s3877, 160 [#allocation3]
      %v3888 = vld [vmem:[%s3887] ss:$2 sm:$0xff]
      %s3889 = scalar_lea.vmem %s3877, 192 [#allocation3]
      %v3890 = vld [vmem:[%s3889] ss:$2 sm:$0xff]
      %s3891 = scalar_lea.vmem %s3877, 224 [#allocation3]
      %v3892 = vld [vmem:[%s3891] ss:$2 sm:$0xff]
      %s3893 = scalar_lea.vmem %s3877, 1 [#allocation3]
      %v3894 = vld [vmem:[%s3893] ss:$2 sm:$0xff]
      %s3895 = scalar_lea.vmem %s3877, 33 [#allocation3]
      %v3896 = vld [vmem:[%s3895] ss:$2 sm:$0xff]
      %s3897 = scalar_lea.vmem %s3877, 65 [#allocation3]
      %v3898 = vld [vmem:[%s3897] ss:$2 sm:$0xff]
      %s3899 = scalar_lea.vmem %s3877, 97 [#allocation3]
      %v3900 = vld [vmem:[%s3899] ss:$2 sm:$0xff]
      %s3901 = scalar_lea.vmem %s3877, 129 [#allocation3]
      %v3902 = vld [vmem:[%s3901] ss:$2 sm:$0xff]
      %s3903 = scalar_lea.vmem %s3877, 161 [#allocation3]
      %v3904 = vld [vmem:[%s3903] ss:$2 sm:$0xff]
      %s3905 = scalar_lea.vmem %s3877, 193 [#allocation3]
      %v3906 = vld [vmem:[%s3905] ss:$2 sm:$0xff]
      %s3907 = scalar_lea.vmem %s3877, 225 [#allocation3]
      %v3908 = vld [vmem:[%s3907] ss:$2 sm:$0xff]
      %v3909 = vmax.f32 %v3846, %v3862
      %v3910 = vmax.f32 %v3848, %v3864
      %v3911 = vmax.f32 %v3850, %v3866
      %v3912 = vmax.f32 %v3852, %v3868
      %v3913 = vmax.f32 %v3854, %v3870
      %v3914 = vmax.f32 %v3856, %v3872
      %v3915 = vmax.f32 %v3858, %v3874
      %v3916 = vmax.f32 %v3860, %v3876
      %v3917 = vmax.f32 %v3878, %v3894
      %v3918 = vmax.f32 %v3880, %v3896
      %v3919 = vmax.f32 %v3882, %v3898
      %v3920 = vmax.f32 %v3884, %v3900
      %v3921 = vmax.f32 %v3886, %v3902
      %v3922 = vmax.f32 %v3888, %v3904
      %v3923 = vmax.f32 %v3890, %v3906
      %v3924 = vmax.f32 %v3892, %v3908
      %v3925 = vmax.f32 %v3909, %v3917
      %v3926 = vmax.f32 %v3910, %v3918
      %v3927 = vmax.f32 %v3911, %v3919
      %v3928 = vmax.f32 %v3912, %v3920
      %v3929 = vmax.f32 %v3913, %v3921
      %v3930 = vmax.f32 %v3914, %v3922
      %v3931 = vmax.f32 %v3915, %v3923
      %v3932 = vmax.f32 %v3916, %v3924
      %3933 = vst.msk [vmem:[#allocation4] sm:$0xff] %vm771, 0.0
      %3934 = vst.msk [vmem:[#allocation4 + $0x8] sm:$0xff] %vm771, 0.0
      %3935 = vst.msk [vmem:[#allocation4 + $0x10] sm:$0xff] %vm771, 0.0
      %3936 = vst.msk [vmem:[#allocation4 + $0x18] sm:$0xff] %vm771, 0.0
      %3937 = vst.msk [vmem:[#allocation4 + $0x20] sm:$0xff] %vm771, 0.0
      %3938 = vst.msk [vmem:[#allocation4 + $0x28] sm:$0xff] %vm771, 0.0
      %3939 = vst.msk [vmem:[#allocation4 + $0x30] sm:$0xff] %vm771, 0.0
      %3940 = vst.msk [vmem:[#allocation4 + $0x38] sm:$0xff] %vm771, 0.0
      %3941 = vst.msk [vmem:[#allocation4 + $0x40] sm:$0xff] %vm771, 0.0
      %3942 = vst.msk [vmem:[#allocation4 + $0x48] sm:$0xff] %vm771, 0.0
      %3943 = vst.msk [vmem:[#allocation4 + $0x50] sm:$0xff] %vm771, 0.0
      %3944 = vst.msk [vmem:[#allocation4 + $0x58] sm:$0xff] %vm771, 0.0
      %3945 = vst.msk [vmem:[#allocation4 + $0x60] sm:$0xff] %vm771, 0.0
      %3946 = vst.msk [vmem:[#allocation4 + $0x68] sm:$0xff] %vm771, 0.0
      %3947 = vst.msk [vmem:[#allocation4 + $0x70] sm:$0xff] %vm771, 0.0
      %3948 = vst.msk [vmem:[#allocation4 + $0x78] sm:$0xff] %vm771, 0.0
      %3949 = vst.msk [vmem:[#allocation4 + $0x80] sm:$0xff] %vm771, 0.0
      %3950 = vst.msk [vmem:[#allocation4 + $0x88] sm:$0xff] %vm771, 0.0
      %3951 = vst.msk [vmem:[#allocation4 + $0x90] sm:$0xff] %vm771, 0.0
      %3952 = vst.msk [vmem:[#allocation4 + $0x98] sm:$0xff] %vm771, 0.0
      %3953 = vst.msk [vmem:[#allocation4 + $0xa0] sm:$0xff] %vm771, 0.0
      %3954 = vst.msk [vmem:[#allocation4 + $0xa8] sm:$0xff] %vm771, 0.0
      %3955 = vst.msk [vmem:[#allocation4 + $0xb0] sm:$0xff] %vm771, 0.0
      %3956 = vst.msk [vmem:[#allocation4 + $0xb8] sm:$0xff] %vm771, 0.0
      %3957 = vst.msk [vmem:[#allocation4 + $0xc0] sm:$0xff] %vm771, 0.0
      %3958 = vst.msk [vmem:[#allocation4 + $0xc8] sm:$0xff] %vm771, 0.0
      %3959 = vst.msk [vmem:[#allocation4 + $0xd0] sm:$0xff] %vm771, 0.0
      %3960 = vst.msk [vmem:[#allocation4 + $0xd8] sm:$0xff] %vm771, 0.0
      %3961 = vst.msk [vmem:[#allocation4 + $0xe0] sm:$0xff] %vm771, 0.0
      %3962 = vst.msk [vmem:[#allocation4 + $0xe8] sm:$0xff] %vm771, 0.0
      %s3963 = scalar_lea.vmem [#allocation4], 24
      %3964 = vst.msk [vmem:[%s3963 + $0x8] sm:$0xff] %vm771, %v3925
      %3965 = vst.msk [vmem:[%s3963 + $0x20] sm:$0xff] %vm771, %v3926
      %3966 = vst.msk [vmem:[%s3963 + $0x38] sm:$0xff] %vm771, %v3927
      %3967 = vst.msk [vmem:[%s3963 + $0x50] sm:$0xff] %vm771, %v3928
      %3968 = vst.msk [vmem:[%s3963 + $0x68] sm:$0xff] %vm771, %v3929
      %3969 = vst.msk [vmem:[%s3963 + $0x80] sm:$0xff] %vm771, %v3930
      %3970 = vst.msk [vmem:[%s3963 + $0x98] sm:$0xff] %vm771, %v3931
      %3971 = vst.msk [vmem:[%s3963 + $0xb0] sm:$0xff] %vm771, %v3932
      %v3972 = vld [vmem:[%s6] sm:$0x1]
      %v3974 = vlaneseq
      %v3975 = vshrl.u32 %v3974, 7
      %v3976 = vsub.s32 0, %v3975
      %v3977 = vrot.slane %v3972, %v3976
      %v3979 = vld [vmem:[#allocation4 + $0x7] sm:$0xff]
      %v3980 = vld [vmem:[#allocation4 + $0x1f] sm:$0xff]
      %v3981 = vld [vmem:[#allocation4 + $0x37] sm:$0xff]
      %v3982 = vld [vmem:[#allocation4 + $0x4f] sm:$0xff]
      %v3983 = vld [vmem:[#allocation4 + $0x67] sm:$0xff]
      %v3984 = vld [vmem:[#allocation4 + $0x7f] sm:$0xff]
      %v3985 = vld [vmem:[#allocation4 + $0x97] sm:$0xff]
      %v3986 = vld [vmem:[#allocation4 + $0xaf] sm:$0xff]
      %v3987 = vpack.c.bf16 %v3980, %v3979
      %v3988 = vpack.c.bf16 %v3982, %v3981
      %v3989 = vpack.c.bf16 %v3984, %v3983
      %v3990 = vpack.c.bf16 %v3986, %v3985
      %v3991 = vld [vmem:[%s5] sm:$0xf]
      %v3992 = vld [vmem:[%s5 + $0x4] sm:$0xf]
      %v3993 = vld [vmem:[%s5 + $0x8] sm:$0xf]
      %v3994 = vld [vmem:[%s5 + $0xc] sm:$0xf]
      %v3995 = vld [vmem:[%s5 + $0x10] sm:$0xf]
      %v3996 = vld [vmem:[%s5 + $0x14] sm:$0xf]
      %v3997 = vld [vmem:[%s5 + $0x18] sm:$0xf]
      %v3998 = vld [vmem:[%s5 + $0x1c] sm:$0xf]
      %v4007 = vunpack.c.l.b16 %v3991
      %v4008 = vunpack.c.l.b16 %v3992
      %v4009 = vunpack.c.l.b16 %v3993
      %v4010 = vunpack.c.l.b16 %v3994
      %v4011 = vunpack.c.l.b16 %v3995
      %v4012 = vunpack.c.l.b16 %v3996
      %v4013 = vunpack.c.l.b16 %v3997
      %v4014 = vunpack.c.l.b16 %v3998
      %v4015 = vpack.c.b16 %v4008, %v4007
      %v4016 = vpack.c.b16 %v4010, %v4009
      %v4017 = vpack.c.b16 %v4012, %v4011
      %v4018 = vpack.c.b16 %v4014, %v4013
      %v4024 = vsel %vm771, %v3987, 0
      %v4027 = vsel %vm771, %v3988, 0
      %v4030 = vsel %vm771, %v3989, 0
      %v4033 = vsel %vm771, %v3990, 0
      %4035 = vmatprep.subr.bf16.mxu0 0
      %4036 = vmatpush1.bf16.msra.mxu0 0
      %4037 = vmatprep.subr.bf16.mxu0 0
      %4038 = vmatpush1.bf16.msra.mxu0 0
      %4039 = vmatprep.subr.bf16.mxu0 0
      %4040 = vmatpush1.bf16.msra.mxu0 0
      %4041 = vmatprep.subr.bf16.mxu0 0
      %4042 = vmatpush1.bf16.msra.mxu0 0
      %4043 = vmatprep.subr.bf16.mxu0 0
      %4044 = vmatpush1.bf16.msra.mxu0 %v4018
      %4045 = vmatprep.subr.bf16.mxu0 0
      %4046 = vmatpush1.bf16.msra.mxu0 %v4017
      %4047 = vmatprep.subr.bf16.mxu0 0
      %4048 = vmatpush1.bf16.msra.mxu0 %v4016
      %4049 = vmatprep.subr.bf16.mxu0 0
      %4050 = vmatpush1.bf16.msra.mxu0 %v4015
      %4051 = vmatprep.subr.bf16.mxu0 0
      %4052 = vmatpush2.bf16.msra.mxu0 0
      %4053 = vmatprep.subr.bf16.mxu0 0
      %4054 = vmatpush2.bf16.msra.mxu0 0
      %4055 = vmatprep.subr.bf16.mxu0 0
      %4056 = vmatpush2.bf16.msra.mxu0 0
      %4057 = vmatprep.subr.bf16.mxu0 0
      %4058 = vmatpush2.bf16.msra.mxu0 0
      %4059 = vmatprep.subr.bf16.mxu0 0
      %4060 = vmatpush2.bf16.msra.mxu0 0
      %4061 = vmatprep.subr.bf16.mxu0 0
      %4062 = vmatpush2.bf16.msra.mxu0 0
      %4063 = vmatprep.subr.bf16.mxu0 0
      %4064 = vmatpush2.bf16.msra.mxu0 0
      %4065 = vmatprep.subr.bf16.mxu0 0
      %4066 = vmatpush2.bf16.msra.mxu0 0
      %4067 = vmatprep.mubr.bf16.mxu0 0
      %4068 = vmatmul.mubr.bf16.gmra.mxu0 %v4024
      %v4069 = vpop.f32.mrf.mxu0
      %v4070 = vadd.f32 0.0, %v4069
      %v4071 = vpop.f32.mrf.mxu0
      %v4072 = vpop.f32.mrf.mxu0
      %v4073 = vadd.f32 0.0, %v4072
      %v4074 = vpop.f32.mrf.mxu0
      %4075 = vmatprep.mubr.bf16.mxu0 0
      %4076 = vmatmul.mubr.bf16.gmra.mxu0 %v4027
      %v4077 = vpop.f32.mrf.mxu0
      %v4078 = vadd.f32 0.0, %v4077
      %v4079 = vpop.f32.mrf.mxu0
      %v4080 = vpop.f32.mrf.mxu0
      %v4081 = vadd.f32 0.0, %v4080
      %v4082 = vpop.f32.mrf.mxu0
      %4083 = vmatprep.mubr.bf16.mxu0 0
      %4084 = vmatmul.mubr.bf16.gmra.mxu0 %v4030
      %v4085 = vpop.f32.mrf.mxu0
      %v4086 = vadd.f32 0.0, %v4085
      %v4087 = vpop.f32.mrf.mxu0
      %v4088 = vpop.f32.mrf.mxu0
      %v4089 = vadd.f32 0.0, %v4088
      %v4090 = vpop.f32.mrf.mxu0
      %4091 = vmatprep.mubr.bf16.mxu0 0
      %4092 = vmatmul.mubr.bf16.gmra.mxu0 %v4033
      %v4093 = vpop.f32.mrf.mxu0
      %v4094 = vadd.f32 0.0, %v4093
      %v4095 = vpop.f32.mrf.mxu0
      %v4096 = vpop.f32.mrf.mxu0
      %v4097 = vadd.f32 0.0, %v4096
      %v4098 = vpop.f32.mrf.mxu0
      %4099 = vdwg.mxu0
      %v4100 = vadd.f32 %v3977, %v4070
      %v4101 = vadd.f32 %v3977, %v4073
      %v4102 = vadd.f32 %v3977, %v4078
      %v4103 = vadd.f32 %v3977, %v4081
      %v4104 = vadd.f32 %v3977, %v4086
      %v4105 = vadd.f32 %v3977, %v4089
      %v4106 = vadd.f32 %v3977, %v4094
      %v4107 = vadd.f32 %v3977, %v4097
      %v4108 = vld [vmem:[#allocation4 + $0x8] sm:$0xff]
      %v4109 = vld [vmem:[#allocation4 + $0x20] sm:$0xff]
      %v4110 = vld [vmem:[#allocation4 + $0x38] sm:$0xff]
      %v4111 = vld [vmem:[#allocation4 + $0x50] sm:$0xff]
      %v4112 = vld [vmem:[#allocation4 + $0x68] sm:$0xff]
      %v4113 = vld [vmem:[#allocation4 + $0x80] sm:$0xff]
      %v4114 = vld [vmem:[#allocation4 + $0x98] sm:$0xff]
      %v4115 = vld [vmem:[#allocation4 + $0xb0] sm:$0xff]
      %v4116 = vpack.c.bf16 %v4109, %v4108
      %v4117 = vpack.c.bf16 %v4111, %v4110
      %v4118 = vpack.c.bf16 %v4113, %v4112
      %v4119 = vpack.c.bf16 %v4115, %v4114
      %s4120 = scalar_lea.vmem %s5, 32
      %v4121 = vld [vmem:[%s4120] sm:$0xf]
      %v4122 = vld [vmem:[%s4120 + $0x4] sm:$0xf]
      %v4123 = vld [vmem:[%s4120 + $0x8] sm:$0xf]
      %v4124 = vld [vmem:[%s4120 + $0xc] sm:$0xf]
      %v4125 = vld [vmem:[%s4120 + $0x10] sm:$0xf]
      %v4126 = vld [vmem:[%s4120 + $0x14] sm:$0xf]
      %v4127 = vld [vmem:[%s4120 + $0x18] sm:$0xf]
      %v4128 = vld [vmem:[%s4120 + $0x1c] sm:$0xf]
      %v4137 = vunpack.c.l.b16 %v4121
      %v4138 = vunpack.c.l.b16 %v4122
      %v4139 = vunpack.c.l.b16 %v4123
      %v4140 = vunpack.c.l.b16 %v4124
      %v4141 = vunpack.c.l.b16 %v4125
      %v4142 = vunpack.c.l.b16 %v4126
      %v4143 = vunpack.c.l.b16 %v4127
      %v4144 = vunpack.c.l.b16 %v4128
      %v4145 = vpack.c.b16 %v4138, %v4137
      %v4146 = vpack.c.b16 %v4140, %v4139
      %v4147 = vpack.c.b16 %v4142, %v4141
      %v4148 = vpack.c.b16 %v4144, %v4143
      %v4154 = vsel %vm771, %v4116, 0
      %v4157 = vsel %vm771, %v4117, 0
      %v4160 = vsel %vm771, %v4118, 0
      %v4163 = vsel %vm771, %v4119, 0
      %4165 = vmatprep.subr.bf16.mxu0 0
      %4166 = vmatpush1.bf16.msra.mxu0 0
      %4167 = vmatprep.subr.bf16.mxu0 0
      %4168 = vmatpush1.bf16.msra.mxu0 0
      %4169 = vmatprep.subr.bf16.mxu0 0
      %4170 = vmatpush1.bf16.msra.mxu0 0
      %4171 = vmatprep.subr.bf16.mxu0 0
      %4172 = vmatpush1.bf16.msra.mxu0 0
      %4173 = vmatprep.subr.bf16.mxu0 0
      %4174 = vmatpush1.bf16.msra.mxu0 %v4148
      %4175 = vmatprep.subr.bf16.mxu0 0
      %4176 = vmatpush1.bf16.msra.mxu0 %v4147
      %4177 = vmatprep.subr.bf16.mxu0 0
      %4178 = vmatpush1.bf16.msra.mxu0 %v4146
      %4179 = vmatprep.subr.bf16.mxu0 0
      %4180 = vmatpush1.bf16.msra.mxu0 %v4145
      %4181 = vmatprep.subr.bf16.mxu0 0
      %4182 = vmatpush2.bf16.msra.mxu0 0
      %4183 = vmatprep.subr.bf16.mxu0 0
      %4184 = vmatpush2.bf16.msra.mxu0 0
      %4185 = vmatprep.subr.bf16.mxu0 0
      %4186 = vmatpush2.bf16.msra.mxu0 0
      %4187 = vmatprep.subr.bf16.mxu0 0
      %4188 = vmatpush2.bf16.msra.mxu0 0
      %4189 = vmatprep.subr.bf16.mxu0 0
      %4190 = vmatpush2.bf16.msra.mxu0 0
      %4191 = vmatprep.subr.bf16.mxu0 0
      %4192 = vmatpush2.bf16.msra.mxu0 0
      %4193 = vmatprep.subr.bf16.mxu0 0
      %4194 = vmatpush2.bf16.msra.mxu0 0
      %4195 = vmatprep.subr.bf16.mxu0 0
      %4196 = vmatpush2.bf16.msra.mxu0 0
      %4197 = vmatprep.mubr.bf16.mxu0 0
      %4198 = vmatmul.mubr.bf16.gmra.mxu0 %v4154
      %v4199 = vpop.f32.mrf.mxu0
      %v4200 = vadd.f32 0.0, %v4199
      %v4201 = vpop.f32.mrf.mxu0
      %v4202 = vpop.f32.mrf.mxu0
      %v4203 = vadd.f32 0.0, %v4202
      %v4204 = vpop.f32.mrf.mxu0
      %4205 = vmatprep.mubr.bf16.mxu0 0
      %4206 = vmatmul.mubr.bf16.gmra.mxu0 %v4157
      %v4207 = vpop.f32.mrf.mxu0
      %v4208 = vadd.f32 0.0, %v4207
      %v4209 = vpop.f32.mrf.mxu0
      %v4210 = vpop.f32.mrf.mxu0
      %v4211 = vadd.f32 0.0, %v4210
      %v4212 = vpop.f32.mrf.mxu0
      %4213 = vmatprep.mubr.bf16.mxu0 0
      %4214 = vmatmul.mubr.bf16.gmra.mxu0 %v4160
      %v4215 = vpop.f32.mrf.mxu0
      %v4216 = vadd.f32 0.0, %v4215
      %v4217 = vpop.f32.mrf.mxu0
      %v4218 = vpop.f32.mrf.mxu0
      %v4219 = vadd.f32 0.0, %v4218
      %v4220 = vpop.f32.mrf.mxu0
      %4221 = vmatprep.mubr.bf16.mxu0 0
      %4222 = vmatmul.mubr.bf16.gmra.mxu0 %v4163
      %v4223 = vpop.f32.mrf.mxu0
      %v4224 = vadd.f32 0.0, %v4223
      %v4225 = vpop.f32.mrf.mxu0
      %v4226 = vpop.f32.mrf.mxu0
      %v4227 = vadd.f32 0.0, %v4226
      %v4228 = vpop.f32.mrf.mxu0
      %4229 = vdwg.mxu0
      %v4230 = vadd.f32 %v4100, %v4200
      %v4231 = vadd.f32 %v4101, %v4203
      %v4232 = vadd.f32 %v4102, %v4208
      %v4233 = vadd.f32 %v4103, %v4211
      %v4234 = vadd.f32 %v4104, %v4216
      %v4235 = vadd.f32 %v4105, %v4219
      %v4236 = vadd.f32 %v4106, %v4224
      %v4237 = vadd.f32 %v4107, %v4227
      %v4238 = vld [vmem:[#allocation4 + $0x9] sm:$0xff]
      %v4239 = vld [vmem:[#allocation4 + $0x21] sm:$0xff]
      %v4240 = vld [vmem:[#allocation4 + $0x39] sm:$0xff]
      %v4241 = vld [vmem:[#allocation4 + $0x51] sm:$0xff]
      %v4242 = vld [vmem:[#allocation4 + $0x69] sm:$0xff]
      %v4243 = vld [vmem:[#allocation4 + $0x81] sm:$0xff]
      %v4244 = vld [vmem:[#allocation4 + $0x99] sm:$0xff]
      %v4245 = vld [vmem:[#allocation4 + $0xb1] sm:$0xff]
      %v4246 = vpack.c.bf16 %v4239, %v4238
      %v4247 = vpack.c.bf16 %v4241, %v4240
      %v4248 = vpack.c.bf16 %v4243, %v4242
      %v4249 = vpack.c.bf16 %v4245, %v4244
      %s4250 = scalar_lea.vmem %s5, 64
      %v4251 = vld [vmem:[%s4250] sm:$0xf]
      %v4252 = vld [vmem:[%s4250 + $0x4] sm:$0xf]
      %v4253 = vld [vmem:[%s4250 + $0x8] sm:$0xf]
      %v4254 = vld [vmem:[%s4250 + $0xc] sm:$0xf]
      %v4255 = vld [vmem:[%s4250 + $0x10] sm:$0xf]
      %v4256 = vld [vmem:[%s4250 + $0x14] sm:$0xf]
      %v4257 = vld [vmem:[%s4250 + $0x18] sm:$0xf]
      %v4258 = vld [vmem:[%s4250 + $0x1c] sm:$0xf]
      %v4267 = vunpack.c.l.b16 %v4251
      %v4268 = vunpack.c.l.b16 %v4252
      %v4269 = vunpack.c.l.b16 %v4253
      %v4270 = vunpack.c.l.b16 %v4254
      %v4271 = vunpack.c.l.b16 %v4255
      %v4272 = vunpack.c.l.b16 %v4256
      %v4273 = vunpack.c.l.b16 %v4257
      %v4274 = vunpack.c.l.b16 %v4258
      %v4275 = vpack.c.b16 %v4268, %v4267
      %v4276 = vpack.c.b16 %v4270, %v4269
      %v4277 = vpack.c.b16 %v4272, %v4271
      %v4278 = vpack.c.b16 %v4274, %v4273
      %v4284 = vsel %vm771, %v4246, 0
      %v4287 = vsel %vm771, %v4247, 0
      %v4290 = vsel %vm771, %v4248, 0
      %v4293 = vsel %vm771, %v4249, 0
      %4295 = vmatprep.subr.bf16.mxu0 0
      %4296 = vmatpush1.bf16.msra.mxu0 0
      %4297 = vmatprep.subr.bf16.mxu0 0
      %4298 = vmatpush1.bf16.msra.mxu0 0
      %4299 = vmatprep.subr.bf16.mxu0 0
      %4300 = vmatpush1.bf16.msra.mxu0 0
      %4301 = vmatprep.subr.bf16.mxu0 0
      %4302 = vmatpush1.bf16.msra.mxu0 0
      %4303 = vmatprep.subr.bf16.mxu0 0
      %4304 = vmatpush1.bf16.msra.mxu0 %v4278
      %4305 = vmatprep.subr.bf16.mxu0 0
      %4306 = vmatpush1.bf16.msra.mxu0 %v4277
      %4307 = vmatprep.subr.bf16.mxu0 0
      %4308 = vmatpush1.bf16.msra.mxu0 %v4276
      %4309 = vmatprep.subr.bf16.mxu0 0
      %4310 = vmatpush1.bf16.msra.mxu0 %v4275
      %4311 = vmatprep.subr.bf16.mxu0 0
      %4312 = vmatpush2.bf16.msra.mxu0 0
      %4313 = vmatprep.subr.bf16.mxu0 0
      %4314 = vmatpush2.bf16.msra.mxu0 0
      %4315 = vmatprep.subr.bf16.mxu0 0
      %4316 = vmatpush2.bf16.msra.mxu0 0
      %4317 = vmatprep.subr.bf16.mxu0 0
      %4318 = vmatpush2.bf16.msra.mxu0 0
      %4319 = vmatprep.subr.bf16.mxu0 0
      %4320 = vmatpush2.bf16.msra.mxu0 0
      %4321 = vmatprep.subr.bf16.mxu0 0
      %4322 = vmatpush2.bf16.msra.mxu0 0
      %4323 = vmatprep.subr.bf16.mxu0 0
      %4324 = vmatpush2.bf16.msra.mxu0 0
      %4325 = vmatprep.subr.bf16.mxu0 0
      %4326 = vmatpush2.bf16.msra.mxu0 0
      %4327 = vmatprep.mubr.bf16.mxu0 0
      %4328 = vmatmul.mubr.bf16.gmra.mxu0 %v4284
      %v4329 = vpop.f32.mrf.mxu0
      %v4330 = vadd.f32 0.0, %v4329
      %v4331 = vpop.f32.mrf.mxu0
      %v4332 = vpop.f32.mrf.mxu0
      %v4333 = vadd.f32 0.0, %v4332
      %v4334 = vpop.f32.mrf.mxu0
      %4335 = vmatprep.mubr.bf16.mxu0 0
      %4336 = vmatmul.mubr.bf16.gmra.mxu0 %v4287
      %v4337 = vpop.f32.mrf.mxu0
      %v4338 = vadd.f32 0.0, %v4337
      %v4339 = vpop.f32.mrf.mxu0
      %v4340 = vpop.f32.mrf.mxu0
      %v4341 = vadd.f32 0.0, %v4340
      %v4342 = vpop.f32.mrf.mxu0
      %4343 = vmatprep.mubr.bf16.mxu0 0
      %4344 = vmatmul.mubr.bf16.gmra.mxu0 %v4290
      %v4345 = vpop.f32.mrf.mxu0
      %v4346 = vadd.f32 0.0, %v4345
      %v4347 = vpop.f32.mrf.mxu0
      %v4348 = vpop.f32.mrf.mxu0
      %v4349 = vadd.f32 0.0, %v4348
      %v4350 = vpop.f32.mrf.mxu0
      %4351 = vmatprep.mubr.bf16.mxu0 0
      %4352 = vmatmul.mubr.bf16.gmra.mxu0 %v4293
      %v4353 = vpop.f32.mrf.mxu0
      %v4354 = vadd.f32 0.0, %v4353
      %v4355 = vpop.f32.mrf.mxu0
      %v4356 = vpop.f32.mrf.mxu0
      %v4357 = vadd.f32 0.0, %v4356
      %v4358 = vpop.f32.mrf.mxu0
      %4359 = vdwg.mxu0
      %v4360 = vadd.f32 %v4230, %v4330
      %v4361 = vadd.f32 %v4231, %v4333
      %v4362 = vadd.f32 %v4232, %v4338
      %v4363 = vadd.f32 %v4233, %v4341
      %v4364 = vadd.f32 %v4234, %v4346
      %v4365 = vadd.f32 %v4235, %v4349
      %v4366 = vadd.f32 %v4236, %v4354
      %v4367 = vadd.f32 %v4237, %v4357
      %v4368 = vld [vmem:[%s3963 + $0x7] sm:$0xff]
      %v4369 = vld [vmem:[%s3963 + $0x1f] sm:$0xff]
      %v4370 = vld [vmem:[%s3963 + $0x37] sm:$0xff]
      %v4371 = vld [vmem:[%s3963 + $0x4f] sm:$0xff]
      %v4372 = vld [vmem:[%s3963 + $0x67] sm:$0xff]
      %v4373 = vld [vmem:[%s3963 + $0x7f] sm:$0xff]
      %v4374 = vld [vmem:[%s3963 + $0x97] sm:$0xff]
      %v4375 = vld [vmem:[%s3963 + $0xaf] sm:$0xff]
      %v4376 = vpack.c.bf16 %v4369, %v4368
      %v4377 = vpack.c.bf16 %v4371, %v4370
      %v4378 = vpack.c.bf16 %v4373, %v4372
      %v4379 = vpack.c.bf16 %v4375, %v4374
      %s4380 = scalar_lea.vmem %s5, 96
      %v4381 = vld [vmem:[%s4380] sm:$0xf]
      %v4382 = vld [vmem:[%s4380 + $0x4] sm:$0xf]
      %v4383 = vld [vmem:[%s4380 + $0x8] sm:$0xf]
      %v4384 = vld [vmem:[%s4380 + $0xc] sm:$0xf]
      %v4385 = vld [vmem:[%s4380 + $0x10] sm:$0xf]
      %v4386 = vld [vmem:[%s4380 + $0x14] sm:$0xf]
      %v4387 = vld [vmem:[%s4380 + $0x18] sm:$0xf]
      %v4388 = vld [vmem:[%s4380 + $0x1c] sm:$0xf]
      %v4397 = vunpack.c.l.b16 %v4381
      %v4398 = vunpack.c.l.b16 %v4382
      %v4399 = vunpack.c.l.b16 %v4383
      %v4400 = vunpack.c.l.b16 %v4384
      %v4401 = vunpack.c.l.b16 %v4385
      %v4402 = vunpack.c.l.b16 %v4386
      %v4403 = vunpack.c.l.b16 %v4387
      %v4404 = vunpack.c.l.b16 %v4388
      %v4405 = vpack.c.b16 %v4398, %v4397
      %v4406 = vpack.c.b16 %v4400, %v4399
      %v4407 = vpack.c.b16 %v4402, %v4401
      %v4408 = vpack.c.b16 %v4404, %v4403
      %v4414 = vsel %vm771, %v4376, 0
      %v4417 = vsel %vm771, %v4377, 0
      %v4420 = vsel %vm771, %v4378, 0
      %v4423 = vsel %vm771, %v4379, 0
      %4425 = vmatprep.subr.bf16.mxu0 0
      %4426 = vmatpush1.bf16.msra.mxu0 0
      %4427 = vmatprep.subr.bf16.mxu0 0
      %4428 = vmatpush1.bf16.msra.mxu0 0
      %4429 = vmatprep.subr.bf16.mxu0 0
      %4430 = vmatpush1.bf16.msra.mxu0 0
      %4431 = vmatprep.subr.bf16.mxu0 0
      %4432 = vmatpush1.bf16.msra.mxu0 0
      %4433 = vmatprep.subr.bf16.mxu0 0
      %4434 = vmatpush1.bf16.msra.mxu0 %v4408
      %4435 = vmatprep.subr.bf16.mxu0 0
      %4436 = vmatpush1.bf16.msra.mxu0 %v4407
      %4437 = vmatprep.subr.bf16.mxu0 0
      %4438 = vmatpush1.bf16.msra.mxu0 %v4406
      %4439 = vmatprep.subr.bf16.mxu0 0
      %4440 = vmatpush1.bf16.msra.mxu0 %v4405
      %4441 = vmatprep.subr.bf16.mxu0 0
      %4442 = vmatpush2.bf16.msra.mxu0 0
      %4443 = vmatprep.subr.bf16.mxu0 0
      %4444 = vmatpush2.bf16.msra.mxu0 0
      %4445 = vmatprep.subr.bf16.mxu0 0
      %4446 = vmatpush2.bf16.msra.mxu0 0
      %4447 = vmatprep.subr.bf16.mxu0 0
      %4448 = vmatpush2.bf16.msra.mxu0 0
      %4449 = vmatprep.subr.bf16.mxu0 0
      %4450 = vmatpush2.bf16.msra.mxu0 0
      %4451 = vmatprep.subr.bf16.mxu0 0
      %4452 = vmatpush2.bf16.msra.mxu0 0
      %4453 = vmatprep.subr.bf16.mxu0 0
      %4454 = vmatpush2.bf16.msra.mxu0 0
      %4455 = vmatprep.subr.bf16.mxu0 0
      %4456 = vmatpush2.bf16.msra.mxu0 0
      %4457 = vmatprep.mubr.bf16.mxu0 0
      %4458 = vmatmul.mubr.bf16.gmra.mxu0 %v4414
      %v4459 = vpop.f32.mrf.mxu0
      %v4460 = vadd.f32 0.0, %v4459
      %v4461 = vpop.f32.mrf.mxu0
      %v4462 = vpop.f32.mrf.mxu0
      %v4463 = vadd.f32 0.0, %v4462
      %v4464 = vpop.f32.mrf.mxu0
      %4465 = vmatprep.mubr.bf16.mxu0 0
      %4466 = vmatmul.mubr.bf16.gmra.mxu0 %v4417
      %v4467 = vpop.f32.mrf.mxu0
      %v4468 = vadd.f32 0.0, %v4467
      %v4469 = vpop.f32.mrf.mxu0
      %v4470 = vpop.f32.mrf.mxu0
      %v4471 = vadd.f32 0.0, %v4470
      %v4472 = vpop.f32.mrf.mxu0
      %4473 = vmatprep.mubr.bf16.mxu0 0
      %4474 = vmatmul.mubr.bf16.gmra.mxu0 %v4420
      %v4475 = vpop.f32.mrf.mxu0
      %v4476 = vadd.f32 0.0, %v4475
      %v4477 = vpop.f32.mrf.mxu0
      %v4478 = vpop.f32.mrf.mxu0
      %v4479 = vadd.f32 0.0, %v4478
      %v4480 = vpop.f32.mrf.mxu0
      %4481 = vmatprep.mubr.bf16.mxu0 0
      %4482 = vmatmul.mubr.bf16.gmra.mxu0 %v4423
      %v4483 = vpop.f32.mrf.mxu0
      %v4484 = vadd.f32 0.0, %v4483
      %v4485 = vpop.f32.mrf.mxu0
      %v4486 = vpop.f32.mrf.mxu0
      %v4487 = vadd.f32 0.0, %v4486
      %v4488 = vpop.f32.mrf.mxu0
      %4489 = vdwg.mxu0
      %v4490 = vadd.f32 %v4360, %v4460
      %v4491 = vadd.f32 %v4361, %v4463
      %v4492 = vadd.f32 %v4362, %v4468
      %v4493 = vadd.f32 %v4363, %v4471
      %v4494 = vadd.f32 %v4364, %v4476
      %v4495 = vadd.f32 %v4365, %v4479
      %v4496 = vadd.f32 %v4366, %v4484
      %v4497 = vadd.f32 %v4367, %v4487
      %v4498 = vld [vmem:[%s3963 + $0x8] sm:$0xff]
      %v4499 = vld [vmem:[%s3963 + $0x20] sm:$0xff]
      %v4500 = vld [vmem:[%s3963 + $0x38] sm:$0xff]
      %v4501 = vld [vmem:[%s3963 + $0x50] sm:$0xff]
      %v4502 = vld [vmem:[%s3963 + $0x68] sm:$0xff]
      %v4503 = vld [vmem:[%s3963 + $0x80] sm:$0xff]
      %v4504 = vld [vmem:[%s3963 + $0x98] sm:$0xff]
      %v4505 = vld [vmem:[%s3963 + $0xb0] sm:$0xff]
      %v4506 = vpack.c.bf16 %v4499, %v4498
      %v4507 = vpack.c.bf16 %v4501, %v4500
      %v4508 = vpack.c.bf16 %v4503, %v4502
      %v4509 = vpack.c.bf16 %v4505, %v4504
      %s4510 = scalar_lea.vmem %s5, 128
      %v4511 = vld [vmem:[%s4510] sm:$0xf]
      %v4512 = vld [vmem:[%s4510 + $0x4] sm:$0xf]
      %v4513 = vld [vmem:[%s4510 + $0x8] sm:$0xf]
      %v4514 = vld [vmem:[%s4510 + $0xc] sm:$0xf]
      %v4515 = vld [vmem:[%s4510 + $0x10] sm:$0xf]
      %v4516 = vld [vmem:[%s4510 + $0x14] sm:$0xf]
      %v4517 = vld [vmem:[%s4510 + $0x18] sm:$0xf]
      %v4518 = vld [vmem:[%s4510 + $0x1c] sm:$0xf]
      %v4527 = vunpack.c.l.b16 %v4511
      %v4528 = vunpack.c.l.b16 %v4512
      %v4529 = vunpack.c.l.b16 %v4513
      %v4530 = vunpack.c.l.b16 %v4514
      %v4531 = vunpack.c.l.b16 %v4515
      %v4532 = vunpack.c.l.b16 %v4516
      %v4533 = vunpack.c.l.b16 %v4517
      %v4534 = vunpack.c.l.b16 %v4518
      %v4535 = vpack.c.b16 %v4528, %v4527
      %v4536 = vpack.c.b16 %v4530, %v4529
      %v4537 = vpack.c.b16 %v4532, %v4531
      %v4538 = vpack.c.b16 %v4534, %v4533
      %v4544 = vsel %vm771, %v4506, 0
      %v4547 = vsel %vm771, %v4507, 0
      %v4550 = vsel %vm771, %v4508, 0
      %v4553 = vsel %vm771, %v4509, 0
      %4555 = vmatprep.subr.bf16.mxu0 0
      %4556 = vmatpush1.bf16.msra.mxu0 0
      %4557 = vmatprep.subr.bf16.mxu0 0
      %4558 = vmatpush1.bf16.msra.mxu0 0
      %4559 = vmatprep.subr.bf16.mxu0 0
      %4560 = vmatpush1.bf16.msra.mxu0 0
      %4561 = vmatprep.subr.bf16.mxu0 0
      %4562 = vmatpush1.bf16.msra.mxu0 0
      %4563 = vmatprep.subr.bf16.mxu0 0
      %4564 = vmatpush1.bf16.msra.mxu0 %v4538
      %4565 = vmatprep.subr.bf16.mxu0 0
      %4566 = vmatpush1.bf16.msra.mxu0 %v4537
      %4567 = vmatprep.subr.bf16.mxu0 0
      %4568 = vmatpush1.bf16.msra.mxu0 %v4536
      %4569 = vmatprep.subr.bf16.mxu0 0
      %4570 = vmatpush1.bf16.msra.mxu0 %v4535
      %4571 = vmatprep.subr.bf16.mxu0 0
      %4572 = vmatpush2.bf16.msra.mxu0 0
      %4573 = vmatprep.subr.bf16.mxu0 0
      %4574 = vmatpush2.bf16.msra.mxu0 0
      %4575 = vmatprep.subr.bf16.mxu0 0
      %4576 = vmatpush2.bf16.msra.mxu0 0
      %4577 = vmatprep.subr.bf16.mxu0 0
      %4578 = vmatpush2.bf16.msra.mxu0 0
      %4579 = vmatprep.subr.bf16.mxu0 0
      %4580 = vmatpush2.bf16.msra.mxu0 0
      %4581 = vmatprep.subr.bf16.mxu0 0
      %4582 = vmatpush2.bf16.msra.mxu0 0
      %4583 = vmatprep.subr.bf16.mxu0 0
      %4584 = vmatpush2.bf16.msra.mxu0 0
      %4585 = vmatprep.subr.bf16.mxu0 0
      %4586 = vmatpush2.bf16.msra.mxu0 0
      %4587 = vmatprep.mubr.bf16.mxu0 0
      %4588 = vmatmul.mubr.bf16.gmra.mxu0 %v4544
      %v4589 = vpop.f32.mrf.mxu0
      %v4590 = vadd.f32 0.0, %v4589
      %v4591 = vpop.f32.mrf.mxu0
      %v4592 = vpop.f32.mrf.mxu0
      %v4593 = vadd.f32 0.0, %v4592
      %v4594 = vpop.f32.mrf.mxu0
      %4595 = vmatprep.mubr.bf16.mxu0 0
      %4596 = vmatmul.mubr.bf16.gmra.mxu0 %v4547
      %v4597 = vpop.f32.mrf.mxu0
      %v4598 = vadd.f32 0.0, %v4597
      %v4599 = vpop.f32.mrf.mxu0
      %v4600 = vpop.f32.mrf.mxu0
      %v4601 = vadd.f32 0.0, %v4600
      %v4602 = vpop.f32.mrf.mxu0
      %4603 = vmatprep.mubr.bf16.mxu0 0
      %4604 = vmatmul.mubr.bf16.gmra.mxu0 %v4550
      %v4605 = vpop.f32.mrf.mxu0
      %v4606 = vadd.f32 0.0, %v4605
      %v4607 = vpop.f32.mrf.mxu0
      %v4608 = vpop.f32.mrf.mxu0
      %v4609 = vadd.f32 0.0, %v4608
      %v4610 = vpop.f32.mrf.mxu0
      %4611 = vmatprep.mubr.bf16.mxu0 0
      %4612 = vmatmul.mubr.bf16.gmra.mxu0 %v4553
      %v4613 = vpop.f32.mrf.mxu0
      %v4614 = vadd.f32 0.0, %v4613
      %v4615 = vpop.f32.mrf.mxu0
      %v4616 = vpop.f32.mrf.mxu0
      %v4617 = vadd.f32 0.0, %v4616
      %v4618 = vpop.f32.mrf.mxu0
      %4619 = vdwg.mxu0
      %v4620 = vadd.f32 %v4490, %v4590
      %v4621 = vadd.f32 %v4491, %v4593
      %v4622 = vadd.f32 %v4492, %v4598
      %v4623 = vadd.f32 %v4493, %v4601
      %v4624 = vadd.f32 %v4494, %v4606
      %v4625 = vadd.f32 %v4495, %v4609
      %v4626 = vadd.f32 %v4496, %v4614
      %v4627 = vadd.f32 %v4497, %v4617
      %v4628 = vld [vmem:[%s3963 + $0x9] sm:$0xff]
      %v4629 = vld [vmem:[%s3963 + $0x21] sm:$0xff]
      %v4630 = vld [vmem:[%s3963 + $0x39] sm:$0xff]
      %v4631 = vld [vmem:[%s3963 + $0x51] sm:$0xff]
      %v4632 = vld [vmem:[%s3963 + $0x69] sm:$0xff]
      %v4633 = vld [vmem:[%s3963 + $0x81] sm:$0xff]
      %v4634 = vld [vmem:[%s3963 + $0x99] sm:$0xff]
      %v4635 = vld [vmem:[%s3963 + $0xb1] sm:$0xff]
      %v4636 = vpack.c.bf16 %v4629, %v4628
      %v4637 = vpack.c.bf16 %v4631, %v4630
      %v4638 = vpack.c.bf16 %v4633, %v4632
      %v4639 = vpack.c.bf16 %v4635, %v4634
      %s4640 = scalar_lea.vmem %s5, 160
      %v4641 = vld [vmem:[%s4640] sm:$0xf]
      %v4642 = vld [vmem:[%s4640 + $0x4] sm:$0xf]
      %v4643 = vld [vmem:[%s4640 + $0x8] sm:$0xf]
      %v4644 = vld [vmem:[%s4640 + $0xc] sm:$0xf]
      %v4645 = vld [vmem:[%s4640 + $0x10] sm:$0xf]
      %v4646 = vld [vmem:[%s4640 + $0x14] sm:$0xf]
      %v4647 = vld [vmem:[%s4640 + $0x18] sm:$0xf]
      %v4648 = vld [vmem:[%s4640 + $0x1c] sm:$0xf]
      %v4657 = vunpack.c.l.b16 %v4641
      %v4658 = vunpack.c.l.b16 %v4642
      %v4659 = vunpack.c.l.b16 %v4643
      %v4660 = vunpack.c.l.b16 %v4644
      %v4661 = vunpack.c.l.b16 %v4645
      %v4662 = vunpack.c.l.b16 %v4646
      %v4663 = vunpack.c.l.b16 %v4647
      %v4664 = vunpack.c.l.b16 %v4648
      %v4665 = vpack.c.b16 %v4658, %v4657
      %v4666 = vpack.c.b16 %v4660, %v4659
      %v4667 = vpack.c.b16 %v4662, %v4661
      %v4668 = vpack.c.b16 %v4664, %v4663
      %v4674 = vsel %vm771, %v4636, 0
      %v4677 = vsel %vm771, %v4637, 0
      %v4680 = vsel %vm771, %v4638, 0
      %v4683 = vsel %vm771, %v4639, 0
      %4685 = vmatprep.subr.bf16.mxu0 0
      %4686 = vmatpush1.bf16.msra.mxu0 0
      %4687 = vmatprep.subr.bf16.mxu0 0
      %4688 = vmatpush1.bf16.msra.mxu0 0
      %4689 = vmatprep.subr.bf16.mxu0 0
      %4690 = vmatpush1.bf16.msra.mxu0 0
      %4691 = vmatprep.subr.bf16.mxu0 0
      %4692 = vmatpush1.bf16.msra.mxu0 0
      %4693 = vmatprep.subr.bf16.mxu0 0
      %4694 = vmatpush1.bf16.msra.mxu0 %v4668
      %4695 = vmatprep.subr.bf16.mxu0 0
      %4696 = vmatpush1.bf16.msra.mxu0 %v4667
      %4697 = vmatprep.subr.bf16.mxu0 0
      %4698 = vmatpush1.bf16.msra.mxu0 %v4666
      %4699 = vmatprep.subr.bf16.mxu0 0
      %4700 = vmatpush1.bf16.msra.mxu0 %v4665
      %4701 = vmatprep.subr.bf16.mxu0 0
      %4702 = vmatpush2.bf16.msra.mxu0 0
      %4703 = vmatprep.subr.bf16.mxu0 0
      %4704 = vmatpush2.bf16.msra.mxu0 0
      %4705 = vmatprep.subr.bf16.mxu0 0
      %4706 = vmatpush2.bf16.msra.mxu0 0
      %4707 = vmatprep.subr.bf16.mxu0 0
      %4708 = vmatpush2.bf16.msra.mxu0 0
      %4709 = vmatprep.subr.bf16.mxu0 0
      %4710 = vmatpush2.bf16.msra.mxu0 0
      %4711 = vmatprep.subr.bf16.mxu0 0
      %4712 = vmatpush2.bf16.msra.mxu0 0
      %4713 = vmatprep.subr.bf16.mxu0 0
      %4714 = vmatpush2.bf16.msra.mxu0 0
      %4715 = vmatprep.subr.bf16.mxu0 0
      %4716 = vmatpush2.bf16.msra.mxu0 0
      %4717 = vmatprep.mubr.bf16.mxu0 0
      %4718 = vmatmul.mubr.bf16.gmra.mxu0 %v4674
      %v4719 = vpop.f32.mrf.mxu0
      %v4720 = vadd.f32 0.0, %v4719
      %v4721 = vpop.f32.mrf.mxu0
      %v4722 = vpop.f32.mrf.mxu0
      %v4723 = vadd.f32 0.0, %v4722
      %v4724 = vpop.f32.mrf.mxu0
      %4725 = vmatprep.mubr.bf16.mxu0 0
      %4726 = vmatmul.mubr.bf16.gmra.mxu0 %v4677
      %v4727 = vpop.f32.mrf.mxu0
      %v4728 = vadd.f32 0.0, %v4727
      %v4729 = vpop.f32.mrf.mxu0
      %v4730 = vpop.f32.mrf.mxu0
      %v4731 = vadd.f32 0.0, %v4730
      %v4732 = vpop.f32.mrf.mxu0
      %4733 = vmatprep.mubr.bf16.mxu0 0
      %4734 = vmatmul.mubr.bf16.gmra.mxu0 %v4680
      %v4735 = vpop.f32.mrf.mxu0
      %v4736 = vadd.f32 0.0, %v4735
      %v4737 = vpop.f32.mrf.mxu0
      %v4738 = vpop.f32.mrf.mxu0
      %v4739 = vadd.f32 0.0, %v4738
      %v4740 = vpop.f32.mrf.mxu0
      %4741 = vmatprep.mubr.bf16.mxu0 0
      %4742 = vmatmul.mubr.bf16.gmra.mxu0 %v4683
      %v4743 = vpop.f32.mrf.mxu0
      %v4744 = vadd.f32 0.0, %v4743
      %v4745 = vpop.f32.mrf.mxu0
      %v4746 = vpop.f32.mrf.mxu0
      %v4747 = vadd.f32 0.0, %v4746
      %v4748 = vpop.f32.mrf.mxu0
      %4749 = vdwg.mxu0
      %v4750 = vadd.f32 %v4620, %v4720
      %v4751 = vadd.f32 %v4621, %v4723
      %v4752 = vadd.f32 %v4622, %v4728
      %v4753 = vadd.f32 %v4623, %v4731
      %v4754 = vadd.f32 %v4624, %v4736
      %v4755 = vadd.f32 %v4625, %v4739
      %v4756 = vadd.f32 %v4626, %v4744
      %v4757 = vadd.f32 %v4627, %v4747
      %s4758 = scalar_lea.vmem [#allocation4], 48
      %v4759 = vld [vmem:[%s4758 + $0x7] sm:$0xff]
      %v4760 = vld [vmem:[%s4758 + $0x1f] sm:$0xff]
      %v4761 = vld [vmem:[%s4758 + $0x37] sm:$0xff]
      %v4762 = vld [vmem:[%s4758 + $0x4f] sm:$0xff]
      %v4763 = vld [vmem:[%s4758 + $0x67] sm:$0xff]
      %v4764 = vld [vmem:[%s4758 + $0x7f] sm:$0xff]
      %v4765 = vld [vmem:[%s4758 + $0x97] sm:$0xff]
      %v4766 = vld [vmem:[%s4758 + $0xaf] sm:$0xff]
      %v4767 = vpack.c.bf16 %v4760, %v4759
      %v4768 = vpack.c.bf16 %v4762, %v4761
      %v4769 = vpack.c.bf16 %v4764, %v4763
      %v4770 = vpack.c.bf16 %v4766, %v4765
      %s4771 = scalar_lea.vmem %s5, 192
      %v4772 = vld [vmem:[%s4771] sm:$0xf]
      %v4773 = vld [vmem:[%s4771 + $0x4] sm:$0xf]
      %v4774 = vld [vmem:[%s4771 + $0x8] sm:$0xf]
      %v4775 = vld [vmem:[%s4771 + $0xc] sm:$0xf]
      %v4776 = vld [vmem:[%s4771 + $0x10] sm:$0xf]
      %v4777 = vld [vmem:[%s4771 + $0x14] sm:$0xf]
      %v4778 = vld [vmem:[%s4771 + $0x18] sm:$0xf]
      %v4779 = vld [vmem:[%s4771 + $0x1c] sm:$0xf]
      %v4788 = vunpack.c.l.b16 %v4772
      %v4789 = vunpack.c.l.b16 %v4773
      %v4790 = vunpack.c.l.b16 %v4774
      %v4791 = vunpack.c.l.b16 %v4775
      %v4792 = vunpack.c.l.b16 %v4776
      %v4793 = vunpack.c.l.b16 %v4777
      %v4794 = vunpack.c.l.b16 %v4778
      %v4795 = vunpack.c.l.b16 %v4779
      %v4796 = vpack.c.b16 %v4789, %v4788
      %v4797 = vpack.c.b16 %v4791, %v4790
      %v4798 = vpack.c.b16 %v4793, %v4792
      %v4799 = vpack.c.b16 %v4795, %v4794
      %v4805 = vsel %vm771, %v4767, 0
      %v4808 = vsel %vm771, %v4768, 0
      %v4811 = vsel %vm771, %v4769, 0
      %v4814 = vsel %vm771, %v4770, 0
      %4816 = vmatprep.subr.bf16.mxu0 0
      %4817 = vmatpush1.bf16.msra.mxu0 0
      %4818 = vmatprep.subr.bf16.mxu0 0
      %4819 = vmatpush1.bf16.msra.mxu0 0
      %4820 = vmatprep.subr.bf16.mxu0 0
      %4821 = vmatpush1.bf16.msra.mxu0 0
      %4822 = vmatprep.subr.bf16.mxu0 0
      %4823 = vmatpush1.bf16.msra.mxu0 0
      %4824 = vmatprep.subr.bf16.mxu0 0
      %4825 = vmatpush1.bf16.msra.mxu0 %v4799
      %4826 = vmatprep.subr.bf16.mxu0 0
      %4827 = vmatpush1.bf16.msra.mxu0 %v4798
      %4828 = vmatprep.subr.bf16.mxu0 0
      %4829 = vmatpush1.bf16.msra.mxu0 %v4797
      %4830 = vmatprep.subr.bf16.mxu0 0
      %4831 = vmatpush1.bf16.msra.mxu0 %v4796
      %4832 = vmatprep.subr.bf16.mxu0 0
      %4833 = vmatpush2.bf16.msra.mxu0 0
      %4834 = vmatprep.subr.bf16.mxu0 0
      %4835 = vmatpush2.bf16.msra.mxu0 0
      %4836 = vmatprep.subr.bf16.mxu0 0
      %4837 = vmatpush2.bf16.msra.mxu0 0
      %4838 = vmatprep.subr.bf16.mxu0 0
      %4839 = vmatpush2.bf16.msra.mxu0 0
      %4840 = vmatprep.subr.bf16.mxu0 0
      %4841 = vmatpush2.bf16.msra.mxu0 0
      %4842 = vmatprep.subr.bf16.mxu0 0
      %4843 = vmatpush2.bf16.msra.mxu0 0
      %4844 = vmatprep.subr.bf16.mxu0 0
      %4845 = vmatpush2.bf16.msra.mxu0 0
      %4846 = vmatprep.subr.bf16.mxu0 0
      %4847 = vmatpush2.bf16.msra.mxu0 0
      %4848 = vmatprep.mubr.bf16.mxu0 0
      %4849 = vmatmul.mubr.bf16.gmra.mxu0 %v4805
      %v4850 = vpop.f32.mrf.mxu0
      %v4851 = vadd.f32 0.0, %v4850
      %v4852 = vpop.f32.mrf.mxu0
      %v4853 = vpop.f32.mrf.mxu0
      %v4854 = vadd.f32 0.0, %v4853
      %v4855 = vpop.f32.mrf.mxu0
      %4856 = vmatprep.mubr.bf16.mxu0 0
      %4857 = vmatmul.mubr.bf16.gmra.mxu0 %v4808
      %v4858 = vpop.f32.mrf.mxu0
      %v4859 = vadd.f32 0.0, %v4858
      %v4860 = vpop.f32.mrf.mxu0
      %v4861 = vpop.f32.mrf.mxu0
      %v4862 = vadd.f32 0.0, %v4861
      %v4863 = vpop.f32.mrf.mxu0
      %4864 = vmatprep.mubr.bf16.mxu0 0
      %4865 = vmatmul.mubr.bf16.gmra.mxu0 %v4811
      %v4866 = vpop.f32.mrf.mxu0
      %v4867 = vadd.f32 0.0, %v4866
      %v4868 = vpop.f32.mrf.mxu0
      %v4869 = vpop.f32.mrf.mxu0
      %v4870 = vadd.f32 0.0, %v4869
      %v4871 = vpop.f32.mrf.mxu0
      %4872 = vmatprep.mubr.bf16.mxu0 0
      %4873 = vmatmul.mubr.bf16.gmra.mxu0 %v4814
      %v4874 = vpop.f32.mrf.mxu0
      %v4875 = vadd.f32 0.0, %v4874
      %v4876 = vpop.f32.mrf.mxu0
      %v4877 = vpop.f32.mrf.mxu0
      %v4878 = vadd.f32 0.0, %v4877
      %v4879 = vpop.f32.mrf.mxu0
      %4880 = vdwg.mxu0
      %v4881 = vadd.f32 %v4750, %v4851
      %v4882 = vadd.f32 %v4751, %v4854
      %v4883 = vadd.f32 %v4752, %v4859
      %v4884 = vadd.f32 %v4753, %v4862
      %v4885 = vadd.f32 %v4754, %v4867
      %v4886 = vadd.f32 %v4755, %v4870
      %v4887 = vadd.f32 %v4756, %v4875
      %v4888 = vadd.f32 %v4757, %v4878
      %v4889 = vld [vmem:[%s4758 + $0x8] sm:$0xff]
      %v4890 = vld [vmem:[%s4758 + $0x20] sm:$0xff]
      %v4891 = vld [vmem:[%s4758 + $0x38] sm:$0xff]
      %v4892 = vld [vmem:[%s4758 + $0x50] sm:$0xff]
      %v4893 = vld [vmem:[%s4758 + $0x68] sm:$0xff]
      %v4894 = vld [vmem:[%s4758 + $0x80] sm:$0xff]
      %v4895 = vld [vmem:[%s4758 + $0x98] sm:$0xff]
      %v4896 = vld [vmem:[%s4758 + $0xb0] sm:$0xff]
      %v4897 = vpack.c.bf16 %v4890, %v4889
      %v4898 = vpack.c.bf16 %v4892, %v4891
      %v4899 = vpack.c.bf16 %v4894, %v4893
      %v4900 = vpack.c.bf16 %v4896, %v4895
      %s4901 = scalar_lea.vmem %s5, 224
      %v4902 = vld [vmem:[%s4901] sm:$0xf]
      %v4903 = vld [vmem:[%s4901 + $0x4] sm:$0xf]
      %v4904 = vld [vmem:[%s4901 + $0x8] sm:$0xf]
      %v4905 = vld [vmem:[%s4901 + $0xc] sm:$0xf]
      %v4906 = vld [vmem:[%s4901 + $0x10] sm:$0xf]
      %v4907 = vld [vmem:[%s4901 + $0x14] sm:$0xf]
      %v4908 = vld [vmem:[%s4901 + $0x18] sm:$0xf]
      %v4909 = vld [vmem:[%s4901 + $0x1c] sm:$0xf]
      %v4918 = vunpack.c.l.b16 %v4902
      %v4919 = vunpack.c.l.b16 %v4903
      %v4920 = vunpack.c.l.b16 %v4904
      %v4921 = vunpack.c.l.b16 %v4905
      %v4922 = vunpack.c.l.b16 %v4906
      %v4923 = vunpack.c.l.b16 %v4907
      %v4924 = vunpack.c.l.b16 %v4908
      %v4925 = vunpack.c.l.b16 %v4909
      %v4926 = vpack.c.b16 %v4919, %v4918
      %v4927 = vpack.c.b16 %v4921, %v4920
      %v4928 = vpack.c.b16 %v4923, %v4922
      %v4929 = vpack.c.b16 %v4925, %v4924
      %v4935 = vsel %vm771, %v4897, 0
      %v4938 = vsel %vm771, %v4898, 0
      %v4941 = vsel %vm771, %v4899, 0
      %v4944 = vsel %vm771, %v4900, 0
      %4946 = vmatprep.subr.bf16.mxu0 0
      %4947 = vmatpush1.bf16.msra.mxu0 0
      %4948 = vmatprep.subr.bf16.mxu0 0
      %4949 = vmatpush1.bf16.msra.mxu0 0
      %4950 = vmatprep.subr.bf16.mxu0 0
      %4951 = vmatpush1.bf16.msra.mxu0 0
      %4952 = vmatprep.subr.bf16.mxu0 0
      %4953 = vmatpush1.bf16.msra.mxu0 0
      %4954 = vmatprep.subr.bf16.mxu0 0
      %4955 = vmatpush1.bf16.msra.mxu0 %v4929
      %4956 = vmatprep.subr.bf16.mxu0 0
      %4957 = vmatpush1.bf16.msra.mxu0 %v4928
      %4958 = vmatprep.subr.bf16.mxu0 0
      %4959 = vmatpush1.bf16.msra.mxu0 %v4927
      %4960 = vmatprep.subr.bf16.mxu0 0
      %4961 = vmatpush1.bf16.msra.mxu0 %v4926
      %4962 = vmatprep.subr.bf16.mxu0 0
      %4963 = vmatpush2.bf16.msra.mxu0 0
      %4964 = vmatprep.subr.bf16.mxu0 0
      %4965 = vmatpush2.bf16.msra.mxu0 0
      %4966 = vmatprep.subr.bf16.mxu0 0
      %4967 = vmatpush2.bf16.msra.mxu0 0
      %4968 = vmatprep.subr.bf16.mxu0 0
      %4969 = vmatpush2.bf16.msra.mxu0 0
      %4970 = vmatprep.subr.bf16.mxu0 0
      %4971 = vmatpush2.bf16.msra.mxu0 0
      %4972 = vmatprep.subr.bf16.mxu0 0
      %4973 = vmatpush2.bf16.msra.mxu0 0
      %4974 = vmatprep.subr.bf16.mxu0 0
      %4975 = vmatpush2.bf16.msra.mxu0 0
      %4976 = vmatprep.subr.bf16.mxu0 0
      %4977 = vmatpush2.bf16.msra.mxu0 0
      %4978 = vmatprep.mubr.bf16.mxu0 0
      %4979 = vmatmul.mubr.bf16.gmra.mxu0 %v4935
      %v4980 = vpop.f32.mrf.mxu0
      %v4981 = vadd.f32 0.0, %v4980
      %v4982 = vpop.f32.mrf.mxu0
      %v4983 = vpop.f32.mrf.mxu0
      %v4984 = vadd.f32 0.0, %v4983
      %v4985 = vpop.f32.mrf.mxu0
      %4986 = vmatprep.mubr.bf16.mxu0 0
      %4987 = vmatmul.mubr.bf16.gmra.mxu0 %v4938
      %v4988 = vpop.f32.mrf.mxu0
      %v4989 = vadd.f32 0.0, %v4988
      %v4990 = vpop.f32.mrf.mxu0
      %v4991 = vpop.f32.mrf.mxu0
      %v4992 = vadd.f32 0.0, %v4991
      %v4993 = vpop.f32.mrf.mxu0
      %4994 = vmatprep.mubr.bf16.mxu0 0
      %4995 = vmatmul.mubr.bf16.gmra.mxu0 %v4941
      %v4996 = vpop.f32.mrf.mxu0
      %v4997 = vadd.f32 0.0, %v4996
      %v4998 = vpop.f32.mrf.mxu0
      %v4999 = vpop.f32.mrf.mxu0
      %v5000 = vadd.f32 0.0, %v4999
      %v5001 = vpop.f32.mrf.mxu0
      %5002 = vmatprep.mubr.bf16.mxu0 0
      %5003 = vmatmul.mubr.bf16.gmra.mxu0 %v4944
      %v5004 = vpop.f32.mrf.mxu0
      %v5005 = vadd.f32 0.0, %v5004
      %v5006 = vpop.f32.mrf.mxu0
      %v5007 = vpop.f32.mrf.mxu0
      %v5008 = vadd.f32 0.0, %v5007
      %v5009 = vpop.f32.mrf.mxu0
      %5010 = vdwg.mxu0
      %v5011 = vadd.f32 %v4881, %v4981
      %v5012 = vadd.f32 %v4882, %v4984
      %v5013 = vadd.f32 %v4883, %v4989
      %v5014 = vadd.f32 %v4884, %v4992
      %v5015 = vadd.f32 %v4885, %v4997
      %v5016 = vadd.f32 %v4886, %v5000
      %v5017 = vadd.f32 %v4887, %v5005
      %v5018 = vadd.f32 %v4888, %v5008
      %v5019 = vld [vmem:[%s4758 + $0x9] sm:$0xff]
      %v5020 = vld [vmem:[%s4758 + $0x21] sm:$0xff]
      %v5021 = vld [vmem:[%s4758 + $0x39] sm:$0xff]
      %v5022 = vld [vmem:[%s4758 + $0x51] sm:$0xff]
      %v5023 = vld [vmem:[%s4758 + $0x69] sm:$0xff]
      %v5024 = vld [vmem:[%s4758 + $0x81] sm:$0xff]
      %v5025 = vld [vmem:[%s4758 + $0x99] sm:$0xff]
      %v5026 = vld [vmem:[%s4758 + $0xb1] sm:$0xff]
      %v5027 = vpack.c.bf16 %v5020, %v5019
      %v5028 = vpack.c.bf16 %v5022, %v5021
      %v5029 = vpack.c.bf16 %v5024, %v5023
      %v5030 = vpack.c.bf16 %v5026, %v5025
      %s5031 = scalar_lea.vmem %s5, 256
      %v5032 = vld [vmem:[%s5031] sm:$0xf]
      %v5033 = vld [vmem:[%s5031 + $0x4] sm:$0xf]
      %v5034 = vld [vmem:[%s5031 + $0x8] sm:$0xf]
      %v5035 = vld [vmem:[%s5031 + $0xc] sm:$0xf]
      %v5036 = vld [vmem:[%s5031 + $0x10] sm:$0xf]
      %v5037 = vld [vmem:[%s5031 + $0x14] sm:$0xf]
      %v5038 = vld [vmem:[%s5031 + $0x18] sm:$0xf]
      %v5039 = vld [vmem:[%s5031 + $0x1c] sm:$0xf]
      %v5048 = vunpack.c.l.b16 %v5032
      %v5049 = vunpack.c.l.b16 %v5033
      %v5050 = vunpack.c.l.b16 %v5034
      %v5051 = vunpack.c.l.b16 %v5035
      %v5052 = vunpack.c.l.b16 %v5036
      %v5053 = vunpack.c.l.b16 %v5037
      %v5054 = vunpack.c.l.b16 %v5038
      %v5055 = vunpack.c.l.b16 %v5039
      %v5056 = vpack.c.b16 %v5049, %v5048
      %v5057 = vpack.c.b16 %v5051, %v5050
      %v5058 = vpack.c.b16 %v5053, %v5052
      %v5059 = vpack.c.b16 %v5055, %v5054
      %v5065 = vsel %vm771, %v5027, 0
      %v5068 = vsel %vm771, %v5028, 0
      %v5071 = vsel %vm771, %v5029, 0
      %v5074 = vsel %vm771, %v5030, 0
      %5076 = vmatprep.subr.bf16.mxu0 0
      %5077 = vmatpush1.bf16.msra.mxu0 0
      %5078 = vmatprep.subr.bf16.mxu0 0
      %5079 = vmatpush1.bf16.msra.mxu0 0
      %5080 = vmatprep.subr.bf16.mxu0 0
      %5081 = vmatpush1.bf16.msra.mxu0 0
      %5082 = vmatprep.subr.bf16.mxu0 0
      %5083 = vmatpush1.bf16.msra.mxu0 0
      %5084 = vmatprep.subr.bf16.mxu0 0
      %5085 = vmatpush1.bf16.msra.mxu0 %v5059
      %5086 = vmatprep.subr.bf16.mxu0 0
      %5087 = vmatpush1.bf16.msra.mxu0 %v5058
      %5088 = vmatprep.subr.bf16.mxu0 0
      %5089 = vmatpush1.bf16.msra.mxu0 %v5057
      %5090 = vmatprep.subr.bf16.mxu0 0
      %5091 = vmatpush1.bf16.msra.mxu0 %v5056
      %5092 = vmatprep.subr.bf16.mxu0 0
      %5093 = vmatpush2.bf16.msra.mxu0 0
      %5094 = vmatprep.subr.bf16.mxu0 0
      %5095 = vmatpush2.bf16.msra.mxu0 0
      %5096 = vmatprep.subr.bf16.mxu0 0
      %5097 = vmatpush2.bf16.msra.mxu0 0
      %5098 = vmatprep.subr.bf16.mxu0 0
      %5099 = vmatpush2.bf16.msra.mxu0 0
      %5100 = vmatprep.subr.bf16.mxu0 0
      %5101 = vmatpush2.bf16.msra.mxu0 0
      %5102 = vmatprep.subr.bf16.mxu0 0
      %5103 = vmatpush2.bf16.msra.mxu0 0
      %5104 = vmatprep.subr.bf16.mxu0 0
      %5105 = vmatpush2.bf16.msra.mxu0 0
      %5106 = vmatprep.subr.bf16.mxu0 0
      %5107 = vmatpush2.bf16.msra.mxu0 0
      %5108 = vmatprep.mubr.bf16.mxu0 0
      %5109 = vmatmul.mubr.bf16.gmra.mxu0 %v5065
      %v5110 = vpop.f32.mrf.mxu0
      %v5111 = vadd.f32 0.0, %v5110
      %v5112 = vpop.f32.mrf.mxu0
      %v5113 = vpop.f32.mrf.mxu0
      %v5114 = vadd.f32 0.0, %v5113
      %v5115 = vpop.f32.mrf.mxu0
      %5116 = vmatprep.mubr.bf16.mxu0 0
      %5117 = vmatmul.mubr.bf16.gmra.mxu0 %v5068
      %v5118 = vpop.f32.mrf.mxu0
      %v5119 = vadd.f32 0.0, %v5118
      %v5120 = vpop.f32.mrf.mxu0
      %v5121 = vpop.f32.mrf.mxu0
      %v5122 = vadd.f32 0.0, %v5121
      %v5123 = vpop.f32.mrf.mxu0
      %5124 = vmatprep.mubr.bf16.mxu0 0
      %5125 = vmatmul.mubr.bf16.gmra.mxu0 %v5071
      %v5126 = vpop.f32.mrf.mxu0
      %v5127 = vadd.f32 0.0, %v5126
      %v5128 = vpop.f32.mrf.mxu0
      %v5129 = vpop.f32.mrf.mxu0
      %v5130 = vadd.f32 0.0, %v5129
      %v5131 = vpop.f32.mrf.mxu0
      %5132 = vmatprep.mubr.bf16.mxu0 0
      %5133 = vmatmul.mubr.bf16.gmra.mxu0 %v5074
      %v5134 = vpop.f32.mrf.mxu0
      %v5135 = vadd.f32 0.0, %v5134
      %v5136 = vpop.f32.mrf.mxu0
      %v5137 = vpop.f32.mrf.mxu0
      %v5138 = vadd.f32 0.0, %v5137
      %v5139 = vpop.f32.mrf.mxu0
      %5140 = vdwg.mxu0
      %v5141 = vadd.f32 %v5011, %v5111
      %v5142 = vadd.f32 %v5012, %v5114
      %v5143 = vadd.f32 %v5013, %v5119
      %v5144 = vadd.f32 %v5014, %v5122
      %v5145 = vadd.f32 %v5015, %v5127
      %v5146 = vadd.f32 %v5016, %v5130
      %v5147 = vadd.f32 %v5017, %v5135
      %v5148 = vadd.f32 %v5018, %v5138
      %v5149 = vmax.f32 %v5141, 0.0
      %v5150 = vmax.f32 %v5142, 0.0
      %v5151 = vmax.f32 %v5143, 0.0
      %v5152 = vmax.f32 %v5144, 0.0
      %v5153 = vmax.f32 %v5145, 0.0
      %v5154 = vmax.f32 %v5146, 0.0
      %v5155 = vmax.f32 %v5147, 0.0
      %v5156 = vmax.f32 %v5148, 0.0
      %5157 = vst [vmem:[#allocation5] sm:$0xff] 0.0
      %5158 = vst [vmem:[#allocation5 + $0x8] sm:$0xff] 0.0
      %5159 = vst [vmem:[#allocation5 + $0x10] sm:$0xff] 0.0
      %5160 = vst [vmem:[#allocation5 + $0x18] sm:$0xff] 0.0
      %5161 = vst [vmem:[#allocation5 + $0x20] sm:$0xff] 0.0
      %5162 = vst [vmem:[#allocation5 + $0x28] sm:$0xff] 0.0
      %5163 = vst [vmem:[#allocation5 + $0x30] sm:$0xff] 0.0
      %5164 = vst [vmem:[#allocation5 + $0x38] sm:$0xff] 0.0
      %5165 = vst [vmem:[#allocation5 + $0x40] sm:$0xff] 0.0
      %5166 = vst [vmem:[#allocation5 + $0x48] sm:$0xff] 0.0
      %5167 = vst [vmem:[#allocation5 + $0x50] sm:$0xff] 0.0
      %5168 = vst [vmem:[#allocation5 + $0x58] sm:$0xff] 0.0
      %5169 = vst [vmem:[#allocation5 + $0x60] sm:$0xff] 0.0
      %5170 = vst [vmem:[#allocation5 + $0x68] sm:$0xff] 0.0
      %5171 = vst [vmem:[#allocation5 + $0x70] sm:$0xff] 0.0
      %5172 = vst [vmem:[#allocation5 + $0x78] sm:$0xff] 0.0
      %5173 = vst [vmem:[#allocation5 + $0x80] sm:$0xff] 0.0
      %5174 = vst [vmem:[#allocation5 + $0x88] sm:$0xff] 0.0
      %5175 = vst [vmem:[#allocation5 + $0x90] sm:$0xff] 0.0
      %5176 = vst [vmem:[#allocation5 + $0x98] sm:$0xff] 0.0
      %5177 = vst [vmem:[#allocation5 + $0xa0] sm:$0xff] 0.0
      %5178 = vst [vmem:[#allocation5 + $0xa8] sm:$0xff] 0.0
      %5179 = vst [vmem:[#allocation5 + $0xb0] sm:$0xff] 0.0
      %5180 = vst [vmem:[#allocation5 + $0xb8] sm:$0xff] 0.0
      %5181 = vst [vmem:[#allocation5 + $0xc0] sm:$0xff] 0.0
      %5182 = vst [vmem:[#allocation5 + $0xc8] sm:$0xff] 0.0
      %5183 = vst [vmem:[#allocation5 + $0xd0] sm:$0xff] 0.0
      %5184 = vst [vmem:[#allocation5 + $0xd8] sm:$0xff] 0.0
      %5185 = vst [vmem:[#allocation5 + $0xe0] sm:$0xff] 0.0
      %5186 = vst [vmem:[#allocation5 + $0xe8] sm:$0xff] 0.0
      %s5187 = scalar_lea.vmem [#allocation5], 24
      %5188 = vst [vmem:[%s5187 + $0x8] sm:$0xff] %v5149
      %5189 = vst [vmem:[%s5187 + $0x20] sm:$0xff] %v5150
      %5190 = vst [vmem:[%s5187 + $0x38] sm:$0xff] %v5151
      %5191 = vst [vmem:[%s5187 + $0x50] sm:$0xff] %v5152
      %5192 = vst [vmem:[%s5187 + $0x68] sm:$0xff] %v5153
      %5193 = vst [vmem:[%s5187 + $0x80] sm:$0xff] %v5154
      %5194 = vst [vmem:[%s5187 + $0x98] sm:$0xff] %v5155
      %5195 = vst [vmem:[%s5187 + $0xb0] sm:$0xff] %v5156
      %v5196 = vld [vmem:[%s8] sm:$0x1]
      %v5198 = vlaneseq
      %v5199 = vshrl.u32 %v5198, 7
      %v5200 = vsub.s32 0, %v5199
      %v5201 = vrot.slane %v5196, %v5200
      %v5203 = vld [vmem:[#allocation5 + $0x7] sm:$0xff]
      %v5204 = vld [vmem:[#allocation5 + $0x1f] sm:$0xff]
      %v5205 = vld [vmem:[#allocation5 + $0x37] sm:$0xff]
      %v5206 = vld [vmem:[#allocation5 + $0x4f] sm:$0xff]
      %v5207 = vld [vmem:[#allocation5 + $0x67] sm:$0xff]
      %v5208 = vld [vmem:[#allocation5 + $0x7f] sm:$0xff]
      %v5209 = vld [vmem:[#allocation5 + $0x97] sm:$0xff]
      %v5210 = vld [vmem:[#allocation5 + $0xaf] sm:$0xff]
      %v5211 = vpack.c.bf16 %v5204, %v5203
      %v5212 = vpack.c.bf16 %v5206, %v5205
      %v5213 = vpack.c.bf16 %v5208, %v5207
      %v5214 = vpack.c.bf16 %v5210, %v5209
      %v5215 = vld [vmem:[%s7] sm:$0xf]
      %v5216 = vld [vmem:[%s7 + $0x4] sm:$0xf]
      %v5217 = vld [vmem:[%s7 + $0x8] sm:$0xf]
      %v5218 = vld [vmem:[%s7 + $0xc] sm:$0xf]
      %v5219 = vld [vmem:[%s7 + $0x10] sm:$0xf]
      %v5220 = vld [vmem:[%s7 + $0x14] sm:$0xf]
      %v5221 = vld [vmem:[%s7 + $0x18] sm:$0xf]
      %v5222 = vld [vmem:[%s7 + $0x1c] sm:$0xf]
      %v5223 = vld [vmem:[%s7 + $0x20] sm:$0xf]
      %v5224 = vld [vmem:[%s7 + $0x24] sm:$0xf]
      %v5225 = vld [vmem:[%s7 + $0x28] sm:$0xf]
      %v5226 = vld [vmem:[%s7 + $0x2c] sm:$0xf]
      %v5227 = vld [vmem:[%s7 + $0x30] sm:$0xf]
      %v5228 = vld [vmem:[%s7 + $0x34] sm:$0xf]
      %v5229 = vld [vmem:[%s7 + $0x38] sm:$0xf]
      %v5230 = vld [vmem:[%s7 + $0x3c] sm:$0xf]
      %v5247 = vunpack.c.l.b16 %v5215
      %v5248 = vunpack.c.l.b16 %v5216
      %v5249 = vunpack.c.l.b16 %v5217
      %v5250 = vunpack.c.l.b16 %v5218
      %v5251 = vunpack.c.l.b16 %v5219
      %v5252 = vunpack.c.l.b16 %v5220
      %v5253 = vunpack.c.l.b16 %v5221
      %v5254 = vunpack.c.l.b16 %v5222
      %v5255 = vunpack.c.l.b16 %v5223
      %v5256 = vunpack.c.l.b16 %v5224
      %v5257 = vunpack.c.l.b16 %v5225
      %v5258 = vunpack.c.l.b16 %v5226
      %v5259 = vunpack.c.l.b16 %v5227
      %v5260 = vunpack.c.l.b16 %v5228
      %v5261 = vunpack.c.l.b16 %v5229
      %v5262 = vunpack.c.l.b16 %v5230
      %v5263 = vpack.c.b16 %v5248, %v5247
      %v5264 = vpack.c.b16 %v5250, %v5249
      %v5265 = vpack.c.b16 %v5252, %v5251
      %v5266 = vpack.c.b16 %v5254, %v5253
      %v5267 = vpack.c.b16 %v5256, %v5255
      %v5268 = vpack.c.b16 %v5258, %v5257
      %v5269 = vpack.c.b16 %v5260, %v5259
      %v5270 = vpack.c.b16 %v5262, %v5261
      %5279 = vmatprep.subr.bf16.mxu0 0
      %5280 = vmatpush1.bf16.msra.mxu0 %v5270
      %5281 = vmatprep.subr.bf16.mxu0 0
      %5282 = vmatpush1.bf16.msra.mxu0 %v5269
      %5283 = vmatprep.subr.bf16.mxu0 0
      %5284 = vmatpush1.bf16.msra.mxu0 %v5268
      %5285 = vmatprep.subr.bf16.mxu0 0
      %5286 = vmatpush1.bf16.msra.mxu0 %v5267
      %5287 = vmatprep.subr.bf16.mxu0 0
      %5288 = vmatpush1.bf16.msra.mxu0 %v5266
      %5289 = vmatprep.subr.bf16.mxu0 0
      %5290 = vmatpush1.bf16.msra.mxu0 %v5265
      %5291 = vmatprep.subr.bf16.mxu0 0
      %5292 = vmatpush1.bf16.msra.mxu0 %v5264
      %5293 = vmatprep.subr.bf16.mxu0 0
      %5294 = vmatpush1.bf16.msra.mxu0 %v5263
      %5295 = vmatprep.subr.bf16.mxu0 0
      %5296 = vmatpush2.bf16.msra.mxu0 0
      %5297 = vmatprep.subr.bf16.mxu0 0
      %5298 = vmatpush2.bf16.msra.mxu0 0
      %5299 = vmatprep.subr.bf16.mxu0 0
      %5300 = vmatpush2.bf16.msra.mxu0 0
      %5301 = vmatprep.subr.bf16.mxu0 0
      %5302 = vmatpush2.bf16.msra.mxu0 0
      %5303 = vmatprep.subr.bf16.mxu0 0
      %5304 = vmatpush2.bf16.msra.mxu0 0
      %5305 = vmatprep.subr.bf16.mxu0 0
      %5306 = vmatpush2.bf16.msra.mxu0 0
      %5307 = vmatprep.subr.bf16.mxu0 0
      %5308 = vmatpush2.bf16.msra.mxu0 0
      %5309 = vmatprep.subr.bf16.mxu0 0
      %5310 = vmatpush2.bf16.msra.mxu0 0
      %5311 = vmatprep.mubr.bf16.mxu0 0
      %5312 = vmatmul.mubr.bf16.gmra.mxu0 %v5211
      %v5313 = vpop.f32.mrf.mxu0
      %v5314 = vadd.f32 0.0, %v5313
      %v5315 = vpop.f32.mrf.mxu0
      %v5316 = vpop.f32.mrf.mxu0
      %v5317 = vadd.f32 0.0, %v5316
      %v5318 = vpop.f32.mrf.mxu0
      %5319 = vmatprep.mubr.bf16.mxu0 0
      %5320 = vmatmul.mubr.bf16.gmra.mxu0 %v5212
      %v5321 = vpop.f32.mrf.mxu0
      %v5322 = vadd.f32 0.0, %v5321
      %v5323 = vpop.f32.mrf.mxu0
      %v5324 = vpop.f32.mrf.mxu0
      %v5325 = vadd.f32 0.0, %v5324
      %v5326 = vpop.f32.mrf.mxu0
      %5327 = vmatprep.mubr.bf16.mxu0 0
      %5328 = vmatmul.mubr.bf16.gmra.mxu0 %v5213
      %v5329 = vpop.f32.mrf.mxu0
      %v5330 = vadd.f32 0.0, %v5329
      %v5331 = vpop.f32.mrf.mxu0
      %v5332 = vpop.f32.mrf.mxu0
      %v5333 = vadd.f32 0.0, %v5332
      %v5334 = vpop.f32.mrf.mxu0
      %5335 = vmatprep.mubr.bf16.mxu0 0
      %5336 = vmatmul.mubr.bf16.gmra.mxu0 %v5214
      %v5337 = vpop.f32.mrf.mxu0
      %v5338 = vadd.f32 0.0, %v5337
      %v5339 = vpop.f32.mrf.mxu0
      %v5340 = vpop.f32.mrf.mxu0
      %v5341 = vadd.f32 0.0, %v5340
      %v5342 = vpop.f32.mrf.mxu0
      %5343 = vdwg.mxu0
      %v5344 = vadd.f32 %v5201, %v5314
      %v5345 = vadd.f32 %v5201, %v5317
      %v5346 = vadd.f32 %v5201, %v5322
      %v5347 = vadd.f32 %v5201, %v5325
      %v5348 = vadd.f32 %v5201, %v5330
      %v5349 = vadd.f32 %v5201, %v5333
      %v5350 = vadd.f32 %v5201, %v5338
      %v5351 = vadd.f32 %v5201, %v5341
      %v5352 = vld [vmem:[#allocation5 + $0x8] sm:$0xff]
      %v5353 = vld [vmem:[#allocation5 + $0x20] sm:$0xff]
      %v5354 = vld [vmem:[#allocation5 + $0x38] sm:$0xff]
      %v5355 = vld [vmem:[#allocation5 + $0x50] sm:$0xff]
      %v5356 = vld [vmem:[#allocation5 + $0x68] sm:$0xff]
      %v5357 = vld [vmem:[#allocation5 + $0x80] sm:$0xff]
      %v5358 = vld [vmem:[#allocation5 + $0x98] sm:$0xff]
      %v5359 = vld [vmem:[#allocation5 + $0xb0] sm:$0xff]
      %v5360 = vpack.c.bf16 %v5353, %v5352
      %v5361 = vpack.c.bf16 %v5355, %v5354
      %v5362 = vpack.c.bf16 %v5357, %v5356
      %v5363 = vpack.c.bf16 %v5359, %v5358
      %s5364 = scalar_lea.vmem %s7, 64
      %v5365 = vld [vmem:[%s5364] sm:$0xf]
      %v5366 = vld [vmem:[%s5364 + $0x4] sm:$0xf]
      %v5367 = vld [vmem:[%s5364 + $0x8] sm:$0xf]
      %v5368 = vld [vmem:[%s5364 + $0xc] sm:$0xf]
      %v5369 = vld [vmem:[%s5364 + $0x10] sm:$0xf]
      %v5370 = vld [vmem:[%s5364 + $0x14] sm:$0xf]
      %v5371 = vld [vmem:[%s5364 + $0x18] sm:$0xf]
      %v5372 = vld [vmem:[%s5364 + $0x1c] sm:$0xf]
      %v5373 = vld [vmem:[%s5364 + $0x20] sm:$0xf]
      %v5374 = vld [vmem:[%s5364 + $0x24] sm:$0xf]
      %v5375 = vld [vmem:[%s5364 + $0x28] sm:$0xf]
      %v5376 = vld [vmem:[%s5364 + $0x2c] sm:$0xf]
      %v5377 = vld [vmem:[%s5364 + $0x30] sm:$0xf]
      %v5378 = vld [vmem:[%s5364 + $0x34] sm:$0xf]
      %v5379 = vld [vmem:[%s5364 + $0x38] sm:$0xf]
      %v5380 = vld [vmem:[%s5364 + $0x3c] sm:$0xf]
      %v5397 = vunpack.c.l.b16 %v5365
      %v5398 = vunpack.c.l.b16 %v5366
      %v5399 = vunpack.c.l.b16 %v5367
      %v5400 = vunpack.c.l.b16 %v5368
      %v5401 = vunpack.c.l.b16 %v5369
      %v5402 = vunpack.c.l.b16 %v5370
      %v5403 = vunpack.c.l.b16 %v5371
      %v5404 = vunpack.c.l.b16 %v5372
      %v5405 = vunpack.c.l.b16 %v5373
      %v5406 = vunpack.c.l.b16 %v5374
      %v5407 = vunpack.c.l.b16 %v5375
      %v5408 = vunpack.c.l.b16 %v5376
      %v5409 = vunpack.c.l.b16 %v5377
      %v5410 = vunpack.c.l.b16 %v5378
      %v5411 = vunpack.c.l.b16 %v5379
      %v5412 = vunpack.c.l.b16 %v5380
      %v5413 = vpack.c.b16 %v5398, %v5397
      %v5414 = vpack.c.b16 %v5400, %v5399
      %v5415 = vpack.c.b16 %v5402, %v5401
      %v5416 = vpack.c.b16 %v5404, %v5403
      %v5417 = vpack.c.b16 %v5406, %v5405
      %v5418 = vpack.c.b16 %v5408, %v5407
      %v5419 = vpack.c.b16 %v5410, %v5409
      %v5420 = vpack.c.b16 %v5412, %v5411
      %5429 = vmatprep.subr.bf16.mxu0 0
      %5430 = vmatpush1.bf16.msra.mxu0 %v5420
      %5431 = vmatprep.subr.bf16.mxu0 0
      %5432 = vmatpush1.bf16.msra.mxu0 %v5419
      %5433 = vmatprep.subr.bf16.mxu0 0
      %5434 = vmatpush1.bf16.msra.mxu0 %v5418
      %5435 = vmatprep.subr.bf16.mxu0 0
      %5436 = vmatpush1.bf16.msra.mxu0 %v5417
      %5437 = vmatprep.subr.bf16.mxu0 0
      %5438 = vmatpush1.bf16.msra.mxu0 %v5416
      %5439 = vmatprep.subr.bf16.mxu0 0
      %5440 = vmatpush1.bf16.msra.mxu0 %v5415
      %5441 = vmatprep.subr.bf16.mxu0 0
      %5442 = vmatpush1.bf16.msra.mxu0 %v5414
      %5443 = vmatprep.subr.bf16.mxu0 0
      %5444 = vmatpush1.bf16.msra.mxu0 %v5413
      %5445 = vmatprep.subr.bf16.mxu0 0
      %5446 = vmatpush2.bf16.msra.mxu0 0
      %5447 = vmatprep.subr.bf16.mxu0 0
      %5448 = vmatpush2.bf16.msra.mxu0 0
      %5449 = vmatprep.subr.bf16.mxu0 0
      %5450 = vmatpush2.bf16.msra.mxu0 0
      %5451 = vmatprep.subr.bf16.mxu0 0
      %5452 = vmatpush2.bf16.msra.mxu0 0
      %5453 = vmatprep.subr.bf16.mxu0 0
      %5454 = vmatpush2.bf16.msra.mxu0 0
      %5455 = vmatprep.subr.bf16.mxu0 0
      %5456 = vmatpush2.bf16.msra.mxu0 0
      %5457 = vmatprep.subr.bf16.mxu0 0
      %5458 = vmatpush2.bf16.msra.mxu0 0
      %5459 = vmatprep.subr.bf16.mxu0 0
      %5460 = vmatpush2.bf16.msra.mxu0 0
      %5461 = vmatprep.mubr.bf16.mxu0 0
      %5462 = vmatmul.mubr.bf16.gmra.mxu0 %v5360
      %v5463 = vpop.f32.mrf.mxu0
      %v5464 = vadd.f32 0.0, %v5463
      %v5465 = vpop.f32.mrf.mxu0
      %v5466 = vpop.f32.mrf.mxu0
      %v5467 = vadd.f32 0.0, %v5466
      %v5468 = vpop.f32.mrf.mxu0
      %5469 = vmatprep.mubr.bf16.mxu0 0
      %5470 = vmatmul.mubr.bf16.gmra.mxu0 %v5361
      %v5471 = vpop.f32.mrf.mxu0
      %v5472 = vadd.f32 0.0, %v5471
      %v5473 = vpop.f32.mrf.mxu0
      %v5474 = vpop.f32.mrf.mxu0
      %v5475 = vadd.f32 0.0, %v5474
      %v5476 = vpop.f32.mrf.mxu0
      %5477 = vmatprep.mubr.bf16.mxu0 0
      %5478 = vmatmul.mubr.bf16.gmra.mxu0 %v5362
      %v5479 = vpop.f32.mrf.mxu0
      %v5480 = vadd.f32 0.0, %v5479
      %v5481 = vpop.f32.mrf.mxu0
      %v5482 = vpop.f32.mrf.mxu0
      %v5483 = vadd.f32 0.0, %v5482
      %v5484 = vpop.f32.mrf.mxu0
      %5485 = vmatprep.mubr.bf16.mxu0 0
      %5486 = vmatmul.mubr.bf16.gmra.mxu0 %v5363
      %v5487 = vpop.f32.mrf.mxu0
      %v5488 = vadd.f32 0.0, %v5487
      %v5489 = vpop.f32.mrf.mxu0
      %v5490 = vpop.f32.mrf.mxu0
      %v5491 = vadd.f32 0.0, %v5490
      %v5492 = vpop.f32.mrf.mxu0
      %5493 = vdwg.mxu0
      %v5494 = vadd.f32 %v5344, %v5464
      %v5495 = vadd.f32 %v5345, %v5467
      %v5496 = vadd.f32 %v5346, %v5472
      %v5497 = vadd.f32 %v5347, %v5475
      %v5498 = vadd.f32 %v5348, %v5480
      %v5499 = vadd.f32 %v5349, %v5483
      %v5500 = vadd.f32 %v5350, %v5488
      %v5501 = vadd.f32 %v5351, %v5491
      %v5502 = vld [vmem:[#allocation5 + $0x9] sm:$0xff]
      %v5503 = vld [vmem:[#allocation5 + $0x21] sm:$0xff]
      %v5504 = vld [vmem:[#allocation5 + $0x39] sm:$0xff]
      %v5505 = vld [vmem:[#allocation5 + $0x51] sm:$0xff]
      %v5506 = vld [vmem:[#allocation5 + $0x69] sm:$0xff]
      %v5507 = vld [vmem:[#allocation5 + $0x81] sm:$0xff]
      %v5508 = vld [vmem:[#allocation5 + $0x99] sm:$0xff]
      %v5509 = vld [vmem:[#allocation5 + $0xb1] sm:$0xff]
      %v5510 = vpack.c.bf16 %v5503, %v5502
      %v5511 = vpack.c.bf16 %v5505, %v5504
      %v5512 = vpack.c.bf16 %v5507, %v5506
      %v5513 = vpack.c.bf16 %v5509, %v5508
      %s5514 = scalar_lea.vmem %s7, 128
      %v5515 = vld [vmem:[%s5514] sm:$0xf]
      %v5516 = vld [vmem:[%s5514 + $0x4] sm:$0xf]
      %v5517 = vld [vmem:[%s5514 + $0x8] sm:$0xf]
      %v5518 = vld [vmem:[%s5514 + $0xc] sm:$0xf]
      %v5519 = vld [vmem:[%s5514 + $0x10] sm:$0xf]
      %v5520 = vld [vmem:[%s5514 + $0x14] sm:$0xf]
      %v5521 = vld [vmem:[%s5514 + $0x18] sm:$0xf]
      %v5522 = vld [vmem:[%s5514 + $0x1c] sm:$0xf]
      %v5523 = vld [vmem:[%s5514 + $0x20] sm:$0xf]
      %v5524 = vld [vmem:[%s5514 + $0x24] sm:$0xf]
      %v5525 = vld [vmem:[%s5514 + $0x28] sm:$0xf]
      %v5526 = vld [vmem:[%s5514 + $0x2c] sm:$0xf]
      %v5527 = vld [vmem:[%s5514 + $0x30] sm:$0xf]
      %v5528 = vld [vmem:[%s5514 + $0x34] sm:$0xf]
      %v5529 = vld [vmem:[%s5514 + $0x38] sm:$0xf]
      %v5530 = vld [vmem:[%s5514 + $0x3c] sm:$0xf]
      %v5547 = vunpack.c.l.b16 %v5515
      %v5548 = vunpack.c.l.b16 %v5516
      %v5549 = vunpack.c.l.b16 %v5517
      %v5550 = vunpack.c.l.b16 %v5518
      %v5551 = vunpack.c.l.b16 %v5519
      %v5552 = vunpack.c.l.b16 %v5520
      %v5553 = vunpack.c.l.b16 %v5521
      %v5554 = vunpack.c.l.b16 %v5522
      %v5555 = vunpack.c.l.b16 %v5523
      %v5556 = vunpack.c.l.b16 %v5524
      %v5557 = vunpack.c.l.b16 %v5525
      %v5558 = vunpack.c.l.b16 %v5526
      %v5559 = vunpack.c.l.b16 %v5527
      %v5560 = vunpack.c.l.b16 %v5528
      %v5561 = vunpack.c.l.b16 %v5529
      %v5562 = vunpack.c.l.b16 %v5530
      %v5563 = vpack.c.b16 %v5548, %v5547
      %v5564 = vpack.c.b16 %v5550, %v5549
      %v5565 = vpack.c.b16 %v5552, %v5551
      %v5566 = vpack.c.b16 %v5554, %v5553
      %v5567 = vpack.c.b16 %v5556, %v5555
      %v5568 = vpack.c.b16 %v5558, %v5557
      %v5569 = vpack.c.b16 %v5560, %v5559
      %v5570 = vpack.c.b16 %v5562, %v5561
      %5579 = vmatprep.subr.bf16.mxu0 0
      %5580 = vmatpush1.bf16.msra.mxu0 %v5570
      %5581 = vmatprep.subr.bf16.mxu0 0
      %5582 = vmatpush1.bf16.msra.mxu0 %v5569
      %5583 = vmatprep.subr.bf16.mxu0 0
      %5584 = vmatpush1.bf16.msra.mxu0 %v5568
      %5585 = vmatprep.subr.bf16.mxu0 0
      %5586 = vmatpush1.bf16.msra.mxu0 %v5567
      %5587 = vmatprep.subr.bf16.mxu0 0
      %5588 = vmatpush1.bf16.msra.mxu0 %v5566
      %5589 = vmatprep.subr.bf16.mxu0 0
      %5590 = vmatpush1.bf16.msra.mxu0 %v5565
      %5591 = vmatprep.subr.bf16.mxu0 0
      %5592 = vmatpush1.bf16.msra.mxu0 %v5564
      %5593 = vmatprep.subr.bf16.mxu0 0
      %5594 = vmatpush1.bf16.msra.mxu0 %v5563
      %5595 = vmatprep.subr.bf16.mxu0 0
      %5596 = vmatpush2.bf16.msra.mxu0 0
      %5597 = vmatprep.subr.bf16.mxu0 0
      %5598 = vmatpush2.bf16.msra.mxu0 0
      %5599 = vmatprep.subr.bf16.mxu0 0
      %5600 = vmatpush2.bf16.msra.mxu0 0
      %5601 = vmatprep.subr.bf16.mxu0 0
      %5602 = vmatpush2.bf16.msra.mxu0 0
      %5603 = vmatprep.subr.bf16.mxu0 0
      %5604 = vmatpush2.bf16.msra.mxu0 0
      %5605 = vmatprep.subr.bf16.mxu0 0
      %5606 = vmatpush2.bf16.msra.mxu0 0
      %5607 = vmatprep.subr.bf16.mxu0 0
      %5608 = vmatpush2.bf16.msra.mxu0 0
      %5609 = vmatprep.subr.bf16.mxu0 0
      %5610 = vmatpush2.bf16.msra.mxu0 0
      %5611 = vmatprep.mubr.bf16.mxu0 0
      %5612 = vmatmul.mubr.bf16.gmra.mxu0 %v5510
      %v5613 = vpop.f32.mrf.mxu0
      %v5614 = vadd.f32 0.0, %v5613
      %v5615 = vpop.f32.mrf.mxu0
      %v5616 = vpop.f32.mrf.mxu0
      %v5617 = vadd.f32 0.0, %v5616
      %v5618 = vpop.f32.mrf.mxu0
      %5619 = vmatprep.mubr.bf16.mxu0 0
      %5620 = vmatmul.mubr.bf16.gmra.mxu0 %v5511
      %v5621 = vpop.f32.mrf.mxu0
      %v5622 = vadd.f32 0.0, %v5621
      %v5623 = vpop.f32.mrf.mxu0
      %v5624 = vpop.f32.mrf.mxu0
      %v5625 = vadd.f32 0.0, %v5624
      %v5626 = vpop.f32.mrf.mxu0
      %5627 = vmatprep.mubr.bf16.mxu0 0
      %5628 = vmatmul.mubr.bf16.gmra.mxu0 %v5512
      %v5629 = vpop.f32.mrf.mxu0
      %v5630 = vadd.f32 0.0, %v5629
      %v5631 = vpop.f32.mrf.mxu0
      %v5632 = vpop.f32.mrf.mxu0
      %v5633 = vadd.f32 0.0, %v5632
      %v5634 = vpop.f32.mrf.mxu0
      %5635 = vmatprep.mubr.bf16.mxu0 0
      %5636 = vmatmul.mubr.bf16.gmra.mxu0 %v5513
      %v5637 = vpop.f32.mrf.mxu0
      %v5638 = vadd.f32 0.0, %v5637
      %v5639 = vpop.f32.mrf.mxu0
      %v5640 = vpop.f32.mrf.mxu0
      %v5641 = vadd.f32 0.0, %v5640
      %v5642 = vpop.f32.mrf.mxu0
      %5643 = vdwg.mxu0
      %v5644 = vadd.f32 %v5494, %v5614
      %v5645 = vadd.f32 %v5495, %v5617
      %v5646 = vadd.f32 %v5496, %v5622
      %v5647 = vadd.f32 %v5497, %v5625
      %v5648 = vadd.f32 %v5498, %v5630
      %v5649 = vadd.f32 %v5499, %v5633
      %v5650 = vadd.f32 %v5500, %v5638
      %v5651 = vadd.f32 %v5501, %v5641
      %v5652 = vld [vmem:[%s5187 + $0x7] sm:$0xff]
      %v5653 = vld [vmem:[%s5187 + $0x1f] sm:$0xff]
      %v5654 = vld [vmem:[%s5187 + $0x37] sm:$0xff]
      %v5655 = vld [vmem:[%s5187 + $0x4f] sm:$0xff]
      %v5656 = vld [vmem:[%s5187 + $0x67] sm:$0xff]
      %v5657 = vld [vmem:[%s5187 + $0x7f] sm:$0xff]
      %v5658 = vld [vmem:[%s5187 + $0x97] sm:$0xff]
      %v5659 = vld [vmem:[%s5187 + $0xaf] sm:$0xff]
      %v5660 = vpack.c.bf16 %v5653, %v5652
      %v5661 = vpack.c.bf16 %v5655, %v5654
      %v5662 = vpack.c.bf16 %v5657, %v5656
      %v5663 = vpack.c.bf16 %v5659, %v5658
      %s5664 = scalar_lea.vmem %s7, 192
      %v5665 = vld [vmem:[%s5664] sm:$0xf]
      %v5666 = vld [vmem:[%s5664 + $0x4] sm:$0xf]
      %v5667 = vld [vmem:[%s5664 + $0x8] sm:$0xf]
      %v5668 = vld [vmem:[%s5664 + $0xc] sm:$0xf]
      %v5669 = vld [vmem:[%s5664 + $0x10] sm:$0xf]
      %v5670 = vld [vmem:[%s5664 + $0x14] sm:$0xf]
      %v5671 = vld [vmem:[%s5664 + $0x18] sm:$0xf]
      %v5672 = vld [vmem:[%s5664 + $0x1c] sm:$0xf]
      %v5673 = vld [vmem:[%s5664 + $0x20] sm:$0xf]
      %v5674 = vld [vmem:[%s5664 + $0x24] sm:$0xf]
      %v5675 = vld [vmem:[%s5664 + $0x28] sm:$0xf]
      %v5676 = vld [vmem:[%s5664 + $0x2c] sm:$0xf]
      %v5677 = vld [vmem:[%s5664 + $0x30] sm:$0xf]
      %v5678 = vld [vmem:[%s5664 + $0x34] sm:$0xf]
      %v5679 = vld [vmem:[%s5664 + $0x38] sm:$0xf]
      %v5680 = vld [vmem:[%s5664 + $0x3c] sm:$0xf]
      %v5697 = vunpack.c.l.b16 %v5665
      %v5698 = vunpack.c.l.b16 %v5666
      %v5699 = vunpack.c.l.b16 %v5667
      %v5700 = vunpack.c.l.b16 %v5668
      %v5701 = vunpack.c.l.b16 %v5669
      %v5702 = vunpack.c.l.b16 %v5670
      %v5703 = vunpack.c.l.b16 %v5671
      %v5704 = vunpack.c.l.b16 %v5672
      %v5705 = vunpack.c.l.b16 %v5673
      %v5706 = vunpack.c.l.b16 %v5674
      %v5707 = vunpack.c.l.b16 %v5675
      %v5708 = vunpack.c.l.b16 %v5676
      %v5709 = vunpack.c.l.b16 %v5677
      %v5710 = vunpack.c.l.b16 %v5678
      %v5711 = vunpack.c.l.b16 %v5679
      %v5712 = vunpack.c.l.b16 %v5680
      %v5713 = vpack.c.b16 %v5698, %v5697
      %v5714 = vpack.c.b16 %v5700, %v5699
      %v5715 = vpack.c.b16 %v5702, %v5701
      %v5716 = vpack.c.b16 %v5704, %v5703
      %v5717 = vpack.c.b16 %v5706, %v5705
      %v5718 = vpack.c.b16 %v5708, %v5707
      %v5719 = vpack.c.b16 %v5710, %v5709
      %v5720 = vpack.c.b16 %v5712, %v5711
      %5729 = vmatprep.subr.bf16.mxu0 0
      %5730 = vmatpush1.bf16.msra.mxu0 %v5720
      %5731 = vmatprep.subr.bf16.mxu0 0
      %5732 = vmatpush1.bf16.msra.mxu0 %v5719
      %5733 = vmatprep.subr.bf16.mxu0 0
      %5734 = vmatpush1.bf16.msra.mxu0 %v5718
      %5735 = vmatprep.subr.bf16.mxu0 0
      %5736 = vmatpush1.bf16.msra.mxu0 %v5717
      %5737 = vmatprep.subr.bf16.mxu0 0
      %5738 = vmatpush1.bf16.msra.mxu0 %v5716
      %5739 = vmatprep.subr.bf16.mxu0 0
      %5740 = vmatpush1.bf16.msra.mxu0 %v5715
      %5741 = vmatprep.subr.bf16.mxu0 0
      %5742 = vmatpush1.bf16.msra.mxu0 %v5714
      %5743 = vmatprep.subr.bf16.mxu0 0
      %5744 = vmatpush1.bf16.msra.mxu0 %v5713
      %5745 = vmatprep.subr.bf16.mxu0 0
      %5746 = vmatpush2.bf16.msra.mxu0 0
      %5747 = vmatprep.subr.bf16.mxu0 0
      %5748 = vmatpush2.bf16.msra.mxu0 0
      %5749 = vmatprep.subr.bf16.mxu0 0
      %5750 = vmatpush2.bf16.msra.mxu0 0
      %5751 = vmatprep.subr.bf16.mxu0 0
      %5752 = vmatpush2.bf16.msra.mxu0 0
      %5753 = vmatprep.subr.bf16.mxu0 0
      %5754 = vmatpush2.bf16.msra.mxu0 0
      %5755 = vmatprep.subr.bf16.mxu0 0
      %5756 = vmatpush2.bf16.msra.mxu0 0
      %5757 = vmatprep.subr.bf16.mxu0 0
      %5758 = vmatpush2.bf16.msra.mxu0 0
      %5759 = vmatprep.subr.bf16.mxu0 0
      %5760 = vmatpush2.bf16.msra.mxu0 0
      %5761 = vmatprep.mubr.bf16.mxu0 0
      %5762 = vmatmul.mubr.bf16.gmra.mxu0 %v5660
      %v5763 = vpop.f32.mrf.mxu0
      %v5764 = vadd.f32 0.0, %v5763
      %v5765 = vpop.f32.mrf.mxu0
      %v5766 = vpop.f32.mrf.mxu0
      %v5767 = vadd.f32 0.0, %v5766
      %v5768 = vpop.f32.mrf.mxu0
      %5769 = vmatprep.mubr.bf16.mxu0 0
      %5770 = vmatmul.mubr.bf16.gmra.mxu0 %v5661
      %v5771 = vpop.f32.mrf.mxu0
      %v5772 = vadd.f32 0.0, %v5771
      %v5773 = vpop.f32.mrf.mxu0
      %v5774 = vpop.f32.mrf.mxu0
      %v5775 = vadd.f32 0.0, %v5774
      %v5776 = vpop.f32.mrf.mxu0
      %5777 = vmatprep.mubr.bf16.mxu0 0
      %5778 = vmatmul.mubr.bf16.gmra.mxu0 %v5662
      %v5779 = vpop.f32.mrf.mxu0
      %v5780 = vadd.f32 0.0, %v5779
      %v5781 = vpop.f32.mrf.mxu0
      %v5782 = vpop.f32.mrf.mxu0
      %v5783 = vadd.f32 0.0, %v5782
      %v5784 = vpop.f32.mrf.mxu0
      %5785 = vmatprep.mubr.bf16.mxu0 0
      %5786 = vmatmul.mubr.bf16.gmra.mxu0 %v5663
      %v5787 = vpop.f32.mrf.mxu0
      %v5788 = vadd.f32 0.0, %v5787
      %v5789 = vpop.f32.mrf.mxu0
      %v5790 = vpop.f32.mrf.mxu0
      %v5791 = vadd.f32 0.0, %v5790
      %v5792 = vpop.f32.mrf.mxu0
      %5793 = vdwg.mxu0
      %v5794 = vadd.f32 %v5644, %v5764
      %v5795 = vadd.f32 %v5645, %v5767
      %v5796 = vadd.f32 %v5646, %v5772
      %v5797 = vadd.f32 %v5647, %v5775
      %v5798 = vadd.f32 %v5648, %v5780
      %v5799 = vadd.f32 %v5649, %v5783
      %v5800 = vadd.f32 %v5650, %v5788
      %v5801 = vadd.f32 %v5651, %v5791
      %v5802 = vld [vmem:[%s5187 + $0x8] sm:$0xff]
      %v5803 = vld [vmem:[%s5187 + $0x20] sm:$0xff]
      %v5804 = vld [vmem:[%s5187 + $0x38] sm:$0xff]
      %v5805 = vld [vmem:[%s5187 + $0x50] sm:$0xff]
      %v5806 = vld [vmem:[%s5187 + $0x68] sm:$0xff]
      %v5807 = vld [vmem:[%s5187 + $0x80] sm:$0xff]
      %v5808 = vld [vmem:[%s5187 + $0x98] sm:$0xff]
      %v5809 = vld [vmem:[%s5187 + $0xb0] sm:$0xff]
      %v5810 = vpack.c.bf16 %v5803, %v5802
      %v5811 = vpack.c.bf16 %v5805, %v5804
      %v5812 = vpack.c.bf16 %v5807, %v5806
      %v5813 = vpack.c.bf16 %v5809, %v5808
      %s5814 = scalar_lea.vmem %s7, 256
      %v5815 = vld [vmem:[%s5814] sm:$0xf]
      %v5816 = vld [vmem:[%s5814 + $0x4] sm:$0xf]
      %v5817 = vld [vmem:[%s5814 + $0x8] sm:$0xf]
      %v5818 = vld [vmem:[%s5814 + $0xc] sm:$0xf]
      %v5819 = vld [vmem:[%s5814 + $0x10] sm:$0xf]
      %v5820 = vld [vmem:[%s5814 + $0x14] sm:$0xf]
      %v5821 = vld [vmem:[%s5814 + $0x18] sm:$0xf]
      %v5822 = vld [vmem:[%s5814 + $0x1c] sm:$0xf]
      %v5823 = vld [vmem:[%s5814 + $0x20] sm:$0xf]
      %v5824 = vld [vmem:[%s5814 + $0x24] sm:$0xf]
      %v5825 = vld [vmem:[%s5814 + $0x28] sm:$0xf]
      %v5826 = vld [vmem:[%s5814 + $0x2c] sm:$0xf]
      %v5827 = vld [vmem:[%s5814 + $0x30] sm:$0xf]
      %v5828 = vld [vmem:[%s5814 + $0x34] sm:$0xf]
      %v5829 = vld [vmem:[%s5814 + $0x38] sm:$0xf]
      %v5830 = vld [vmem:[%s5814 + $0x3c] sm:$0xf]
      %v5847 = vunpack.c.l.b16 %v5815
      %v5848 = vunpack.c.l.b16 %v5816
      %v5849 = vunpack.c.l.b16 %v5817
      %v5850 = vunpack.c.l.b16 %v5818
      %v5851 = vunpack.c.l.b16 %v5819
      %v5852 = vunpack.c.l.b16 %v5820
      %v5853 = vunpack.c.l.b16 %v5821
      %v5854 = vunpack.c.l.b16 %v5822
      %v5855 = vunpack.c.l.b16 %v5823
      %v5856 = vunpack.c.l.b16 %v5824
      %v5857 = vunpack.c.l.b16 %v5825
      %v5858 = vunpack.c.l.b16 %v5826
      %v5859 = vunpack.c.l.b16 %v5827
      %v5860 = vunpack.c.l.b16 %v5828
      %v5861 = vunpack.c.l.b16 %v5829
      %v5862 = vunpack.c.l.b16 %v5830
      %v5863 = vpack.c.b16 %v5848, %v5847
      %v5864 = vpack.c.b16 %v5850, %v5849
      %v5865 = vpack.c.b16 %v5852, %v5851
      %v5866 = vpack.c.b16 %v5854, %v5853
      %v5867 = vpack.c.b16 %v5856, %v5855
      %v5868 = vpack.c.b16 %v5858, %v5857
      %v5869 = vpack.c.b16 %v5860, %v5859
      %v5870 = vpack.c.b16 %v5862, %v5861
      %5879 = vmatprep.subr.bf16.mxu0 0
      %5880 = vmatpush1.bf16.msra.mxu0 %v5870
      %5881 = vmatprep.subr.bf16.mxu0 0
      %5882 = vmatpush1.bf16.msra.mxu0 %v5869
      %5883 = vmatprep.subr.bf16.mxu0 0
      %5884 = vmatpush1.bf16.msra.mxu0 %v5868
      %5885 = vmatprep.subr.bf16.mxu0 0
      %5886 = vmatpush1.bf16.msra.mxu0 %v5867
      %5887 = vmatprep.subr.bf16.mxu0 0
      %5888 = vmatpush1.bf16.msra.mxu0 %v5866
      %5889 = vmatprep.subr.bf16.mxu0 0
      %5890 = vmatpush1.bf16.msra.mxu0 %v5865
      %5891 = vmatprep.subr.bf16.mxu0 0
      %5892 = vmatpush1.bf16.msra.mxu0 %v5864
      %5893 = vmatprep.subr.bf16.mxu0 0
      %5894 = vmatpush1.bf16.msra.mxu0 %v5863
      %5895 = vmatprep.subr.bf16.mxu0 0
      %5896 = vmatpush2.bf16.msra.mxu0 0
      %5897 = vmatprep.subr.bf16.mxu0 0
      %5898 = vmatpush2.bf16.msra.mxu0 0
      %5899 = vmatprep.subr.bf16.mxu0 0
      %5900 = vmatpush2.bf16.msra.mxu0 0
      %5901 = vmatprep.subr.bf16.mxu0 0
      %5902 = vmatpush2.bf16.msra.mxu0 0
      %5903 = vmatprep.subr.bf16.mxu0 0
      %5904 = vmatpush2.bf16.msra.mxu0 0
      %5905 = vmatprep.subr.bf16.mxu0 0
      %5906 = vmatpush2.bf16.msra.mxu0 0
      %5907 = vmatprep.subr.bf16.mxu0 0
      %5908 = vmatpush2.bf16.msra.mxu0 0
      %5909 = vmatprep.subr.bf16.mxu0 0
      %5910 = vmatpush2.bf16.msra.mxu0 0
      %5911 = vmatprep.mubr.bf16.mxu0 0
      %5912 = vmatmul.mubr.bf16.gmra.mxu0 %v5810
      %v5913 = vpop.f32.mrf.mxu0
      %v5914 = vadd.f32 0.0, %v5913
      %v5915 = vpop.f32.mrf.mxu0
      %v5916 = vpop.f32.mrf.mxu0
      %v5917 = vadd.f32 0.0, %v5916
      %v5918 = vpop.f32.mrf.mxu0
      %5919 = vmatprep.mubr.bf16.mxu0 0
      %5920 = vmatmul.mubr.bf16.gmra.mxu0 %v5811
      %v5921 = vpop.f32.mrf.mxu0
      %v5922 = vadd.f32 0.0, %v5921
      %v5923 = vpop.f32.mrf.mxu0
      %v5924 = vpop.f32.mrf.mxu0
      %v5925 = vadd.f32 0.0, %v5924
      %v5926 = vpop.f32.mrf.mxu0
      %5927 = vmatprep.mubr.bf16.mxu0 0
      %5928 = vmatmul.mubr.bf16.gmra.mxu0 %v5812
      %v5929 = vpop.f32.mrf.mxu0
      %v5930 = vadd.f32 0.0, %v5929
      %v5931 = vpop.f32.mrf.mxu0
      %v5932 = vpop.f32.mrf.mxu0
      %v5933 = vadd.f32 0.0, %v5932
      %v5934 = vpop.f32.mrf.mxu0
      %5935 = vmatprep.mubr.bf16.mxu0 0
      %5936 = vmatmul.mubr.bf16.gmra.mxu0 %v5813
      %v5937 = vpop.f32.mrf.mxu0
      %v5938 = vadd.f32 0.0, %v5937
      %v5939 = vpop.f32.mrf.mxu0
      %v5940 = vpop.f32.mrf.mxu0
      %v5941 = vadd.f32 0.0, %v5940
      %v5942 = vpop.f32.mrf.mxu0
      %5943 = vdwg.mxu0
      %v5944 = vadd.f32 %v5794, %v5914
      %v5945 = vadd.f32 %v5795, %v5917
      %v5946 = vadd.f32 %v5796, %v5922
      %v5947 = vadd.f32 %v5797, %v5925
      %v5948 = vadd.f32 %v5798, %v5930
      %v5949 = vadd.f32 %v5799, %v5933
      %v5950 = vadd.f32 %v5800, %v5938
      %v5951 = vadd.f32 %v5801, %v5941
      %v5952 = vld [vmem:[%s5187 + $0x9] sm:$0xff]
      %v5953 = vld [vmem:[%s5187 + $0x21] sm:$0xff]
      %v5954 = vld [vmem:[%s5187 + $0x39] sm:$0xff]
      %v5955 = vld [vmem:[%s5187 + $0x51] sm:$0xff]
      %v5956 = vld [vmem:[%s5187 + $0x69] sm:$0xff]
      %v5957 = vld [vmem:[%s5187 + $0x81] sm:$0xff]
      %v5958 = vld [vmem:[%s5187 + $0x99] sm:$0xff]
      %v5959 = vld [vmem:[%s5187 + $0xb1] sm:$0xff]
      %v5960 = vpack.c.bf16 %v5953, %v5952
      %v5961 = vpack.c.bf16 %v5955, %v5954
      %v5962 = vpack.c.bf16 %v5957, %v5956
      %v5963 = vpack.c.bf16 %v5959, %v5958
      %s5964 = scalar_lea.vmem %s7, 320
      %v5965 = vld [vmem:[%s5964] sm:$0xf]
      %v5966 = vld [vmem:[%s5964 + $0x4] sm:$0xf]
      %v5967 = vld [vmem:[%s5964 + $0x8] sm:$0xf]
      %v5968 = vld [vmem:[%s5964 + $0xc] sm:$0xf]
      %v5969 = vld [vmem:[%s5964 + $0x10] sm:$0xf]
      %v5970 = vld [vmem:[%s5964 + $0x14] sm:$0xf]
      %v5971 = vld [vmem:[%s5964 + $0x18] sm:$0xf]
      %v5972 = vld [vmem:[%s5964 + $0x1c] sm:$0xf]
      %v5973 = vld [vmem:[%s5964 + $0x20] sm:$0xf]
      %v5974 = vld [vmem:[%s5964 + $0x24] sm:$0xf]
      %v5975 = vld [vmem:[%s5964 + $0x28] sm:$0xf]
      %v5976 = vld [vmem:[%s5964 + $0x2c] sm:$0xf]
      %v5977 = vld [vmem:[%s5964 + $0x30] sm:$0xf]
      %v5978 = vld [vmem:[%s5964 + $0x34] sm:$0xf]
      %v5979 = vld [vmem:[%s5964 + $0x38] sm:$0xf]
      %v5980 = vld [vmem:[%s5964 + $0x3c] sm:$0xf]
      %v5997 = vunpack.c.l.b16 %v5965
      %v5998 = vunpack.c.l.b16 %v5966
      %v5999 = vunpack.c.l.b16 %v5967
      %v6000 = vunpack.c.l.b16 %v5968
      %v6001 = vunpack.c.l.b16 %v5969
      %v6002 = vunpack.c.l.b16 %v5970
      %v6003 = vunpack.c.l.b16 %v5971
      %v6004 = vunpack.c.l.b16 %v5972
      %v6005 = vunpack.c.l.b16 %v5973
      %v6006 = vunpack.c.l.b16 %v5974
      %v6007 = vunpack.c.l.b16 %v5975
      %v6008 = vunpack.c.l.b16 %v5976
      %v6009 = vunpack.c.l.b16 %v5977
      %v6010 = vunpack.c.l.b16 %v5978
      %v6011 = vunpack.c.l.b16 %v5979
      %v6012 = vunpack.c.l.b16 %v5980
      %v6013 = vpack.c.b16 %v5998, %v5997
      %v6014 = vpack.c.b16 %v6000, %v5999
      %v6015 = vpack.c.b16 %v6002, %v6001
      %v6016 = vpack.c.b16 %v6004, %v6003
      %v6017 = vpack.c.b16 %v6006, %v6005
      %v6018 = vpack.c.b16 %v6008, %v6007
      %v6019 = vpack.c.b16 %v6010, %v6009
      %v6020 = vpack.c.b16 %v6012, %v6011
      %6029 = vmatprep.subr.bf16.mxu0 0
      %6030 = vmatpush1.bf16.msra.mxu0 %v6020
      %6031 = vmatprep.subr.bf16.mxu0 0
      %6032 = vmatpush1.bf16.msra.mxu0 %v6019
      %6033 = vmatprep.subr.bf16.mxu0 0
      %6034 = vmatpush1.bf16.msra.mxu0 %v6018
      %6035 = vmatprep.subr.bf16.mxu0 0
      %6036 = vmatpush1.bf16.msra.mxu0 %v6017
      %6037 = vmatprep.subr.bf16.mxu0 0
      %6038 = vmatpush1.bf16.msra.mxu0 %v6016
      %6039 = vmatprep.subr.bf16.mxu0 0
      %6040 = vmatpush1.bf16.msra.mxu0 %v6015
      %6041 = vmatprep.subr.bf16.mxu0 0
      %6042 = vmatpush1.bf16.msra.mxu0 %v6014
      %6043 = vmatprep.subr.bf16.mxu0 0
      %6044 = vmatpush1.bf16.msra.mxu0 %v6013
      %6045 = vmatprep.subr.bf16.mxu0 0
      %6046 = vmatpush2.bf16.msra.mxu0 0
      %6047 = vmatprep.subr.bf16.mxu0 0
      %6048 = vmatpush2.bf16.msra.mxu0 0
      %6049 = vmatprep.subr.bf16.mxu0 0
      %6050 = vmatpush2.bf16.msra.mxu0 0
      %6051 = vmatprep.subr.bf16.mxu0 0
      %6052 = vmatpush2.bf16.msra.mxu0 0
      %6053 = vmatprep.subr.bf16.mxu0 0
      %6054 = vmatpush2.bf16.msra.mxu0 0
      %6055 = vmatprep.subr.bf16.mxu0 0
      %6056 = vmatpush2.bf16.msra.mxu0 0
      %6057 = vmatprep.subr.bf16.mxu0 0
      %6058 = vmatpush2.bf16.msra.mxu0 0
      %6059 = vmatprep.subr.bf16.mxu0 0
      %6060 = vmatpush2.bf16.msra.mxu0 0
      %6061 = vmatprep.mubr.bf16.mxu0 0
      %6062 = vmatmul.mubr.bf16.gmra.mxu0 %v5960
      %v6063 = vpop.f32.mrf.mxu0
      %v6064 = vadd.f32 0.0, %v6063
      %v6065 = vpop.f32.mrf.mxu0
      %v6066 = vpop.f32.mrf.mxu0
      %v6067 = vadd.f32 0.0, %v6066
      %v6068 = vpop.f32.mrf.mxu0
      %6069 = vmatprep.mubr.bf16.mxu0 0
      %6070 = vmatmul.mubr.bf16.gmra.mxu0 %v5961
      %v6071 = vpop.f32.mrf.mxu0
      %v6072 = vadd.f32 0.0, %v6071
      %v6073 = vpop.f32.mrf.mxu0
      %v6074 = vpop.f32.mrf.mxu0
      %v6075 = vadd.f32 0.0, %v6074
      %v6076 = vpop.f32.mrf.mxu0
      %6077 = vmatprep.mubr.bf16.mxu0 0
      %6078 = vmatmul.mubr.bf16.gmra.mxu0 %v5962
      %v6079 = vpop.f32.mrf.mxu0
      %v6080 = vadd.f32 0.0, %v6079
      %v6081 = vpop.f32.mrf.mxu0
      %v6082 = vpop.f32.mrf.mxu0
      %v6083 = vadd.f32 0.0, %v6082
      %v6084 = vpop.f32.mrf.mxu0
      %6085 = vmatprep.mubr.bf16.mxu0 0
      %6086 = vmatmul.mubr.bf16.gmra.mxu0 %v5963
      %v6087 = vpop.f32.mrf.mxu0
      %v6088 = vadd.f32 0.0, %v6087
      %v6089 = vpop.f32.mrf.mxu0
      %v6090 = vpop.f32.mrf.mxu0
      %v6091 = vadd.f32 0.0, %v6090
      %v6092 = vpop.f32.mrf.mxu0
      %6093 = vdwg.mxu0
      %v6094 = vadd.f32 %v5944, %v6064
      %v6095 = vadd.f32 %v5945, %v6067
      %v6096 = vadd.f32 %v5946, %v6072
      %v6097 = vadd.f32 %v5947, %v6075
      %v6098 = vadd.f32 %v5948, %v6080
      %v6099 = vadd.f32 %v5949, %v6083
      %v6100 = vadd.f32 %v5950, %v6088
      %v6101 = vadd.f32 %v5951, %v6091
      %s6102 = scalar_lea.vmem [#allocation5], 48
      %v6103 = vld [vmem:[%s6102 + $0x7] sm:$0xff]
      %v6104 = vld [vmem:[%s6102 + $0x1f] sm:$0xff]
      %v6105 = vld [vmem:[%s6102 + $0x37] sm:$0xff]
      %v6106 = vld [vmem:[%s6102 + $0x4f] sm:$0xff]
      %v6107 = vld [vmem:[%s6102 + $0x67] sm:$0xff]
      %v6108 = vld [vmem:[%s6102 + $0x7f] sm:$0xff]
      %v6109 = vld [vmem:[%s6102 + $0x97] sm:$0xff]
      %v6110 = vld [vmem:[%s6102 + $0xaf] sm:$0xff]
      %v6111 = vpack.c.bf16 %v6104, %v6103
      %v6112 = vpack.c.bf16 %v6106, %v6105
      %v6113 = vpack.c.bf16 %v6108, %v6107
      %v6114 = vpack.c.bf16 %v6110, %v6109
      %s6115 = scalar_lea.vmem %s7, 384
      %v6116 = vld [vmem:[%s6115] sm:$0xf]
      %v6117 = vld [vmem:[%s6115 + $0x4] sm:$0xf]
      %v6118 = vld [vmem:[%s6115 + $0x8] sm:$0xf]
      %v6119 = vld [vmem:[%s6115 + $0xc] sm:$0xf]
      %v6120 = vld [vmem:[%s6115 + $0x10] sm:$0xf]
      %v6121 = vld [vmem:[%s6115 + $0x14] sm:$0xf]
      %v6122 = vld [vmem:[%s6115 + $0x18] sm:$0xf]
      %v6123 = vld [vmem:[%s6115 + $0x1c] sm:$0xf]
      %v6124 = vld [vmem:[%s6115 + $0x20] sm:$0xf]
      %v6125 = vld [vmem:[%s6115 + $0x24] sm:$0xf]
      %v6126 = vld [vmem:[%s6115 + $0x28] sm:$0xf]
      %v6127 = vld [vmem:[%s6115 + $0x2c] sm:$0xf]
      %v6128 = vld [vmem:[%s6115 + $0x30] sm:$0xf]
      %v6129 = vld [vmem:[%s6115 + $0x34] sm:$0xf]
      %v6130 = vld [vmem:[%s6115 + $0x38] sm:$0xf]
      %v6131 = vld [vmem:[%s6115 + $0x3c] sm:$0xf]
      %v6148 = vunpack.c.l.b16 %v6116
      %v6149 = vunpack.c.l.b16 %v6117
      %v6150 = vunpack.c.l.b16 %v6118
      %v6151 = vunpack.c.l.b16 %v6119
      %v6152 = vunpack.c.l.b16 %v6120
      %v6153 = vunpack.c.l.b16 %v6121
      %v6154 = vunpack.c.l.b16 %v6122
      %v6155 = vunpack.c.l.b16 %v6123
      %v6156 = vunpack.c.l.b16 %v6124
      %v6157 = vunpack.c.l.b16 %v6125
      %v6158 = vunpack.c.l.b16 %v6126
      %v6159 = vunpack.c.l.b16 %v6127
      %v6160 = vunpack.c.l.b16 %v6128
      %v6161 = vunpack.c.l.b16 %v6129
      %v6162 = vunpack.c.l.b16 %v6130
      %v6163 = vunpack.c.l.b16 %v6131
      %v6164 = vpack.c.b16 %v6149, %v6148
      %v6165 = vpack.c.b16 %v6151, %v6150
      %v6166 = vpack.c.b16 %v6153, %v6152
      %v6167 = vpack.c.b16 %v6155, %v6154
      %v6168 = vpack.c.b16 %v6157, %v6156
      %v6169 = vpack.c.b16 %v6159, %v6158
      %v6170 = vpack.c.b16 %v6161, %v6160
      %v6171 = vpack.c.b16 %v6163, %v6162
      %6180 = vmatprep.subr.bf16.mxu0 0
      %6181 = vmatpush1.bf16.msra.mxu0 %v6171
      %6182 = vmatprep.subr.bf16.mxu0 0
      %6183 = vmatpush1.bf16.msra.mxu0 %v6170
      %6184 = vmatprep.subr.bf16.mxu0 0
      %6185 = vmatpush1.bf16.msra.mxu0 %v6169
      %6186 = vmatprep.subr.bf16.mxu0 0
      %6187 = vmatpush1.bf16.msra.mxu0 %v6168
      %6188 = vmatprep.subr.bf16.mxu0 0
      %6189 = vmatpush1.bf16.msra.mxu0 %v6167
      %6190 = vmatprep.subr.bf16.mxu0 0
      %6191 = vmatpush1.bf16.msra.mxu0 %v6166
      %6192 = vmatprep.subr.bf16.mxu0 0
      %6193 = vmatpush1.bf16.msra.mxu0 %v6165
      %6194 = vmatprep.subr.bf16.mxu0 0
      %6195 = vmatpush1.bf16.msra.mxu0 %v6164
      %6196 = vmatprep.subr.bf16.mxu0 0
      %6197 = vmatpush2.bf16.msra.mxu0 0
      %6198 = vmatprep.subr.bf16.mxu0 0
      %6199 = vmatpush2.bf16.msra.mxu0 0
      %6200 = vmatprep.subr.bf16.mxu0 0
      %6201 = vmatpush2.bf16.msra.mxu0 0
      %6202 = vmatprep.subr.bf16.mxu0 0
      %6203 = vmatpush2.bf16.msra.mxu0 0
      %6204 = vmatprep.subr.bf16.mxu0 0
      %6205 = vmatpush2.bf16.msra.mxu0 0
      %6206 = vmatprep.subr.bf16.mxu0 0
      %6207 = vmatpush2.bf16.msra.mxu0 0
      %6208 = vmatprep.subr.bf16.mxu0 0
      %6209 = vmatpush2.bf16.msra.mxu0 0
      %6210 = vmatprep.subr.bf16.mxu0 0
      %6211 = vmatpush2.bf16.msra.mxu0 0
      %6212 = vmatprep.mubr.bf16.mxu0 0
      %6213 = vmatmul.mubr.bf16.gmra.mxu0 %v6111
      %v6214 = vpop.f32.mrf.mxu0
      %v6215 = vadd.f32 0.0, %v6214
      %v6216 = vpop.f32.mrf.mxu0
      %v6217 = vpop.f32.mrf.mxu0
      %v6218 = vadd.f32 0.0, %v6217
      %v6219 = vpop.f32.mrf.mxu0
      %6220 = vmatprep.mubr.bf16.mxu0 0
      %6221 = vmatmul.mubr.bf16.gmra.mxu0 %v6112
      %v6222 = vpop.f32.mrf.mxu0
      %v6223 = vadd.f32 0.0, %v6222
      %v6224 = vpop.f32.mrf.mxu0
      %v6225 = vpop.f32.mrf.mxu0
      %v6226 = vadd.f32 0.0, %v6225
      %v6227 = vpop.f32.mrf.mxu0
      %6228 = vmatprep.mubr.bf16.mxu0 0
      %6229 = vmatmul.mubr.bf16.gmra.mxu0 %v6113
      %v6230 = vpop.f32.mrf.mxu0
      %v6231 = vadd.f32 0.0, %v6230
      %v6232 = vpop.f32.mrf.mxu0
      %v6233 = vpop.f32.mrf.mxu0
      %v6234 = vadd.f32 0.0, %v6233
      %v6235 = vpop.f32.mrf.mxu0
      %6236 = vmatprep.mubr.bf16.mxu0 0
      %6237 = vmatmul.mubr.bf16.gmra.mxu0 %v6114
      %v6238 = vpop.f32.mrf.mxu0
      %v6239 = vadd.f32 0.0, %v6238
      %v6240 = vpop.f32.mrf.mxu0
      %v6241 = vpop.f32.mrf.mxu0
      %v6242 = vadd.f32 0.0, %v6241
      %v6243 = vpop.f32.mrf.mxu0
      %6244 = vdwg.mxu0
      %v6245 = vadd.f32 %v6094, %v6215
      %v6246 = vadd.f32 %v6095, %v6218
      %v6247 = vadd.f32 %v6096, %v6223
      %v6248 = vadd.f32 %v6097, %v6226
      %v6249 = vadd.f32 %v6098, %v6231
      %v6250 = vadd.f32 %v6099, %v6234
      %v6251 = vadd.f32 %v6100, %v6239
      %v6252 = vadd.f32 %v6101, %v6242
      %v6253 = vld [vmem:[%s6102 + $0x8] sm:$0xff]
      %v6254 = vld [vmem:[%s6102 + $0x20] sm:$0xff]
      %v6255 = vld [vmem:[%s6102 + $0x38] sm:$0xff]
      %v6256 = vld [vmem:[%s6102 + $0x50] sm:$0xff]
      %v6257 = vld [vmem:[%s6102 + $0x68] sm:$0xff]
      %v6258 = vld [vmem:[%s6102 + $0x80] sm:$0xff]
      %v6259 = vld [vmem:[%s6102 + $0x98] sm:$0xff]
      %v6260 = vld [vmem:[%s6102 + $0xb0] sm:$0xff]
      %v6261 = vpack.c.bf16 %v6254, %v6253
      %v6262 = vpack.c.bf16 %v6256, %v6255
      %v6263 = vpack.c.bf16 %v6258, %v6257
      %v6264 = vpack.c.bf16 %v6260, %v6259
      %s6265 = scalar_lea.vmem %s7, 448
      %v6266 = vld [vmem:[%s6265] sm:$0xf]
      %v6267 = vld [vmem:[%s6265 + $0x4] sm:$0xf]
      %v6268 = vld [vmem:[%s6265 + $0x8] sm:$0xf]
      %v6269 = vld [vmem:[%s6265 + $0xc] sm:$0xf]
      %v6270 = vld [vmem:[%s6265 + $0x10] sm:$0xf]
      %v6271 = vld [vmem:[%s6265 + $0x14] sm:$0xf]
      %v6272 = vld [vmem:[%s6265 + $0x18] sm:$0xf]
      %v6273 = vld [vmem:[%s6265 + $0x1c] sm:$0xf]
      %v6274 = vld [vmem:[%s6265 + $0x20] sm:$0xf]
      %v6275 = vld [vmem:[%s6265 + $0x24] sm:$0xf]
      %v6276 = vld [vmem:[%s6265 + $0x28] sm:$0xf]
      %v6277 = vld [vmem:[%s6265 + $0x2c] sm:$0xf]
      %v6278 = vld [vmem:[%s6265 + $0x30] sm:$0xf]
      %v6279 = vld [vmem:[%s6265 + $0x34] sm:$0xf]
      %v6280 = vld [vmem:[%s6265 + $0x38] sm:$0xf]
      %v6281 = vld [vmem:[%s6265 + $0x3c] sm:$0xf]
      %v6298 = vunpack.c.l.b16 %v6266
      %v6299 = vunpack.c.l.b16 %v6267
      %v6300 = vunpack.c.l.b16 %v6268
      %v6301 = vunpack.c.l.b16 %v6269
      %v6302 = vunpack.c.l.b16 %v6270
      %v6303 = vunpack.c.l.b16 %v6271
      %v6304 = vunpack.c.l.b16 %v6272
      %v6305 = vunpack.c.l.b16 %v6273
      %v6306 = vunpack.c.l.b16 %v6274
      %v6307 = vunpack.c.l.b16 %v6275
      %v6308 = vunpack.c.l.b16 %v6276
      %v6309 = vunpack.c.l.b16 %v6277
      %v6310 = vunpack.c.l.b16 %v6278
      %v6311 = vunpack.c.l.b16 %v6279
      %v6312 = vunpack.c.l.b16 %v6280
      %v6313 = vunpack.c.l.b16 %v6281
      %v6314 = vpack.c.b16 %v6299, %v6298
      %v6315 = vpack.c.b16 %v6301, %v6300
      %v6316 = vpack.c.b16 %v6303, %v6302
      %v6317 = vpack.c.b16 %v6305, %v6304
      %v6318 = vpack.c.b16 %v6307, %v6306
      %v6319 = vpack.c.b16 %v6309, %v6308
      %v6320 = vpack.c.b16 %v6311, %v6310
      %v6321 = vpack.c.b16 %v6313, %v6312
      %6330 = vmatprep.subr.bf16.mxu0 0
      %6331 = vmatpush1.bf16.msra.mxu0 %v6321
      %6332 = vmatprep.subr.bf16.mxu0 0
      %6333 = vmatpush1.bf16.msra.mxu0 %v6320
      %6334 = vmatprep.subr.bf16.mxu0 0
      %6335 = vmatpush1.bf16.msra.mxu0 %v6319
      %6336 = vmatprep.subr.bf16.mxu0 0
      %6337 = vmatpush1.bf16.msra.mxu0 %v6318
      %6338 = vmatprep.subr.bf16.mxu0 0
      %6339 = vmatpush1.bf16.msra.mxu0 %v6317
      %6340 = vmatprep.subr.bf16.mxu0 0
      %6341 = vmatpush1.bf16.msra.mxu0 %v6316
      %6342 = vmatprep.subr.bf16.mxu0 0
      %6343 = vmatpush1.bf16.msra.mxu0 %v6315
      %6344 = vmatprep.subr.bf16.mxu0 0
      %6345 = vmatpush1.bf16.msra.mxu0 %v6314
      %6346 = vmatprep.subr.bf16.mxu0 0
      %6347 = vmatpush2.bf16.msra.mxu0 0
      %6348 = vmatprep.subr.bf16.mxu0 0
      %6349 = vmatpush2.bf16.msra.mxu0 0
      %6350 = vmatprep.subr.bf16.mxu0 0
      %6351 = vmatpush2.bf16.msra.mxu0 0
      %6352 = vmatprep.subr.bf16.mxu0 0
      %6353 = vmatpush2.bf16.msra.mxu0 0
      %6354 = vmatprep.subr.bf16.mxu0 0
      %6355 = vmatpush2.bf16.msra.mxu0 0
      %6356 = vmatprep.subr.bf16.mxu0 0
      %6357 = vmatpush2.bf16.msra.mxu0 0
      %6358 = vmatprep.subr.bf16.mxu0 0
      %6359 = vmatpush2.bf16.msra.mxu0 0
      %6360 = vmatprep.subr.bf16.mxu0 0
      %6361 = vmatpush2.bf16.msra.mxu0 0
      %6362 = vmatprep.mubr.bf16.mxu0 0
      %6363 = vmatmul.mubr.bf16.gmra.mxu0 %v6261
      %v6364 = vpop.f32.mrf.mxu0
      %v6365 = vadd.f32 0.0, %v6364
      %v6366 = vpop.f32.mrf.mxu0
      %v6367 = vpop.f32.mrf.mxu0
      %v6368 = vadd.f32 0.0, %v6367
      %v6369 = vpop.f32.mrf.mxu0
      %6370 = vmatprep.mubr.bf16.mxu0 0
      %6371 = vmatmul.mubr.bf16.gmra.mxu0 %v6262
      %v6372 = vpop.f32.mrf.mxu0
      %v6373 = vadd.f32 0.0, %v6372
      %v6374 = vpop.f32.mrf.mxu0
      %v6375 = vpop.f32.mrf.mxu0
      %v6376 = vadd.f32 0.0, %v6375
      %v6377 = vpop.f32.mrf.mxu0
      %6378 = vmatprep.mubr.bf16.mxu0 0
      %6379 = vmatmul.mubr.bf16.gmra.mxu0 %v6263
      %v6380 = vpop.f32.mrf.mxu0
      %v6381 = vadd.f32 0.0, %v6380
      %v6382 = vpop.f32.mrf.mxu0
      %v6383 = vpop.f32.mrf.mxu0
      %v6384 = vadd.f32 0.0, %v6383
      %v6385 = vpop.f32.mrf.mxu0
      %6386 = vmatprep.mubr.bf16.mxu0 0
      %6387 = vmatmul.mubr.bf16.gmra.mxu0 %v6264
      %v6388 = vpop.f32.mrf.mxu0
      %v6389 = vadd.f32 0.0, %v6388
      %v6390 = vpop.f32.mrf.mxu0
      %v6391 = vpop.f32.mrf.mxu0
      %v6392 = vadd.f32 0.0, %v6391
      %v6393 = vpop.f32.mrf.mxu0
      %6394 = vdwg.mxu0
      %v6395 = vadd.f32 %v6245, %v6365
      %v6396 = vadd.f32 %v6246, %v6368
      %v6397 = vadd.f32 %v6247, %v6373
      %v6398 = vadd.f32 %v6248, %v6376
      %v6399 = vadd.f32 %v6249, %v6381
      %v6400 = vadd.f32 %v6250, %v6384
      %v6401 = vadd.f32 %v6251, %v6389
      %v6402 = vadd.f32 %v6252, %v6392
      %v6403 = vld [vmem:[%s6102 + $0x9] sm:$0xff]
      %v6404 = vld [vmem:[%s6102 + $0x21] sm:$0xff]
      %v6405 = vld [vmem:[%s6102 + $0x39] sm:$0xff]
      %v6406 = vld [vmem:[%s6102 + $0x51] sm:$0xff]
      %v6407 = vld [vmem:[%s6102 + $0x69] sm:$0xff]
      %v6408 = vld [vmem:[%s6102 + $0x81] sm:$0xff]
      %v6409 = vld [vmem:[%s6102 + $0x99] sm:$0xff]
      %v6410 = vld [vmem:[%s6102 + $0xb1] sm:$0xff]
      %v6411 = vpack.c.bf16 %v6404, %v6403
      %v6412 = vpack.c.bf16 %v6406, %v6405
      %v6413 = vpack.c.bf16 %v6408, %v6407
      %v6414 = vpack.c.bf16 %v6410, %v6409
      %s6415 = scalar_lea.vmem %s7, 512
      %v6416 = vld [vmem:[%s6415] sm:$0xf]
      %v6417 = vld [vmem:[%s6415 + $0x4] sm:$0xf]
      %v6418 = vld [vmem:[%s6415 + $0x8] sm:$0xf]
      %v6419 = vld [vmem:[%s6415 + $0xc] sm:$0xf]
      %v6420 = vld [vmem:[%s6415 + $0x10] sm:$0xf]
      %v6421 = vld [vmem:[%s6415 + $0x14] sm:$0xf]
      %v6422 = vld [vmem:[%s6415 + $0x18] sm:$0xf]
      %v6423 = vld [vmem:[%s6415 + $0x1c] sm:$0xf]
      %v6424 = vld [vmem:[%s6415 + $0x20] sm:$0xf]
      %v6425 = vld [vmem:[%s6415 + $0x24] sm:$0xf]
      %v6426 = vld [vmem:[%s6415 + $0x28] sm:$0xf]
      %v6427 = vld [vmem:[%s6415 + $0x2c] sm:$0xf]
      %v6428 = vld [vmem:[%s6415 + $0x30] sm:$0xf]
      %v6429 = vld [vmem:[%s6415 + $0x34] sm:$0xf]
      %v6430 = vld [vmem:[%s6415 + $0x38] sm:$0xf]
      %v6431 = vld [vmem:[%s6415 + $0x3c] sm:$0xf]
      %v6448 = vunpack.c.l.b16 %v6416
      %v6449 = vunpack.c.l.b16 %v6417
      %v6450 = vunpack.c.l.b16 %v6418
      %v6451 = vunpack.c.l.b16 %v6419
      %v6452 = vunpack.c.l.b16 %v6420
      %v6453 = vunpack.c.l.b16 %v6421
      %v6454 = vunpack.c.l.b16 %v6422
      %v6455 = vunpack.c.l.b16 %v6423
      %v6456 = vunpack.c.l.b16 %v6424
      %v6457 = vunpack.c.l.b16 %v6425
      %v6458 = vunpack.c.l.b16 %v6426
      %v6459 = vunpack.c.l.b16 %v6427
      %v6460 = vunpack.c.l.b16 %v6428
      %v6461 = vunpack.c.l.b16 %v6429
      %v6462 = vunpack.c.l.b16 %v6430
      %v6463 = vunpack.c.l.b16 %v6431
      %v6464 = vpack.c.b16 %v6449, %v6448
      %v6465 = vpack.c.b16 %v6451, %v6450
      %v6466 = vpack.c.b16 %v6453, %v6452
      %v6467 = vpack.c.b16 %v6455, %v6454
      %v6468 = vpack.c.b16 %v6457, %v6456
      %v6469 = vpack.c.b16 %v6459, %v6458
      %v6470 = vpack.c.b16 %v6461, %v6460
      %v6471 = vpack.c.b16 %v6463, %v6462
      %6480 = vmatprep.subr.bf16.mxu0 0
      %6481 = vmatpush1.bf16.msra.mxu0 %v6471
      %6482 = vmatprep.subr.bf16.mxu0 0
      %6483 = vmatpush1.bf16.msra.mxu0 %v6470
      %6484 = vmatprep.subr.bf16.mxu0 0
      %6485 = vmatpush1.bf16.msra.mxu0 %v6469
      %6486 = vmatprep.subr.bf16.mxu0 0
      %6487 = vmatpush1.bf16.msra.mxu0 %v6468
      %6488 = vmatprep.subr.bf16.mxu0 0
      %6489 = vmatpush1.bf16.msra.mxu0 %v6467
      %6490 = vmatprep.subr.bf16.mxu0 0
      %6491 = vmatpush1.bf16.msra.mxu0 %v6466
      %6492 = vmatprep.subr.bf16.mxu0 0
      %6493 = vmatpush1.bf16.msra.mxu0 %v6465
      %6494 = vmatprep.subr.bf16.mxu0 0
      %6495 = vmatpush1.bf16.msra.mxu0 %v6464
      %6496 = vmatprep.subr.bf16.mxu0 0
      %6497 = vmatpush2.bf16.msra.mxu0 0
      %6498 = vmatprep.subr.bf16.mxu0 0
      %6499 = vmatpush2.bf16.msra.mxu0 0
      %6500 = vmatprep.subr.bf16.mxu0 0
      %6501 = vmatpush2.bf16.msra.mxu0 0
      %6502 = vmatprep.subr.bf16.mxu0 0
      %6503 = vmatpush2.bf16.msra.mxu0 0
      %6504 = vmatprep.subr.bf16.mxu0 0
      %6505 = vmatpush2.bf16.msra.mxu0 0
      %6506 = vmatprep.subr.bf16.mxu0 0
      %6507 = vmatpush2.bf16.msra.mxu0 0
      %6508 = vmatprep.subr.bf16.mxu0 0
      %6509 = vmatpush2.bf16.msra.mxu0 0
      %6510 = vmatprep.subr.bf16.mxu0 0
      %6511 = vmatpush2.bf16.msra.mxu0 0
      %6512 = vmatprep.mubr.bf16.mxu0 0
      %6513 = vmatmul.mubr.bf16.gmra.mxu0 %v6411
      %v6514 = vpop.f32.mrf.mxu0
      %v6515 = vadd.f32 0.0, %v6514
      %v6516 = vpop.f32.mrf.mxu0
      %v6517 = vpop.f32.mrf.mxu0
      %v6518 = vadd.f32 0.0, %v6517
      %v6519 = vpop.f32.mrf.mxu0
      %6520 = vmatprep.mubr.bf16.mxu0 0
      %6521 = vmatmul.mubr.bf16.gmra.mxu0 %v6412
      %v6522 = vpop.f32.mrf.mxu0
      %v6523 = vadd.f32 0.0, %v6522
      %v6524 = vpop.f32.mrf.mxu0
      %v6525 = vpop.f32.mrf.mxu0
      %v6526 = vadd.f32 0.0, %v6525
      %v6527 = vpop.f32.mrf.mxu0
      %6528 = vmatprep.mubr.bf16.mxu0 0
      %6529 = vmatmul.mubr.bf16.gmra.mxu0 %v6413
      %v6530 = vpop.f32.mrf.mxu0
      %v6531 = vadd.f32 0.0, %v6530
      %v6532 = vpop.f32.mrf.mxu0
      %v6533 = vpop.f32.mrf.mxu0
      %v6534 = vadd.f32 0.0, %v6533
      %v6535 = vpop.f32.mrf.mxu0
      %6536 = vmatprep.mubr.bf16.mxu0 0
      %6537 = vmatmul.mubr.bf16.gmra.mxu0 %v6414
      %v6538 = vpop.f32.mrf.mxu0
      %v6539 = vadd.f32 0.0, %v6538
      %v6540 = vpop.f32.mrf.mxu0
      %v6541 = vpop.f32.mrf.mxu0
      %v6542 = vadd.f32 0.0, %v6541
      %v6543 = vpop.f32.mrf.mxu0
      %6544 = vdwg.mxu0
      %v6545 = vadd.f32 %v6395, %v6515
      %v6546 = vadd.f32 %v6396, %v6518
      %v6547 = vadd.f32 %v6397, %v6523
      %v6548 = vadd.f32 %v6398, %v6526
      %v6549 = vadd.f32 %v6399, %v6531
      %v6550 = vadd.f32 %v6400, %v6534
      %v6551 = vadd.f32 %v6401, %v6539
      %v6552 = vadd.f32 %v6402, %v6542
      %v6553 = vmax.f32 %v6545, 0.0
      %v6554 = vmax.f32 %v6546, 0.0
      %v6555 = vmax.f32 %v6547, 0.0
      %v6556 = vmax.f32 %v6548, 0.0
      %v6557 = vmax.f32 %v6549, 0.0
      %v6558 = vmax.f32 %v6550, 0.0
      %v6559 = vmax.f32 %v6551, 0.0
      %v6560 = vmax.f32 %v6552, 0.0
      %6561 = vst [vmem:[#allocation6] sm:$0xff] %v6553
      %6562 = vst [vmem:[#allocation6 + $0x8] sm:$0xff] %v6554
      %6563 = vst [vmem:[#allocation6 + $0x10] sm:$0xff] %v6555
      %6564 = vst [vmem:[#allocation6 + $0x18] sm:$0xff] %v6556
      %6565 = vst [vmem:[#allocation6 + $0x20] sm:$0xff] %v6557
      %6566 = vst [vmem:[#allocation6 + $0x28] sm:$0xff] %v6558
      %6567 = vst [vmem:[#allocation6 + $0x30] sm:$0xff] %v6559
      %6568 = vst [vmem:[#allocation6 + $0x38] sm:$0xff] %v6560
      %v6569 = vld [vmem:[#allocation6] ss:$2 sm:$0xf]
      %s6570 = scalar_lea.vmem [#allocation6], 16
      %v6571 = vld [vmem:[%s6570] ss:$2 sm:$0xf]
      %s6572 = scalar_lea.vmem [#allocation6], 32
      %v6573 = vld [vmem:[%s6572] ss:$2 sm:$0xf]
      %s6574 = scalar_lea.vmem [#allocation6], 48
      %v6575 = vld [vmem:[%s6574] ss:$2 sm:$0xf]
      %s6576 = scalar_lea.vmem [#allocation6], 1
      %v6577 = vld [vmem:[%s6576] ss:$2 sm:$0xf]
      %s6578 = scalar_lea.vmem [#allocation6], 17
      %v6579 = vld [vmem:[%s6578] ss:$2 sm:$0xf]
      %s6580 = scalar_lea.vmem [#allocation6], 33
      %v6581 = vld [vmem:[%s6580] ss:$2 sm:$0xf]
      %s6582 = scalar_lea.vmem [#allocation6], 49
      %v6583 = vld [vmem:[%s6582] ss:$2 sm:$0xf]
      %s6584 = scalar_lea.vmem [#allocation6], 8
      %v6585 = vld [vmem:[%s6584] ss:$2 sm:$0xf]
      %s6586 = scalar_lea.vmem %s6584, 16 [#allocation6]
      %v6587 = vld [vmem:[%s6586] ss:$2 sm:$0xf]
      %s6588 = scalar_lea.vmem %s6584, 32 [#allocation6]
      %v6589 = vld [vmem:[%s6588] ss:$2 sm:$0xf]
      %s6590 = scalar_lea.vmem %s6584, 48 [#allocation6]
      %v6591 = vld [vmem:[%s6590] ss:$2 sm:$0xf]
      %s6592 = scalar_lea.vmem %s6584, 1 [#allocation6]
      %v6593 = vld [vmem:[%s6592] ss:$2 sm:$0xf]
      %s6594 = scalar_lea.vmem %s6584, 17 [#allocation6]
      %v6595 = vld [vmem:[%s6594] ss:$2 sm:$0xf]
      %s6596 = scalar_lea.vmem %s6584, 33 [#allocation6]
      %v6597 = vld [vmem:[%s6596] ss:$2 sm:$0xf]
      %s6598 = scalar_lea.vmem %s6584, 49 [#allocation6]
      %v6599 = vld [vmem:[%s6598] ss:$2 sm:$0xf]
      %v6600 = vmax.f32 %v6569, %v6577
      %v6601 = vmax.f32 %v6571, %v6579
      %v6602 = vmax.f32 %v6573, %v6581
      %v6603 = vmax.f32 %v6575, %v6583
      %v6604 = vmax.f32 %v6585, %v6593
      %v6605 = vmax.f32 %v6587, %v6595
      %v6606 = vmax.f32 %v6589, %v6597
      %v6607 = vmax.f32 %v6591, %v6599
      %v6608 = vmax.f32 %v6600, %v6604
      %v6609 = vmax.f32 %v6601, %v6605
      %v6610 = vmax.f32 %v6602, %v6606
      %v6611 = vmax.f32 %v6603, %v6607
      %6612 = vst [vmem:[#allocation7] sm:$0xff] 0.0
      %6613 = vst [vmem:[#allocation7 + $0x8] sm:$0xff] 0.0
      %6614 = vst [vmem:[#allocation7 + $0x10] sm:$0xf] 0.0
      %6615 = vst [vmem:[#allocation7 + $0x18] sm:$0xff] 0.0
      %6616 = vst [vmem:[#allocation7 + $0x20] sm:$0xff] 0.0
      %6617 = vst [vmem:[#allocation7 + $0x28] sm:$0xf] 0.0
      %6618 = vst [vmem:[#allocation7 + $0x30] sm:$0xff] 0.0
      %6619 = vst [vmem:[#allocation7 + $0x38] sm:$0xff] 0.0
      %6620 = vst [vmem:[#allocation7 + $0x40] sm:$0xf] 0.0
      %6621 = vst [vmem:[#allocation7 + $0x48] sm:$0xff] 0.0
      %6622 = vst [vmem:[#allocation7 + $0x50] sm:$0xff] 0.0
      %6623 = vst [vmem:[#allocation7 + $0x58] sm:$0xf] 0.0
      %6624 = vst [vmem:[#allocation7 + $0x60] sm:$0xff] 0.0
      %6625 = vst [vmem:[#allocation7 + $0x68] sm:$0xff] 0.0
      %6626 = vst [vmem:[#allocation7 + $0x70] sm:$0xf] 0.0
      %6627 = vst [vmem:[#allocation7 + $0x78] sm:$0xff] 0.0
      %6628 = vst [vmem:[#allocation7 + $0x80] sm:$0xff] 0.0
      %6629 = vst [vmem:[#allocation7 + $0x88] sm:$0xf] 0.0
      %s6630 = scalar_lea.vmem [#allocation7], 24
      %6631 = vst [vmem:[%s6630 + $0x8] sm:$0xf] %v6608
      %6632 = vst [vmem:[%s6630 + $0x20] sm:$0xf] %v6609
      %6633 = vst [vmem:[%s6630 + $0x38] sm:$0xf] %v6610
      %6634 = vst [vmem:[%s6630 + $0x50] sm:$0xf] %v6611
      %v6635 = vld [vmem:[%s10] sm:$0x3]
      %v6637 = vlaneseq
      %v6638 = vshrl.u32 %v6637, 7
      %v6639 = vsub.s32 0, %v6638
      %v6640 = vrot.slane %v6635, %v6639
      %v6641 = vlaneseq
      %v6642 = vshrl.u32 %v6641, 7
      %v6643 = vsub.s32 1, %v6642
      %v6644 = vrot.slane %v6635, %v6643
      %v6647 = vld [vmem:[#allocation7 + $0x7] sm:$0xf]
      %v6648 = vld [vmem:[#allocation7 + $0x1f] sm:$0xf]
      %v6649 = vld [vmem:[#allocation7 + $0x37] sm:$0xf]
      %v6650 = vld [vmem:[#allocation7 + $0x4f] sm:$0xf]
      %v6655 = vcombine.low %v6647, %v6648
      %v6656 = vcombine.low %v6649, %v6650
      %v6659 = vpack.c.bf16 %v6656, %v6655
      %v6660 = vld [vmem:[%s9] sm:$0xff]
      %v6661 = vld [vmem:[%s9 + $0x8] sm:$0xff]
      %v6662 = vld [vmem:[%s9 + $0x10] sm:$0xff]
      %v6663 = vld [vmem:[%s9 + $0x18] sm:$0xff]
      %v6664 = vld [vmem:[%s9 + $0x20] sm:$0xff]
      %v6665 = vld [vmem:[%s9 + $0x28] sm:$0xff]
      %v6666 = vld [vmem:[%s9 + $0x30] sm:$0xff]
      %v6667 = vld [vmem:[%s9 + $0x38] sm:$0xff]
      %v6668 = vld [vmem:[%s9 + $0x40] sm:$0xff]
      %v6669 = vld [vmem:[%s9 + $0x48] sm:$0xff]
      %v6670 = vld [vmem:[%s9 + $0x50] sm:$0xff]
      %v6671 = vld [vmem:[%s9 + $0x58] sm:$0xff]
      %v6672 = vld [vmem:[%s9 + $0x60] sm:$0xff]
      %v6673 = vld [vmem:[%s9 + $0x68] sm:$0xff]
      %v6674 = vld [vmem:[%s9 + $0x70] sm:$0xff]
      %v6675 = vld [vmem:[%s9 + $0x78] sm:$0xff]
      %v6692 = vunpack.c.l.b16 %v6660
      %v6693 = vunpack.c.h.b16 %v6660
      %v6694 = vunpack.c.l.b16 %v6661
      %v6695 = vunpack.c.h.b16 %v6661
      %v6696 = vunpack.c.l.b16 %v6662
      %v6697 = vunpack.c.h.b16 %v6662
      %v6698 = vunpack.c.l.b16 %v6663
      %v6699 = vunpack.c.h.b16 %v6663
      %v6700 = vunpack.c.l.b16 %v6664
      %v6701 = vunpack.c.h.b16 %v6664
      %v6702 = vunpack.c.l.b16 %v6665
      %v6703 = vunpack.c.h.b16 %v6665
      %v6704 = vunpack.c.l.b16 %v6666
      %v6705 = vunpack.c.h.b16 %v6666
      %v6706 = vunpack.c.l.b16 %v6667
      %v6707 = vunpack.c.h.b16 %v6667
      %v6708 = vunpack.c.l.b16 %v6668
      %v6709 = vunpack.c.h.b16 %v6668
      %v6710 = vunpack.c.l.b16 %v6669
      %v6711 = vunpack.c.h.b16 %v6669
      %v6712 = vunpack.c.l.b16 %v6670
      %v6713 = vunpack.c.h.b16 %v6670
      %v6714 = vunpack.c.l.b16 %v6671
      %v6715 = vunpack.c.h.b16 %v6671
      %v6716 = vunpack.c.l.b16 %v6672
      %v6717 = vunpack.c.h.b16 %v6672
      %v6718 = vunpack.c.l.b16 %v6673
      %v6719 = vunpack.c.h.b16 %v6673
      %v6720 = vunpack.c.l.b16 %v6674
      %v6721 = vunpack.c.h.b16 %v6674
      %v6722 = vunpack.c.l.b16 %v6675
      %v6723 = vunpack.c.h.b16 %v6675
      %v6724 = vpack.c.b16 %v6694, %v6692
      %v6725 = vpack.c.b16 %v6695, %v6693
      %v6726 = vpack.c.b16 %v6698, %v6696
      %v6727 = vpack.c.b16 %v6699, %v6697
      %v6728 = vpack.c.b16 %v6702, %v6700
      %v6729 = vpack.c.b16 %v6703, %v6701
      %v6730 = vpack.c.b16 %v6706, %v6704
      %v6731 = vpack.c.b16 %v6707, %v6705
      %v6732 = vpack.c.b16 %v6710, %v6708
      %v6733 = vpack.c.b16 %v6711, %v6709
      %v6734 = vpack.c.b16 %v6714, %v6712
      %v6735 = vpack.c.b16 %v6715, %v6713
      %v6736 = vpack.c.b16 %v6718, %v6716
      %v6737 = vpack.c.b16 %v6719, %v6717
      %v6738 = vpack.c.b16 %v6722, %v6720
      %v6739 = vpack.c.b16 %v6723, %v6721
      %6756 = vmatprep.subr.bf16.mxu0 %v6739
      %6757 = vmatpush1.bf16.msra.mxu0 %v6738
      %6758 = vmatprep.subr.bf16.mxu0 %v6737
      %6759 = vmatpush1.bf16.msra.mxu0 %v6736
      %6760 = vmatprep.subr.bf16.mxu0 %v6735
      %6761 = vmatpush1.bf16.msra.mxu0 %v6734
      %6762 = vmatprep.subr.bf16.mxu0 %v6733
      %6763 = vmatpush1.bf16.msra.mxu0 %v6732
      %6764 = vmatprep.subr.bf16.mxu0 %v6731
      %6765 = vmatpush1.bf16.msra.mxu0 %v6730
      %6766 = vmatprep.subr.bf16.mxu0 %v6729
      %6767 = vmatpush1.bf16.msra.mxu0 %v6728
      %6768 = vmatprep.subr.bf16.mxu0 %v6727
      %6769 = vmatpush1.bf16.msra.mxu0 %v6726
      %6770 = vmatprep.subr.bf16.mxu0 %v6725
      %6771 = vmatpush1.bf16.msra.mxu0 %v6724
      %6772 = vmatprep.subr.bf16.mxu0 0
      %6773 = vmatpush2.bf16.msra.mxu0 0
      %6774 = vmatprep.subr.bf16.mxu0 0
      %6775 = vmatpush2.bf16.msra.mxu0 0
      %6776 = vmatprep.subr.bf16.mxu0 0
      %6777 = vmatpush2.bf16.msra.mxu0 0
      %6778 = vmatprep.subr.bf16.mxu0 0
      %6779 = vmatpush2.bf16.msra.mxu0 0
      %6780 = vmatprep.subr.bf16.mxu0 0
      %6781 = vmatpush2.bf16.msra.mxu0 0
      %6782 = vmatprep.subr.bf16.mxu0 0
      %6783 = vmatpush2.bf16.msra.mxu0 0
      %6784 = vmatprep.subr.bf16.mxu0 0
      %6785 = vmatpush2.bf16.msra.mxu0 0
      %6786 = vmatprep.subr.bf16.mxu0 0
      %6787 = vmatpush2.bf16.msra.mxu0 0
      %6788 = vmatprep.mubr.bf16.mxu0 0
      %6789 = vmatmul.mubr.bf16.gmra.mxu0 %v6659
      %v6790 = vpop.f32.mrf.mxu0
      %v6791 = vadd.f32 0.0, %v6790
      %v6792 = vpop.f32.mrf.mxu0
      %v6793 = vadd.f32 0.0, %v6792
      %v6794 = vpop.f32.mrf.mxu0
      %v6795 = vadd.f32 0.0, %v6794
      %v6796 = vpop.f32.mrf.mxu0
      %v6797 = vadd.f32 0.0, %v6796
      %6798 = vdwg.mxu0
      %v6799 = vadd.f32 %v6640, %v6791
      %v6800 = vadd.f32 %v6644, %v6793
      %v6801 = vadd.f32 %v6640, %v6795
      %v6802 = vadd.f32 %v6644, %v6797
      %v6803 = vld [vmem:[#allocation7 + $0x8] sm:$0xf]
      %v6804 = vld [vmem:[#allocation7 + $0x20] sm:$0xf]
      %v6805 = vld [vmem:[#allocation7 + $0x38] sm:$0xf]
      %v6806 = vld [vmem:[#allocation7 + $0x50] sm:$0xf]
      %v6811 = vcombine.low %v6803, %v6804
      %v6812 = vcombine.low %v6805, %v6806
      %v6815 = vpack.c.bf16 %v6812, %v6811
      %s6816 = scalar_lea.vmem %s9, 128
      %v6817 = vld [vmem:[%s6816] sm:$0xff]
      %v6818 = vld [vmem:[%s6816 + $0x8] sm:$0xff]
      %v6819 = vld [vmem:[%s6816 + $0x10] sm:$0xff]
      %v6820 = vld [vmem:[%s6816 + $0x18] sm:$0xff]
      %v6821 = vld [vmem:[%s6816 + $0x20] sm:$0xff]
      %v6822 = vld [vmem:[%s6816 + $0x28] sm:$0xff]
      %v6823 = vld [vmem:[%s6816 + $0x30] sm:$0xff]
      %v6824 = vld [vmem:[%s6816 + $0x38] sm:$0xff]
      %v6825 = vld [vmem:[%s6816 + $0x40] sm:$0xff]
      %v6826 = vld [vmem:[%s6816 + $0x48] sm:$0xff]
      %v6827 = vld [vmem:[%s6816 + $0x50] sm:$0xff]
      %v6828 = vld [vmem:[%s6816 + $0x58] sm:$0xff]
      %v6829 = vld [vmem:[%s6816 + $0x60] sm:$0xff]
      %v6830 = vld [vmem:[%s6816 + $0x68] sm:$0xff]
      %v6831 = vld [vmem:[%s6816 + $0x70] sm:$0xff]
      %v6832 = vld [vmem:[%s6816 + $0x78] sm:$0xff]
      %v6849 = vunpack.c.l.b16 %v6817
      %v6850 = vunpack.c.h.b16 %v6817
      %v6851 = vunpack.c.l.b16 %v6818
      %v6852 = vunpack.c.h.b16 %v6818
      %v6853 = vunpack.c.l.b16 %v6819
      %v6854 = vunpack.c.h.b16 %v6819
      %v6855 = vunpack.c.l.b16 %v6820
      %v6856 = vunpack.c.h.b16 %v6820
      %v6857 = vunpack.c.l.b16 %v6821
      %v6858 = vunpack.c.h.b16 %v6821
      %v6859 = vunpack.c.l.b16 %v6822
      %v6860 = vunpack.c.h.b16 %v6822
      %v6861 = vunpack.c.l.b16 %v6823
      %v6862 = vunpack.c.h.b16 %v6823
      %v6863 = vunpack.c.l.b16 %v6824
      %v6864 = vunpack.c.h.b16 %v6824
      %v6865 = vunpack.c.l.b16 %v6825
      %v6866 = vunpack.c.h.b16 %v6825
      %v6867 = vunpack.c.l.b16 %v6826
      %v6868 = vunpack.c.h.b16 %v6826
      %v6869 = vunpack.c.l.b16 %v6827
      %v6870 = vunpack.c.h.b16 %v6827
      %v6871 = vunpack.c.l.b16 %v6828
      %v6872 = vunpack.c.h.b16 %v6828
      %v6873 = vunpack.c.l.b16 %v6829
      %v6874 = vunpack.c.h.b16 %v6829
      %v6875 = vunpack.c.l.b16 %v6830
      %v6876 = vunpack.c.h.b16 %v6830
      %v6877 = vunpack.c.l.b16 %v6831
      %v6878 = vunpack.c.h.b16 %v6831
      %v6879 = vunpack.c.l.b16 %v6832
      %v6880 = vunpack.c.h.b16 %v6832
      %v6881 = vpack.c.b16 %v6851, %v6849
      %v6882 = vpack.c.b16 %v6852, %v6850
      %v6883 = vpack.c.b16 %v6855, %v6853
      %v6884 = vpack.c.b16 %v6856, %v6854
      %v6885 = vpack.c.b16 %v6859, %v6857
      %v6886 = vpack.c.b16 %v6860, %v6858
      %v6887 = vpack.c.b16 %v6863, %v6861
      %v6888 = vpack.c.b16 %v6864, %v6862
      %v6889 = vpack.c.b16 %v6867, %v6865
      %v6890 = vpack.c.b16 %v6868, %v6866
      %v6891 = vpack.c.b16 %v6871, %v6869
      %v6892 = vpack.c.b16 %v6872, %v6870
      %v6893 = vpack.c.b16 %v6875, %v6873
      %v6894 = vpack.c.b16 %v6876, %v6874
      %v6895 = vpack.c.b16 %v6879, %v6877
      %v6896 = vpack.c.b16 %v6880, %v6878
      %6913 = vmatprep.subr.bf16.mxu0 %v6896
      %6914 = vmatpush1.bf16.msra.mxu0 %v6895
      %6915 = vmatprep.subr.bf16.mxu0 %v6894
      %6916 = vmatpush1.bf16.msra.mxu0 %v6893
      %6917 = vmatprep.subr.bf16.mxu0 %v6892
      %6918 = vmatpush1.bf16.msra.mxu0 %v6891
      %6919 = vmatprep.subr.bf16.mxu0 %v6890
      %6920 = vmatpush1.bf16.msra.mxu0 %v6889
      %6921 = vmatprep.subr.bf16.mxu0 %v6888
      %6922 = vmatpush1.bf16.msra.mxu0 %v6887
      %6923 = vmatprep.subr.bf16.mxu0 %v6886
      %6924 = vmatpush1.bf16.msra.mxu0 %v6885
      %6925 = vmatprep.subr.bf16.mxu0 %v6884
      %6926 = vmatpush1.bf16.msra.mxu0 %v6883
      %6927 = vmatprep.subr.bf16.mxu0 %v6882
      %6928 = vmatpush1.bf16.msra.mxu0 %v6881
      %6929 = vmatprep.subr.bf16.mxu0 0
      %6930 = vmatpush2.bf16.msra.mxu0 0
      %6931 = vmatprep.subr.bf16.mxu0 0
      %6932 = vmatpush2.bf16.msra.mxu0 0
      %6933 = vmatprep.subr.bf16.mxu0 0
      %6934 = vmatpush2.bf16.msra.mxu0 0
      %6935 = vmatprep.subr.bf16.mxu0 0
      %6936 = vmatpush2.bf16.msra.mxu0 0
      %6937 = vmatprep.subr.bf16.mxu0 0
      %6938 = vmatpush2.bf16.msra.mxu0 0
      %6939 = vmatprep.subr.bf16.mxu0 0
      %6940 = vmatpush2.bf16.msra.mxu0 0
      %6941 = vmatprep.subr.bf16.mxu0 0
      %6942 = vmatpush2.bf16.msra.mxu0 0
      %6943 = vmatprep.subr.bf16.mxu0 0
      %6944 = vmatpush2.bf16.msra.mxu0 0
      %6945 = vmatprep.mubr.bf16.mxu0 0
      %6946 = vmatmul.mubr.bf16.gmra.mxu0 %v6815
      %v6947 = vpop.f32.mrf.mxu0
      %v6948 = vadd.f32 0.0, %v6947
      %v6949 = vpop.f32.mrf.mxu0
      %v6950 = vadd.f32 0.0, %v6949
      %v6951 = vpop.f32.mrf.mxu0
      %v6952 = vadd.f32 0.0, %v6951
      %v6953 = vpop.f32.mrf.mxu0
      %v6954 = vadd.f32 0.0, %v6953
      %6955 = vdwg.mxu0
      %v6956 = vadd.f32 %v6799, %v6948
      %v6957 = vadd.f32 %v6800, %v6950
      %v6958 = vadd.f32 %v6801, %v6952
      %v6959 = vadd.f32 %v6802, %v6954
      %v6960 = vld [vmem:[#allocation7 + $0x9] sm:$0xf]
      %v6961 = vld [vmem:[#allocation7 + $0x21] sm:$0xf]
      %v6962 = vld [vmem:[#allocation7 + $0x39] sm:$0xf]
      %v6963 = vld [vmem:[#allocation7 + $0x51] sm:$0xf]
      %v6968 = vcombine.low %v6960, %v6961
      %v6969 = vcombine.low %v6962, %v6963
      %v6972 = vpack.c.bf16 %v6969, %v6968
      %s6973 = scalar_lea.vmem %s9, 256
      %v6974 = vld [vmem:[%s6973] sm:$0xff]
      %v6975 = vld [vmem:[%s6973 + $0x8] sm:$0xff]
      %v6976 = vld [vmem:[%s6973 + $0x10] sm:$0xff]
      %v6977 = vld [vmem:[%s6973 + $0x18] sm:$0xff]
      %v6978 = vld [vmem:[%s6973 + $0x20] sm:$0xff]
      %v6979 = vld [vmem:[%s6973 + $0x28] sm:$0xff]
      %v6980 = vld [vmem:[%s6973 + $0x30] sm:$0xff]
      %v6981 = vld [vmem:[%s6973 + $0x38] sm:$0xff]
      %v6982 = vld [vmem:[%s6973 + $0x40] sm:$0xff]
      %v6983 = vld [vmem:[%s6973 + $0x48] sm:$0xff]
      %v6984 = vld [vmem:[%s6973 + $0x50] sm:$0xff]
      %v6985 = vld [vmem:[%s6973 + $0x58] sm:$0xff]
      %v6986 = vld [vmem:[%s6973 + $0x60] sm:$0xff]
      %v6987 = vld [vmem:[%s6973 + $0x68] sm:$0xff]
      %v6988 = vld [vmem:[%s6973 + $0x70] sm:$0xff]
      %v6989 = vld [vmem:[%s6973 + $0x78] sm:$0xff]
      %v7006 = vunpack.c.l.b16 %v6974
      %v7007 = vunpack.c.h.b16 %v6974
      %v7008 = vunpack.c.l.b16 %v6975
      %v7009 = vunpack.c.h.b16 %v6975
      %v7010 = vunpack.c.l.b16 %v6976
      %v7011 = vunpack.c.h.b16 %v6976
      %v7012 = vunpack.c.l.b16 %v6977
      %v7013 = vunpack.c.h.b16 %v6977
      %v7014 = vunpack.c.l.b16 %v6978
      %v7015 = vunpack.c.h.b16 %v6978
      %v7016 = vunpack.c.l.b16 %v6979
      %v7017 = vunpack.c.h.b16 %v6979
      %v7018 = vunpack.c.l.b16 %v6980
      %v7019 = vunpack.c.h.b16 %v6980
      %v7020 = vunpack.c.l.b16 %v6981
      %v7021 = vunpack.c.h.b16 %v6981
      %v7022 = vunpack.c.l.b16 %v6982
      %v7023 = vunpack.c.h.b16 %v6982
      %v7024 = vunpack.c.l.b16 %v6983
      %v7025 = vunpack.c.h.b16 %v6983
      %v7026 = vunpack.c.l.b16 %v6984
      %v7027 = vunpack.c.h.b16 %v6984
      %v7028 = vunpack.c.l.b16 %v6985
      %v7029 = vunpack.c.h.b16 %v6985
      %v7030 = vunpack.c.l.b16 %v6986
      %v7031 = vunpack.c.h.b16 %v6986
      %v7032 = vunpack.c.l.b16 %v6987
      %v7033 = vunpack.c.h.b16 %v6987
      %v7034 = vunpack.c.l.b16 %v6988
      %v7035 = vunpack.c.h.b16 %v6988
      %v7036 = vunpack.c.l.b16 %v6989
      %v7037 = vunpack.c.h.b16 %v6989
      %v7038 = vpack.c.b16 %v7008, %v7006
      %v7039 = vpack.c.b16 %v7009, %v7007
      %v7040 = vpack.c.b16 %v7012, %v7010
      %v7041 = vpack.c.b16 %v7013, %v7011
      %v7042 = vpack.c.b16 %v7016, %v7014
      %v7043 = vpack.c.b16 %v7017, %v7015
      %v7044 = vpack.c.b16 %v7020, %v7018
      %v7045 = vpack.c.b16 %v7021, %v7019
      %v7046 = vpack.c.b16 %v7024, %v7022
      %v7047 = vpack.c.b16 %v7025, %v7023
      %v7048 = vpack.c.b16 %v7028, %v7026
      %v7049 = vpack.c.b16 %v7029, %v7027
      %v7050 = vpack.c.b16 %v7032, %v7030
      %v7051 = vpack.c.b16 %v7033, %v7031
      %v7052 = vpack.c.b16 %v7036, %v7034
      %v7053 = vpack.c.b16 %v7037, %v7035
      %7070 = vmatprep.subr.bf16.mxu0 %v7053
      %7071 = vmatpush1.bf16.msra.mxu0 %v7052
      %7072 = vmatprep.subr.bf16.mxu0 %v7051
      %7073 = vmatpush1.bf16.msra.mxu0 %v7050
      %7074 = vmatprep.subr.bf16.mxu0 %v7049
      %7075 = vmatpush1.bf16.msra.mxu0 %v7048
      %7076 = vmatprep.subr.bf16.mxu0 %v7047
      %7077 = vmatpush1.bf16.msra.mxu0 %v7046
      %7078 = vmatprep.subr.bf16.mxu0 %v7045
      %7079 = vmatpush1.bf16.msra.mxu0 %v7044
      %7080 = vmatprep.subr.bf16.mxu0 %v7043
      %7081 = vmatpush1.bf16.msra.mxu0 %v7042
      %7082 = vmatprep.subr.bf16.mxu0 %v7041
      %7083 = vmatpush1.bf16.msra.mxu0 %v7040
      %7084 = vmatprep.subr.bf16.mxu0 %v7039
      %7085 = vmatpush1.bf16.msra.mxu0 %v7038
      %7086 = vmatprep.subr.bf16.mxu0 0
      %7087 = vmatpush2.bf16.msra.mxu0 0
      %7088 = vmatprep.subr.bf16.mxu0 0
      %7089 = vmatpush2.bf16.msra.mxu0 0
      %7090 = vmatprep.subr.bf16.mxu0 0
      %7091 = vmatpush2.bf16.msra.mxu0 0
      %7092 = vmatprep.subr.bf16.mxu0 0
      %7093 = vmatpush2.bf16.msra.mxu0 0
      %7094 = vmatprep.subr.bf16.mxu0 0
      %7095 = vmatpush2.bf16.msra.mxu0 0
      %7096 = vmatprep.subr.bf16.mxu0 0
      %7097 = vmatpush2.bf16.msra.mxu0 0
      %7098 = vmatprep.subr.bf16.mxu0 0
      %7099 = vmatpush2.bf16.msra.mxu0 0
      %7100 = vmatprep.subr.bf16.mxu0 0
      %7101 = vmatpush2.bf16.msra.mxu0 0
      %7102 = vmatprep.mubr.bf16.mxu0 0
      %7103 = vmatmul.mubr.bf16.gmra.mxu0 %v6972
      %v7104 = vpop.f32.mrf.mxu0
      %v7105 = vadd.f32 0.0, %v7104
      %v7106 = vpop.f32.mrf.mxu0
      %v7107 = vadd.f32 0.0, %v7106
      %v7108 = vpop.f32.mrf.mxu0
      %v7109 = vadd.f32 0.0, %v7108
      %v7110 = vpop.f32.mrf.mxu0
      %v7111 = vadd.f32 0.0, %v7110
      %7112 = vdwg.mxu0
      %v7113 = vadd.f32 %v6956, %v7105
      %v7114 = vadd.f32 %v6957, %v7107
      %v7115 = vadd.f32 %v6958, %v7109
      %v7116 = vadd.f32 %v6959, %v7111
      %v7117 = vld [vmem:[%s6630 + $0x7] sm:$0xf]
      %v7118 = vld [vmem:[%s6630 + $0x1f] sm:$0xf]
      %v7119 = vld [vmem:[%s6630 + $0x37] sm:$0xf]
      %v7120 = vld [vmem:[%s6630 + $0x4f] sm:$0xf]
      %v7125 = vcombine.low %v7117, %v7118
      %v7126 = vcombine.low %v7119, %v7120
      %v7129 = vpack.c.bf16 %v7126, %v7125
      %s7130 = scalar_lea.vmem %s9, 384
      %v7131 = vld [vmem:[%s7130] sm:$0xff]
      %v7132 = vld [vmem:[%s7130 + $0x8] sm:$0xff]
      %v7133 = vld [vmem:[%s7130 + $0x10] sm:$0xff]
      %v7134 = vld [vmem:[%s7130 + $0x18] sm:$0xff]
      %v7135 = vld [vmem:[%s7130 + $0x20] sm:$0xff]
      %v7136 = vld [vmem:[%s7130 + $0x28] sm:$0xff]
      %v7137 = vld [vmem:[%s7130 + $0x30] sm:$0xff]
      %v7138 = vld [vmem:[%s7130 + $0x38] sm:$0xff]
      %v7139 = vld [vmem:[%s7130 + $0x40] sm:$0xff]
      %v7140 = vld [vmem:[%s7130 + $0x48] sm:$0xff]
      %v7141 = vld [vmem:[%s7130 + $0x50] sm:$0xff]
      %v7142 = vld [vmem:[%s7130 + $0x58] sm:$0xff]
      %v7143 = vld [vmem:[%s7130 + $0x60] sm:$0xff]
      %v7144 = vld [vmem:[%s7130 + $0x68] sm:$0xff]
      %v7145 = vld [vmem:[%s7130 + $0x70] sm:$0xff]
      %v7146 = vld [vmem:[%s7130 + $0x78] sm:$0xff]
      %v7163 = vunpack.c.l.b16 %v7131
      %v7164 = vunpack.c.h.b16 %v7131
      %v7165 = vunpack.c.l.b16 %v7132
      %v7166 = vunpack.c.h.b16 %v7132
      %v7167 = vunpack.c.l.b16 %v7133
      %v7168 = vunpack.c.h.b16 %v7133
      %v7169 = vunpack.c.l.b16 %v7134
      %v7170 = vunpack.c.h.b16 %v7134
      %v7171 = vunpack.c.l.b16 %v7135
      %v7172 = vunpack.c.h.b16 %v7135
      %v7173 = vunpack.c.l.b16 %v7136
      %v7174 = vunpack.c.h.b16 %v7136
      %v7175 = vunpack.c.l.b16 %v7137
      %v7176 = vunpack.c.h.b16 %v7137
      %v7177 = vunpack.c.l.b16 %v7138
      %v7178 = vunpack.c.h.b16 %v7138
      %v7179 = vunpack.c.l.b16 %v7139
      %v7180 = vunpack.c.h.b16 %v7139
      %v7181 = vunpack.c.l.b16 %v7140
      %v7182 = vunpack.c.h.b16 %v7140
      %v7183 = vunpack.c.l.b16 %v7141
      %v7184 = vunpack.c.h.b16 %v7141
      %v7185 = vunpack.c.l.b16 %v7142
      %v7186 = vunpack.c.h.b16 %v7142
      %v7187 = vunpack.c.l.b16 %v7143
      %v7188 = vunpack.c.h.b16 %v7143
      %v7189 = vunpack.c.l.b16 %v7144
      %v7190 = vunpack.c.h.b16 %v7144
      %v7191 = vunpack.c.l.b16 %v7145
      %v7192 = vunpack.c.h.b16 %v7145
      %v7193 = vunpack.c.l.b16 %v7146
      %v7194 = vunpack.c.h.b16 %v7146
      %v7195 = vpack.c.b16 %v7165, %v7163
      %v7196 = vpack.c.b16 %v7166, %v7164
      %v7197 = vpack.c.b16 %v7169, %v7167
      %v7198 = vpack.c.b16 %v7170, %v7168
      %v7199 = vpack.c.b16 %v7173, %v7171
      %v7200 = vpack.c.b16 %v7174, %v7172
      %v7201 = vpack.c.b16 %v7177, %v7175
      %v7202 = vpack.c.b16 %v7178, %v7176
      %v7203 = vpack.c.b16 %v7181, %v7179
      %v7204 = vpack.c.b16 %v7182, %v7180
      %v7205 = vpack.c.b16 %v7185, %v7183
      %v7206 = vpack.c.b16 %v7186, %v7184
      %v7207 = vpack.c.b16 %v7189, %v7187
      %v7208 = vpack.c.b16 %v7190, %v7188
      %v7209 = vpack.c.b16 %v7193, %v7191
      %v7210 = vpack.c.b16 %v7194, %v7192
      %7227 = vmatprep.subr.bf16.mxu0 %v7210
      %7228 = vmatpush1.bf16.msra.mxu0 %v7209
      %7229 = vmatprep.subr.bf16.mxu0 %v7208
      %7230 = vmatpush1.bf16.msra.mxu0 %v7207
      %7231 = vmatprep.subr.bf16.mxu0 %v7206
      %7232 = vmatpush1.bf16.msra.mxu0 %v7205
      %7233 = vmatprep.subr.bf16.mxu0 %v7204
      %7234 = vmatpush1.bf16.msra.mxu0 %v7203
      %7235 = vmatprep.subr.bf16.mxu0 %v7202
      %7236 = vmatpush1.bf16.msra.mxu0 %v7201
      %7237 = vmatprep.subr.bf16.mxu0 %v7200
      %7238 = vmatpush1.bf16.msra.mxu0 %v7199
      %7239 = vmatprep.subr.bf16.mxu0 %v7198
      %7240 = vmatpush1.bf16.msra.mxu0 %v7197
      %7241 = vmatprep.subr.bf16.mxu0 %v7196
      %7242 = vmatpush1.bf16.msra.mxu0 %v7195
      %7243 = vmatprep.subr.bf16.mxu0 0
      %7244 = vmatpush2.bf16.msra.mxu0 0
      %7245 = vmatprep.subr.bf16.mxu0 0
      %7246 = vmatpush2.bf16.msra.mxu0 0
      %7247 = vmatprep.subr.bf16.mxu0 0
      %7248 = vmatpush2.bf16.msra.mxu0 0
      %7249 = vmatprep.subr.bf16.mxu0 0
      %7250 = vmatpush2.bf16.msra.mxu0 0
      %7251 = vmatprep.subr.bf16.mxu0 0
      %7252 = vmatpush2.bf16.msra.mxu0 0
      %7253 = vmatprep.subr.bf16.mxu0 0
      %7254 = vmatpush2.bf16.msra.mxu0 0
      %7255 = vmatprep.subr.bf16.mxu0 0
      %7256 = vmatpush2.bf16.msra.mxu0 0
      %7257 = vmatprep.subr.bf16.mxu0 0
      %7258 = vmatpush2.bf16.msra.mxu0 0
      %7259 = vmatprep.mubr.bf16.mxu0 0
      %7260 = vmatmul.mubr.bf16.gmra.mxu0 %v7129
      %v7261 = vpop.f32.mrf.mxu0
      %v7262 = vadd.f32 0.0, %v7261
      %v7263 = vpop.f32.mrf.mxu0
      %v7264 = vadd.f32 0.0, %v7263
      %v7265 = vpop.f32.mrf.mxu0
      %v7266 = vadd.f32 0.0, %v7265
      %v7267 = vpop.f32.mrf.mxu0
      %v7268 = vadd.f32 0.0, %v7267
      %7269 = vdwg.mxu0
      %v7270 = vadd.f32 %v7113, %v7262
      %v7271 = vadd.f32 %v7114, %v7264
      %v7272 = vadd.f32 %v7115, %v7266
      %v7273 = vadd.f32 %v7116, %v7268
      %v7274 = vld [vmem:[%s6630 + $0x8] sm:$0xf]
      %v7275 = vld [vmem:[%s6630 + $0x20] sm:$0xf]
      %v7276 = vld [vmem:[%s6630 + $0x38] sm:$0xf]
      %v7277 = vld [vmem:[%s6630 + $0x50] sm:$0xf]
      %v7282 = vcombine.low %v7274, %v7275
      %v7283 = vcombine.low %v7276, %v7277
      %v7286 = vpack.c.bf16 %v7283, %v7282
      %s7287 = scalar_lea.vmem %s9, 512
      %v7288 = vld [vmem:[%s7287] sm:$0xff]
      %v7289 = vld [vmem:[%s7287 + $0x8] sm:$0xff]
      %v7290 = vld [vmem:[%s7287 + $0x10] sm:$0xff]
      %v7291 = vld [vmem:[%s7287 + $0x18] sm:$0xff]
      %v7292 = vld [vmem:[%s7287 + $0x20] sm:$0xff]
      %v7293 = vld [vmem:[%s7287 + $0x28] sm:$0xff]
      %v7294 = vld [vmem:[%s7287 + $0x30] sm:$0xff]
      %v7295 = vld [vmem:[%s7287 + $0x38] sm:$0xff]
      %v7296 = vld [vmem:[%s7287 + $0x40] sm:$0xff]
      %v7297 = vld [vmem:[%s7287 + $0x48] sm:$0xff]
      %v7298 = vld [vmem:[%s7287 + $0x50] sm:$0xff]
      %v7299 = vld [vmem:[%s7287 + $0x58] sm:$0xff]
      %v7300 = vld [vmem:[%s7287 + $0x60] sm:$0xff]
      %v7301 = vld [vmem:[%s7287 + $0x68] sm:$0xff]
      %v7302 = vld [vmem:[%s7287 + $0x70] sm:$0xff]
      %v7303 = vld [vmem:[%s7287 + $0x78] sm:$0xff]
      %v7320 = vunpack.c.l.b16 %v7288
      %v7321 = vunpack.c.h.b16 %v7288
      %v7322 = vunpack.c.l.b16 %v7289
      %v7323 = vunpack.c.h.b16 %v7289
      %v7324 = vunpack.c.l.b16 %v7290
      %v7325 = vunpack.c.h.b16 %v7290
      %v7326 = vunpack.c.l.b16 %v7291
      %v7327 = vunpack.c.h.b16 %v7291
      %v7328 = vunpack.c.l.b16 %v7292
      %v7329 = vunpack.c.h.b16 %v7292
      %v7330 = vunpack.c.l.b16 %v7293
      %v7331 = vunpack.c.h.b16 %v7293
      %v7332 = vunpack.c.l.b16 %v7294
      %v7333 = vunpack.c.h.b16 %v7294
      %v7334 = vunpack.c.l.b16 %v7295
      %v7335 = vunpack.c.h.b16 %v7295
      %v7336 = vunpack.c.l.b16 %v7296
      %v7337 = vunpack.c.h.b16 %v7296
      %v7338 = vunpack.c.l.b16 %v7297
      %v7339 = vunpack.c.h.b16 %v7297
      %v7340 = vunpack.c.l.b16 %v7298
      %v7341 = vunpack.c.h.b16 %v7298
      %v7342 = vunpack.c.l.b16 %v7299
      %v7343 = vunpack.c.h.b16 %v7299
      %v7344 = vunpack.c.l.b16 %v7300
      %v7345 = vunpack.c.h.b16 %v7300
      %v7346 = vunpack.c.l.b16 %v7301
      %v7347 = vunpack.c.h.b16 %v7301
      %v7348 = vunpack.c.l.b16 %v7302
      %v7349 = vunpack.c.h.b16 %v7302
      %v7350 = vunpack.c.l.b16 %v7303
      %v7351 = vunpack.c.h.b16 %v7303
      %v7352 = vpack.c.b16 %v7322, %v7320
      %v7353 = vpack.c.b16 %v7323, %v7321
      %v7354 = vpack.c.b16 %v7326, %v7324
      %v7355 = vpack.c.b16 %v7327, %v7325
      %v7356 = vpack.c.b16 %v7330, %v7328
      %v7357 = vpack.c.b16 %v7331, %v7329
      %v7358 = vpack.c.b16 %v7334, %v7332
      %v7359 = vpack.c.b16 %v7335, %v7333
      %v7360 = vpack.c.b16 %v7338, %v7336
      %v7361 = vpack.c.b16 %v7339, %v7337
      %v7362 = vpack.c.b16 %v7342, %v7340
      %v7363 = vpack.c.b16 %v7343, %v7341
      %v7364 = vpack.c.b16 %v7346, %v7344
      %v7365 = vpack.c.b16 %v7347, %v7345
      %v7366 = vpack.c.b16 %v7350, %v7348
      %v7367 = vpack.c.b16 %v7351, %v7349
      %7384 = vmatprep.subr.bf16.mxu0 %v7367
      %7385 = vmatpush1.bf16.msra.mxu0 %v7366
      %7386 = vmatprep.subr.bf16.mxu0 %v7365
      %7387 = vmatpush1.bf16.msra.mxu0 %v7364
      %7388 = vmatprep.subr.bf16.mxu0 %v7363
      %7389 = vmatpush1.bf16.msra.mxu0 %v7362
      %7390 = vmatprep.subr.bf16.mxu0 %v7361
      %7391 = vmatpush1.bf16.msra.mxu0 %v7360
      %7392 = vmatprep.subr.bf16.mxu0 %v7359
      %7393 = vmatpush1.bf16.msra.mxu0 %v7358
      %7394 = vmatprep.subr.bf16.mxu0 %v7357
      %7395 = vmatpush1.bf16.msra.mxu0 %v7356
      %7396 = vmatprep.subr.bf16.mxu0 %v7355
      %7397 = vmatpush1.bf16.msra.mxu0 %v7354
      %7398 = vmatprep.subr.bf16.mxu0 %v7353
      %7399 = vmatpush1.bf16.msra.mxu0 %v7352
      %7400 = vmatprep.subr.bf16.mxu0 0
      %7401 = vmatpush2.bf16.msra.mxu0 0
      %7402 = vmatprep.subr.bf16.mxu0 0
      %7403 = vmatpush2.bf16.msra.mxu0 0
      %7404 = vmatprep.subr.bf16.mxu0 0
      %7405 = vmatpush2.bf16.msra.mxu0 0
      %7406 = vmatprep.subr.bf16.mxu0 0
      %7407 = vmatpush2.bf16.msra.mxu0 0
      %7408 = vmatprep.subr.bf16.mxu0 0
      %7409 = vmatpush2.bf16.msra.mxu0 0
      %7410 = vmatprep.subr.bf16.mxu0 0
      %7411 = vmatpush2.bf16.msra.mxu0 0
      %7412 = vmatprep.subr.bf16.mxu0 0
      %7413 = vmatpush2.bf16.msra.mxu0 0
      %7414 = vmatprep.subr.bf16.mxu0 0
      %7415 = vmatpush2.bf16.msra.mxu0 0
      %7416 = vmatprep.mubr.bf16.mxu0 0
      %7417 = vmatmul.mubr.bf16.gmra.mxu0 %v7286
      %v7418 = vpop.f32.mrf.mxu0
      %v7419 = vadd.f32 0.0, %v7418
      %v7420 = vpop.f32.mrf.mxu0
      %v7421 = vadd.f32 0.0, %v7420
      %v7422 = vpop.f32.mrf.mxu0
      %v7423 = vadd.f32 0.0, %v7422
      %v7424 = vpop.f32.mrf.mxu0
      %v7425 = vadd.f32 0.0, %v7424
      %7426 = vdwg.mxu0
      %v7427 = vadd.f32 %v7270, %v7419
      %v7428 = vadd.f32 %v7271, %v7421
      %v7429 = vadd.f32 %v7272, %v7423
      %v7430 = vadd.f32 %v7273, %v7425
      %v7431 = vld [vmem:[%s6630 + $0x9] sm:$0xf]
      %v7432 = vld [vmem:[%s6630 + $0x21] sm:$0xf]
      %v7433 = vld [vmem:[%s6630 + $0x39] sm:$0xf]
      %v7434 = vld [vmem:[%s6630 + $0x51] sm:$0xf]
      %v7439 = vcombine.low %v7431, %v7432
      %v7440 = vcombine.low %v7433, %v7434
      %v7443 = vpack.c.bf16 %v7440, %v7439
      %s7444 = scalar_lea.vmem %s9, 640
      %v7445 = vld [vmem:[%s7444] sm:$0xff]
      %v7446 = vld [vmem:[%s7444 + $0x8] sm:$0xff]
      %v7447 = vld [vmem:[%s7444 + $0x10] sm:$0xff]
      %v7448 = vld [vmem:[%s7444 + $0x18] sm:$0xff]
      %v7449 = vld [vmem:[%s7444 + $0x20] sm:$0xff]
      %v7450 = vld [vmem:[%s7444 + $0x28] sm:$0xff]
      %v7451 = vld [vmem:[%s7444 + $0x30] sm:$0xff]
      %v7452 = vld [vmem:[%s7444 + $0x38] sm:$0xff]
      %v7453 = vld [vmem:[%s7444 + $0x40] sm:$0xff]
      %v7454 = vld [vmem:[%s7444 + $0x48] sm:$0xff]
      %v7455 = vld [vmem:[%s7444 + $0x50] sm:$0xff]
      %v7456 = vld [vmem:[%s7444 + $0x58] sm:$0xff]
      %v7457 = vld [vmem:[%s7444 + $0x60] sm:$0xff]
      %v7458 = vld [vmem:[%s7444 + $0x68] sm:$0xff]
      %v7459 = vld [vmem:[%s7444 + $0x70] sm:$0xff]
      %v7460 = vld [vmem:[%s7444 + $0x78] sm:$0xff]
      %v7477 = vunpack.c.l.b16 %v7445
      %v7478 = vunpack.c.h.b16 %v7445
      %v7479 = vunpack.c.l.b16 %v7446
      %v7480 = vunpack.c.h.b16 %v7446
      %v7481 = vunpack.c.l.b16 %v7447
      %v7482 = vunpack.c.h.b16 %v7447
      %v7483 = vunpack.c.l.b16 %v7448
      %v7484 = vunpack.c.h.b16 %v7448
      %v7485 = vunpack.c.l.b16 %v7449
      %v7486 = vunpack.c.h.b16 %v7449
      %v7487 = vunpack.c.l.b16 %v7450
      %v7488 = vunpack.c.h.b16 %v7450
      %v7489 = vunpack.c.l.b16 %v7451
      %v7490 = vunpack.c.h.b16 %v7451
      %v7491 = vunpack.c.l.b16 %v7452
      %v7492 = vunpack.c.h.b16 %v7452
      %v7493 = vunpack.c.l.b16 %v7453
      %v7494 = vunpack.c.h.b16 %v7453
      %v7495 = vunpack.c.l.b16 %v7454
      %v7496 = vunpack.c.h.b16 %v7454
      %v7497 = vunpack.c.l.b16 %v7455
      %v7498 = vunpack.c.h.b16 %v7455
      %v7499 = vunpack.c.l.b16 %v7456
      %v7500 = vunpack.c.h.b16 %v7456
      %v7501 = vunpack.c.l.b16 %v7457
      %v7502 = vunpack.c.h.b16 %v7457
      %v7503 = vunpack.c.l.b16 %v7458
      %v7504 = vunpack.c.h.b16 %v7458
      %v7505 = vunpack.c.l.b16 %v7459
      %v7506 = vunpack.c.h.b16 %v7459
      %v7507 = vunpack.c.l.b16 %v7460
      %v7508 = vunpack.c.h.b16 %v7460
      %v7509 = vpack.c.b16 %v7479, %v7477
      %v7510 = vpack.c.b16 %v7480, %v7478
      %v7511 = vpack.c.b16 %v7483, %v7481
      %v7512 = vpack.c.b16 %v7484, %v7482
      %v7513 = vpack.c.b16 %v7487, %v7485
      %v7514 = vpack.c.b16 %v7488, %v7486
      %v7515 = vpack.c.b16 %v7491, %v7489
      %v7516 = vpack.c.b16 %v7492, %v7490
      %v7517 = vpack.c.b16 %v7495, %v7493
      %v7518 = vpack.c.b16 %v7496, %v7494
      %v7519 = vpack.c.b16 %v7499, %v7497
      %v7520 = vpack.c.b16 %v7500, %v7498
      %v7521 = vpack.c.b16 %v7503, %v7501
      %v7522 = vpack.c.b16 %v7504, %v7502
      %v7523 = vpack.c.b16 %v7507, %v7505
      %v7524 = vpack.c.b16 %v7508, %v7506
      %7541 = vmatprep.subr.bf16.mxu0 %v7524
      %7542 = vmatpush1.bf16.msra.mxu0 %v7523
      %7543 = vmatprep.subr.bf16.mxu0 %v7522
      %7544 = vmatpush1.bf16.msra.mxu0 %v7521
      %7545 = vmatprep.subr.bf16.mxu0 %v7520
      %7546 = vmatpush1.bf16.msra.mxu0 %v7519
      %7547 = vmatprep.subr.bf16.mxu0 %v7518
      %7548 = vmatpush1.bf16.msra.mxu0 %v7517
      %7549 = vmatprep.subr.bf16.mxu0 %v7516
      %7550 = vmatpush1.bf16.msra.mxu0 %v7515
      %7551 = vmatprep.subr.bf16.mxu0 %v7514
      %7552 = vmatpush1.bf16.msra.mxu0 %v7513
      %7553 = vmatprep.subr.bf16.mxu0 %v7512
      %7554 = vmatpush1.bf16.msra.mxu0 %v7511
      %7555 = vmatprep.subr.bf16.mxu0 %v7510
      %7556 = vmatpush1.bf16.msra.mxu0 %v7509
      %7557 = vmatprep.subr.bf16.mxu0 0
      %7558 = vmatpush2.bf16.msra.mxu0 0
      %7559 = vmatprep.subr.bf16.mxu0 0
      %7560 = vmatpush2.bf16.msra.mxu0 0
      %7561 = vmatprep.subr.bf16.mxu0 0
      %7562 = vmatpush2.bf16.msra.mxu0 0
      %7563 = vmatprep.subr.bf16.mxu0 0
      %7564 = vmatpush2.bf16.msra.mxu0 0
      %7565 = vmatprep.subr.bf16.mxu0 0
      %7566 = vmatpush2.bf16.msra.mxu0 0
      %7567 = vmatprep.subr.bf16.mxu0 0
      %7568 = vmatpush2.bf16.msra.mxu0 0
      %7569 = vmatprep.subr.bf16.mxu0 0
      %7570 = vmatpush2.bf16.msra.mxu0 0
      %7571 = vmatprep.subr.bf16.mxu0 0
      %7572 = vmatpush2.bf16.msra.mxu0 0
      %7573 = vmatprep.mubr.bf16.mxu0 0
      %7574 = vmatmul.mubr.bf16.gmra.mxu0 %v7443
      %v7575 = vpop.f32.mrf.mxu0
      %v7576 = vadd.f32 0.0, %v7575
      %v7577 = vpop.f32.mrf.mxu0
      %v7578 = vadd.f32 0.0, %v7577
      %v7579 = vpop.f32.mrf.mxu0
      %v7580 = vadd.f32 0.0, %v7579
      %v7581 = vpop.f32.mrf.mxu0
      %v7582 = vadd.f32 0.0, %v7581
      %7583 = vdwg.mxu0
      %v7584 = vadd.f32 %v7427, %v7576
      %v7585 = vadd.f32 %v7428, %v7578
      %v7586 = vadd.f32 %v7429, %v7580
      %v7587 = vadd.f32 %v7430, %v7582
      %s7588 = scalar_lea.vmem [#allocation7], 48
      %v7589 = vld [vmem:[%s7588 + $0x7] sm:$0xf]
      %v7590 = vld [vmem:[%s7588 + $0x1f] sm:$0xf]
      %v7591 = vld [vmem:[%s7588 + $0x37] sm:$0xf]
      %v7592 = vld [vmem:[%s7588 + $0x4f] sm:$0xf]
      %v7597 = vcombine.low %v7589, %v7590
      %v7598 = vcombine.low %v7591, %v7592
      %v7601 = vpack.c.bf16 %v7598, %v7597
      %s7602 = scalar_lea.vmem %s9, 768
      %v7603 = vld [vmem:[%s7602] sm:$0xff]
      %v7604 = vld [vmem:[%s7602 + $0x8] sm:$0xff]
      %v7605 = vld [vmem:[%s7602 + $0x10] sm:$0xff]
      %v7606 = vld [vmem:[%s7602 + $0x18] sm:$0xff]
      %v7607 = vld [vmem:[%s7602 + $0x20] sm:$0xff]
      %v7608 = vld [vmem:[%s7602 + $0x28] sm:$0xff]
      %v7609 = vld [vmem:[%s7602 + $0x30] sm:$0xff]
      %v7610 = vld [vmem:[%s7602 + $0x38] sm:$0xff]
      %v7611 = vld [vmem:[%s7602 + $0x40] sm:$0xff]
      %v7612 = vld [vmem:[%s7602 + $0x48] sm:$0xff]
      %v7613 = vld [vmem:[%s7602 + $0x50] sm:$0xff]
      %v7614 = vld [vmem:[%s7602 + $0x58] sm:$0xff]
      %v7615 = vld [vmem:[%s7602 + $0x60] sm:$0xff]
      %v7616 = vld [vmem:[%s7602 + $0x68] sm:$0xff]
      %v7617 = vld [vmem:[%s7602 + $0x70] sm:$0xff]
      %v7618 = vld [vmem:[%s7602 + $0x78] sm:$0xff]
      %v7635 = vunpack.c.l.b16 %v7603
      %v7636 = vunpack.c.h.b16 %v7603
      %v7637 = vunpack.c.l.b16 %v7604
      %v7638 = vunpack.c.h.b16 %v7604
      %v7639 = vunpack.c.l.b16 %v7605
      %v7640 = vunpack.c.h.b16 %v7605
      %v7641 = vunpack.c.l.b16 %v7606
      %v7642 = vunpack.c.h.b16 %v7606
      %v7643 = vunpack.c.l.b16 %v7607
      %v7644 = vunpack.c.h.b16 %v7607
      %v7645 = vunpack.c.l.b16 %v7608
      %v7646 = vunpack.c.h.b16 %v7608
      %v7647 = vunpack.c.l.b16 %v7609
      %v7648 = vunpack.c.h.b16 %v7609
      %v7649 = vunpack.c.l.b16 %v7610
      %v7650 = vunpack.c.h.b16 %v7610
      %v7651 = vunpack.c.l.b16 %v7611
      %v7652 = vunpack.c.h.b16 %v7611
      %v7653 = vunpack.c.l.b16 %v7612
      %v7654 = vunpack.c.h.b16 %v7612
      %v7655 = vunpack.c.l.b16 %v7613
      %v7656 = vunpack.c.h.b16 %v7613
      %v7657 = vunpack.c.l.b16 %v7614
      %v7658 = vunpack.c.h.b16 %v7614
      %v7659 = vunpack.c.l.b16 %v7615
      %v7660 = vunpack.c.h.b16 %v7615
      %v7661 = vunpack.c.l.b16 %v7616
      %v7662 = vunpack.c.h.b16 %v7616
      %v7663 = vunpack.c.l.b16 %v7617
      %v7664 = vunpack.c.h.b16 %v7617
      %v7665 = vunpack.c.l.b16 %v7618
      %v7666 = vunpack.c.h.b16 %v7618
      %v7667 = vpack.c.b16 %v7637, %v7635
      %v7668 = vpack.c.b16 %v7638, %v7636
      %v7669 = vpack.c.b16 %v7641, %v7639
      %v7670 = vpack.c.b16 %v7642, %v7640
      %v7671 = vpack.c.b16 %v7645, %v7643
      %v7672 = vpack.c.b16 %v7646, %v7644
      %v7673 = vpack.c.b16 %v7649, %v7647
      %v7674 = vpack.c.b16 %v7650, %v7648
      %v7675 = vpack.c.b16 %v7653, %v7651
      %v7676 = vpack.c.b16 %v7654, %v7652
      %v7677 = vpack.c.b16 %v7657, %v7655
      %v7678 = vpack.c.b16 %v7658, %v7656
      %v7679 = vpack.c.b16 %v7661, %v7659
      %v7680 = vpack.c.b16 %v7662, %v7660
      %v7681 = vpack.c.b16 %v7665, %v7663
      %v7682 = vpack.c.b16 %v7666, %v7664
      %7699 = vmatprep.subr.bf16.mxu0 %v7682
      %7700 = vmatpush1.bf16.msra.mxu0 %v7681
      %7701 = vmatprep.subr.bf16.mxu0 %v7680
      %7702 = vmatpush1.bf16.msra.mxu0 %v7679
      %7703 = vmatprep.subr.bf16.mxu0 %v7678
      %7704 = vmatpush1.bf16.msra.mxu0 %v7677
      %7705 = vmatprep.subr.bf16.mxu0 %v7676
      %7706 = vmatpush1.bf16.msra.mxu0 %v7675
      %7707 = vmatprep.subr.bf16.mxu0 %v7674
      %7708 = vmatpush1.bf16.msra.mxu0 %v7673
      %7709 = vmatprep.subr.bf16.mxu0 %v7672
      %7710 = vmatpush1.bf16.msra.mxu0 %v7671
      %7711 = vmatprep.subr.bf16.mxu0 %v7670
      %7712 = vmatpush1.bf16.msra.mxu0 %v7669
      %7713 = vmatprep.subr.bf16.mxu0 %v7668
      %7714 = vmatpush1.bf16.msra.mxu0 %v7667
      %7715 = vmatprep.subr.bf16.mxu0 0
      %7716 = vmatpush2.bf16.msra.mxu0 0
      %7717 = vmatprep.subr.bf16.mxu0 0
      %7718 = vmatpush2.bf16.msra.mxu0 0
      %7719 = vmatprep.subr.bf16.mxu0 0
      %7720 = vmatpush2.bf16.msra.mxu0 0
      %7721 = vmatprep.subr.bf16.mxu0 0
      %7722 = vmatpush2.bf16.msra.mxu0 0
      %7723 = vmatprep.subr.bf16.mxu0 0
      %7724 = vmatpush2.bf16.msra.mxu0 0
      %7725 = vmatprep.subr.bf16.mxu0 0
      %7726 = vmatpush2.bf16.msra.mxu0 0
      %7727 = vmatprep.subr.bf16.mxu0 0
      %7728 = vmatpush2.bf16.msra.mxu0 0
      %7729 = vmatprep.subr.bf16.mxu0 0
      %7730 = vmatpush2.bf16.msra.mxu0 0
      %7731 = vmatprep.mubr.bf16.mxu0 0
      %7732 = vmatmul.mubr.bf16.gmra.mxu0 %v7601
      %v7733 = vpop.f32.mrf.mxu0
      %v7734 = vadd.f32 0.0, %v7733
      %v7735 = vpop.f32.mrf.mxu0
      %v7736 = vadd.f32 0.0, %v7735
      %v7737 = vpop.f32.mrf.mxu0
      %v7738 = vadd.f32 0.0, %v7737
      %v7739 = vpop.f32.mrf.mxu0
      %v7740 = vadd.f32 0.0, %v7739
      %7741 = vdwg.mxu0
      %v7742 = vadd.f32 %v7584, %v7734
      %v7743 = vadd.f32 %v7585, %v7736
      %v7744 = vadd.f32 %v7586, %v7738
      %v7745 = vadd.f32 %v7587, %v7740
      %v7746 = vld [vmem:[%s7588 + $0x8] sm:$0xf]
      %v7747 = vld [vmem:[%s7588 + $0x20] sm:$0xf]
      %v7748 = vld [vmem:[%s7588 + $0x38] sm:$0xf]
      %v7749 = vld [vmem:[%s7588 + $0x50] sm:$0xf]
      %v7754 = vcombine.low %v7746, %v7747
      %v7755 = vcombine.low %v7748, %v7749
      %v7758 = vpack.c.bf16 %v7755, %v7754
      %s7759 = scalar_lea.vmem %s9, 896
      %v7760 = vld [vmem:[%s7759] sm:$0xff]
      %v7761 = vld [vmem:[%s7759 + $0x8] sm:$0xff]
      %v7762 = vld [vmem:[%s7759 + $0x10] sm:$0xff]
      %v7763 = vld [vmem:[%s7759 + $0x18] sm:$0xff]
      %v7764 = vld [vmem:[%s7759 + $0x20] sm:$0xff]
      %v7765 = vld [vmem:[%s7759 + $0x28] sm:$0xff]
      %v7766 = vld [vmem:[%s7759 + $0x30] sm:$0xff]
      %v7767 = vld [vmem:[%s7759 + $0x38] sm:$0xff]
      %v7768 = vld [vmem:[%s7759 + $0x40] sm:$0xff]
      %v7769 = vld [vmem:[%s7759 + $0x48] sm:$0xff]
      %v7770 = vld [vmem:[%s7759 + $0x50] sm:$0xff]
      %v7771 = vld [vmem:[%s7759 + $0x58] sm:$0xff]
      %v7772 = vld [vmem:[%s7759 + $0x60] sm:$0xff]
      %v7773 = vld [vmem:[%s7759 + $0x68] sm:$0xff]
      %v7774 = vld [vmem:[%s7759 + $0x70] sm:$0xff]
      %v7775 = vld [vmem:[%s7759 + $0x78] sm:$0xff]
      %v7792 = vunpack.c.l.b16 %v7760
      %v7793 = vunpack.c.h.b16 %v7760
      %v7794 = vunpack.c.l.b16 %v7761
      %v7795 = vunpack.c.h.b16 %v7761
      %v7796 = vunpack.c.l.b16 %v7762
      %v7797 = vunpack.c.h.b16 %v7762
      %v7798 = vunpack.c.l.b16 %v7763
      %v7799 = vunpack.c.h.b16 %v7763
      %v7800 = vunpack.c.l.b16 %v7764
      %v7801 = vunpack.c.h.b16 %v7764
      %v7802 = vunpack.c.l.b16 %v7765
      %v7803 = vunpack.c.h.b16 %v7765
      %v7804 = vunpack.c.l.b16 %v7766
      %v7805 = vunpack.c.h.b16 %v7766
      %v7806 = vunpack.c.l.b16 %v7767
      %v7807 = vunpack.c.h.b16 %v7767
      %v7808 = vunpack.c.l.b16 %v7768
      %v7809 = vunpack.c.h.b16 %v7768
      %v7810 = vunpack.c.l.b16 %v7769
      %v7811 = vunpack.c.h.b16 %v7769
      %v7812 = vunpack.c.l.b16 %v7770
      %v7813 = vunpack.c.h.b16 %v7770
      %v7814 = vunpack.c.l.b16 %v7771
      %v7815 = vunpack.c.h.b16 %v7771
      %v7816 = vunpack.c.l.b16 %v7772
      %v7817 = vunpack.c.h.b16 %v7772
      %v7818 = vunpack.c.l.b16 %v7773
      %v7819 = vunpack.c.h.b16 %v7773
      %v7820 = vunpack.c.l.b16 %v7774
      %v7821 = vunpack.c.h.b16 %v7774
      %v7822 = vunpack.c.l.b16 %v7775
      %v7823 = vunpack.c.h.b16 %v7775
      %v7824 = vpack.c.b16 %v7794, %v7792
      %v7825 = vpack.c.b16 %v7795, %v7793
      %v7826 = vpack.c.b16 %v7798, %v7796
      %v7827 = vpack.c.b16 %v7799, %v7797
      %v7828 = vpack.c.b16 %v7802, %v7800
      %v7829 = vpack.c.b16 %v7803, %v7801
      %v7830 = vpack.c.b16 %v7806, %v7804
      %v7831 = vpack.c.b16 %v7807, %v7805
      %v7832 = vpack.c.b16 %v7810, %v7808
      %v7833 = vpack.c.b16 %v7811, %v7809
      %v7834 = vpack.c.b16 %v7814, %v7812
      %v7835 = vpack.c.b16 %v7815, %v7813
      %v7836 = vpack.c.b16 %v7818, %v7816
      %v7837 = vpack.c.b16 %v7819, %v7817
      %v7838 = vpack.c.b16 %v7822, %v7820
      %v7839 = vpack.c.b16 %v7823, %v7821
      %7856 = vmatprep.subr.bf16.mxu0 %v7839
      %7857 = vmatpush1.bf16.msra.mxu0 %v7838
      %7858 = vmatprep.subr.bf16.mxu0 %v7837
      %7859 = vmatpush1.bf16.msra.mxu0 %v7836
      %7860 = vmatprep.subr.bf16.mxu0 %v7835
      %7861 = vmatpush1.bf16.msra.mxu0 %v7834
      %7862 = vmatprep.subr.bf16.mxu0 %v7833
      %7863 = vmatpush1.bf16.msra.mxu0 %v7832
      %7864 = vmatprep.subr.bf16.mxu0 %v7831
      %7865 = vmatpush1.bf16.msra.mxu0 %v7830
      %7866 = vmatprep.subr.bf16.mxu0 %v7829
      %7867 = vmatpush1.bf16.msra.mxu0 %v7828
      %7868 = vmatprep.subr.bf16.mxu0 %v7827
      %7869 = vmatpush1.bf16.msra.mxu0 %v7826
      %7870 = vmatprep.subr.bf16.mxu0 %v7825
      %7871 = vmatpush1.bf16.msra.mxu0 %v7824
      %7872 = vmatprep.subr.bf16.mxu0 0
      %7873 = vmatpush2.bf16.msra.mxu0 0
      %7874 = vmatprep.subr.bf16.mxu0 0
      %7875 = vmatpush2.bf16.msra.mxu0 0
      %7876 = vmatprep.subr.bf16.mxu0 0
      %7877 = vmatpush2.bf16.msra.mxu0 0
      %7878 = vmatprep.subr.bf16.mxu0 0
      %7879 = vmatpush2.bf16.msra.mxu0 0
      %7880 = vmatprep.subr.bf16.mxu0 0
      %7881 = vmatpush2.bf16.msra.mxu0 0
      %7882 = vmatprep.subr.bf16.mxu0 0
      %7883 = vmatpush2.bf16.msra.mxu0 0
      %7884 = vmatprep.subr.bf16.mxu0 0
      %7885 = vmatpush2.bf16.msra.mxu0 0
      %7886 = vmatprep.subr.bf16.mxu0 0
      %7887 = vmatpush2.bf16.msra.mxu0 0
      %7888 = vmatprep.mubr.bf16.mxu0 0
      %7889 = vmatmul.mubr.bf16.gmra.mxu0 %v7758
      %v7890 = vpop.f32.mrf.mxu0
      %v7891 = vadd.f32 0.0, %v7890
      %v7892 = vpop.f32.mrf.mxu0
      %v7893 = vadd.f32 0.0, %v7892
      %v7894 = vpop.f32.mrf.mxu0
      %v7895 = vadd.f32 0.0, %v7894
      %v7896 = vpop.f32.mrf.mxu0
      %v7897 = vadd.f32 0.0, %v7896
      %7898 = vdwg.mxu0
      %v7899 = vadd.f32 %v7742, %v7891
      %v7900 = vadd.f32 %v7743, %v7893
      %v7901 = vadd.f32 %v7744, %v7895
      %v7902 = vadd.f32 %v7745, %v7897
      %v7903 = vld [vmem:[%s7588 + $0x9] sm:$0xf]
      %v7904 = vld [vmem:[%s7588 + $0x21] sm:$0xf]
      %v7905 = vld [vmem:[%s7588 + $0x39] sm:$0xf]
      %v7906 = vld [vmem:[%s7588 + $0x51] sm:$0xf]
      %v7911 = vcombine.low %v7903, %v7904
      %v7912 = vcombine.low %v7905, %v7906
      %v7915 = vpack.c.bf16 %v7912, %v7911
      %s7916 = scalar_lea.vmem %s9, 1024
      %v7917 = vld [vmem:[%s7916] sm:$0xff]
      %v7918 = vld [vmem:[%s7916 + $0x8] sm:$0xff]
      %v7919 = vld [vmem:[%s7916 + $0x10] sm:$0xff]
      %v7920 = vld [vmem:[%s7916 + $0x18] sm:$0xff]
      %v7921 = vld [vmem:[%s7916 + $0x20] sm:$0xff]
      %v7922 = vld [vmem:[%s7916 + $0x28] sm:$0xff]
      %v7923 = vld [vmem:[%s7916 + $0x30] sm:$0xff]
      %v7924 = vld [vmem:[%s7916 + $0x38] sm:$0xff]
      %v7925 = vld [vmem:[%s7916 + $0x40] sm:$0xff]
      %v7926 = vld [vmem:[%s7916 + $0x48] sm:$0xff]
      %v7927 = vld [vmem:[%s7916 + $0x50] sm:$0xff]
      %v7928 = vld [vmem:[%s7916 + $0x58] sm:$0xff]
      %v7929 = vld [vmem:[%s7916 + $0x60] sm:$0xff]
      %v7930 = vld [vmem:[%s7916 + $0x68] sm:$0xff]
      %v7931 = vld [vmem:[%s7916 + $0x70] sm:$0xff]
      %v7932 = vld [vmem:[%s7916 + $0x78] sm:$0xff]
      %v7949 = vunpack.c.l.b16 %v7917
      %v7950 = vunpack.c.h.b16 %v7917
      %v7951 = vunpack.c.l.b16 %v7918
      %v7952 = vunpack.c.h.b16 %v7918
      %v7953 = vunpack.c.l.b16 %v7919
      %v7954 = vunpack.c.h.b16 %v7919
      %v7955 = vunpack.c.l.b16 %v7920
      %v7956 = vunpack.c.h.b16 %v7920
      %v7957 = vunpack.c.l.b16 %v7921
      %v7958 = vunpack.c.h.b16 %v7921
      %v7959 = vunpack.c.l.b16 %v7922
      %v7960 = vunpack.c.h.b16 %v7922
      %v7961 = vunpack.c.l.b16 %v7923
      %v7962 = vunpack.c.h.b16 %v7923
      %v7963 = vunpack.c.l.b16 %v7924
      %v7964 = vunpack.c.h.b16 %v7924
      %v7965 = vunpack.c.l.b16 %v7925
      %v7966 = vunpack.c.h.b16 %v7925
      %v7967 = vunpack.c.l.b16 %v7926
      %v7968 = vunpack.c.h.b16 %v7926
      %v7969 = vunpack.c.l.b16 %v7927
      %v7970 = vunpack.c.h.b16 %v7927
      %v7971 = vunpack.c.l.b16 %v7928
      %v7972 = vunpack.c.h.b16 %v7928
      %v7973 = vunpack.c.l.b16 %v7929
      %v7974 = vunpack.c.h.b16 %v7929
      %v7975 = vunpack.c.l.b16 %v7930
      %v7976 = vunpack.c.h.b16 %v7930
      %v7977 = vunpack.c.l.b16 %v7931
      %v7978 = vunpack.c.h.b16 %v7931
      %v7979 = vunpack.c.l.b16 %v7932
      %v7980 = vunpack.c.h.b16 %v7932
      %v7981 = vpack.c.b16 %v7951, %v7949
      %v7982 = vpack.c.b16 %v7952, %v7950
      %v7983 = vpack.c.b16 %v7955, %v7953
      %v7984 = vpack.c.b16 %v7956, %v7954
      %v7985 = vpack.c.b16 %v7959, %v7957
      %v7986 = vpack.c.b16 %v7960, %v7958
      %v7987 = vpack.c.b16 %v7963, %v7961
      %v7988 = vpack.c.b16 %v7964, %v7962
      %v7989 = vpack.c.b16 %v7967, %v7965
      %v7990 = vpack.c.b16 %v7968, %v7966
      %v7991 = vpack.c.b16 %v7971, %v7969
      %v7992 = vpack.c.b16 %v7972, %v7970
      %v7993 = vpack.c.b16 %v7975, %v7973
      %v7994 = vpack.c.b16 %v7976, %v7974
      %v7995 = vpack.c.b16 %v7979, %v7977
      %v7996 = vpack.c.b16 %v7980, %v7978
      %8013 = vmatprep.subr.bf16.mxu0 %v7996
      %8014 = vmatpush1.bf16.msra.mxu0 %v7995
      %8015 = vmatprep.subr.bf16.mxu0 %v7994
      %8016 = vmatpush1.bf16.msra.mxu0 %v7993
      %8017 = vmatprep.subr.bf16.mxu0 %v7992
      %8018 = vmatpush1.bf16.msra.mxu0 %v7991
      %8019 = vmatprep.subr.bf16.mxu0 %v7990
      %8020 = vmatpush1.bf16.msra.mxu0 %v7989
      %8021 = vmatprep.subr.bf16.mxu0 %v7988
      %8022 = vmatpush1.bf16.msra.mxu0 %v7987
      %8023 = vmatprep.subr.bf16.mxu0 %v7986
      %8024 = vmatpush1.bf16.msra.mxu0 %v7985
      %8025 = vmatprep.subr.bf16.mxu0 %v7984
      %8026 = vmatpush1.bf16.msra.mxu0 %v7983
      %8027 = vmatprep.subr.bf16.mxu0 %v7982
      %8028 = vmatpush1.bf16.msra.mxu0 %v7981
      %8029 = vmatprep.subr.bf16.mxu0 0
      %8030 = vmatpush2.bf16.msra.mxu0 0
      %8031 = vmatprep.subr.bf16.mxu0 0
      %8032 = vmatpush2.bf16.msra.mxu0 0
      %8033 = vmatprep.subr.bf16.mxu0 0
      %8034 = vmatpush2.bf16.msra.mxu0 0
      %8035 = vmatprep.subr.bf16.mxu0 0
      %8036 = vmatpush2.bf16.msra.mxu0 0
      %8037 = vmatprep.subr.bf16.mxu0 0
      %8038 = vmatpush2.bf16.msra.mxu0 0
      %8039 = vmatprep.subr.bf16.mxu0 0
      %8040 = vmatpush2.bf16.msra.mxu0 0
      %8041 = vmatprep.subr.bf16.mxu0 0
      %8042 = vmatpush2.bf16.msra.mxu0 0
      %8043 = vmatprep.subr.bf16.mxu0 0
      %8044 = vmatpush2.bf16.msra.mxu0 0
      %8045 = vmatprep.mubr.bf16.mxu0 0
      %8046 = vmatmul.mubr.bf16.gmra.mxu0 %v7915
      %v8047 = vpop.f32.mrf.mxu0
      %v8048 = vadd.f32 0.0, %v8047
      %v8049 = vpop.f32.mrf.mxu0
      %v8050 = vadd.f32 0.0, %v8049
      %v8051 = vpop.f32.mrf.mxu0
      %v8052 = vadd.f32 0.0, %v8051
      %v8053 = vpop.f32.mrf.mxu0
      %v8054 = vadd.f32 0.0, %v8053
      %8055 = vdwg.mxu0
      %v8056 = vadd.f32 %v7899, %v8048
      %v8057 = vadd.f32 %v7900, %v8050
      %v8058 = vadd.f32 %v7901, %v8052
      %v8059 = vadd.f32 %v7902, %v8054
      %8060 = vst [vmem:[%s386] sm:$0xff] %v8056
      %8061 = vst [vmem:[%s386 + $0x8] sm:$0xff] %v8057
      %8062 = vst [vmem:[%s386 + $0x10] sm:$0xff] %v8058
      %8063 = vst [vmem:[%s386 + $0x18] sm:$0xff] %v8059
      %p8064 = scmp.lt.s32.totalorder %s22, 1
      %s8065 = scalar_select %p8064, %s22, 1
      %s8066 = smul.addr %s8065, 4
      %s8067 = smul.addr %s8066, 8
      %s8068 = scalar_lea.vmem %s11, %s8067
      // Predicated region
      $region65: #{dnn_activations_vgg16_layer11.1} parent=63 // pred_check
        %p8069 = pneg %p276
      $region66: #{dnn_activations_vgg16_layer11.1} parent=63 // pred_check_branch
        %8071 = sbr.rel (%p8069) target = $region68
      $region67: #{dnn_activations_vgg16_layer11.1} parent=63 // pred_region
        _
      $region68: #{dnn_activations_vgg16_layer11.1} parent=63 // pred_fallthru
        _
    $region64: #{dnn_activations_vgg16_layer11.1} parent=5 // pred_fallthru
      _
    %p8072 = scmp.le.s32.totalorder 2, %s17
    // Predicated region
    $region69: #{dnn_activations_vgg16_layer11.1} parent=5 // pred_check
      %p8073 = pneg %p8072
    $region70: #{dnn_activations_vgg16_layer11.1} parent=5 // pred_check_branch
      %8075 = sbr.rel (%p8073) target = $region72
    $region71: #{dnn_activations_vgg16_layer11.1} parent=5 // pred_region
      %s8076 = ssub.s32 %s17, 2
      // Predicated region
      $region73: #{dnn_activations_vgg16_layer11.1} parent=71 // pred_check
        %p8077 = pneg %p282
      $region74: #{dnn_activations_vgg16_layer11.1} parent=71 // pred_check_branch
        %8079 = sbr.rel (%p8077) target = $region76
      $region75: #{dnn_activations_vgg16_layer11.1} parent=71 // pred_region
        %p8080 = scmp.lt.s32.totalorder %s23, 1
        %s8081 = scalar_select %p8080, %s23, 1
        %s8082 = smul.addr %s8081, 4
        %s8083 = smul.addr %s8082, 8
        %s8084 = scalar_lea.vmem %s11, %s8083
      $region76: #{dnn_activations_vgg16_layer11.1} parent=71 // pred_fallthru
        _
    $region72: #{dnn_activations_vgg16_layer11.1} parent=5 // pred_fallthru
      _
  $region6: #{dnn_activations_vgg16_layer11.1} parent=0 // loop_footer
    %s21 = sadd.s32 1, %s17
  $region7: #{dnn_activations_vgg16_layer11.1} parent=0 // loop_footer_branch
    %16 = sbr.rel target = $region3
  $region8: #{dnn_activations_vgg16_layer11.1} parent=0 // loop_exit
    _

</llo_original>
